<compile_context>
chip_gen: v7x
topology: tpu7x:2x2x1
jax: 0.10.0
libtpu: 0.0.40
codegen_flags: <defaults>
</compile_context>

<pallas_src>
import jax
import jax.numpy as jnp
from jax.experimental import pallas as pl
from jax.experimental.pallas import tpu as pltpu


# ---------------------------------------------------------------------------
# Kernel A: ln1 (latent -> 8*8*128) and ln (n_classes -> 8*8), row-tiled.
# ln1's weight columns are pre-permuted (prepare_params) so that its output
# reshapes row-major to rows=(batch, position), lanes=channel for kernel B.
# ---------------------------------------------------------------------------
def _head_kernel(noise_ref, yemb_ref, wln1_ref, bln1_ref, wln_ref, bln_ref,
                 x_ref, y_ref):
    bf16, f32 = jnp.bfloat16, jnp.float32
    x_ref[...] = (jnp.dot(noise_ref[...].astype(bf16), wln1_ref[...],
                          preferred_element_type=f32) + bln1_ref[...])
    y_ref[...] = (jnp.dot(yemb_ref[...].astype(bf16), wln_ref[...],
                          preferred_element_type=f32) + bln_ref[...])


# ---------------------------------------------------------------------------
# Kernel B: deconv1 + deconv2 + deconv3 (+ReLU), fully fused.
#
# One grid step processes G batch elements = R = G*64 rows.  Layout is
# rows = spatial position, lanes = channels.  Every deconv output is kept as
# "phase planes": column p*C + o of stage-s output is channel o at output
# position (stride-product)*row + p.  The ConvTranspose overlap-add is folded
# into block-sparse weights (W2big / W3big, built once in prepare_params); the
# only cross-row terms (taps that spill into the neighbouring phase group) are
# handled by appending 128-lane-aligned, 1-row-shifted copies of the input to
# the GEMM LHS.  Shifts are masked at 64-row boundaries so grouped batch
# elements never leak into each other.
# ---------------------------------------------------------------------------
def _deconv_stack_kernel(ts_ref, lab_ref, w1_ref, w1l_ref, b1_ref,
                         w2big_ref, b2_ref, w3big_ref, b3_ref, o_ref):
    f32, bf16 = jnp.float32, jnp.bfloat16
    R = ts_ref.shape[0]                      # G * 64 rows

    row = jax.lax.broadcasted_iota(jnp.int32, (R, 1), 0)
    first_row = (row % 64) == 0              # first position of a batch element
    last_row = (row % 64) == 63              # last position of a batch element

    def shift_dn(x):                         # x[r] := x[r-1], 0 at block starts
        return jnp.where(first_row, 0.0, jnp.roll(x, 1, axis=0))

    def shift_up(x):                         # x[r] := x[r+1], 0 at block ends
        return jnp.where(last_row, 0.0, jnp.roll(x, -1, axis=0))

    # ---- deconv1: stride 4, K 4, pad 0, 129 -> 64 channels.
    # Lane-aligned 128-channel GEMM + rank-1 label-channel correction (f32).
    # Column k*64+o of d1 = channel o of deconv1 output at position 4*row + k.
    y1 = jnp.dot(ts_ref[...].astype(bf16), w1_ref[...],
                 preferred_element_type=f32)
    y1 = y1 + lab_ref[...] * w1l_ref[...]
    d1 = jnp.maximum(y1 + b1_ref[...], 0.0)                       # (R, 256)

    # ---- deconv2: stride 2, K 4, pad 1, 64 -> 32 channels, one GEMM.
    # LHS = [ d1 | shift_dn(d1 lanes 128:256) | shift_up(d1 lanes 0:128) ],
    # every block is vreg-aligned (128 lanes) so the concat is shuffle-free.
    lhs2 = jnp.concatenate(
        [d1, shift_dn(d1[:, 128:256]), shift_up(d1[:, 0:128])], axis=1)
    y2 = jnp.dot(lhs2.astype(bf16), w2big_ref[...],
                 preferred_element_type=f32)
    d2 = jnp.maximum(y2 + b2_ref[...], 0.0)                       # (R, 256)

    # ---- deconv3: stride 2, K 4, pad 1, 32 -> 1 channel, one GEMM.
    # Column r3 of the result = final output position 16*row + r3.
    lhs3 = jnp.concatenate(
        [d2, shift_dn(d2[:, 128:256]), shift_up(d2[:, 0:128])], axis=1)
    y3 = jnp.dot(lhs3.astype(bf16), w3big_ref[...],
                 preferred_element_type=f32)
    o_ref[...] = jnp.maximum(y3 + b3_ref[...], 0.0)               # (R, 16)


# ---------------------------------------------------------------------------
# Kernel C: final Linear(1024, 1024), row-tiled.
# ---------------------------------------------------------------------------
def _ln2_kernel(x_ref, w_ref, b_ref, o_ref):
    o_ref[...] = (jnp.dot(x_ref[...].astype(jnp.bfloat16), w_ref[...],
                          preferred_element_type=jnp.float32) + b_ref[...])


# ---------------------------------------------------------------------------
# Helpers
# ---------------------------------------------------------------------------
def _row_tile(n, cap):
    """Largest row tile <= cap that divides n and is 8-aligned (or n itself)."""
    if n <= cap:
        return n
    t = (cap // 8) * 8
    while t >= 8:
        if n % t == 0:
            return t
        t -= 8
    return n


def _cost(flops, bytes_accessed):
    return pl.CostEstimate(flops=int(flops), transcendentals=0,
                           bytes_accessed=int(bytes_accessed))


# ---------------------------------------------------------------------------
# One-time parameter preparation (weight repack + bf16 casts), hoisted out of
# the jitted forward so none of this layout glue runs per call.
# ---------------------------------------------------------------------------
def prepare_params(params):
    f32, bf16 = jnp.float32, jnp.bfloat16
    w_ln1, b_ln1 = params["ln1"]
    w_ln, b_ln = params["ln"]
    w1, b1 = params["deconv1"]            # (129, 64, 4), (64,)
    w2, b2 = params["deconv2"]            # (64, 32, 4), (32,)
    w3, b3 = params["deconv3"]            # (32, 1, 4), (1,)
    w_ln2, b_ln2 = params["ln2"]
    latent_dim = w_ln1.shape[0]

    # ln1 columns permuted so x.reshape(B*64, 128) has rows=(b, l), lanes=chan.
    w_ln1_p = (w_ln1.reshape(latent_dim, 128, 64).transpose(0, 2, 1)
               .reshape(latent_dim, 8192)).astype(bf16)
    b_ln1_p = b_ln1.reshape(128, 64).T.reshape(1, 8192).astype(f32)

    # deconv1 as (Ci=128, K*Co=256) with columns ordered (k, o); label channel
    # kept as a separate rank-1 row (bf16-rounded, applied in f32).
    w1_main = w1[:128].transpose(0, 2, 1).reshape(128, 256).astype(bf16)
    w1_lab = w1[128].transpose(1, 0).reshape(1, 256).astype(bf16).astype(f32)
    b1_t = jnp.tile(b1, 4).reshape(1, 256).astype(f32)

    # deconv2 folded into ONE block-sparse GEMM weight W2big (512, 256).
    # LHS column layout: [0:256]   d1 (phases k1=0..3, 64 chan each)
    #                    [256:384] shift_dn(d1 lanes 128:256)   (phases 2,3)
    #                    [384:512] shift_up(d1 lanes 0:128)     (phases 0,1)
    # Output column r2*32+o holds deconv2 channel o at position 8*row + r2.
    w2big = jnp.zeros((512, 256), f32)
    for k1 in range(4):
        for r2 in range(8):
            k2 = r2 + 1 - 2 * k1                     # tap hitting (k1 -> r2)
            if 0 <= k2 <= 3:
                w2big = w2big.at[k1 * 64:(k1 + 1) * 64,
                                 r2 * 32:(r2 + 1) * 32].set(w2[:, :, k2])
    w2big = w2big.at[320:384, 0:32].set(w2[:, :, 3])      # dn(phase-3) -> r2=0
    w2big = w2big.at[384:448, 224:256].set(w2[:, :, 0])   # up(phase-0) -> r2=7
    w2big = w2big.astype(bf16)
    b2_t = jnp.tile(b2, 8).reshape(1, 256).astype(f32)

    # deconv3 folded into ONE block-sparse GEMM weight W3big (512, 16).
    # LHS column layout: [0:256]   d2 (phases r2=0..7, 32 chan each)
    #                    [256:384] shift_dn(d2 lanes 128:256)   (phases 4..7)
    #                    [384:512] shift_up(d2 lanes 0:128)     (phases 0..3)
    # Output column r3 holds the final map at position 16*row + r3.
    w3m = w3[:, 0, :]                                     # (32, 4)
    w3big = jnp.zeros((512, 16), f32)
    for r2 in range(8):
        for r3 in range(16):
            k3 = r3 + 1 - 2 * r2
            if 0 <= k3 <= 3:
                w3big = w3big.at[r2 * 32:(r2 + 1) * 32, r3].set(w3m[:, k3])
    w3big = w3big.at[352:384, 0].set(w3m[:, 3])           # dn(phase-7) -> r3=0
    w3big = w3big.at[384:416, 15].set(w3m[:, 0])          # up(phase-0) -> r3=15
    w3big = w3big.astype(bf16)
    b3_t = jnp.tile(b3, 16).reshape(1, 16).astype(f32)

    return dict(
        emb=params["emb"],
        w_ln1=w_ln1_p, b_ln1=b_ln1_p,
        w_ln=w_ln.astype(bf16), b_ln=b_ln.reshape(1, 64).astype(f32),
        w1=w1_main, w1_lab=w1_lab, b1=b1_t,
        w2big=w2big, b2=b2_t,
        w3big=w3big, b3=b3_t,
        w_ln2=w_ln2.astype(bf16), b_ln2=b_ln2.reshape(1, 1024).astype(f32),
    )


# ---------------------------------------------------------------------------
# Generator forward (jit this; takes pre-packed params)
# ---------------------------------------------------------------------------
def generator_forward(packed, noise, labels):
    f32 = jnp.float32
    B, latent_dim = noise.shape
    n_classes = packed["emb"].shape[1]

    # Embedding lookup (gather) kept as XLA glue.
    # TODO(synk): nn.Embedding gather has no clean single-kernel Pallas form here.
    yemb = jnp.take(packed["emb"], labels, axis=0)                # (B, n_classes)

    # --- kernel A: ln1 + ln -------------------------------------------------
    tm_a = _row_tile(B, 128)
    cost_a = _cost(
        2 * B * (latent_dim * 8192 + n_classes * 64),
        B * (latent_dim + n_classes) * 4
        + (latent_dim * 8192 + n_classes * 64) * 2
        + (8192 + 64) * 4 + B * (8192 + 64) * 4)
    x, y = pl.pallas_call(
        _head_kernel,
        grid=(B // tm_a,),
        in_specs=[
            pl.BlockSpec((tm_a, latent_dim), lambda i: (i, 0)),
            pl.BlockSpec((tm_a, n_classes), lambda i: (i, 0)),
            pl.BlockSpec((latent_dim, 8192), lambda i: (0, 0)),
            pl.BlockSpec((1, 8192), lambda i: (0, 0)),
            pl.BlockSpec((n_classes, 64), lambda i: (0, 0)),
            pl.BlockSpec((1, 64), lambda i: (0, 0)),
        ],
        out_specs=(pl.BlockSpec((tm_a, 8192), lambda i: (i, 0)),
                   pl.BlockSpec((tm_a, 64), lambda i: (i, 0))),
        out_shape=(jax.ShapeDtypeStruct((B, 8192), f32),
                   jax.ShapeDtypeStruct((B, 64), f32)),
        compiler_params=pltpu.CompilerParams(
            dimension_semantics=("parallel",)),
        cost_estimate=cost_a,
    )(noise, yemb, packed["w_ln1"], packed["b_ln1"],
      packed["w_ln"], packed["b_ln"])

    # Glue: position moves from lanes to rows (pure row-major reshapes).
    ts_main = x.reshape(B * 64, 128)         # rows = (b, l), lanes = channel
    ts_lab = y.reshape(B * 64, 1)            # label-channel value per (b, l)

    # --- kernel B: fused deconv stack, G batch elements per grid step -------
    G = 4 if B % 4 == 0 else (2 if B % 2 == 0 else 1)
    R = G * 64
    cost_b = _cost(
        2 * B * 64 * (128 * 256 + 512 * 256 + 512 * 16 + 256),
        B * 64 * (128 + 1 + 16) * 4
        + (128 * 256 + 512 * 256 + 512 * 16) * 2
        + (256 * 4 + 16) * 4)
    tcat = pl.pallas_call(
        _deconv_stack_kernel,
        grid=(B // G,),
        in_specs=[
            pl.BlockSpec((R, 128), lambda i: (i, 0)),     # ts_main
            pl.BlockSpec((R, 1), lambda i: (i, 0)),       # ts_lab
            pl.BlockSpec((128, 256), lambda i: (0, 0)),   # w1 (main channels)
            pl.BlockSpec((1, 256), lambda i: (0, 0)),     # w1 (label channel)
            pl.BlockSpec((1, 256), lambda i: (0, 0)),     # b1 tiled (k, o)
            pl.BlockSpec((512, 256), lambda i: (0, 0)),   # W2big
            pl.BlockSpec((1, 256), lambda i: (0, 0)),     # b2 tiled (r2, o)
            pl.BlockSpec((512, 16), lambda i: (0, 0)),    # W3big
            pl.BlockSpec((1, 16), lambda i: (0, 0)),      # b3 tiled
        ],
        out_specs=pl.BlockSpec((R, 16), lambda i: (i, 0)),
        out_shape=jax.ShapeDtypeStruct((B * 64, 16), f32),
        compiler_params=pltpu.CompilerParams(
            dimension_semantics=("parallel",)),
        cost_estimate=cost_b,
    )(ts_main, ts_lab, packed["w1"], packed["w1_lab"], packed["b1"],
      packed["w2big"], packed["b2"], packed["w3big"], packed["b3"])

    # Glue: (B*64, 16) -> (B, 1024); col r3 at row (b, u) is position 16*u+r3.
    ts3 = tcat.reshape(B, 1024)

    # --- kernel C: ln2 -------------------------------------------------------
    tm_c = _row_tile(B, 256)
    cost_c = _cost(2 * B * 1024 * 1024,
                   B * 1024 * 4 * 2 + 1024 * 1024 * 2 + 1024 * 4)
    out = pl.pallas_call(
        _ln2_kernel,
        grid=(B // tm_c,),
        in_specs=[pl.BlockSpec((tm_c, 1024), lambda i: (i, 0)),
                  pl.BlockSpec((1024, 1024), lambda i: (0, 0)),
                  pl.BlockSpec((1, 1024), lambda i: (0, 0))],
        out_specs=pl.BlockSpec((tm_c, 1024), lambda i: (i, 0)),
        out_shape=jax.ShapeDtypeStruct((B, 1024), f32),
        compiler_params=pltpu.CompilerParams(
            dimension_semantics=("parallel",)),
        cost_estimate=cost_c,
    )(ts3, packed["w_ln2"], packed["b_ln2"])

    return out.reshape(B, 1, 1024)


# ---------------------------------------------------------------------------
# Parameter init (deterministic, PyTorch-default-like uniform bounds)
# ---------------------------------------------------------------------------
def init_params(key, n_classes, latent_dim):
    keys = jax.random.split(key, 8)

    def lin(k, fin, fout):
        bound = 1.0 / (fin ** 0.5)
        kw, kb = jax.random.split(k)
        w = jax.random.uniform(kw, (fin, fout), jnp.float32, -bound, bound)
        b = jax.random.uniform(kb, (fout,), jnp.float32, -bound, bound)
        return w, b

    def deconv(k, cin, cout, ksz):
        bound = 1.0 / ((cin * ksz) ** 0.5)
        kw, kb = jax.random.split(k)
        w = jax.random.uniform(kw, (cin, cout, ksz), jnp.float32, -bound, bound)
        b = jax.random.uniform(kb, (cout,), jnp.float32, -bound, bound)
        return w, b

    return {
        "emb":     jax.random.normal(keys[0], (n_classes, n_classes), jnp.float32),
        "ln":      lin(keys[1], n_classes, 8 * 8),
        "ln1":     lin(keys[2], latent_dim, 8 * 8 * 128),
        "deconv1": deconv(keys[3], 129, 64, 4),
        "deconv2": deconv(keys[4], 64, 32, 4),
        "deconv3": deconv(keys[5], 32, 1, 4),
        "ln2":     lin(keys[6], 1024, 1024),
    }


# ---------------------------------------------------------------------------
# Pure-JAX reference (independent zero-insert + flipped-kernel formulation).
# Weights are rounded through bf16 to match the kernels' MXU operand dtype;
# activations stay f32 in the reference, so the comparison bounds the extra
# activation rounding done inside the kernels as well.
# ---------------------------------------------------------------------------
def _ref_conv_transpose1d(x, w, b, stride, padding):
    B, Ci, L = x.shape
    _, Co, K = w.shape
    L_out = (L - 1) * stride - 2 * padding + K
    L_up = (L - 1) * stride + 1
    x_up = jnp.zeros((B, Ci, L_up), x.dtype).at[:, :, ::stride].set(x)
    pad = K - 1 - padding
    x_pad = jnp.pad(x_up, ((0, 0), (0, 0), (pad, pad)))
    cols = jnp.stack([x_pad[:, :, kk:kk + L_out] for kk in range(K)], axis=-1)
    wf = w[:, :, ::-1]
    return jnp.einsum("bclk,cok->bol", cols, wf) + b[None, :, None]


def reference_forward(params, noise, labels):
    rnd = lambda w: w.astype(jnp.bfloat16).astype(jnp.float32)
    B = noise.shape[0]
    w_ln1, b_ln1 = params["ln1"]
    w_ln, b_ln = params["ln"]
    w1, b1 = params["deconv1"]
    w2, b2 = params["deconv2"]
    w3, b3 = params["deconv3"]
    w_ln2, b_ln2 = params["ln2"]

    x = (noise @ rnd(w_ln1) + b_ln1).reshape(B, 128, 64)
    y = (jnp.take(params["emb"], labels, axis=0) @ rnd(w_ln) + b_ln).reshape(B, 1, 64)
    ts = jnp.concatenate([x, y], axis=1)
    ts = jax.nn.relu(_ref_conv_transpose1d(ts, rnd(w1), b1, 4, 0))
    ts = jax.nn.relu(_ref_conv_transpose1d(ts, rnd(w2), b2, 2, 1))
    ts = jax.nn.relu(_ref_conv_transpose1d(ts, rnd(w3), b3, 2, 1))
    out = ts.reshape(B, 1024) @ rnd(w_ln2) + b_ln2
    return out.reshape(B, 1, 1024)


if __name__ == "__main__":
    n_classes, latent_dim, batch = 10, 32, 2

    key = jax.random.PRNGKey(0)
    k_param, k_noise, k_lab = jax.random.split(key, 3)

    params = init_params(k_param, n_classes, latent_dim)
    noise = jax.random.normal(k_noise, (batch, latent_dim), jnp.float32)
    labels = jax.random.randint(k_lab, (batch,), 0, n_classes)

    packed = prepare_params(params)        # one-time repack + bf16 cast
    fwd = jax.jit(generator_forward)
    out = jax.block_until_ready(fwd(packed, noise, labels))
    assert out.shape == (batch, 1, 1024), out.shape
    assert out.dtype == jnp.float32

    ref = reference_forward(params, noise, labels)
    err = float(jnp.max(jnp.abs(out - ref)))
    assert err < 1e-2, f"max abs error vs reference: {err}"

    print("KERNEL_OK")
</pallas_src>

<mosaic_0001>
module attributes {stable_mosaic.version = 11 : i64} {
  func.func @_deconv_stack_kernel(%arg0: i32, %arg1: memref<128x128xf32, #tpu.memory_space<vmem>>, %arg2: memref<128x1xf32, #tpu.memory_space<vmem>>, %arg3: memref<128x256xbf16, #tpu.memory_space<vmem>>, %arg4: memref<1x256xf32, #tpu.memory_space<vmem>>, %arg5: memref<1x256xf32, #tpu.memory_space<vmem>>, %arg6: memref<512x256xbf16, #tpu.memory_space<vmem>>, %arg7: memref<1x256xf32, #tpu.memory_space<vmem>>, %arg8: memref<512x16xbf16, #tpu.memory_space<vmem>>, %arg9: memref<1x16xf32, #tpu.memory_space<vmem>>, %arg10: memref<128x16xf32, #tpu.memory_space<vmem>>) attributes {dimension_semantics = [#tpu.dimension_semantics<parallel>], iteration_bounds = array<i64: 1>, scalar_prefetch = 0 : i64, scratch_operands = 0 : i64, tpu.core_type = #tpu.core_type<tc>, window_params = [{transform_indices = @transform_0, window_bounds = array<i64: 128, 128>}, {transform_indices = @transform_1, window_bounds = array<i64: 128, 1>}, {pipeline_mode = #tpu.pipeline_mode<synchronous>, transform_indices = @transform_2, window_bounds = array<i64: 128, 256>}, {pipeline_mode = #tpu.pipeline_mode<synchronous>, transform_indices = @transform_3, window_bounds = array<i64: 1, 256>}, {pipeline_mode = #tpu.pipeline_mode<synchronous>, transform_indices = @transform_4, window_bounds = array<i64: 1, 256>}, {pipeline_mode = #tpu.pipeline_mode<synchronous>, transform_indices = @transform_5, window_bounds = array<i64: 512, 256>}, {pipeline_mode = #tpu.pipeline_mode<synchronous>, transform_indices = @transform_6, window_bounds = array<i64: 1, 256>}, {pipeline_mode = #tpu.pipeline_mode<synchronous>, transform_indices = @transform_7, window_bounds = array<i64: 512, 16>}, {pipeline_mode = #tpu.pipeline_mode<synchronous>, transform_indices = @transform_8, window_bounds = array<i64: 1, 16>}, {transform_indices = @transform_9, window_bounds = array<i64: 128, 16>}]} {
    %0 = tpu.iota {dimensions = array<i32: 0>} : vector<128x1xi32>
    %c64_i32 = arith.constant 64 : i32
    %c0_i32 = arith.constant 0 : i32
    %1 = arith.cmpi eq, %c64_i32, %c0_i32 : i32
    %c1_i32 = arith.constant 1 : i32
    %2 = arith.select %1, %c1_i32, %c64_i32 : i32
    %3 = vector.broadcast %2 : i32 to vector<128x1xi32>
    %4 = arith.remsi %0, %3 : vector<128x1xi32>
    %c0_i32_0 = arith.constant 0 : i32
    %5 = vector.broadcast %c0_i32_0 : i32 to vector<128x1xi32>
    %6 = arith.cmpi ne, %4, %5 : vector<128x1xi32>
    %c0_i32_1 = arith.constant 0 : i32
    %7 = vector.broadcast %c0_i32_1 : i32 to vector<128x1xi32>
    %8 = arith.cmpi slt, %4, %7 : vector<128x1xi32>
    %c0_i32_2 = arith.constant 0 : i32
    %9 = arith.cmpi slt, %2, %c0_i32_2 : i32
    %10 = vector.broadcast %9 : i1 to vector<128x1xi1>
    %11 = vector.broadcast %10 : vector<128x1xi1> to vector<128x1xi1>
    %12 = arith.xori %8, %11 : vector<128x1xi1>
    %13 = arith.andi %12, %6 : vector<128x1xi1>
    %14 = vector.broadcast %2 : i32 to vector<128x1xi32>
    %15 = arith.addi %4, %14 : vector<128x1xi32>
    %16 = arith.select %13, %15, %4 : vector<128x1xi1>, vector<128x1xi32>
    %c0_i32_3 = arith.constant 0 : i32
    %17 = vector.broadcast %c0_i32_3 : i32 to vector<128x1xi32>
    %18 = arith.cmpi eq, %16, %17 : vector<128x1xi32>
    %c64_i32_4 = arith.constant 64 : i32
    %c0_i32_5 = arith.constant 0 : i32
    %19 = arith.cmpi eq, %c64_i32_4, %c0_i32_5 : i32
    %c1_i32_6 = arith.constant 1 : i32
    %20 = arith.select %19, %c1_i32_6, %c64_i32_4 : i32
    %21 = vector.broadcast %20 : i32 to vector<128x1xi32>
    %22 = arith.remsi %0, %21 : vector<128x1xi32>
    %c0_i32_7 = arith.constant 0 : i32
    %23 = vector.broadcast %c0_i32_7 : i32 to vector<128x1xi32>
    %24 = arith.cmpi ne, %22, %23 : vector<128x1xi32>
    %c0_i32_8 = arith.constant 0 : i32
    %25 = vector.broadcast %c0_i32_8 : i32 to vector<128x1xi32>
    %26 = arith.cmpi slt, %22, %25 : vector<128x1xi32>
    %c0_i32_9 = arith.constant 0 : i32
    %27 = arith.cmpi slt, %20, %c0_i32_9 : i32
    %28 = vector.broadcast %27 : i1 to vector<128x1xi1>
    %29 = vector.broadcast %28 : vector<128x1xi1> to vector<128x1xi1>
    %30 = arith.xori %26, %29 : vector<128x1xi1>
    %31 = arith.andi %30, %24 : vector<128x1xi1>
    %32 = vector.broadcast %20 : i32 to vector<128x1xi32>
    %33 = arith.addi %22, %32 : vector<128x1xi32>
    %34 = arith.select %31, %33, %22 : vector<128x1xi1>, vector<128x1xi32>
    %c63_i32 = arith.constant 63 : i32
    %35 = vector.broadcast %c63_i32 : i32 to vector<128x1xi32>
    %36 = arith.cmpi eq, %34, %35 : vector<128x1xi32>
    %c0 = arith.constant 0 : index
    %c0_10 = arith.constant 0 : index
    %37 = vector.load %arg1[%c0, %c0_10] : memref<128x128xf32, #tpu.memory_space<vmem>>, vector<128x128xf32>
    %38 = arith.truncf %37 : vector<128x128xf32> to vector<128x128xbf16>
    %c0_11 = arith.constant 0 : index
    %c0_12 = arith.constant 0 : index
    %39 = vector.load %arg3[%c0_11, %c0_12] : memref<128x256xbf16, #tpu.memory_space<vmem>>, vector<128x256xbf16>
    %cst = arith.constant dense<0.000000e+00> : vector<128x256xf32>
    %40 = tpu.matmul %38, %39, %cst {dimension_numbers = #tpu.dot_dimension_numbers<[1], [0], [0], [1], [0, 0, 1, 1], [], []>} : vector<128x128xbf16>, vector<128x256xbf16>, vector<128x256xf32> -> vector<128x256xf32>
    %c0_13 = arith.constant 0 : index
    %c0_14 = arith.constant 0 : index
    %41 = vector.load %arg2[%c0_13, %c0_14] : memref<128x1xf32, #tpu.memory_space<vmem>>, vector<128x1xf32>
    %c0_15 = arith.constant 0 : index
    %c0_16 = arith.constant 0 : index
    %42 = vector.load %arg4[%c0_15, %c0_16] : memref<1x256xf32, #tpu.memory_space<vmem>>, vector<1x256xf32>
    %43 = vector.broadcast %41 : vector<128x1xf32> to vector<128x256xf32>
    %44 = vector.broadcast %42 : vector<1x256xf32> to vector<128x256xf32>
    %45 = arith.mulf %43, %44 : vector<128x256xf32>
    %46 = arith.addf %40, %45 : vector<128x256xf32>
    %c0_17 = arith.constant 0 : index
    %c0_18 = arith.constant 0 : index
    %47 = vector.load %arg5[%c0_17, %c0_18] : memref<1x256xf32, #tpu.memory_space<vmem>>, vector<1x256xf32>
    %48 = vector.broadcast %47 : vector<1x256xf32> to vector<128x256xf32>
    %49 = arith.addf %46, %48 : vector<128x256xf32>
    %cst_19 = arith.constant 0.000000e+00 : f32
    %50 = vector.broadcast %cst_19 : f32 to vector<128x256xf32>
    %51 = arith.maximumf %49, %50 : vector<128x256xf32>
    %52 = vector.extract_strided_slice %51 {offsets = [0, 128], sizes = [128, 128], strides = [1, 1]} : vector<128x256xf32> to vector<128x128xf32>
    %53 = vector.extract_strided_slice %52 {offsets = [127, 0], sizes = [1, 128], strides = [1, 1]} : vector<128x128xf32> to vector<1x128xf32>
    %54 = vector.extract_strided_slice %52 {offsets = [0, 0], sizes = [127, 128], strides = [1, 1]} : vector<128x128xf32> to vector<127x128xf32>
    %55 = tpu.concatenate %53, %54 in 0 : vector<1x128xf32>, vector<127x128xf32> -> vector<128x128xf32>
    %cst_20 = arith.constant 0.000000e+00 : f32
    %56 = vector.shape_cast %18 : vector<128x1xi1> to vector<128x1xi1>
    %57 = vector.broadcast %56 : vector<128x1xi1> to vector<128x128xi1>
    %58 = vector.broadcast %cst_20 : f32 to vector<128x128xf32>
    %59 = arith.select %57, %58, %55 : vector<128x128xi1>, vector<128x128xf32>
    %60 = vector.extract_strided_slice %51 {offsets = [0, 0], sizes = [128, 128], strides = [1, 1]} : vector<128x256xf32> to vector<128x128xf32>
    %61 = vector.extract_strided_slice %60 {offsets = [1, 0], sizes = [127, 128], strides = [1, 1]} : vector<128x128xf32> to vector<127x128xf32>
    %62 = vector.extract_strided_slice %60 {offsets = [0, 0], sizes = [1, 128], strides = [1, 1]} : vector<128x128xf32> to vector<1x128xf32>
    %63 = tpu.concatenate %61, %62 in 0 : vector<127x128xf32>, vector<1x128xf32> -> vector<128x128xf32>
    %cst_21 = arith.constant 0.000000e+00 : f32
    %64 = vector.shape_cast %36 : vector<128x1xi1> to vector<128x1xi1>
    %65 = vector.broadcast %64 : vector<128x1xi1> to vector<128x128xi1>
    %66 = vector.broadcast %cst_21 : f32 to vector<128x128xf32>
    %67 = arith.select %65, %66, %63 : vector<128x128xi1>, vector<128x128xf32>
    %68 = tpu.concatenate %51, %59, %67 in 1 : vector<128x256xf32>, vector<128x128xf32>, vector<128x128xf32> -> vector<128x512xf32>
    %69 = arith.truncf %68 : vector<128x512xf32> to vector<128x512xbf16>
    %c0_22 = arith.constant 0 : index
    %c0_23 = arith.constant 0 : index
    %70 = vector.load %arg6[%c0_22, %c0_23] : memref<512x256xbf16, #tpu.memory_space<vmem>>, vector<512x256xbf16>
    %cst_24 = arith.constant dense<0.000000e+00> : vector<128x256xf32>
    %71 = tpu.matmul %69, %70, %cst_24 {dimension_numbers = #tpu.dot_dimension_numbers<[1], [0], [0], [1], [0, 0, 1, 1], [], []>} : vector<128x512xbf16>, vector<512x256xbf16>, vector<128x256xf32> -> vector<128x256xf32>
    %c0_25 = arith.constant 0 : index
    %c0_26 = arith.constant 0 : index
    %72 = vector.load %arg7[%c0_25, %c0_26] : memref<1x256xf32, #tpu.memory_space<vmem>>, vector<1x256xf32>
    %73 = vector.broadcast %72 : vector<1x256xf32> to vector<128x256xf32>
    %74 = arith.addf %71, %73 : vector<128x256xf32>
    %cst_27 = arith.constant 0.000000e+00 : f32
    %75 = vector.broadcast %cst_27 : f32 to vector<128x256xf32>
    %76 = arith.maximumf %74, %75 : vector<128x256xf32>
    %77 = vector.extract_strided_slice %76 {offsets = [0, 128], sizes = [128, 128], strides = [1, 1]} : vector<128x256xf32> to vector<128x128xf32>
    %78 = vector.extract_strided_slice %77 {offsets = [127, 0], sizes = [1, 128], strides = [1, 1]} : vector<128x128xf32> to vector<1x128xf32>
    %79 = vector.extract_strided_slice %77 {offsets = [0, 0], sizes = [127, 128], strides = [1, 1]} : vector<128x128xf32> to vector<127x128xf32>
    %80 = tpu.concatenate %78, %79 in 0 : vector<1x128xf32>, vector<127x128xf32> -> vector<128x128xf32>
    %cst_28 = arith.constant 0.000000e+00 : f32
    %81 = vector.shape_cast %18 : vector<128x1xi1> to vector<128x1xi1>
    %82 = vector.broadcast %81 : vector<128x1xi1> to vector<128x128xi1>
    %83 = vector.broadcast %cst_28 : f32 to vector<128x128xf32>
    %84 = arith.select %82, %83, %80 : vector<128x128xi1>, vector<128x128xf32>
    %85 = vector.extract_strided_slice %76 {offsets = [0, 0], sizes = [128, 128], strides = [1, 1]} : vector<128x256xf32> to vector<128x128xf32>
    %86 = vector.extract_strided_slice %85 {offsets = [1, 0], sizes = [127, 128], strides = [1, 1]} : vector<128x128xf32> to vector<127x128xf32>
    %87 = vector.extract_strided_slice %85 {offsets = [0, 0], sizes = [1, 128], strides = [1, 1]} : vector<128x128xf32> to vector<1x128xf32>
    %88 = tpu.concatenate %86, %87 in 0 : vector<127x128xf32>, vector<1x128xf32> -> vector<128x128xf32>
    %cst_29 = arith.constant 0.000000e+00 : f32
    %89 = vector.shape_cast %36 : vector<128x1xi1> to vector<128x1xi1>
    %90 = vector.broadcast %89 : vector<128x1xi1> to vector<128x128xi1>
    %91 = vector.broadcast %cst_29 : f32 to vector<128x128xf32>
    %92 = arith.select %90, %91, %88 : vector<128x128xi1>, vector<128x128xf32>
    %93 = tpu.concatenate %76, %84, %92 in 1 : vector<128x256xf32>, vector<128x128xf32>, vector<128x128xf32> -> vector<128x512xf32>
    %94 = arith.truncf %93 : vector<128x512xf32> to vector<128x512xbf16>
    %c0_30 = arith.constant 0 : index
    %c0_31 = arith.constant 0 : index
    %95 = vector.load %arg8[%c0_30, %c0_31] : memref<512x16xbf16, #tpu.memory_space<vmem>>, vector<512x16xbf16>
    %cst_32 = arith.constant dense<0.000000e+00> : vector<128x16xf32>
    %96 = tpu.matmul %94, %95, %cst_32 {dimension_numbers = #tpu.dot_dimension_numbers<[1], [0], [0], [1], [0, 0, 1, 1], [], []>} : vector<128x512xbf16>, vector<512x16xbf16>, vector<128x16xf32> -> vector<128x16xf32>
    %c0_33 = arith.constant 0 : index
    %c0_34 = arith.constant 0 : index
    %97 = vector.load %arg9[%c0_33, %c0_34] : memref<1x16xf32, #tpu.memory_space<vmem>>, vector<1x16xf32>
    %98 = vector.broadcast %97 : vector<1x16xf32> to vector<128x16xf32>
    %99 = arith.addf %96, %98 : vector<128x16xf32>
    %cst_35 = arith.constant 0.000000e+00 : f32
    %100 = vector.broadcast %cst_35 : f32 to vector<128x16xf32>
    %101 = arith.maximumf %99, %100 : vector<128x16xf32>
    %c0_36 = arith.constant 0 : index
    %c0_37 = arith.constant 0 : index
    %102 = vector.load %arg10[%c0_36, %c0_37] : memref<128x16xf32, #tpu.memory_space<vmem>>, vector<128x16xf32>
    tpu.vector_store %arg10[%c0_36, %c0_37], %101 {strides = array<i32>} : memref<128x16xf32, #tpu.memory_space<vmem>>, vector<128x16xf32>,
    return
  }
  func.func @transform_0(%arg0: i32) -> (i32, i32) {
    %c0_i32 = arith.constant 0 : i32
    %c0_i32_0 = arith.constant 0 : i32
    return %arg0, %c0_i32 : i32, i32
  }
  func.func @transform_1(%arg0: i32) -> (i32, i32) {
    %c0_i32 = arith.constant 0 : i32
    %c0_i32_0 = arith.constant 0 : i32
    return %arg0, %c0_i32 : i32, i32
  }
  func.func @transform_2(%arg0: i32) -> (i32, i32) {
    %c0_i32 = arith.constant 0 : i32
    %c0_i32_0 = arith.constant 0 : i32
    %c0_i32_1 = arith.constant 0 : i32
    return %c0_i32, %c0_i32_0 : i32, i32
  }
  func.func @transform_3(%arg0: i32) -> (i32, i32) {
    %c0_i32 = arith.constant 0 : i32
    %c0_i32_0 = arith.constant 0 : i32
    %c0_i32_1 = arith.constant 0 : i32
    return %c0_i32, %c0_i32_0 : i32, i32
  }
  func.func @transform_4(%arg0: i32) -> (i32, i32) {
    %c0_i32 = arith.constant 0 : i32
    %c0_i32_0 = arith.constant 0 : i32
    %c0_i32_1 = arith.constant 0 : i32
    return %c0_i32, %c0_i32_0 : i32, i32
  }
  func.func @transform_5(%arg0: i32) -> (i32, i32) {
    %c0_i32 = arith.constant 0 : i32
    %c0_i32_0 = arith.constant 0 : i32
    %c0_i32_1 = arith.constant 0 : i32
    return %c0_i32, %c0_i32_0 : i32, i32
  }
  func.func @transform_6(%arg0: i32) -> (i32, i32) {
    %c0_i32 = arith.constant 0 : i32
    %c0_i32_0 = arith.constant 0 : i32
    %c0_i32_1 = arith.constant 0 : i32
    return %c0_i32, %c0_i32_0 : i32, i32
  }
  func.func @transform_7(%arg0: i32) -> (i32, i32) {
    %c0_i32 = arith.constant 0 : i32
    %c0_i32_0 = arith.constant 0 : i32
    %c0_i32_1 = arith.constant 0 : i32
    return %c0_i32, %c0_i32_0 : i32, i32
  }
  func.func @transform_8(%arg0: i32) -> (i32, i32) {
    %c0_i32 = arith.constant 0 : i32
    %c0_i32_0 = arith.constant 0 : i32
    %c0_i32_1 = arith.constant 0 : i32
    return %c0_i32, %c0_i32_0 : i32, i32
  }
  func.func @transform_9(%arg0: i32) -> (i32, i32) {
    %c0_i32 = arith.constant 0 : i32
    %c0_i32_0 = arith.constant 0 : i32
    return %arg0, %c0_i32 : i32, i32
  }
}

module attributes {stable_mosaic.version = 11 : i64} {
  func.func @_head_kernel(%arg0: i32, %arg1: memref<2x32xf32, #tpu.memory_space<vmem>>, %arg2: memref<2x10xf32, #tpu.memory_space<vmem>>, %arg3: memref<32x8192xbf16, #tpu.memory_space<vmem>>, %arg4: memref<1x8192xf32, #tpu.memory_space<vmem>>, %arg5: memref<10x64xbf16, #tpu.memory_space<vmem>>, %arg6: memref<1x64xf32, #tpu.memory_space<vmem>>, %arg7: memref<2x8192xf32, #tpu.memory_space<vmem>>, %arg8: memref<2x64xf32, #tpu.memory_space<vmem>>) attributes {dimension_semantics = [#tpu.dimension_semantics<parallel>], iteration_bounds = array<i64: 1>, scalar_prefetch = 0 : i64, scratch_operands = 0 : i64, tpu.core_type = #tpu.core_type<tc>, window_params = [{transform_indices = @transform_0, window_bounds = array<i64: 2, 32>}, {transform_indices = @transform_1, window_bounds = array<i64: 2, 10>}, {pipeline_mode = #tpu.pipeline_mode<synchronous>, transform_indices = @transform_2, window_bounds = array<i64: 32, 8192>}, {pipeline_mode = #tpu.pipeline_mode<synchronous>, transform_indices = @transform_3, window_bounds = array<i64: 1, 8192>}, {pipeline_mode = #tpu.pipeline_mode<synchronous>, transform_indices = @transform_4, window_bounds = array<i64: 10, 64>}, {pipeline_mode = #tpu.pipeline_mode<synchronous>, transform_indices = @transform_5, window_bounds = array<i64: 1, 64>}, {transform_indices = @transform_6, window_bounds = array<i64: 2, 8192>}, {transform_indices = @transform_7, window_bounds = array<i64: 2, 64>}]} {
    %c0 = arith.constant 0 : index
    %c0_0 = arith.constant 0 : index
    %0 = vector.load %arg1[%c0, %c0_0] : memref<2x32xf32, #tpu.memory_space<vmem>>, vector<2x32xf32>
    %1 = arith.truncf %0 : vector<2x32xf32> to vector<2x32xbf16>
    %c0_1 = arith.constant 0 : index
    %c0_2 = arith.constant 0 : index
    %2 = vector.load %arg3[%c0_1, %c0_2] : memref<32x8192xbf16, #tpu.memory_space<vmem>>, vector<32x8192xbf16>
    %cst = arith.constant dense<0.000000e+00> : vector<2x8192xf32>
    %3 = tpu.matmul %1, %2, %cst {dimension_numbers = #tpu.dot_dimension_numbers<[1], [0], [0], [1], [0, 0, 1, 1], [], []>} : vector<2x32xbf16>, vector<32x8192xbf16>, vector<2x8192xf32> -> vector<2x8192xf32>
    %c0_3 = arith.constant 0 : index
    %c0_4 = arith.constant 0 : index
    %4 = vector.load %arg4[%c0_3, %c0_4] : memref<1x8192xf32, #tpu.memory_space<vmem>>, vector<1x8192xf32>
    %5 = vector.broadcast %4 : vector<1x8192xf32> to vector<2x8192xf32>
    %6 = arith.addf %3, %5 : vector<2x8192xf32>
    %c0_5 = arith.constant 0 : index
    %c0_6 = arith.constant 0 : index
    %7 = vector.load %arg7[%c0_5, %c0_6] : memref<2x8192xf32, #tpu.memory_space<vmem>>, vector<2x8192xf32>
    tpu.vector_store %arg7[%c0_5, %c0_6], %6 {strides = array<i32>} : memref<2x8192xf32, #tpu.memory_space<vmem>>, vector<2x8192xf32>,
    %c0_7 = arith.constant 0 : index
    %c0_8 = arith.constant 0 : index
    %8 = vector.load %arg2[%c0_7, %c0_8] : memref<2x10xf32, #tpu.memory_space<vmem>>, vector<2x10xf32>
    %9 = arith.truncf %8 : vector<2x10xf32> to vector<2x10xbf16>
    %c0_9 = arith.constant 0 : index
    %c0_10 = arith.constant 0 : index
    %10 = vector.load %arg5[%c0_9, %c0_10] : memref<10x64xbf16, #tpu.memory_space<vmem>>, vector<10x64xbf16>
    %cst_11 = arith.constant dense<0.000000e+00> : vector<2x64xf32>
    %11 = tpu.matmul %9, %10, %cst_11 {dimension_numbers = #tpu.dot_dimension_numbers<[1], [0], [0], [1], [0, 0, 1, 1], [], []>} : vector<2x10xbf16>, vector<10x64xbf16>, vector<2x64xf32> -> vector<2x64xf32>
    %c0_12 = arith.constant 0 : index
    %c0_13 = arith.constant 0 : index
    %12 = vector.load %arg6[%c0_12, %c0_13] : memref<1x64xf32, #tpu.memory_space<vmem>>, vector<1x64xf32>
    %13 = vector.broadcast %12 : vector<1x64xf32> to vector<2x64xf32>
    %14 = arith.addf %11, %13 : vector<2x64xf32>
    %c0_14 = arith.constant 0 : index
    %c0_15 = arith.constant 0 : index
    %15 = vector.load %arg8[%c0_14, %c0_15] : memref<2x64xf32, #tpu.memory_space<vmem>>, vector<2x64xf32>
    tpu.vector_store %arg8[%c0_14, %c0_15], %14 {strides = array<i32>} : memref<2x64xf32, #tpu.memory_space<vmem>>, vector<2x64xf32>,
    return
  }
  func.func @transform_0(%arg0: i32) -> (i32, i32) {
    %c0_i32 = arith.constant 0 : i32
    %c0_i32_0 = arith.constant 0 : i32
    return %arg0, %c0_i32 : i32, i32
  }
  func.func @transform_1(%arg0: i32) -> (i32, i32) {
    %c0_i32 = arith.constant 0 : i32
    %c0_i32_0 = arith.constant 0 : i32
    return %arg0, %c0_i32 : i32, i32
  }
  func.func @transform_2(%arg0: i32) -> (i32, i32) {
    %c0_i32 = arith.constant 0 : i32
    %c0_i32_0 = arith.constant 0 : i32
    %c0_i32_1 = arith.constant 0 : i32
    return %c0_i32, %c0_i32_0 : i32, i32
  }
  func.func @transform_3(%arg0: i32) -> (i32, i32) {
    %c0_i32 = arith.constant 0 : i32
    %c0_i32_0 = arith.constant 0 : i32
    %c0_i32_1 = arith.constant 0 : i32
    return %c0_i32, %c0_i32_0 : i32, i32
  }
  func.func @transform_4(%arg0: i32) -> (i32, i32) {
    %c0_i32 = arith.constant 0 : i32
    %c0_i32_0 = arith.constant 0 : i32
    %c0_i32_1 = arith.constant 0 : i32
    return %c0_i32, %c0_i32_0 : i32, i32
  }
  func.func @transform_5(%arg0: i32) -> (i32, i32) {
    %c0_i32 = arith.constant 0 : i32
    %c0_i32_0 = arith.constant 0 : i32
    %c0_i32_1 = arith.constant 0 : i32
    return %c0_i32, %c0_i32_0 : i32, i32
  }
  func.func @transform_6(%arg0: i32) -> (i32, i32) {
    %c0_i32 = arith.constant 0 : i32
    %c0_i32_0 = arith.constant 0 : i32
    return %arg0, %c0_i32 : i32, i32
  }
  func.func @transform_7(%arg0: i32) -> (i32, i32) {
    %c0_i32 = arith.constant 0 : i32
    %c0_i32_0 = arith.constant 0 : i32
    return %arg0, %c0_i32 : i32, i32
  }
}

module attributes {stable_mosaic.version = 11 : i64} {
  func.func @_ln2_kernel(%arg0: i32, %arg1: memref<2x1024xf32, #tpu.memory_space<vmem>>, %arg2: memref<1024x1024xbf16, #tpu.memory_space<vmem>>, %arg3: memref<1x1024xf32, #tpu.memory_space<vmem>>, %arg4: memref<2x1024xf32, #tpu.memory_space<vmem>>) attributes {dimension_semantics = [#tpu.dimension_semantics<parallel>], iteration_bounds = array<i64: 1>, scalar_prefetch = 0 : i64, scratch_operands = 0 : i64, tpu.core_type = #tpu.core_type<tc>, window_params = [{transform_indices = @transform_0, window_bounds = array<i64: 2, 1024>}, {pipeline_mode = #tpu.pipeline_mode<synchronous>, transform_indices = @transform_1, window_bounds = array<i64: 1024, 1024>}, {pipeline_mode = #tpu.pipeline_mode<synchronous>, transform_indices = @transform_2, window_bounds = array<i64: 1, 1024>}, {transform_indices = @transform_3, window_bounds = array<i64: 2, 1024>}]} {
    %c0 = arith.constant 0 : index
    %c0_0 = arith.constant 0 : index
    %0 = vector.load %arg1[%c0, %c0_0] : memref<2x1024xf32, #tpu.memory_space<vmem>>, vector<2x1024xf32>
    %1 = arith.truncf %0 : vector<2x1024xf32> to vector<2x1024xbf16>
    %c0_1 = arith.constant 0 : index
    %c0_2 = arith.constant 0 : index
    %2 = vector.load %arg2[%c0_1, %c0_2] : memref<1024x1024xbf16, #tpu.memory_space<vmem>>, vector<1024x1024xbf16>
    %cst = arith.constant dense<0.000000e+00> : vector<2x1024xf32>
    %3 = tpu.matmul %1, %2, %cst {dimension_numbers = #tpu.dot_dimension_numbers<[1], [0], [0], [1], [0, 0, 1, 1], [], []>} : vector<2x1024xbf16>, vector<1024x1024xbf16>, vector<2x1024xf32> -> vector<2x1024xf32>
    %c0_3 = arith.constant 0 : index
    %c0_4 = arith.constant 0 : index
    %4 = vector.load %arg3[%c0_3, %c0_4] : memref<1x1024xf32, #tpu.memory_space<vmem>>, vector<1x1024xf32>
    %5 = vector.broadcast %4 : vector<1x1024xf32> to vector<2x1024xf32>
    %6 = arith.addf %3, %5 : vector<2x1024xf32>
    %c0_5 = arith.constant 0 : index
    %c0_6 = arith.constant 0 : index
    %7 = vector.load %arg4[%c0_5, %c0_6] : memref<2x1024xf32, #tpu.memory_space<vmem>>, vector<2x1024xf32>
    tpu.vector_store %arg4[%c0_5, %c0_6], %6 {strides = array<i32>} : memref<2x1024xf32, #tpu.memory_space<vmem>>, vector<2x1024xf32>,
    return
  }
  func.func @transform_0(%arg0: i32) -> (i32, i32) {
    %c0_i32 = arith.constant 0 : i32
    %c0_i32_0 = arith.constant 0 : i32
    return %arg0, %c0_i32 : i32, i32
  }
  func.func @transform_1(%arg0: i32) -> (i32, i32) {
    %c0_i32 = arith.constant 0 : i32
    %c0_i32_0 = arith.constant 0 : i32
    %c0_i32_1 = arith.constant 0 : i32
    return %c0_i32, %c0_i32_0 : i32, i32
  }
  func.func @transform_2(%arg0: i32) -> (i32, i32) {
    %c0_i32 = arith.constant 0 : i32
    %c0_i32_0 = arith.constant 0 : i32
    %c0_i32_1 = arith.constant 0 : i32
    return %c0_i32, %c0_i32_0 : i32, i32
  }
  func.func @transform_3(%arg0: i32) -> (i32, i32) {
    %c0_i32 = arith.constant 0 : i32
    %c0_i32_0 = arith.constant 0 : i32
    return %arg0, %c0_i32 : i32, i32
  }
}

</mosaic_0001>

<llo_original>
// kernel: generator_forward.4
$region0: #{generator_forward.4}
  #allocation0 [shape = 'u32[]', space=smem, size = 0x4, offset = 0x4, fixed_abs, tag = 'smem constant byte address 0x4 - core index']
  #allocation1 [shape = 'u32[144,128]{1,0:T(1,128)}', space=vmem, size = 0x12000, scoped, tag = 'internal scratch']
  %s0 = inlined_call_operand.vmem [shape: f32[128,128], index: 0, kind: input, shape index: {}]
  %s1 = inlined_call_operand.vmem [shape: f32[128,1], index: 1, kind: input, shape index: {}]
  %s2 = inlined_call_operand.hbm [shape: bf16[128,256], index: 2, kind: input, shape index: {}]
  %s3 = inlined_call_operand.hbm [shape: f32[1,256], index: 3, kind: input, shape index: {}]
  %s4 = inlined_call_operand.hbm [shape: f32[1,256], index: 4, kind: input, shape index: {}]
  %s5 = inlined_call_operand.hbm [shape: bf16[512,256], index: 5, kind: input, shape index: {}]
  %s6 = inlined_call_operand.hbm [shape: f32[1,256], index: 6, kind: input, shape index: {}]
  %s7 = inlined_call_operand.vmem [shape: bf16[512,16], index: 7, kind: input, shape index: {}]
  %s8 = inlined_call_operand.hbm [shape: f32[1,16], index: 8, kind: input, shape index: {}]
  %s9 = inlined_call_operand.vmem [shape: f32[128,16], index: 9, kind: output, shape index: {}]
  %s10 = sld [smem:[#allocation0]]
  $region70: #{generator_forward.4} parent=0
    _
  %s12 = ssub.s32 1, %s10
  %s13 = scalar_select 0, %s12, %s10
  $region1: #{generator_forward.4} parent=0
    #allocation2 [shape = 'u8[65536]{0}', space=vmem, size = 0x10000, scoped, tag = 'input window, operand 2, single buffered']
    #allocation3 [shape = 's32[1]{0}', space=sflag, size = 0x4, scoped, tag = 'scoped memory for generator_forward.4']
    #allocation4 [shape = 'u8[1024]{0}', space=vmem, size = 0x400, scoped, tag = 'input window, operand 3, single buffered']
    #allocation5 [shape = 's32[1]{0}', space=sflag, size = 0x4, scoped, tag = 'scoped memory for generator_forward.4']
    #allocation6 [shape = 'u8[1024]{0}', space=vmem, size = 0x400, scoped, tag = 'input window, operand 4, single buffered']
    #allocation7 [shape = 'u8[262144]{0}', space=vmem, size = 0x40000, scoped, tag = 'input window, operand 5, single buffered']
    #allocation8 [shape = 's32[1]{0}', space=sflag, size = 0x4, scoped, tag = 'scoped memory for generator_forward.4']
    #allocation9 [shape = 'u8[1024]{0}', space=vmem, size = 0x400, scoped, tag = 'input window, operand 6, single buffered']
    #allocation10 [shape = 'u8[512]{0}', space=vmem, size = 0x400, scoped, tag = 'input window, operand 8, single buffered']
    #allocation11 [shape = 's32[1]{0}', space=sflag, size = 0x4, scoped, tag = 'scoped memory for generator_forward.4']
    %14 = vsyncpa [#allocation3], 0
    %15 = vsyncpa [#allocation5], 0
    %16 = vsyncpa [#allocation8], 0
    %17 = vsyncpa [#allocation11], 0
    // Predicated region
    $region2: #{generator_forward.4} parent=1 // pred_check
      _
    $region3: #{generator_forward.4} parent=1 // pred_check_branch
      %19 = sbr.rel (0) target = $region5
    $region4: #{generator_forward.4} parent=1 // pred_region
      _
    $region5: #{generator_forward.4} parent=1 // pred_fallthru
      _
    // Predicated region
    $region6: #{generator_forward.4} parent=1 // pred_check
      _
    $region7: #{generator_forward.4} parent=1 // pred_check_branch
      %21 = sbr.rel (0) target = $region9
    $region8: #{generator_forward.4} parent=1 // pred_region
      _
    $region9: #{generator_forward.4} parent=1 // pred_fallthru
      _
    // Predicated region
    $region10: #{generator_forward.4} parent=1 // pred_check
      _
    $region11: #{generator_forward.4} parent=1 // pred_check_branch
      %23 = sbr.rel (0) target = $region13
    $region12: #{generator_forward.4} parent=1 // pred_region
      %s25 = ssub.s32 2048, 2048
      %26 = vsyncadd [#allocation3], %s25
      %s27 = sshll.u32 [#allocation2], 4
      %s28 = int_to_ptr.vmem [resolvable:$true] %s27
      %33 = dma.hbm_to_vmem [thread:$0]  %s2, 2048, %s28, [#allocation3], 128, 128, 8
    $region13: #{generator_forward.4} parent=1 // pred_fallthru
      _
    // Predicated region
    $region14: #{generator_forward.4} parent=1 // pred_check
      _
    $region15: #{generator_forward.4} parent=1 // pred_check_branch
      %35 = sbr.rel (0) target = $region17
    $region16: #{generator_forward.4} parent=1 // pred_region
      %s37 = ssub.s32 32, 32
      %38 = vsyncadd [#allocation5], %s37
      %s40 = sshll.u32 [#allocation4], 4
      %s41 = int_to_ptr.vmem [resolvable:$true] %s40
      %43 = dma.hbm_to_vmem [thread:$0]  %s3, 32, %s41, [#allocation5]
    $region17: #{generator_forward.4} parent=1 // pred_fallthru
      _
    // Predicated region
    $region18: #{generator_forward.4} parent=1 // pred_check
      _
    $region19: #{generator_forward.4} parent=1 // pred_check_branch
      %45 = sbr.rel (0) target = $region21
    $region20: #{generator_forward.4} parent=1 // pred_region
      %s47 = ssub.s32 32, 32
      %48 = vsyncadd [#allocation5], %s47
      %s50 = sshll.u32 [#allocation6], 4
      %s51 = int_to_ptr.vmem [resolvable:$true] %s50
      %53 = dma.hbm_to_vmem [thread:$0]  %s4, 32, %s51, [#allocation5]
    $region21: #{generator_forward.4} parent=1 // pred_fallthru
      _
    // Predicated region
    $region22: #{generator_forward.4} parent=1 // pred_check
      _
    $region23: #{generator_forward.4} parent=1 // pred_check_branch
      %55 = sbr.rel (0) target = $region25
    $region24: #{generator_forward.4} parent=1 // pred_region
      %s57 = ssub.s32 8192, 8192
      %58 = vsyncadd [#allocation8], %s57
      %s59 = sshll.u32 [#allocation7], 4
      %s60 = int_to_ptr.vmem [resolvable:$true] %s59
      %65 = dma.hbm_to_vmem [thread:$0]  %s5, 8192, %s60, [#allocation8], 128, 128, 8
    $region25: #{generator_forward.4} parent=1 // pred_fallthru
      _
    // Predicated region
    $region26: #{generator_forward.4} parent=1 // pred_check
      _
    $region27: #{generator_forward.4} parent=1 // pred_check_branch
      %67 = sbr.rel (0) target = $region29
    $region28: #{generator_forward.4} parent=1 // pred_region
      %s69 = ssub.s32 32, 32
      %70 = vsyncadd [#allocation8], %s69
      %s72 = sshll.u32 [#allocation9], 4
      %s73 = int_to_ptr.vmem [resolvable:$true] %s72
      %75 = dma.hbm_to_vmem [thread:$0]  %s6, 32, %s73, [#allocation8]
    $region29: #{generator_forward.4} parent=1 // pred_fallthru
      _
    // Predicated region
    $region30: #{generator_forward.4} parent=1 // pred_check
      _
    $region31: #{generator_forward.4} parent=1 // pred_check_branch
      %77 = sbr.rel (0) target = $region33
    $region32: #{generator_forward.4} parent=1 // pred_region
      _
    $region33: #{generator_forward.4} parent=1 // pred_fallthru
      _
    // Predicated region
    $region34: #{generator_forward.4} parent=1 // pred_check
      _
    $region35: #{generator_forward.4} parent=1 // pred_check_branch
      %79 = sbr.rel (0) target = $region37
    $region36: #{generator_forward.4} parent=1 // pred_region
      %s81 = ssub.s32 16, 16
      %82 = vsyncadd [#allocation11], %s81
      %s84 = sshll.u32 [#allocation10], 4
      %s85 = int_to_ptr.vmem [resolvable:$true] %s84
      %87 = dma.hbm_to_vmem [thread:$0]  %s8, 16, %s85, [#allocation11]
    $region37: #{generator_forward.4} parent=1 // pred_fallthru
      _
    // Predicated region
    $region38: #{generator_forward.4} parent=1 // pred_check
      _
    $region39: #{generator_forward.4} parent=1 // pred_check_branch
      %89 = sbr.rel (0) target = $region41
    $region40: #{generator_forward.4} parent=1 // pred_region
      %90 = dma.done [#allocation3], 2048
    $region41: #{generator_forward.4} parent=1 // pred_fallthru
      _
    // Predicated region
    $region42: #{generator_forward.4} parent=1 // pred_check
      _
    $region43: #{generator_forward.4} parent=1 // pred_check_branch
      %92 = sbr.rel (0) target = $region45
    $region44: #{generator_forward.4} parent=1 // pred_region
      %93 = dma.done [#allocation5], 32
    $region45: #{generator_forward.4} parent=1 // pred_fallthru
      _
    // Predicated region
    $region46: #{generator_forward.4} parent=1 // pred_check
      _
    $region47: #{generator_forward.4} parent=1 // pred_check_branch
      %95 = sbr.rel (0) target = $region49
    $region48: #{generator_forward.4} parent=1 // pred_region
      %96 = dma.done [#allocation5], 32
    $region49: #{generator_forward.4} parent=1 // pred_fallthru
      _
    // Predicated region
    $region50: #{generator_forward.4} parent=1 // pred_check
      _
    $region51: #{generator_forward.4} parent=1 // pred_check_branch
      %98 = sbr.rel (0) target = $region53
    $region52: #{generator_forward.4} parent=1 // pred_region
      %99 = dma.done [#allocation8], 8192
    $region53: #{generator_forward.4} parent=1 // pred_fallthru
      _
    // Predicated region
    $region54: #{generator_forward.4} parent=1 // pred_check
      _
    $region55: #{generator_forward.4} parent=1 // pred_check_branch
      %101 = sbr.rel (0) target = $region57
    $region56: #{generator_forward.4} parent=1 // pred_region
      %102 = dma.done [#allocation8], 32
    $region57: #{generator_forward.4} parent=1 // pred_fallthru
      _
    // Predicated region
    $region58: #{generator_forward.4} parent=1 // pred_check
      _
    $region59: #{generator_forward.4} parent=1 // pred_check_branch
      %104 = sbr.rel (0) target = $region61
    $region60: #{generator_forward.4} parent=1 // pred_region
      %105 = dma.done [#allocation11], 16
    $region61: #{generator_forward.4} parent=1 // pred_fallthru
      _
    %v107 = vlaneseq
    %v108 = vshrl.u32 %v107, 7
    %v109 = vadd.s32 %v108, 8
    %v110 = vadd.s32 %v108, 16
    %v111 = vadd.s32 %v108, 24
    %v112 = vadd.s32 %v108, 32
    %v113 = vadd.s32 %v108, 40
    %v114 = vadd.s32 %v108, 48
    %v115 = vadd.s32 %v108, 56
    %v116 = vadd.s32 %v108, 64
    %v117 = vadd.s32 %v108, 72
    %v118 = vadd.s32 %v108, 80
    %v119 = vadd.s32 %v108, 88
    %v120 = vadd.s32 %v108, 96
    %v121 = vadd.s32 %v108, 104
    %v122 = vadd.s32 %v108, 112
    %v123 = vadd.s32 %v108, 120
    %vm124 = vcmp.lt.s32.totalorder %v108, 0
    %v125 = vsub.s32 0, %v108
    %v126 = vsel %vm124, %v125, %v108
    %v127 = vshrl.u32 %v126, 6
    %v128 = vand.u32 %v126, 63
    %v129 = vsub.s32 0, %v128
    %v130 = vsel %vm124, %v129, %v128
    %vm131 = vcmp.lt.s32.totalorder %v109, 0
    %v132 = vsub.s32 0, %v109
    %v133 = vsel %vm131, %v132, %v109
    %v134 = vshrl.u32 %v133, 6
    %v135 = vand.u32 %v133, 63
    %v136 = vsub.s32 0, %v135
    %v137 = vsel %vm131, %v136, %v135
    %vm138 = vcmp.lt.s32.totalorder %v110, 0
    %v139 = vsub.s32 0, %v110
    %v140 = vsel %vm138, %v139, %v110
    %v141 = vshrl.u32 %v140, 6
    %v142 = vand.u32 %v140, 63
    %v143 = vsub.s32 0, %v142
    %v144 = vsel %vm138, %v143, %v142
    %vm145 = vcmp.lt.s32.totalorder %v111, 0
    %v146 = vsub.s32 0, %v111
    %v147 = vsel %vm145, %v146, %v111
    %v148 = vshrl.u32 %v147, 6
    %v149 = vand.u32 %v147, 63
    %v150 = vsub.s32 0, %v149
    %v151 = vsel %vm145, %v150, %v149
    %vm152 = vcmp.lt.s32.totalorder %v112, 0
    %v153 = vsub.s32 0, %v112
    %v154 = vsel %vm152, %v153, %v112
    %v155 = vshrl.u32 %v154, 6
    %v156 = vand.u32 %v154, 63
    %v157 = vsub.s32 0, %v156
    %v158 = vsel %vm152, %v157, %v156
    %vm159 = vcmp.lt.s32.totalorder %v113, 0
    %v160 = vsub.s32 0, %v113
    %v161 = vsel %vm159, %v160, %v113
    %v162 = vshrl.u32 %v161, 6
    %v163 = vand.u32 %v161, 63
    %v164 = vsub.s32 0, %v163
    %v165 = vsel %vm159, %v164, %v163
    %vm166 = vcmp.lt.s32.totalorder %v114, 0
    %v167 = vsub.s32 0, %v114
    %v168 = vsel %vm166, %v167, %v114
    %v169 = vshrl.u32 %v168, 6
    %v170 = vand.u32 %v168, 63
    %v171 = vsub.s32 0, %v170
    %v172 = vsel %vm166, %v171, %v170
    %vm173 = vcmp.lt.s32.totalorder %v115, 0
    %v174 = vsub.s32 0, %v115
    %v175 = vsel %vm173, %v174, %v115
    %v176 = vshrl.u32 %v175, 6
    %v177 = vand.u32 %v175, 63
    %v178 = vsub.s32 0, %v177
    %v179 = vsel %vm173, %v178, %v177
    %vm180 = vcmp.lt.s32.totalorder %v116, 0
    %v181 = vsub.s32 0, %v116
    %v182 = vsel %vm180, %v181, %v116
    %v183 = vshrl.u32 %v182, 6
    %v184 = vand.u32 %v182, 63
    %v185 = vsub.s32 0, %v184
    %v186 = vsel %vm180, %v185, %v184
    %vm187 = vcmp.lt.s32.totalorder %v117, 0
    %v188 = vsub.s32 0, %v117
    %v189 = vsel %vm187, %v188, %v117
    %v190 = vshrl.u32 %v189, 6
    %v191 = vand.u32 %v189, 63
    %v192 = vsub.s32 0, %v191
    %v193 = vsel %vm187, %v192, %v191
    %vm194 = vcmp.lt.s32.totalorder %v118, 0
    %v195 = vsub.s32 0, %v118
    %v196 = vsel %vm194, %v195, %v118
    %v197 = vshrl.u32 %v196, 6
    %v198 = vand.u32 %v196, 63
    %v199 = vsub.s32 0, %v198
    %v200 = vsel %vm194, %v199, %v198
    %vm201 = vcmp.lt.s32.totalorder %v119, 0
    %v202 = vsub.s32 0, %v119
    %v203 = vsel %vm201, %v202, %v119
    %v204 = vshrl.u32 %v203, 6
    %v205 = vand.u32 %v203, 63
    %v206 = vsub.s32 0, %v205
    %v207 = vsel %vm201, %v206, %v205
    %vm208 = vcmp.lt.s32.totalorder %v120, 0
    %v209 = vsub.s32 0, %v120
    %v210 = vsel %vm208, %v209, %v120
    %v211 = vshrl.u32 %v210, 6
    %v212 = vand.u32 %v210, 63
    %v213 = vsub.s32 0, %v212
    %v214 = vsel %vm208, %v213, %v212
    %vm215 = vcmp.lt.s32.totalorder %v121, 0
    %v216 = vsub.s32 0, %v121
    %v217 = vsel %vm215, %v216, %v121
    %v218 = vshrl.u32 %v217, 6
    %v219 = vand.u32 %v217, 63
    %v220 = vsub.s32 0, %v219
    %v221 = vsel %vm215, %v220, %v219
    %vm222 = vcmp.lt.s32.totalorder %v122, 0
    %v223 = vsub.s32 0, %v122
    %v224 = vsel %vm222, %v223, %v122
    %v225 = vshrl.u32 %v224, 6
    %v226 = vand.u32 %v224, 63
    %v227 = vsub.s32 0, %v226
    %v228 = vsel %vm222, %v227, %v226
    %vm229 = vcmp.lt.s32.totalorder %v123, 0
    %v230 = vsub.s32 0, %v123
    %v231 = vsel %vm229, %v230, %v123
    %v232 = vshrl.u32 %v231, 6
    %v233 = vand.u32 %v231, 63
    %v234 = vsub.s32 0, %v233
    %v235 = vsel %vm229, %v234, %v233
    %vm236 = vcmp.ne.s32.totalorder %v130, 0
    %vm237 = vcmp.ne.s32.totalorder %v137, 0
    %vm238 = vcmp.ne.s32.totalorder %v144, 0
    %vm239 = vcmp.ne.s32.totalorder %v151, 0
    %vm240 = vcmp.ne.s32.totalorder %v158, 0
    %vm241 = vcmp.ne.s32.totalorder %v165, 0
    %vm242 = vcmp.ne.s32.totalorder %v172, 0
    %vm243 = vcmp.ne.s32.totalorder %v179, 0
    %vm244 = vcmp.ne.s32.totalorder %v186, 0
    %vm245 = vcmp.ne.s32.totalorder %v193, 0
    %vm246 = vcmp.ne.s32.totalorder %v200, 0
    %vm247 = vcmp.ne.s32.totalorder %v207, 0
    %vm248 = vcmp.ne.s32.totalorder %v214, 0
    %vm249 = vcmp.ne.s32.totalorder %v221, 0
    %vm250 = vcmp.ne.s32.totalorder %v228, 0
    %vm251 = vcmp.ne.s32.totalorder %v235, 0
    %vm252 = vcmp.lt.s32.totalorder %v130, 0
    %vm253 = vcmp.lt.s32.totalorder %v137, 0
    %vm254 = vcmp.lt.s32.totalorder %v144, 0
    %vm255 = vcmp.lt.s32.totalorder %v151, 0
    %vm256 = vcmp.lt.s32.totalorder %v158, 0
    %vm257 = vcmp.lt.s32.totalorder %v165, 0
    %vm258 = vcmp.lt.s32.totalorder %v172, 0
    %vm259 = vcmp.lt.s32.totalorder %v179, 0
    %vm260 = vcmp.lt.s32.totalorder %v186, 0
    %vm261 = vcmp.lt.s32.totalorder %v193, 0
    %vm262 = vcmp.lt.s32.totalorder %v200, 0
    %vm263 = vcmp.lt.s32.totalorder %v207, 0
    %vm264 = vcmp.lt.s32.totalorder %v214, 0
    %vm265 = vcmp.lt.s32.totalorder %v221, 0
    %vm266 = vcmp.lt.s32.totalorder %v228, 0
    %vm267 = vcmp.lt.s32.totalorder %v235, 0
    %vm268 = vmand %vm252, %vm236
    %vm269 = vmand %vm253, %vm237
    %vm270 = vmand %vm254, %vm238
    %vm271 = vmand %vm255, %vm239
    %vm272 = vmand %vm256, %vm240
    %vm273 = vmand %vm257, %vm241
    %vm274 = vmand %vm258, %vm242
    %vm275 = vmand %vm259, %vm243
    %vm276 = vmand %vm260, %vm244
    %vm277 = vmand %vm261, %vm245
    %vm278 = vmand %vm262, %vm246
    %vm279 = vmand %vm263, %vm247
    %vm280 = vmand %vm264, %vm248
    %vm281 = vmand %vm265, %vm249
    %vm282 = vmand %vm266, %vm250
    %vm283 = vmand %vm267, %vm251
    %v284 = vadd.s32 %v130, 64
    %v285 = vadd.s32 %v137, 64
    %v286 = vadd.s32 %v144, 64
    %v287 = vadd.s32 %v151, 64
    %v288 = vadd.s32 %v158, 64
    %v289 = vadd.s32 %v165, 64
    %v290 = vadd.s32 %v172, 64
    %v291 = vadd.s32 %v179, 64
    %v292 = vadd.s32 %v186, 64
    %v293 = vadd.s32 %v193, 64
    %v294 = vadd.s32 %v200, 64
    %v295 = vadd.s32 %v207, 64
    %v296 = vadd.s32 %v214, 64
    %v297 = vadd.s32 %v221, 64
    %v298 = vadd.s32 %v228, 64
    %v299 = vadd.s32 %v235, 64
    %v300 = vsel %vm268, %v284, %v130
    %v301 = vsel %vm269, %v285, %v137
    %v302 = vsel %vm270, %v286, %v144
    %v303 = vsel %vm271, %v287, %v151
    %v304 = vsel %vm272, %v288, %v158
    %v305 = vsel %vm273, %v289, %v165
    %v306 = vsel %vm274, %v290, %v172
    %v307 = vsel %vm275, %v291, %v179
    %v308 = vsel %vm276, %v292, %v186
    %v309 = vsel %vm277, %v293, %v193
    %v310 = vsel %vm278, %v294, %v200
    %v311 = vsel %vm279, %v295, %v207
    %v312 = vsel %vm280, %v296, %v214
    %v313 = vsel %vm281, %v297, %v221
    %v314 = vsel %vm282, %v298, %v228
    %v315 = vsel %vm283, %v299, %v235
    %vm316 = vcmp.eq.s32.totalorder %v300, 0
    %vm317 = vcmp.eq.s32.totalorder %v301, 0
    %vm318 = vcmp.eq.s32.totalorder %v302, 0
    %vm319 = vcmp.eq.s32.totalorder %v303, 0
    %vm320 = vcmp.eq.s32.totalorder %v304, 0
    %vm321 = vcmp.eq.s32.totalorder %v305, 0
    %vm322 = vcmp.eq.s32.totalorder %v306, 0
    %vm323 = vcmp.eq.s32.totalorder %v307, 0
    %vm324 = vcmp.eq.s32.totalorder %v308, 0
    %vm325 = vcmp.eq.s32.totalorder %v309, 0
    %vm326 = vcmp.eq.s32.totalorder %v310, 0
    %vm327 = vcmp.eq.s32.totalorder %v311, 0
    %vm328 = vcmp.eq.s32.totalorder %v312, 0
    %vm329 = vcmp.eq.s32.totalorder %v313, 0
    %vm330 = vcmp.eq.s32.totalorder %v314, 0
    %vm331 = vcmp.eq.s32.totalorder %v315, 0
    %vm332 = vcmp.eq.s32.totalorder %v300, 63
    %vm333 = vcmp.eq.s32.totalorder %v301, 63
    %vm334 = vcmp.eq.s32.totalorder %v302, 63
    %vm335 = vcmp.eq.s32.totalorder %v303, 63
    %vm336 = vcmp.eq.s32.totalorder %v304, 63
    %vm337 = vcmp.eq.s32.totalorder %v305, 63
    %vm338 = vcmp.eq.s32.totalorder %v306, 63
    %vm339 = vcmp.eq.s32.totalorder %v307, 63
    %vm340 = vcmp.eq.s32.totalorder %v308, 63
    %vm341 = vcmp.eq.s32.totalorder %v309, 63
    %vm342 = vcmp.eq.s32.totalorder %v310, 63
    %vm343 = vcmp.eq.s32.totalorder %v311, 63
    %vm344 = vcmp.eq.s32.totalorder %v312, 63
    %vm345 = vcmp.eq.s32.totalorder %v313, 63
    %vm346 = vcmp.eq.s32.totalorder %v314, 63
    %vm347 = vcmp.eq.s32.totalorder %v315, 63
    %v348 = vld [vmem:[%s0] sm:$0xff]
    %v349 = vld [vmem:[%s0 + $0x8] sm:$0xff]
    %v350 = vld [vmem:[%s0 + $0x10] sm:$0xff]
    %v351 = vld [vmem:[%s0 + $0x18] sm:$0xff]
    %v352 = vld [vmem:[%s0 + $0x20] sm:$0xff]
    %v353 = vld [vmem:[%s0 + $0x28] sm:$0xff]
    %v354 = vld [vmem:[%s0 + $0x30] sm:$0xff]
    %v355 = vld [vmem:[%s0 + $0x38] sm:$0xff]
    %v356 = vld [vmem:[%s0 + $0x40] sm:$0xff]
    %v357 = vld [vmem:[%s0 + $0x48] sm:$0xff]
    %v358 = vld [vmem:[%s0 + $0x50] sm:$0xff]
    %v359 = vld [vmem:[%s0 + $0x58] sm:$0xff]
    %v360 = vld [vmem:[%s0 + $0x60] sm:$0xff]
    %v361 = vld [vmem:[%s0 + $0x68] sm:$0xff]
    %v362 = vld [vmem:[%s0 + $0x70] sm:$0xff]
    %v363 = vld [vmem:[%s0 + $0x78] sm:$0xff]
    %v364 = vpack.c.bf16 %v349, %v348
    %v365 = vpack.c.bf16 %v351, %v350
    %v366 = vpack.c.bf16 %v353, %v352
    %v367 = vpack.c.bf16 %v355, %v354
    %v368 = vpack.c.bf16 %v357, %v356
    %v369 = vpack.c.bf16 %v359, %v358
    %v370 = vpack.c.bf16 %v361, %v360
    %v371 = vpack.c.bf16 %v363, %v362
    %v372 = vld [vmem:[#allocation2] sm:$0xff]
    %v373 = vld [vmem:[#allocation2 + $0x8] sm:$0xff]
    %v374 = vld [vmem:[#allocation2 + $0x10] sm:$0xff]
    %v375 = vld [vmem:[#allocation2 + $0x18] sm:$0xff]
    %v376 = vld [vmem:[#allocation2 + $0x20] sm:$0xff]
    %v377 = vld [vmem:[#allocation2 + $0x28] sm:$0xff]
    %v378 = vld [vmem:[#allocation2 + $0x30] sm:$0xff]
    %v379 = vld [vmem:[#allocation2 + $0x38] sm:$0xff]
    %v380 = vld [vmem:[#allocation2 + $0x40] sm:$0xff]
    %v381 = vld [vmem:[#allocation2 + $0x48] sm:$0xff]
    %v382 = vld [vmem:[#allocation2 + $0x50] sm:$0xff]
    %v383 = vld [vmem:[#allocation2 + $0x58] sm:$0xff]
    %v384 = vld [vmem:[#allocation2 + $0x60] sm:$0xff]
    %v385 = vld [vmem:[#allocation2 + $0x68] sm:$0xff]
    %v386 = vld [vmem:[#allocation2 + $0x70] sm:$0xff]
    %v387 = vld [vmem:[#allocation2 + $0x78] sm:$0xff]
    %v388 = vld [vmem:[%s1] sm:$0xff]
    %v389 = vld [vmem:[%s1 + $0x8] sm:$0xff]
    %v390 = vld [vmem:[%s1 + $0x10] sm:$0xff]
    %v391 = vld [vmem:[%s1 + $0x18] sm:$0xff]
    %v392 = vld [vmem:[%s1 + $0x20] sm:$0xff]
    %v393 = vld [vmem:[%s1 + $0x28] sm:$0xff]
    %v394 = vld [vmem:[%s1 + $0x30] sm:$0xff]
    %v395 = vld [vmem:[%s1 + $0x38] sm:$0xff]
    %v396 = vld [vmem:[%s1 + $0x40] sm:$0xff]
    %v397 = vld [vmem:[%s1 + $0x48] sm:$0xff]
    %v398 = vld [vmem:[%s1 + $0x50] sm:$0xff]
    %v399 = vld [vmem:[%s1 + $0x58] sm:$0xff]
    %v400 = vld [vmem:[%s1 + $0x60] sm:$0xff]
    %v401 = vld [vmem:[%s1 + $0x68] sm:$0xff]
    %v402 = vld [vmem:[%s1 + $0x70] sm:$0xff]
    %v403 = vld [vmem:[%s1 + $0x78] sm:$0xff]
    %v404 = vld [vmem:[#allocation4] sm:$0x3]
    %406 = vset.pattern.permute.xlu0 0
    %407 = vperm.xlu0 %406, %v388
    %v408 = vpop.permute.xlu0 %407
    %411 = vset.pattern.permute.xlu0 0
    %412 = vperm.xlu0 %411, %v389
    %v413 = vpop.permute.xlu0 %412
    %416 = vset.pattern.permute.xlu0 0
    %417 = vperm.xlu0 %416, %v390
    %v418 = vpop.permute.xlu0 %417
    %421 = vset.pattern.permute.xlu0 0
    %422 = vperm.xlu0 %421, %v391
    %v423 = vpop.permute.xlu0 %422
    %426 = vset.pattern.permute.xlu0 0
    %427 = vperm.xlu0 %426, %v392
    %v428 = vpop.permute.xlu0 %427
    %431 = vset.pattern.permute.xlu0 0
    %432 = vperm.xlu0 %431, %v393
    %v433 = vpop.permute.xlu0 %432
    %436 = vset.pattern.permute.xlu0 0
    %437 = vperm.xlu0 %436, %v394
    %v438 = vpop.permute.xlu0 %437
    %441 = vset.pattern.permute.xlu0 0
    %442 = vperm.xlu0 %441, %v395
    %v443 = vpop.permute.xlu0 %442
    %446 = vset.pattern.permute.xlu0 0
    %447 = vperm.xlu0 %446, %v396
    %v448 = vpop.permute.xlu0 %447
    %451 = vset.pattern.permute.xlu0 0
    %452 = vperm.xlu0 %451, %v397
    %v453 = vpop.permute.xlu0 %452
    %456 = vset.pattern.permute.xlu0 0
    %457 = vperm.xlu0 %456, %v398
    %v458 = vpop.permute.xlu0 %457
    %461 = vset.pattern.permute.xlu0 0
    %462 = vperm.xlu0 %461, %v399
    %v463 = vpop.permute.xlu0 %462
    %466 = vset.pattern.permute.xlu0 0
    %467 = vperm.xlu0 %466, %v400
    %v468 = vpop.permute.xlu0 %467
    %471 = vset.pattern.permute.xlu0 0
    %472 = vperm.xlu0 %471, %v401
    %v473 = vpop.permute.xlu0 %472
    %476 = vset.pattern.permute.xlu0 0
    %477 = vperm.xlu0 %476, %v402
    %v478 = vpop.permute.xlu0 %477
    %481 = vset.pattern.permute.xlu0 0
    %482 = vperm.xlu0 %481, %v403
    %v483 = vpop.permute.xlu0 %482
    %v486 = vlaneseq
    %v487 = vshrl.u32 %v486, 7
    %v488 = vsub.s32 0, %v487
    %v489 = vrot.slane %v404, %v488
    %v490 = vlaneseq
    %v491 = vshrl.u32 %v490, 7
    %v492 = vsub.s32 1, %v491
    %v493 = vrot.slane %v404, %v492
    %v496 = vmul.f32 %v408, %v489
    %v497 = vmul.f32 %v408, %v493
    %v498 = vmul.f32 %v413, %v489
    %v499 = vmul.f32 %v413, %v493
    %v500 = vmul.f32 %v418, %v489
    %v501 = vmul.f32 %v418, %v493
    %v502 = vmul.f32 %v423, %v489
    %v503 = vmul.f32 %v423, %v493
    %v504 = vmul.f32 %v428, %v489
    %v505 = vmul.f32 %v428, %v493
    %v506 = vmul.f32 %v433, %v489
    %v507 = vmul.f32 %v433, %v493
    %v508 = vmul.f32 %v438, %v489
    %v509 = vmul.f32 %v438, %v493
    %v510 = vmul.f32 %v443, %v489
    %v511 = vmul.f32 %v443, %v493
    %v512 = vmul.f32 %v448, %v489
    %v513 = vmul.f32 %v448, %v493
    %v514 = vmul.f32 %v453, %v489
    %v515 = vmul.f32 %v453, %v493
    %v516 = vmul.f32 %v458, %v489
    %v517 = vmul.f32 %v458, %v493
    %v518 = vmul.f32 %v463, %v489
    %v519 = vmul.f32 %v463, %v493
    %v520 = vmul.f32 %v468, %v489
    %v521 = vmul.f32 %v468, %v493
    %v522 = vmul.f32 %v473, %v489
    %v523 = vmul.f32 %v473, %v493
    %v524 = vmul.f32 %v478, %v489
    %v525 = vmul.f32 %v478, %v493
    %v526 = vmul.f32 %v483, %v489
    %v527 = vmul.f32 %v483, %v493
    %v544 = vunpack.c.l.b16 %v372
    %v545 = vunpack.c.h.b16 %v372
    %v546 = vunpack.c.l.b16 %v373
    %v547 = vunpack.c.h.b16 %v373
    %v548 = vunpack.c.l.b16 %v374
    %v549 = vunpack.c.h.b16 %v374
    %v550 = vunpack.c.l.b16 %v375
    %v551 = vunpack.c.h.b16 %v375
    %v552 = vunpack.c.l.b16 %v376
    %v553 = vunpack.c.h.b16 %v376
    %v554 = vunpack.c.l.b16 %v377
    %v555 = vunpack.c.h.b16 %v377
    %v556 = vunpack.c.l.b16 %v378
    %v557 = vunpack.c.h.b16 %v378
    %v558 = vunpack.c.l.b16 %v379
    %v559 = vunpack.c.h.b16 %v379
    %v560 = vunpack.c.l.b16 %v380
    %v561 = vunpack.c.h.b16 %v380
    %v562 = vunpack.c.l.b16 %v381
    %v563 = vunpack.c.h.b16 %v381
    %v564 = vunpack.c.l.b16 %v382
    %v565 = vunpack.c.h.b16 %v382
    %v566 = vunpack.c.l.b16 %v383
    %v567 = vunpack.c.h.b16 %v383
    %v568 = vunpack.c.l.b16 %v384
    %v569 = vunpack.c.h.b16 %v384
    %v570 = vunpack.c.l.b16 %v385
    %v571 = vunpack.c.h.b16 %v385
    %v572 = vunpack.c.l.b16 %v386
    %v573 = vunpack.c.h.b16 %v386
    %v574 = vunpack.c.l.b16 %v387
    %v575 = vunpack.c.h.b16 %v387
    %v576 = vpack.c.b16 %v546, %v544
    %v577 = vpack.c.b16 %v547, %v545
    %v578 = vpack.c.b16 %v550, %v548
    %v579 = vpack.c.b16 %v551, %v549
    %v580 = vpack.c.b16 %v554, %v552
    %v581 = vpack.c.b16 %v555, %v553
    %v582 = vpack.c.b16 %v558, %v556
    %v583 = vpack.c.b16 %v559, %v557
    %v584 = vpack.c.b16 %v562, %v560
    %v585 = vpack.c.b16 %v563, %v561
    %v586 = vpack.c.b16 %v566, %v564
    %v587 = vpack.c.b16 %v567, %v565
    %v588 = vpack.c.b16 %v570, %v568
    %v589 = vpack.c.b16 %v571, %v569
    %v590 = vpack.c.b16 %v574, %v572
    %v591 = vpack.c.b16 %v575, %v573
    %608 = vmatprep.subr.bf16.mxu0 %v577
    %609 = vmatpush1.bf16.msra.mxu0 %v576
    %610 = vmatprep.subr.bf16.mxu0 %v579
    %611 = vmatpush1.bf16.msra.mxu0 %v578
    %612 = vmatprep.subr.bf16.mxu0 %v581
    %613 = vmatpush1.bf16.msra.mxu0 %v580
    %614 = vmatprep.subr.bf16.mxu0 %v583
    %615 = vmatpush1.bf16.msra.mxu0 %v582
    %616 = vmatprep.subr.bf16.mxu0 %v585
    %617 = vmatpush1.bf16.msra.mxu0 %v584
    %618 = vmatprep.subr.bf16.mxu0 %v587
    %619 = vmatpush1.bf16.msra.mxu0 %v586
    %620 = vmatprep.subr.bf16.mxu0 %v589
    %621 = vmatpush1.bf16.msra.mxu0 %v588
    %622 = vmatprep.subr.bf16.mxu0 %v591
    %623 = vmatpush1.bf16.msra.mxu0 %v590
    %624 = vmatprep.subr.bf16.mxu0 0
    %625 = vmatpush1.bf16.msra.mxu0 0
    %626 = vmatprep.subr.bf16.mxu0 0
    %627 = vmatpush1.bf16.msra.mxu0 0
    %628 = vmatprep.subr.bf16.mxu0 0
    %629 = vmatpush1.bf16.msra.mxu0 0
    %630 = vmatprep.subr.bf16.mxu0 0
    %631 = vmatpush1.bf16.msra.mxu0 0
    %632 = vmatprep.subr.bf16.mxu0 0
    %633 = vmatpush1.bf16.msra.mxu0 0
    %634 = vmatprep.subr.bf16.mxu0 0
    %635 = vmatpush1.bf16.msra.mxu0 0
    %636 = vmatprep.subr.bf16.mxu0 0
    %637 = vmatpush1.bf16.msra.mxu0 0
    %638 = vmatprep.subr.bf16.mxu0 0
    %639 = vmatpush1.bf16.msra.mxu0 0
    %640 = vmatprep.mubr.bf16.mxu0 0
    %641 = vmatmul.mubr.bf16.gmra.mrb[0].mxu0 %v364
    %v642 = vpop.f32.mrb[0].mxu0
    %v643 = vadd.f32 %v496, %v642
    %v644 = vpop.f32.mrb[0].mxu0
    %v645 = vadd.f32 %v497, %v644
    %v646 = vpop.f32.mrb[0].mxu0
    %v647 = vadd.f32 %v498, %v646
    %v648 = vpop.f32.mrb[0].mxu0
    %v649 = vadd.f32 %v499, %v648
    %650 = vmatprep.mubr.bf16.mxu0 0
    %651 = vmatmul.mubr.bf16.gmra.mrb[0].mxu0 %v365
    %v652 = vpop.f32.mrb[0].mxu0
    %v653 = vadd.f32 %v500, %v652
    %v654 = vpop.f32.mrb[0].mxu0
    %v655 = vadd.f32 %v501, %v654
    %v656 = vpop.f32.mrb[0].mxu0
    %v657 = vadd.f32 %v502, %v656
    %v658 = vpop.f32.mrb[0].mxu0
    %v659 = vadd.f32 %v503, %v658
    %660 = vmatprep.mubr.bf16.mxu0 0
    %661 = vmatmul.mubr.bf16.gmra.mrb[0].mxu0 %v366
    %v662 = vpop.f32.mrb[0].mxu0
    %v663 = vadd.f32 %v504, %v662
    %v664 = vpop.f32.mrb[0].mxu0
    %v665 = vadd.f32 %v505, %v664
    %v666 = vpop.f32.mrb[0].mxu0
    %v667 = vadd.f32 %v506, %v666
    %v668 = vpop.f32.mrb[0].mxu0
    %v669 = vadd.f32 %v507, %v668
    %670 = vmatprep.mubr.bf16.mxu0 0
    %671 = vmatmul.mubr.bf16.gmra.mrb[0].mxu0 %v367
    %v672 = vpop.f32.mrb[0].mxu0
    %v673 = vadd.f32 %v508, %v672
    %v674 = vpop.f32.mrb[0].mxu0
    %v675 = vadd.f32 %v509, %v674
    %v676 = vpop.f32.mrb[0].mxu0
    %v677 = vadd.f32 %v510, %v676
    %v678 = vpop.f32.mrb[0].mxu0
    %v679 = vadd.f32 %v511, %v678
    %680 = vmatprep.mubr.bf16.mxu0 0
    %681 = vmatmul.mubr.bf16.gmra.mrb[0].mxu0 %v368
    %v682 = vpop.f32.mrb[0].mxu0
    %v683 = vadd.f32 %v512, %v682
    %v684 = vpop.f32.mrb[0].mxu0
    %v685 = vadd.f32 %v513, %v684
    %v686 = vpop.f32.mrb[0].mxu0
    %v687 = vadd.f32 %v514, %v686
    %v688 = vpop.f32.mrb[0].mxu0
    %v689 = vadd.f32 %v515, %v688
    %690 = vmatprep.mubr.bf16.mxu0 0
    %691 = vmatmul.mubr.bf16.gmra.mrb[0].mxu0 %v369
    %v692 = vpop.f32.mrb[0].mxu0
    %v693 = vadd.f32 %v516, %v692
    %v694 = vpop.f32.mrb[0].mxu0
    %v695 = vadd.f32 %v517, %v694
    %v696 = vpop.f32.mrb[0].mxu0
    %v697 = vadd.f32 %v518, %v696
    %v698 = vpop.f32.mrb[0].mxu0
    %v699 = vadd.f32 %v519, %v698
    %700 = vmatprep.mubr.bf16.mxu0 0
    %701 = vmatmul.mubr.bf16.gmra.mrb[0].mxu0 %v370
    %v702 = vpop.f32.mrb[0].mxu0
    %v703 = vadd.f32 %v520, %v702
    %v704 = vpop.f32.mrb[0].mxu0
    %v705 = vadd.f32 %v521, %v704
    %v706 = vpop.f32.mrb[0].mxu0
    %v707 = vadd.f32 %v522, %v706
    %v708 = vpop.f32.mrb[0].mxu0
    %v709 = vadd.f32 %v523, %v708
    %710 = vmatprep.mubr.bf16.mxu0 0
    %711 = vmatmul.mubr.bf16.gmra.mrb[0].mxu0 %v371
    %v712 = vpop.f32.mrb[0].mxu0
    %v713 = vadd.f32 %v524, %v712
    %v714 = vpop.f32.mrb[0].mxu0
    %v715 = vadd.f32 %v525, %v714
    %v716 = vpop.f32.mrb[0].mxu0
    %v717 = vadd.f32 %v526, %v716
    %v718 = vpop.f32.mrb[0].mxu0
    %v719 = vadd.f32 %v527, %v718
    %720 = vdwg.mxu0
    %v721 = vld [vmem:[#allocation6] sm:$0x3]
    %v723 = vlaneseq
    %v724 = vshrl.u32 %v723, 7
    %v725 = vsub.s32 0, %v724
    %v726 = vrot.slane %v721, %v725
    %v727 = vlaneseq
    %v728 = vshrl.u32 %v727, 7
    %v729 = vsub.s32 1, %v728
    %v730 = vrot.slane %v721, %v729
    %v733 = vadd.f32 %v643, %v726
    %v734 = vadd.f32 %v645, %v730
    %v735 = vadd.f32 %v647, %v726
    %v736 = vadd.f32 %v649, %v730
    %v737 = vadd.f32 %v653, %v726
    %v738 = vadd.f32 %v655, %v730
    %v739 = vadd.f32 %v657, %v726
    %v740 = vadd.f32 %v659, %v730
    %v741 = vadd.f32 %v663, %v726
    %v742 = vadd.f32 %v665, %v730
    %v743 = vadd.f32 %v667, %v726
    %v744 = vadd.f32 %v669, %v730
    %v745 = vadd.f32 %v673, %v726
    %v746 = vadd.f32 %v675, %v730
    %v747 = vadd.f32 %v677, %v726
    %v748 = vadd.f32 %v679, %v730
    %v749 = vadd.f32 %v683, %v726
    %v750 = vadd.f32 %v685, %v730
    %v751 = vadd.f32 %v687, %v726
    %v752 = vadd.f32 %v689, %v730
    %v753 = vadd.f32 %v693, %v726
    %v754 = vadd.f32 %v695, %v730
    %v755 = vadd.f32 %v697, %v726
    %v756 = vadd.f32 %v699, %v730
    %v757 = vadd.f32 %v703, %v726
    %v758 = vadd.f32 %v705, %v730
    %v759 = vadd.f32 %v707, %v726
    %v760 = vadd.f32 %v709, %v730
    %v761 = vadd.f32 %v713, %v726
    %v762 = vadd.f32 %v715, %v730
    %v763 = vadd.f32 %v717, %v726
    %v764 = vadd.f32 %v719, %v730
    %v765 = vmax.f32 %v733, 0.0
    %v766 = vmax.f32 %v734, 0.0
    %v767 = vmax.f32 %v735, 0.0
    %v768 = vmax.f32 %v736, 0.0
    %v769 = vmax.f32 %v737, 0.0
    %v770 = vmax.f32 %v738, 0.0
    %v771 = vmax.f32 %v739, 0.0
    %v772 = vmax.f32 %v740, 0.0
    %v773 = vmax.f32 %v741, 0.0
    %v774 = vmax.f32 %v742, 0.0
    %v775 = vmax.f32 %v743, 0.0
    %v776 = vmax.f32 %v744, 0.0
    %v777 = vmax.f32 %v745, 0.0
    %v778 = vmax.f32 %v746, 0.0
    %v779 = vmax.f32 %v747, 0.0
    %v780 = vmax.f32 %v748, 0.0
    %v781 = vmax.f32 %v749, 0.0
    %v782 = vmax.f32 %v750, 0.0
    %v783 = vmax.f32 %v751, 0.0
    %v784 = vmax.f32 %v752, 0.0
    %v785 = vmax.f32 %v753, 0.0
    %v786 = vmax.f32 %v754, 0.0
    %v787 = vmax.f32 %v755, 0.0
    %v788 = vmax.f32 %v756, 0.0
    %v789 = vmax.f32 %v757, 0.0
    %v790 = vmax.f32 %v758, 0.0
    %v791 = vmax.f32 %v759, 0.0
    %v792 = vmax.f32 %v760, 0.0
    %v793 = vmax.f32 %v761, 0.0
    %v794 = vmax.f32 %v762, 0.0
    %v795 = vmax.f32 %v763, 0.0
    %v796 = vmax.f32 %v764, 0.0
    %v798 = vrot.slane %v796, 7
    %vm815 = vcmask 1040384
    %v816 = vrot.slane %v766, 7
    %v817 = vrot.slane %v768, 7
    %v818 = vsel %vm815, %v816, %v817
    %v819 = vrot.slane %v770, 7
    %v820 = vsel %vm815, %v817, %v819
    %v821 = vrot.slane %v772, 7
    %v822 = vsel %vm815, %v819, %v821
    %v823 = vrot.slane %v774, 7
    %v824 = vsel %vm815, %v821, %v823
    %v825 = vrot.slane %v776, 7
    %v826 = vsel %vm815, %v823, %v825
    %v827 = vrot.slane %v778, 7
    %v828 = vsel %vm815, %v825, %v827
    %v829 = vrot.slane %v780, 7
    %v830 = vsel %vm815, %v827, %v829
    %v831 = vrot.slane %v782, 7
    %v832 = vsel %vm815, %v829, %v831
    %v833 = vrot.slane %v784, 7
    %v834 = vsel %vm815, %v831, %v833
    %v835 = vrot.slane %v786, 7
    %v836 = vsel %vm815, %v833, %v835
    %v837 = vrot.slane %v788, 7
    %v838 = vsel %vm815, %v835, %v837
    %v839 = vrot.slane %v790, 7
    %v840 = vsel %vm815, %v837, %v839
    %v841 = vrot.slane %v792, 7
    %v842 = vsel %vm815, %v839, %v841
    %v843 = vrot.slane %v794, 7
    %v844 = vsel %vm815, %v841, %v843
    %v845 = vsel %vm815, %v843, %v798
    %v862 = vsel %vm815, %v798, %v816
    %v863 = vsel %vm316, 1, 0
    %v864 = vsel %vm317, 1, 0
    %v865 = vsel %vm318, 1, 0
    %v866 = vsel %vm319, 1, 0
    %v867 = vsel %vm320, 1, 0
    %v868 = vsel %vm321, 1, 0
    %v869 = vsel %vm322, 1, 0
    %v870 = vsel %vm323, 1, 0
    %v871 = vsel %vm324, 1, 0
    %v872 = vsel %vm325, 1, 0
    %v873 = vsel %vm326, 1, 0
    %v874 = vsel %vm327, 1, 0
    %v875 = vsel %vm328, 1, 0
    %v876 = vsel %vm329, 1, 0
    %v877 = vsel %vm330, 1, 0
    %v878 = vsel %vm331, 1, 0
    %vm879 = vcmp.eq.s32.totalorder %v863, 1
    %vm880 = vcmp.eq.s32.totalorder %v864, 1
    %vm881 = vcmp.eq.s32.totalorder %v865, 1
    %vm882 = vcmp.eq.s32.totalorder %v866, 1
    %vm883 = vcmp.eq.s32.totalorder %v867, 1
    %vm884 = vcmp.eq.s32.totalorder %v868, 1
    %vm885 = vcmp.eq.s32.totalorder %v869, 1
    %vm886 = vcmp.eq.s32.totalorder %v870, 1
    %vm887 = vcmp.eq.s32.totalorder %v871, 1
    %vm888 = vcmp.eq.s32.totalorder %v872, 1
    %vm889 = vcmp.eq.s32.totalorder %v873, 1
    %vm890 = vcmp.eq.s32.totalorder %v874, 1
    %vm891 = vcmp.eq.s32.totalorder %v875, 1
    %vm892 = vcmp.eq.s32.totalorder %v876, 1
    %vm893 = vcmp.eq.s32.totalorder %v877, 1
    %vm894 = vcmp.eq.s32.totalorder %v878, 1
    %v895 = vsel %vm879, 0.0, %v862
    %v896 = vsel %vm880, 0.0, %v818
    %v897 = vsel %vm881, 0.0, %v820
    %v898 = vsel %vm882, 0.0, %v822
    %v899 = vsel %vm883, 0.0, %v824
    %v900 = vsel %vm884, 0.0, %v826
    %v901 = vsel %vm885, 0.0, %v828
    %v902 = vsel %vm886, 0.0, %v830
    %v903 = vsel %vm887, 0.0, %v832
    %v904 = vsel %vm888, 0.0, %v834
    %v905 = vsel %vm889, 0.0, %v836
    %v906 = vsel %vm890, 0.0, %v838
    %v907 = vsel %vm891, 0.0, %v840
    %v908 = vsel %vm892, 0.0, %v842
    %v909 = vsel %vm893, 0.0, %v844
    %v910 = vsel %vm894, 0.0, %v845
    %vm927 = vcmask 1046528
    %v928 = vrot.slane %v765, 1
    %v929 = vrot.slane %v767, 1
    %v930 = vsel %vm927, %v928, %v929
    %v931 = vrot.slane %v769, 1
    %v932 = vsel %vm927, %v929, %v931
    %v933 = vrot.slane %v771, 1
    %v934 = vsel %vm927, %v931, %v933
    %v935 = vrot.slane %v773, 1
    %v936 = vsel %vm927, %v933, %v935
    %v937 = vrot.slane %v775, 1
    %v938 = vsel %vm927, %v935, %v937
    %v939 = vrot.slane %v777, 1
    %v940 = vsel %vm927, %v937, %v939
    %v941 = vrot.slane %v779, 1
    %v942 = vsel %vm927, %v939, %v941
    %v943 = vrot.slane %v781, 1
    %v944 = vsel %vm927, %v941, %v943
    %v945 = vrot.slane %v783, 1
    %v946 = vsel %vm927, %v943, %v945
    %v947 = vrot.slane %v785, 1
    %v948 = vsel %vm927, %v945, %v947
    %v949 = vrot.slane %v787, 1
    %v950 = vsel %vm927, %v947, %v949
    %v951 = vrot.slane %v789, 1
    %v952 = vsel %vm927, %v949, %v951
    %v953 = vrot.slane %v791, 1
    %v954 = vsel %vm927, %v951, %v953
    %v955 = vrot.slane %v793, 1
    %v956 = vsel %vm927, %v953, %v955
    %v957 = vrot.slane %v795, 1
    %v958 = vsel %vm927, %v955, %v957
    %v976 = vsel %vm927, %v957, %v928
    %v977 = vsel %vm332, 1, 0
    %v978 = vsel %vm333, 1, 0
    %v979 = vsel %vm334, 1, 0
    %v980 = vsel %vm335, 1, 0
    %v981 = vsel %vm336, 1, 0
    %v982 = vsel %vm337, 1, 0
    %v983 = vsel %vm338, 1, 0
    %v984 = vsel %vm339, 1, 0
    %v985 = vsel %vm340, 1, 0
    %v986 = vsel %vm341, 1, 0
    %v987 = vsel %vm342, 1, 0
    %v988 = vsel %vm343, 1, 0
    %v989 = vsel %vm344, 1, 0
    %v990 = vsel %vm345, 1, 0
    %v991 = vsel %vm346, 1, 0
    %v992 = vsel %vm347, 1, 0
    %vm993 = vcmp.eq.s32.totalorder %v977, 1
    %vm994 = vcmp.eq.s32.totalorder %v978, 1
    %vm995 = vcmp.eq.s32.totalorder %v979, 1
    %vm996 = vcmp.eq.s32.totalorder %v980, 1
    %vm997 = vcmp.eq.s32.totalorder %v981, 1
    %vm998 = vcmp.eq.s32.totalorder %v982, 1
    %vm999 = vcmp.eq.s32.totalorder %v983, 1
    %vm1000 = vcmp.eq.s32.totalorder %v984, 1
    %vm1001 = vcmp.eq.s32.totalorder %v985, 1
    %vm1002 = vcmp.eq.s32.totalorder %v986, 1
    %vm1003 = vcmp.eq.s32.totalorder %v987, 1
    %vm1004 = vcmp.eq.s32.totalorder %v988, 1
    %vm1005 = vcmp.eq.s32.totalorder %v989, 1
    %vm1006 = vcmp.eq.s32.totalorder %v990, 1
    %vm1007 = vcmp.eq.s32.totalorder %v991, 1
    %vm1008 = vcmp.eq.s32.totalorder %v992, 1
    %v1009 = vsel %vm993, 0.0, %v930
    %v1010 = vsel %vm994, 0.0, %v932
    %v1011 = vsel %vm995, 0.0, %v934
    %v1012 = vsel %vm996, 0.0, %v936
    %v1013 = vsel %vm997, 0.0, %v938
    %v1014 = vsel %vm998, 0.0, %v940
    %v1015 = vsel %vm999, 0.0, %v942
    %v1016 = vsel %vm1000, 0.0, %v944
    %v1017 = vsel %vm1001, 0.0, %v946
    %v1018 = vsel %vm1002, 0.0, %v948
    %v1019 = vsel %vm1003, 0.0, %v950
    %v1020 = vsel %vm1004, 0.0, %v952
    %v1021 = vsel %vm1005, 0.0, %v954
    %v1022 = vsel %vm1006, 0.0, %v956
    %v1023 = vsel %vm1007, 0.0, %v958
    %v1024 = vsel %vm1008, 0.0, %v976
    %v1025 = vpack.c.bf16 %v767, %v765
    %v1026 = vpack.c.bf16 %v768, %v766
    %v1027 = vpack.c.bf16 %v896, %v895
    %v1028 = vpack.c.bf16 %v1010, %v1009
    %v1029 = vpack.c.bf16 %v771, %v769
    %v1030 = vpack.c.bf16 %v772, %v770
    %v1031 = vpack.c.bf16 %v898, %v897
    %v1032 = vpack.c.bf16 %v1012, %v1011
    %v1033 = vpack.c.bf16 %v775, %v773
    %v1034 = vpack.c.bf16 %v776, %v774
    %v1035 = vpack.c.bf16 %v900, %v899
    %v1036 = vpack.c.bf16 %v1014, %v1013
    %v1037 = vpack.c.bf16 %v779, %v777
    %v1038 = vpack.c.bf16 %v780, %v778
    %v1039 = vpack.c.bf16 %v902, %v901
    %v1040 = vpack.c.bf16 %v1016, %v1015
    %v1041 = vpack.c.bf16 %v783, %v781
    %v1042 = vpack.c.bf16 %v784, %v782
    %v1043 = vpack.c.bf16 %v904, %v903
    %v1044 = vpack.c.bf16 %v1018, %v1017
    %v1045 = vpack.c.bf16 %v787, %v785
    %v1046 = vpack.c.bf16 %v788, %v786
    %v1047 = vpack.c.bf16 %v906, %v905
    %v1048 = vpack.c.bf16 %v1020, %v1019
    %v1049 = vpack.c.bf16 %v791, %v789
    %v1050 = vpack.c.bf16 %v792, %v790
    %v1051 = vpack.c.bf16 %v908, %v907
    %v1052 = vpack.c.bf16 %v1022, %v1021
    %v1053 = vpack.c.bf16 %v795, %v793
    %v1054 = vpack.c.bf16 %v796, %v794
    %v1055 = vpack.c.bf16 %v910, %v909
    %v1056 = vpack.c.bf16 %v1024, %v1023
    %v1057 = vld [vmem:[#allocation7] sm:$0xff]
    %v1058 = vld [vmem:[#allocation7 + $0x8] sm:$0xff]
    %v1059 = vld [vmem:[#allocation7 + $0x10] sm:$0xff]
    %v1060 = vld [vmem:[#allocation7 + $0x18] sm:$0xff]
    %v1061 = vld [vmem:[#allocation7 + $0x20] sm:$0xff]
    %v1062 = vld [vmem:[#allocation7 + $0x28] sm:$0xff]
    %v1063 = vld [vmem:[#allocation7 + $0x30] sm:$0xff]
    %v1064 = vld [vmem:[#allocation7 + $0x38] sm:$0xff]
    %v1065 = vld [vmem:[#allocation7 + $0x40] sm:$0xff]
    %v1066 = vld [vmem:[#allocation7 + $0x48] sm:$0xff]
    %v1067 = vld [vmem:[#allocation7 + $0x50] sm:$0xff]
    %v1068 = vld [vmem:[#allocation7 + $0x58] sm:$0xff]
    %v1069 = vld [vmem:[#allocation7 + $0x60] sm:$0xff]
    %v1070 = vld [vmem:[#allocation7 + $0x68] sm:$0xff]
    %v1071 = vld [vmem:[#allocation7 + $0x70] sm:$0xff]
    %v1072 = vld [vmem:[#allocation7 + $0x78] sm:$0xff]
    %v1073 = vld [vmem:[#allocation7 + $0x80] sm:$0xff]
    %v1074 = vld [vmem:[#allocation7 + $0x88] sm:$0xff]
    %v1075 = vld [vmem:[#allocation7 + $0x90] sm:$0xff]
    %v1076 = vld [vmem:[#allocation7 + $0x98] sm:$0xff]
    %v1077 = vld [vmem:[#allocation7 + $0xa0] sm:$0xff]
    %v1078 = vld [vmem:[#allocation7 + $0xa8] sm:$0xff]
    %v1079 = vld [vmem:[#allocation7 + $0xb0] sm:$0xff]
    %v1080 = vld [vmem:[#allocation7 + $0xb8] sm:$0xff]
    %v1081 = vld [vmem:[#allocation7 + $0xc0] sm:$0xff]
    %v1082 = vld [vmem:[#allocation7 + $0xc8] sm:$0xff]
    %v1083 = vld [vmem:[#allocation7 + $0xd0] sm:$0xff]
    %v1084 = vld [vmem:[#allocation7 + $0xd8] sm:$0xff]
    %v1085 = vld [vmem:[#allocation7 + $0xe0] sm:$0xff]
    %v1086 = vld [vmem:[#allocation7 + $0xe8] sm:$0xff]
    %v1087 = vld [vmem:[#allocation7 + $0xf0] sm:$0xff]
    %v1088 = vld [vmem:[#allocation7 + $0xf8] sm:$0xff]
    %v1089 = vld [vmem:[#allocation7 + $0x100] sm:$0xff]
    %v1090 = vld [vmem:[#allocation7 + $0x108] sm:$0xff]
    %v1091 = vld [vmem:[#allocation7 + $0x110] sm:$0xff]
    %v1092 = vld [vmem:[#allocation7 + $0x118] sm:$0xff]
    %v1093 = vld [vmem:[#allocation7 + $0x120] sm:$0xff]
    %v1094 = vld [vmem:[#allocation7 + $0x128] sm:$0xff]
    %v1095 = vld [vmem:[#allocation7 + $0x130] sm:$0xff]
    %v1096 = vld [vmem:[#allocation7 + $0x138] sm:$0xff]
    %v1097 = vld [vmem:[#allocation7 + $0x140] sm:$0xff]
    %v1098 = vld [vmem:[#allocation7 + $0x148] sm:$0xff]
    %v1099 = vld [vmem:[#allocation7 + $0x150] sm:$0xff]
    %v1100 = vld [vmem:[#allocation7 + $0x158] sm:$0xff]
    %v1101 = vld [vmem:[#allocation7 + $0x160] sm:$0xff]
    %v1102 = vld [vmem:[#allocation7 + $0x168] sm:$0xff]
    %v1103 = vld [vmem:[#allocation7 + $0x170] sm:$0xff]
    %v1104 = vld [vmem:[#allocation7 + $0x178] sm:$0xff]
    %v1105 = vld [vmem:[#allocation7 + $0x180] sm:$0xff]
    %v1106 = vld [vmem:[#allocation7 + $0x188] sm:$0xff]
    %v1107 = vld [vmem:[#allocation7 + $0x190] sm:$0xff]
    %v1108 = vld [vmem:[#allocation7 + $0x198] sm:$0xff]
    %v1109 = vld [vmem:[#allocation7 + $0x1a0] sm:$0xff]
    %v1110 = vld [vmem:[#allocation7 + $0x1a8] sm:$0xff]
    %v1111 = vld [vmem:[#allocation7 + $0x1b0] sm:$0xff]
    %v1112 = vld [vmem:[#allocation7 + $0x1b8] sm:$0xff]
    %v1113 = vld [vmem:[#allocation7 + $0x1c0] sm:$0xff]
    %v1114 = vld [vmem:[#allocation7 + $0x1c8] sm:$0xff]
    %v1115 = vld [vmem:[#allocation7 + $0x1d0] sm:$0xff]
    %v1116 = vld [vmem:[#allocation7 + $0x1d8] sm:$0xff]
    %v1117 = vld [vmem:[#allocation7 + $0x1e0] sm:$0xff]
    %v1118 = vld [vmem:[#allocation7 + $0x1e8] sm:$0xff]
    %v1119 = vld [vmem:[#allocation7 + $0x1f0] sm:$0xff]
    %v1120 = vld [vmem:[#allocation7 + $0x1f8] sm:$0xff]
    %v1121 = vld [vmem:[#allocation9] sm:$0x3]
    %v1123 = vlaneseq
    %v1124 = vshrl.u32 %v1123, 7
    %v1125 = vsub.s32 0, %v1124
    %v1126 = vrot.slane %v1121, %v1125
    %v1127 = vlaneseq
    %v1128 = vshrl.u32 %v1127, 7
    %v1129 = vsub.s32 1, %v1128
    %v1130 = vrot.slane %v1121, %v1129
    %v1197 = vunpack.c.l.b16 %v1057
    %v1198 = vunpack.c.h.b16 %v1057
    %v1199 = vunpack.c.l.b16 %v1058
    %v1200 = vunpack.c.h.b16 %v1058
    %v1201 = vunpack.c.l.b16 %v1059
    %v1202 = vunpack.c.h.b16 %v1059
    %v1203 = vunpack.c.l.b16 %v1060
    %v1204 = vunpack.c.h.b16 %v1060
    %v1205 = vunpack.c.l.b16 %v1061
    %v1206 = vunpack.c.h.b16 %v1061
    %v1207 = vunpack.c.l.b16 %v1062
    %v1208 = vunpack.c.h.b16 %v1062
    %v1209 = vunpack.c.l.b16 %v1063
    %v1210 = vunpack.c.h.b16 %v1063
    %v1211 = vunpack.c.l.b16 %v1064
    %v1212 = vunpack.c.h.b16 %v1064
    %v1213 = vunpack.c.l.b16 %v1065
    %v1214 = vunpack.c.h.b16 %v1065
    %v1215 = vunpack.c.l.b16 %v1066
    %v1216 = vunpack.c.h.b16 %v1066
    %v1217 = vunpack.c.l.b16 %v1067
    %v1218 = vunpack.c.h.b16 %v1067
    %v1219 = vunpack.c.l.b16 %v1068
    %v1220 = vunpack.c.h.b16 %v1068
    %v1221 = vunpack.c.l.b16 %v1069
    %v1222 = vunpack.c.h.b16 %v1069
    %v1223 = vunpack.c.l.b16 %v1070
    %v1224 = vunpack.c.h.b16 %v1070
    %v1225 = vunpack.c.l.b16 %v1071
    %v1226 = vunpack.c.h.b16 %v1071
    %v1227 = vunpack.c.l.b16 %v1072
    %v1228 = vunpack.c.h.b16 %v1072
    %v1229 = vunpack.c.l.b16 %v1073
    %v1230 = vunpack.c.h.b16 %v1073
    %v1231 = vunpack.c.l.b16 %v1074
    %v1232 = vunpack.c.h.b16 %v1074
    %v1233 = vunpack.c.l.b16 %v1075
    %v1234 = vunpack.c.h.b16 %v1075
    %v1235 = vunpack.c.l.b16 %v1076
    %v1236 = vunpack.c.h.b16 %v1076
    %v1237 = vunpack.c.l.b16 %v1077
    %v1238 = vunpack.c.h.b16 %v1077
    %v1239 = vunpack.c.l.b16 %v1078
    %v1240 = vunpack.c.h.b16 %v1078
    %v1241 = vunpack.c.l.b16 %v1079
    %v1242 = vunpack.c.h.b16 %v1079
    %v1243 = vunpack.c.l.b16 %v1080
    %v1244 = vunpack.c.h.b16 %v1080
    %v1245 = vunpack.c.l.b16 %v1081
    %v1246 = vunpack.c.h.b16 %v1081
    %v1247 = vunpack.c.l.b16 %v1082
    %v1248 = vunpack.c.h.b16 %v1082
    %v1249 = vunpack.c.l.b16 %v1083
    %v1250 = vunpack.c.h.b16 %v1083
    %v1251 = vunpack.c.l.b16 %v1084
    %v1252 = vunpack.c.h.b16 %v1084
    %v1253 = vunpack.c.l.b16 %v1085
    %v1254 = vunpack.c.h.b16 %v1085
    %v1255 = vunpack.c.l.b16 %v1086
    %v1256 = vunpack.c.h.b16 %v1086
    %v1257 = vunpack.c.l.b16 %v1087
    %v1258 = vunpack.c.h.b16 %v1087
    %v1259 = vunpack.c.l.b16 %v1088
    %v1260 = vunpack.c.h.b16 %v1088
    %v1261 = vunpack.c.l.b16 %v1089
    %v1262 = vunpack.c.h.b16 %v1089
    %v1263 = vunpack.c.l.b16 %v1090
    %v1264 = vunpack.c.h.b16 %v1090
    %v1265 = vunpack.c.l.b16 %v1091
    %v1266 = vunpack.c.h.b16 %v1091
    %v1267 = vunpack.c.l.b16 %v1092
    %v1268 = vunpack.c.h.b16 %v1092
    %v1269 = vunpack.c.l.b16 %v1093
    %v1270 = vunpack.c.h.b16 %v1093
    %v1271 = vunpack.c.l.b16 %v1094
    %v1272 = vunpack.c.h.b16 %v1094
    %v1273 = vunpack.c.l.b16 %v1095
    %v1274 = vunpack.c.h.b16 %v1095
    %v1275 = vunpack.c.l.b16 %v1096
    %v1276 = vunpack.c.h.b16 %v1096
    %v1277 = vunpack.c.l.b16 %v1097
    %v1278 = vunpack.c.h.b16 %v1097
    %v1279 = vunpack.c.l.b16 %v1098
    %v1280 = vunpack.c.h.b16 %v1098
    %v1281 = vunpack.c.l.b16 %v1099
    %v1282 = vunpack.c.h.b16 %v1099
    %v1283 = vunpack.c.l.b16 %v1100
    %v1284 = vunpack.c.h.b16 %v1100
    %v1285 = vunpack.c.l.b16 %v1101
    %v1286 = vunpack.c.h.b16 %v1101
    %v1287 = vunpack.c.l.b16 %v1102
    %v1288 = vunpack.c.h.b16 %v1102
    %v1289 = vunpack.c.l.b16 %v1103
    %v1290 = vunpack.c.h.b16 %v1103
    %v1291 = vunpack.c.l.b16 %v1104
    %v1292 = vunpack.c.h.b16 %v1104
    %v1293 = vunpack.c.l.b16 %v1105
    %v1294 = vunpack.c.h.b16 %v1105
    %v1295 = vunpack.c.l.b16 %v1106
    %v1296 = vunpack.c.h.b16 %v1106
    %v1297 = vunpack.c.l.b16 %v1107
    %v1298 = vunpack.c.h.b16 %v1107
    %v1299 = vunpack.c.l.b16 %v1108
    %v1300 = vunpack.c.h.b16 %v1108
    %v1301 = vunpack.c.l.b16 %v1109
    %v1302 = vunpack.c.h.b16 %v1109
    %v1303 = vunpack.c.l.b16 %v1110
    %v1304 = vunpack.c.h.b16 %v1110
    %v1305 = vunpack.c.l.b16 %v1111
    %v1306 = vunpack.c.h.b16 %v1111
    %v1307 = vunpack.c.l.b16 %v1112
    %v1308 = vunpack.c.h.b16 %v1112
    %v1309 = vunpack.c.l.b16 %v1113
    %v1310 = vunpack.c.h.b16 %v1113
    %v1311 = vunpack.c.l.b16 %v1114
    %v1312 = vunpack.c.h.b16 %v1114
    %v1313 = vunpack.c.l.b16 %v1115
    %v1314 = vunpack.c.h.b16 %v1115
    %v1315 = vunpack.c.l.b16 %v1116
    %v1316 = vunpack.c.h.b16 %v1116
    %v1317 = vunpack.c.l.b16 %v1117
    %v1318 = vunpack.c.h.b16 %v1117
    %v1319 = vunpack.c.l.b16 %v1118
    %v1320 = vunpack.c.h.b16 %v1118
    %v1321 = vunpack.c.l.b16 %v1119
    %v1322 = vunpack.c.h.b16 %v1119
    %v1323 = vunpack.c.l.b16 %v1120
    %v1324 = vunpack.c.h.b16 %v1120
    %v1325 = vpack.c.b16 %v1199, %v1197
    %v1326 = vpack.c.b16 %v1200, %v1198
    %v1327 = vpack.c.b16 %v1203, %v1201
    %v1328 = vpack.c.b16 %v1204, %v1202
    %v1329 = vpack.c.b16 %v1207, %v1205
    %v1330 = vpack.c.b16 %v1208, %v1206
    %v1331 = vpack.c.b16 %v1211, %v1209
    %v1332 = vpack.c.b16 %v1212, %v1210
    %v1333 = vpack.c.b16 %v1215, %v1213
    %v1334 = vpack.c.b16 %v1216, %v1214
    %v1335 = vpack.c.b16 %v1219, %v1217
    %v1336 = vpack.c.b16 %v1220, %v1218
    %v1337 = vpack.c.b16 %v1223, %v1221
    %v1338 = vpack.c.b16 %v1224, %v1222
    %v1339 = vpack.c.b16 %v1227, %v1225
    %v1340 = vpack.c.b16 %v1228, %v1226
    %v1341 = vpack.c.b16 %v1231, %v1229
    %v1342 = vpack.c.b16 %v1232, %v1230
    %v1343 = vpack.c.b16 %v1235, %v1233
    %v1344 = vpack.c.b16 %v1236, %v1234
    %v1345 = vpack.c.b16 %v1239, %v1237
    %v1346 = vpack.c.b16 %v1240, %v1238
    %v1347 = vpack.c.b16 %v1243, %v1241
    %v1348 = vpack.c.b16 %v1244, %v1242
    %v1349 = vpack.c.b16 %v1247, %v1245
    %v1350 = vpack.c.b16 %v1248, %v1246
    %v1351 = vpack.c.b16 %v1251, %v1249
    %v1352 = vpack.c.b16 %v1252, %v1250
    %v1353 = vpack.c.b16 %v1255, %v1253
    %v1354 = vpack.c.b16 %v1256, %v1254
    %v1355 = vpack.c.b16 %v1259, %v1257
    %v1356 = vpack.c.b16 %v1260, %v1258
    %v1357 = vpack.c.b16 %v1263, %v1261
    %v1358 = vpack.c.b16 %v1264, %v1262
    %v1359 = vpack.c.b16 %v1267, %v1265
    %v1360 = vpack.c.b16 %v1268, %v1266
    %v1361 = vpack.c.b16 %v1271, %v1269
    %v1362 = vpack.c.b16 %v1272, %v1270
    %v1363 = vpack.c.b16 %v1275, %v1273
    %v1364 = vpack.c.b16 %v1276, %v1274
    %v1365 = vpack.c.b16 %v1279, %v1277
    %v1366 = vpack.c.b16 %v1280, %v1278
    %v1367 = vpack.c.b16 %v1283, %v1281
    %v1368 = vpack.c.b16 %v1284, %v1282
    %v1369 = vpack.c.b16 %v1287, %v1285
    %v1370 = vpack.c.b16 %v1288, %v1286
    %v1371 = vpack.c.b16 %v1291, %v1289
    %v1372 = vpack.c.b16 %v1292, %v1290
    %v1373 = vpack.c.b16 %v1295, %v1293
    %v1374 = vpack.c.b16 %v1296, %v1294
    %v1375 = vpack.c.b16 %v1299, %v1297
    %v1376 = vpack.c.b16 %v1300, %v1298
    %v1377 = vpack.c.b16 %v1303, %v1301
    %v1378 = vpack.c.b16 %v1304, %v1302
    %v1379 = vpack.c.b16 %v1307, %v1305
    %v1380 = vpack.c.b16 %v1308, %v1306
    %v1381 = vpack.c.b16 %v1311, %v1309
    %v1382 = vpack.c.b16 %v1312, %v1310
    %v1383 = vpack.c.b16 %v1315, %v1313
    %v1384 = vpack.c.b16 %v1316, %v1314
    %v1385 = vpack.c.b16 %v1319, %v1317
    %v1386 = vpack.c.b16 %v1320, %v1318
    %v1387 = vpack.c.b16 %v1323, %v1321
    %v1388 = vpack.c.b16 %v1324, %v1322
    %1453 = vmatprep.subr.bf16.mxu0 %v1326
    %1454 = vmatpush1.bf16.msra.mxu0 %v1325
    %1455 = vmatprep.subr.bf16.mxu0 %v1328
    %1456 = vmatpush1.bf16.msra.mxu0 %v1327
    %1457 = vmatprep.subr.bf16.mxu0 %v1330
    %1458 = vmatpush1.bf16.msra.mxu0 %v1329
    %1459 = vmatprep.subr.bf16.mxu0 %v1332
    %1460 = vmatpush1.bf16.msra.mxu0 %v1331
    %1461 = vmatprep.subr.bf16.mxu0 %v1334
    %1462 = vmatpush1.bf16.msra.mxu0 %v1333
    %1463 = vmatprep.subr.bf16.mxu0 %v1336
    %1464 = vmatpush1.bf16.msra.mxu0 %v1335
    %1465 = vmatprep.subr.bf16.mxu0 %v1338
    %1466 = vmatpush1.bf16.msra.mxu0 %v1337
    %1467 = vmatprep.subr.bf16.mxu0 %v1340
    %1468 = vmatpush1.bf16.msra.mxu0 %v1339
    %1469 = vmatprep.subr.bf16.mxu0 %v1342
    %1470 = vmatpush1.bf16.msra.mxu0 %v1341
    %1471 = vmatprep.subr.bf16.mxu0 %v1344
    %1472 = vmatpush1.bf16.msra.mxu0 %v1343
    %1473 = vmatprep.subr.bf16.mxu0 %v1346
    %1474 = vmatpush1.bf16.msra.mxu0 %v1345
    %1475 = vmatprep.subr.bf16.mxu0 %v1348
    %1476 = vmatpush1.bf16.msra.mxu0 %v1347
    %1477 = vmatprep.subr.bf16.mxu0 %v1350
    %1478 = vmatpush1.bf16.msra.mxu0 %v1349
    %1479 = vmatprep.subr.bf16.mxu0 %v1352
    %1480 = vmatpush1.bf16.msra.mxu0 %v1351
    %1481 = vmatprep.subr.bf16.mxu0 %v1354
    %1482 = vmatpush1.bf16.msra.mxu0 %v1353
    %1483 = vmatprep.subr.bf16.mxu0 %v1356
    %1484 = vmatpush1.bf16.msra.mxu0 %v1355
    %1485 = vmatprep.mubr.bf16.mxu0 %v1026
    %1486 = vmatmul.mubr.bf16.gmra.mrb[0].mxu0 %v1025
    %v1487 = vpop.f32.mrb[0].mxu0
    %v1488 = vadd.f32 %v1126, %v1487
    %v1489 = vpop.f32.mrb[0].mxu0
    %v1490 = vadd.f32 %v1130, %v1489
    %v1491 = vpop.f32.mrb[0].mxu0
    %v1492 = vadd.f32 %v1126, %v1491
    %v1493 = vpop.f32.mrb[0].mxu0
    %v1494 = vadd.f32 %v1130, %v1493
    %1495 = vmatprep.mubr.bf16.mxu0 %v1030
    %1496 = vmatmul.mubr.bf16.gmra.mrb[0].mxu0 %v1029
    %v1497 = vpop.f32.mrb[0].mxu0
    %v1498 = vadd.f32 %v1126, %v1497
    %v1499 = vpop.f32.mrb[0].mxu0
    %v1500 = vadd.f32 %v1130, %v1499
    %v1501 = vpop.f32.mrb[0].mxu0
    %v1502 = vadd.f32 %v1126, %v1501
    %v1503 = vpop.f32.mrb[0].mxu0
    %v1504 = vadd.f32 %v1130, %v1503
    %1505 = vmatprep.mubr.bf16.mxu0 %v1034
    %1506 = vmatmul.mubr.bf16.gmra.mrb[0].mxu0 %v1033
    %v1507 = vpop.f32.mrb[0].mxu0
    %v1508 = vadd.f32 %v1126, %v1507
    %v1509 = vpop.f32.mrb[0].mxu0
    %v1510 = vadd.f32 %v1130, %v1509
    %v1511 = vpop.f32.mrb[0].mxu0
    %v1512 = vadd.f32 %v1126, %v1511
    %v1513 = vpop.f32.mrb[0].mxu0
    %v1514 = vadd.f32 %v1130, %v1513
    %1515 = vmatprep.mubr.bf16.mxu0 %v1038
    %1516 = vmatmul.mubr.bf16.gmra.mrb[0].mxu0 %v1037
    %v1517 = vpop.f32.mrb[0].mxu0
    %v1518 = vadd.f32 %v1126, %v1517
    %v1519 = vpop.f32.mrb[0].mxu0
    %v1520 = vadd.f32 %v1130, %v1519
    %v1521 = vpop.f32.mrb[0].mxu0
    %v1522 = vadd.f32 %v1126, %v1521
    %v1523 = vpop.f32.mrb[0].mxu0
    %v1524 = vadd.f32 %v1130, %v1523
    %1525 = vmatprep.mubr.bf16.mxu0 %v1042
    %1526 = vmatmul.mubr.bf16.gmra.mrb[0].mxu0 %v1041
    %v1527 = vpop.f32.mrb[0].mxu0
    %v1528 = vadd.f32 %v1126, %v1527
    %v1529 = vpop.f32.mrb[0].mxu0
    %v1530 = vadd.f32 %v1130, %v1529
    %v1531 = vpop.f32.mrb[0].mxu0
    %v1532 = vadd.f32 %v1126, %v1531
    %v1533 = vpop.f32.mrb[0].mxu0
    %v1534 = vadd.f32 %v1130, %v1533
    %1535 = vmatprep.mubr.bf16.mxu0 %v1046
    %1536 = vmatmul.mubr.bf16.gmra.mrb[0].mxu0 %v1045
    %v1537 = vpop.f32.mrb[0].mxu0
    %v1538 = vadd.f32 %v1126, %v1537
    %v1539 = vpop.f32.mrb[0].mxu0
    %v1540 = vadd.f32 %v1130, %v1539
    %v1541 = vpop.f32.mrb[0].mxu0
    %v1542 = vadd.f32 %v1126, %v1541
    %v1543 = vpop.f32.mrb[0].mxu0
    %v1544 = vadd.f32 %v1130, %v1543
    %1545 = vmatprep.mubr.bf16.mxu0 %v1050
    %1546 = vmatmul.mubr.bf16.gmra.mrb[0].mxu0 %v1049
    %v1547 = vpop.f32.mrb[0].mxu0
    %v1548 = vadd.f32 %v1126, %v1547
    %v1549 = vpop.f32.mrb[0].mxu0
    %v1550 = vadd.f32 %v1130, %v1549
    %v1551 = vpop.f32.mrb[0].mxu0
    %v1552 = vadd.f32 %v1126, %v1551
    %v1553 = vpop.f32.mrb[0].mxu0
    %v1554 = vadd.f32 %v1130, %v1553
    %1555 = vmatprep.mubr.bf16.mxu0 %v1054
    %1556 = vmatmul.mubr.bf16.gmra.mrb[0].mxu0 %v1053
    %v1557 = vpop.f32.mrb[0].mxu0
    %v1558 = vadd.f32 %v1126, %v1557
    %v1559 = vpop.f32.mrb[0].mxu0
    %v1560 = vadd.f32 %v1130, %v1559
    %v1561 = vpop.f32.mrb[0].mxu0
    %v1562 = vadd.f32 %v1126, %v1561
    %v1563 = vpop.f32.mrb[0].mxu0
    %v1564 = vadd.f32 %v1130, %v1563
    %1565 = vdwg.mxu0
    %1566 = vmatprep.subr.bf16.mxu0 %v1358
    %1567 = vmatpush1.bf16.msra.mxu0 %v1357
    %1568 = vmatprep.subr.bf16.mxu0 %v1360
    %1569 = vmatpush1.bf16.msra.mxu0 %v1359
    %1570 = vmatprep.subr.bf16.mxu0 %v1362
    %1571 = vmatpush1.bf16.msra.mxu0 %v1361
    %1572 = vmatprep.subr.bf16.mxu0 %v1364
    %1573 = vmatpush1.bf16.msra.mxu0 %v1363
    %1574 = vmatprep.subr.bf16.mxu0 %v1366
    %1575 = vmatpush1.bf16.msra.mxu0 %v1365
    %1576 = vmatprep.subr.bf16.mxu0 %v1368
    %1577 = vmatpush1.bf16.msra.mxu0 %v1367
    %1578 = vmatprep.subr.bf16.mxu0 %v1370
    %1579 = vmatpush1.bf16.msra.mxu0 %v1369
    %1580 = vmatprep.subr.bf16.mxu0 %v1372
    %1581 = vmatpush1.bf16.msra.mxu0 %v1371
    %1582 = vmatprep.subr.bf16.mxu0 %v1374
    %1583 = vmatpush1.bf16.msra.mxu0 %v1373
    %1584 = vmatprep.subr.bf16.mxu0 %v1376
    %1585 = vmatpush1.bf16.msra.mxu0 %v1375
    %1586 = vmatprep.subr.bf16.mxu0 %v1378
    %1587 = vmatpush1.bf16.msra.mxu0 %v1377
    %1588 = vmatprep.subr.bf16.mxu0 %v1380
    %1589 = vmatpush1.bf16.msra.mxu0 %v1379
    %1590 = vmatprep.subr.bf16.mxu0 %v1382
    %1591 = vmatpush1.bf16.msra.mxu0 %v1381
    %1592 = vmatprep.subr.bf16.mxu0 %v1384
    %1593 = vmatpush1.bf16.msra.mxu0 %v1383
    %1594 = vmatprep.subr.bf16.mxu0 %v1386
    %1595 = vmatpush1.bf16.msra.mxu0 %v1385
    %1596 = vmatprep.subr.bf16.mxu0 %v1388
    %1597 = vmatpush1.bf16.msra.mxu0 %v1387
    %1598 = vmatprep.mubr.bf16.mxu0 %v1028
    %1599 = vmatmul.mubr.bf16.gmra.mrb[0].mxu0 %v1027
    %v1600 = vpop.f32.mrb[0].mxu0
    %v1601 = vadd.f32 %v1488, %v1600
    %v1602 = vpop.f32.mrb[0].mxu0
    %v1603 = vadd.f32 %v1490, %v1602
    %v1604 = vpop.f32.mrb[0].mxu0
    %v1605 = vadd.f32 %v1492, %v1604
    %v1606 = vpop.f32.mrb[0].mxu0
    %v1607 = vadd.f32 %v1494, %v1606
    %1608 = vmatprep.mubr.bf16.mxu0 %v1032
    %1609 = vmatmul.mubr.bf16.gmra.mrb[0].mxu0 %v1031
    %v1610 = vpop.f32.mrb[0].mxu0
    %v1611 = vadd.f32 %v1498, %v1610
    %v1612 = vpop.f32.mrb[0].mxu0
    %v1613 = vadd.f32 %v1500, %v1612
    %v1614 = vpop.f32.mrb[0].mxu0
    %v1615 = vadd.f32 %v1502, %v1614
    %v1616 = vpop.f32.mrb[0].mxu0
    %v1617 = vadd.f32 %v1504, %v1616
    %1618 = vmatprep.mubr.bf16.mxu0 %v1036
    %1619 = vmatmul.mubr.bf16.gmra.mrb[0].mxu0 %v1035
    %v1620 = vpop.f32.mrb[0].mxu0
    %v1621 = vadd.f32 %v1508, %v1620
    %v1622 = vpop.f32.mrb[0].mxu0
    %v1623 = vadd.f32 %v1510, %v1622
    %v1624 = vpop.f32.mrb[0].mxu0
    %v1625 = vadd.f32 %v1512, %v1624
    %v1626 = vpop.f32.mrb[0].mxu0
    %v1627 = vadd.f32 %v1514, %v1626
    %1628 = vmatprep.mubr.bf16.mxu0 %v1040
    %1629 = vmatmul.mubr.bf16.gmra.mrb[0].mxu0 %v1039
    %v1630 = vpop.f32.mrb[0].mxu0
    %v1631 = vadd.f32 %v1518, %v1630
    %v1632 = vpop.f32.mrb[0].mxu0
    %v1633 = vadd.f32 %v1520, %v1632
    %v1634 = vpop.f32.mrb[0].mxu0
    %v1635 = vadd.f32 %v1522, %v1634
    %v1636 = vpop.f32.mrb[0].mxu0
    %v1637 = vadd.f32 %v1524, %v1636
    %1638 = vmatprep.mubr.bf16.mxu0 %v1044
    %1639 = vmatmul.mubr.bf16.gmra.mrb[0].mxu0 %v1043
    %v1640 = vpop.f32.mrb[0].mxu0
    %v1641 = vadd.f32 %v1528, %v1640
    %v1642 = vpop.f32.mrb[0].mxu0
    %v1643 = vadd.f32 %v1530, %v1642
    %v1644 = vpop.f32.mrb[0].mxu0
    %v1645 = vadd.f32 %v1532, %v1644
    %v1646 = vpop.f32.mrb[0].mxu0
    %v1647 = vadd.f32 %v1534, %v1646
    %1648 = vmatprep.mubr.bf16.mxu0 %v1048
    %1649 = vmatmul.mubr.bf16.gmra.mrb[0].mxu0 %v1047
    %v1650 = vpop.f32.mrb[0].mxu0
    %v1651 = vadd.f32 %v1538, %v1650
    %v1652 = vpop.f32.mrb[0].mxu0
    %v1653 = vadd.f32 %v1540, %v1652
    %v1654 = vpop.f32.mrb[0].mxu0
    %v1655 = vadd.f32 %v1542, %v1654
    %v1656 = vpop.f32.mrb[0].mxu0
    %v1657 = vadd.f32 %v1544, %v1656
    %1658 = vmatprep.mubr.bf16.mxu0 %v1052
    %1659 = vmatmul.mubr.bf16.gmra.mrb[0].mxu0 %v1051
    %v1660 = vpop.f32.mrb[0].mxu0
    %v1661 = vadd.f32 %v1548, %v1660
    %v1662 = vpop.f32.mrb[0].mxu0
    %v1663 = vadd.f32 %v1550, %v1662
    %v1664 = vpop.f32.mrb[0].mxu0
    %v1665 = vadd.f32 %v1552, %v1664
    %v1666 = vpop.f32.mrb[0].mxu0
    %v1667 = vadd.f32 %v1554, %v1666
    %1668 = vmatprep.mubr.bf16.mxu0 %v1056
    %1669 = vmatmul.mubr.bf16.gmra.mrb[0].mxu0 %v1055
    %v1670 = vpop.f32.mrb[0].mxu0
    %v1671 = vadd.f32 %v1558, %v1670
    %v1672 = vpop.f32.mrb[0].mxu0
    %v1673 = vadd.f32 %v1560, %v1672
    %v1674 = vpop.f32.mrb[0].mxu0
    %v1675 = vadd.f32 %v1562, %v1674
    %v1676 = vpop.f32.mrb[0].mxu0
    %v1677 = vadd.f32 %v1564, %v1676
    %1678 = vdwg.mxu0
    %v1679 = vmax.f32 %v1601, 0.0
    %v1680 = vmax.f32 %v1603, 0.0
    %v1681 = vmax.f32 %v1605, 0.0
    %v1682 = vmax.f32 %v1607, 0.0
    %v1683 = vmax.f32 %v1611, 0.0
    %v1684 = vmax.f32 %v1613, 0.0
    %v1685 = vmax.f32 %v1615, 0.0
    %v1686 = vmax.f32 %v1617, 0.0
    %v1687 = vmax.f32 %v1621, 0.0
    %v1688 = vmax.f32 %v1623, 0.0
    %v1689 = vmax.f32 %v1625, 0.0
    %v1690 = vmax.f32 %v1627, 0.0
    %v1691 = vmax.f32 %v1631, 0.0
    %v1692 = vmax.f32 %v1633, 0.0
    %v1693 = vmax.f32 %v1635, 0.0
    %v1694 = vmax.f32 %v1637, 0.0
    %v1695 = vmax.f32 %v1641, 0.0
    %v1696 = vmax.f32 %v1643, 0.0
    %v1697 = vmax.f32 %v1645, 0.0
    %v1698 = vmax.f32 %v1647, 0.0
    %v1699 = vmax.f32 %v1651, 0.0
    %v1700 = vmax.f32 %v1653, 0.0
    %v1701 = vmax.f32 %v1655, 0.0
    %v1702 = vmax.f32 %v1657, 0.0
    %v1703 = vmax.f32 %v1661, 0.0
    %v1704 = vmax.f32 %v1663, 0.0
    %v1705 = vmax.f32 %v1665, 0.0
    %v1706 = vmax.f32 %v1667, 0.0
    %v1707 = vmax.f32 %v1671, 0.0
    %v1708 = vmax.f32 %v1673, 0.0
    %v1709 = vmax.f32 %v1675, 0.0
    %v1710 = vmax.f32 %v1677, 0.0
    %v1712 = vrot.slane %v1710, 7
    %v1729 = vrot.slane %v1680, 7
    %v1730 = vrot.slane %v1682, 7
    %v1731 = vsel %vm815, %v1729, %v1730
    %v1732 = vrot.slane %v1684, 7
    %v1733 = vsel %vm815, %v1730, %v1732
    %v1734 = vrot.slane %v1686, 7
    %v1735 = vsel %vm815, %v1732, %v1734
    %v1736 = vrot.slane %v1688, 7
    %v1737 = vsel %vm815, %v1734, %v1736
    %v1738 = vrot.slane %v1690, 7
    %v1739 = vsel %vm815, %v1736, %v1738
    %v1740 = vrot.slane %v1692, 7
    %v1741 = vsel %vm815, %v1738, %v1740
    %v1742 = vrot.slane %v1694, 7
    %v1743 = vsel %vm815, %v1740, %v1742
    %v1744 = vrot.slane %v1696, 7
    %v1745 = vsel %vm815, %v1742, %v1744
    %v1746 = vrot.slane %v1698, 7
    %v1747 = vsel %vm815, %v1744, %v1746
    %v1748 = vrot.slane %v1700, 7
    %v1749 = vsel %vm815, %v1746, %v1748
    %v1750 = vrot.slane %v1702, 7
    %v1751 = vsel %vm815, %v1748, %v1750
    %v1752 = vrot.slane %v1704, 7
    %v1753 = vsel %vm815, %v1750, %v1752
    %v1754 = vrot.slane %v1706, 7
    %v1755 = vsel %vm815, %v1752, %v1754
    %v1756 = vrot.slane %v1708, 7
    %v1757 = vsel %vm815, %v1754, %v1756
    %v1758 = vsel %vm815, %v1756, %v1712
    %v1775 = vsel %vm815, %v1712, %v1729
    %v1776 = vsel %vm879, 0.0, %v1775
    %v1777 = vsel %vm880, 0.0, %v1731
    %v1778 = vsel %vm881, 0.0, %v1733
    %v1779 = vsel %vm882, 0.0, %v1735
    %v1780 = vsel %vm883, 0.0, %v1737
    %v1781 = vsel %vm884, 0.0, %v1739
    %v1782 = vsel %vm885, 0.0, %v1741
    %v1783 = vsel %vm886, 0.0, %v1743
    %v1784 = vsel %vm887, 0.0, %v1745
    %v1785 = vsel %vm888, 0.0, %v1747
    %v1786 = vsel %vm889, 0.0, %v1749
    %v1787 = vsel %vm890, 0.0, %v1751
    %v1788 = vsel %vm891, 0.0, %v1753
    %v1789 = vsel %vm892, 0.0, %v1755
    %v1790 = vsel %vm893, 0.0, %v1757
    %v1791 = vsel %vm894, 0.0, %v1758
    %v1808 = vrot.slane %v1679, 1
    %v1809 = vrot.slane %v1681, 1
    %v1810 = vsel %vm927, %v1808, %v1809
    %v1811 = vrot.slane %v1683, 1
    %v1812 = vsel %vm927, %v1809, %v1811
    %v1813 = vrot.slane %v1685, 1
    %v1814 = vsel %vm927, %v1811, %v1813
    %v1815 = vrot.slane %v1687, 1
    %v1816 = vsel %vm927, %v1813, %v1815
    %v1817 = vrot.slane %v1689, 1
    %v1818 = vsel %vm927, %v1815, %v1817
    %v1819 = vrot.slane %v1691, 1
    %v1820 = vsel %vm927, %v1817, %v1819
    %v1821 = vrot.slane %v1693, 1
    %v1822 = vsel %vm927, %v1819, %v1821
    %v1823 = vrot.slane %v1695, 1
    %v1824 = vsel %vm927, %v1821, %v1823
    %v1825 = vrot.slane %v1697, 1
    %v1826 = vsel %vm927, %v1823, %v1825
    %v1827 = vrot.slane %v1699, 1
    %v1828 = vsel %vm927, %v1825, %v1827
    %v1829 = vrot.slane %v1701, 1
    %v1830 = vsel %vm927, %v1827, %v1829
    %v1831 = vrot.slane %v1703, 1
    %v1832 = vsel %vm927, %v1829, %v1831
    %v1833 = vrot.slane %v1705, 1
    %v1834 = vsel %vm927, %v1831, %v1833
    %v1835 = vrot.slane %v1707, 1
    %v1836 = vsel %vm927, %v1833, %v1835
    %v1837 = vrot.slane %v1709, 1
    %v1838 = vsel %vm927, %v1835, %v1837
    %v1856 = vsel %vm927, %v1837, %v1808
    %v1857 = vsel %vm993, 0.0, %v1810
    %v1858 = vsel %vm994, 0.0, %v1812
    %v1859 = vsel %vm995, 0.0, %v1814
    %v1860 = vsel %vm996, 0.0, %v1816
    %v1861 = vsel %vm997, 0.0, %v1818
    %v1862 = vsel %vm998, 0.0, %v1820
    %v1863 = vsel %vm999, 0.0, %v1822
    %v1864 = vsel %vm1000, 0.0, %v1824
    %v1865 = vsel %vm1001, 0.0, %v1826
    %v1866 = vsel %vm1002, 0.0, %v1828
    %v1867 = vsel %vm1003, 0.0, %v1830
    %v1868 = vsel %vm1004, 0.0, %v1832
    %v1869 = vsel %vm1005, 0.0, %v1834
    %v1870 = vsel %vm1006, 0.0, %v1836
    %v1871 = vsel %vm1007, 0.0, %v1838
    %v1872 = vsel %vm1008, 0.0, %v1856
    %v1873 = vpack.c.bf16 %v1681, %v1679
    %v1874 = vpack.c.bf16 %v1682, %v1680
    %v1875 = vpack.c.bf16 %v1777, %v1776
    %v1876 = vpack.c.bf16 %v1858, %v1857
    %v1877 = vpack.c.bf16 %v1685, %v1683
    %v1878 = vpack.c.bf16 %v1686, %v1684
    %v1879 = vpack.c.bf16 %v1779, %v1778
    %v1880 = vpack.c.bf16 %v1860, %v1859
    %v1881 = vpack.c.bf16 %v1689, %v1687
    %v1882 = vpack.c.bf16 %v1690, %v1688
    %v1883 = vpack.c.bf16 %v1781, %v1780
    %v1884 = vpack.c.bf16 %v1862, %v1861
    %v1885 = vpack.c.bf16 %v1693, %v1691
    %v1886 = vpack.c.bf16 %v1694, %v1692
    %v1887 = vpack.c.bf16 %v1783, %v1782
    %v1888 = vpack.c.bf16 %v1864, %v1863
    %v1889 = vpack.c.bf16 %v1697, %v1695
    %v1890 = vpack.c.bf16 %v1698, %v1696
    %v1891 = vpack.c.bf16 %v1785, %v1784
    %v1892 = vpack.c.bf16 %v1866, %v1865
    %v1893 = vpack.c.bf16 %v1701, %v1699
    %v1894 = vpack.c.bf16 %v1702, %v1700
    %v1895 = vpack.c.bf16 %v1787, %v1786
    %v1896 = vpack.c.bf16 %v1868, %v1867
    %v1897 = vpack.c.bf16 %v1705, %v1703
    %v1898 = vpack.c.bf16 %v1706, %v1704
    %v1899 = vpack.c.bf16 %v1789, %v1788
    %v1900 = vpack.c.bf16 %v1870, %v1869
    %v1901 = vpack.c.bf16 %v1709, %v1707
    %v1902 = vpack.c.bf16 %v1710, %v1708
    %v1903 = vpack.c.bf16 %v1791, %v1790
    %v1904 = vpack.c.bf16 %v1872, %v1871
    %v1905 = vld [vmem:[%s7] sm:$0xf]
    %v1906 = vld [vmem:[%s7 + $0x4] sm:$0xf]
    %v1907 = vld [vmem:[%s7 + $0x8] sm:$0xf]
    %v1908 = vld [vmem:[%s7 + $0xc] sm:$0xf]
    %v1909 = vld [vmem:[%s7 + $0x10] sm:$0xf]
    %v1910 = vld [vmem:[%s7 + $0x14] sm:$0xf]
    %v1911 = vld [vmem:[%s7 + $0x18] sm:$0xf]
    %v1912 = vld [vmem:[%s7 + $0x1c] sm:$0xf]
    %v1913 = vld [vmem:[%s7 + $0x20] sm:$0xf]
    %v1914 = vld [vmem:[%s7 + $0x24] sm:$0xf]
    %v1915 = vld [vmem:[%s7 + $0x28] sm:$0xf]
    %v1916 = vld [vmem:[%s7 + $0x2c] sm:$0xf]
    %v1917 = vld [vmem:[%s7 + $0x30] sm:$0xf]
    %v1918 = vld [vmem:[%s7 + $0x34] sm:$0xf]
    %v1919 = vld [vmem:[%s7 + $0x38] sm:$0xf]
    %v1920 = vld [vmem:[%s7 + $0x3c] sm:$0xf]
    %v1921 = vld [vmem:[%s7 + $0x40] sm:$0xf]
    %v1922 = vld [vmem:[%s7 + $0x44] sm:$0xf]
    %v1923 = vld [vmem:[%s7 + $0x48] sm:$0xf]
    %v1924 = vld [vmem:[%s7 + $0x4c] sm:$0xf]
    %v1925 = vld [vmem:[%s7 + $0x50] sm:$0xf]
    %v1926 = vld [vmem:[%s7 + $0x54] sm:$0xf]
    %v1927 = vld [vmem:[%s7 + $0x58] sm:$0xf]
    %v1928 = vld [vmem:[%s7 + $0x5c] sm:$0xf]
    %v1929 = vld [vmem:[%s7 + $0x60] sm:$0xf]
    %v1930 = vld [vmem:[%s7 + $0x64] sm:$0xf]
    %v1931 = vld [vmem:[%s7 + $0x68] sm:$0xf]
    %v1932 = vld [vmem:[%s7 + $0x6c] sm:$0xf]
    %v1933 = vld [vmem:[%s7 + $0x70] sm:$0xf]
    %v1934 = vld [vmem:[%s7 + $0x74] sm:$0xf]
    %v1935 = vld [vmem:[%s7 + $0x78] sm:$0xf]
    %v1936 = vld [vmem:[%s7 + $0x7c] sm:$0xf]
    %v1937 = vld [vmem:[%s7 + $0x80] sm:$0xf]
    %v1938 = vld [vmem:[%s7 + $0x84] sm:$0xf]
    %v1939 = vld [vmem:[%s7 + $0x88] sm:$0xf]
    %v1940 = vld [vmem:[%s7 + $0x8c] sm:$0xf]
    %v1941 = vld [vmem:[%s7 + $0x90] sm:$0xf]
    %v1942 = vld [vmem:[%s7 + $0x94] sm:$0xf]
    %v1943 = vld [vmem:[%s7 + $0x98] sm:$0xf]
    %v1944 = vld [vmem:[%s7 + $0x9c] sm:$0xf]
    %v1945 = vld [vmem:[%s7 + $0xa0] sm:$0xf]
    %v1946 = vld [vmem:[%s7 + $0xa4] sm:$0xf]
    %v1947 = vld [vmem:[%s7 + $0xa8] sm:$0xf]
    %v1948 = vld [vmem:[%s7 + $0xac] sm:$0xf]
    %v1949 = vld [vmem:[%s7 + $0xb0] sm:$0xf]
    %v1950 = vld [vmem:[%s7 + $0xb4] sm:$0xf]
    %v1951 = vld [vmem:[%s7 + $0xb8] sm:$0xf]
    %v1952 = vld [vmem:[%s7 + $0xbc] sm:$0xf]
    %v1953 = vld [vmem:[%s7 + $0xc0] sm:$0xf]
    %v1954 = vld [vmem:[%s7 + $0xc4] sm:$0xf]
    %v1955 = vld [vmem:[%s7 + $0xc8] sm:$0xf]
    %v1956 = vld [vmem:[%s7 + $0xcc] sm:$0xf]
    %v1957 = vld [vmem:[%s7 + $0xd0] sm:$0xf]
    %v1958 = vld [vmem:[%s7 + $0xd4] sm:$0xf]
    %v1959 = vld [vmem:[%s7 + $0xd8] sm:$0xf]
    %v1960 = vld [vmem:[%s7 + $0xdc] sm:$0xf]
    %v1961 = vld [vmem:[%s7 + $0xe0] sm:$0xf]
    %v1962 = vld [vmem:[%s7 + $0xe4] sm:$0xf]
    %v1963 = vld [vmem:[%s7 + $0xe8] sm:$0xf]
    %v1964 = vld [vmem:[%s7 + $0xec] sm:$0xf]
    %v1965 = vld [vmem:[%s7 + $0xf0] sm:$0xf]
    %v1966 = vld [vmem:[%s7 + $0xf4] sm:$0xf]
    %v1967 = vld [vmem:[%s7 + $0xf8] sm:$0xf]
    %v1968 = vld [vmem:[%s7 + $0xfc] sm:$0xf]
    %v1969 = vld [vmem:[#allocation10] sm:$0x1]
    %v1971 = vlaneseq
    %v1972 = vshrl.u32 %v1971, 7
    %v1973 = vsub.s32 0, %v1972
    %v1974 = vrot.slane %v1969, %v1973
    %v2040 = vunpack.c.l.b16 %v1905
    %v2041 = vunpack.c.l.b16 %v1906
    %v2042 = vunpack.c.l.b16 %v1907
    %v2043 = vunpack.c.l.b16 %v1908
    %v2044 = vunpack.c.l.b16 %v1909
    %v2045 = vunpack.c.l.b16 %v1910
    %v2046 = vunpack.c.l.b16 %v1911
    %v2047 = vunpack.c.l.b16 %v1912
    %v2048 = vunpack.c.l.b16 %v1913
    %v2049 = vunpack.c.l.b16 %v1914
    %v2050 = vunpack.c.l.b16 %v1915
    %v2051 = vunpack.c.l.b16 %v1916
    %v2052 = vunpack.c.l.b16 %v1917
    %v2053 = vunpack.c.l.b16 %v1918
    %v2054 = vunpack.c.l.b16 %v1919
    %v2055 = vunpack.c.l.b16 %v1920
    %v2056 = vunpack.c.l.b16 %v1921
    %v2057 = vunpack.c.l.b16 %v1922
    %v2058 = vunpack.c.l.b16 %v1923
    %v2059 = vunpack.c.l.b16 %v1924
    %v2060 = vunpack.c.l.b16 %v1925
    %v2061 = vunpack.c.l.b16 %v1926
    %v2062 = vunpack.c.l.b16 %v1927
    %v2063 = vunpack.c.l.b16 %v1928
    %v2064 = vunpack.c.l.b16 %v1929
    %v2065 = vunpack.c.l.b16 %v1930
    %v2066 = vunpack.c.l.b16 %v1931
    %v2067 = vunpack.c.l.b16 %v1932
    %v2068 = vunpack.c.l.b16 %v1933
    %v2069 = vunpack.c.l.b16 %v1934
    %v2070 = vunpack.c.l.b16 %v1935
    %v2071 = vunpack.c.l.b16 %v1936
    %v2072 = vunpack.c.l.b16 %v1937
    %v2073 = vunpack.c.l.b16 %v1938
    %v2074 = vunpack.c.l.b16 %v1939
    %v2075 = vunpack.c.l.b16 %v1940
    %v2076 = vunpack.c.l.b16 %v1941
    %v2077 = vunpack.c.l.b16 %v1942
    %v2078 = vunpack.c.l.b16 %v1943
    %v2079 = vunpack.c.l.b16 %v1944
    %v2080 = vunpack.c.l.b16 %v1945
    %v2081 = vunpack.c.l.b16 %v1946
    %v2082 = vunpack.c.l.b16 %v1947
    %v2083 = vunpack.c.l.b16 %v1948
    %v2084 = vunpack.c.l.b16 %v1949
    %v2085 = vunpack.c.l.b16 %v1950
    %v2086 = vunpack.c.l.b16 %v1951
    %v2087 = vunpack.c.l.b16 %v1952
    %v2088 = vunpack.c.l.b16 %v1953
    %v2089 = vunpack.c.l.b16 %v1954
    %v2090 = vunpack.c.l.b16 %v1955
    %v2091 = vunpack.c.l.b16 %v1956
    %v2092 = vunpack.c.l.b16 %v1957
    %v2093 = vunpack.c.l.b16 %v1958
    %v2094 = vunpack.c.l.b16 %v1959
    %v2095 = vunpack.c.l.b16 %v1960
    %v2096 = vunpack.c.l.b16 %v1961
    %v2097 = vunpack.c.l.b16 %v1962
    %v2098 = vunpack.c.l.b16 %v1963
    %v2099 = vunpack.c.l.b16 %v1964
    %v2100 = vunpack.c.l.b16 %v1965
    %v2101 = vunpack.c.l.b16 %v1966
    %v2102 = vunpack.c.l.b16 %v1967
    %v2103 = vunpack.c.l.b16 %v1968
    %v2104 = vpack.c.b16 %v2041, %v2040
    %v2105 = vpack.c.b16 %v2043, %v2042
    %v2106 = vpack.c.b16 %v2045, %v2044
    %v2107 = vpack.c.b16 %v2047, %v2046
    %v2108 = vpack.c.b16 %v2049, %v2048
    %v2109 = vpack.c.b16 %v2051, %v2050
    %v2110 = vpack.c.b16 %v2053, %v2052
    %v2111 = vpack.c.b16 %v2055, %v2054
    %v2112 = vpack.c.b16 %v2057, %v2056
    %v2113 = vpack.c.b16 %v2059, %v2058
    %v2114 = vpack.c.b16 %v2061, %v2060
    %v2115 = vpack.c.b16 %v2063, %v2062
    %v2116 = vpack.c.b16 %v2065, %v2064
    %v2117 = vpack.c.b16 %v2067, %v2066
    %v2118 = vpack.c.b16 %v2069, %v2068
    %v2119 = vpack.c.b16 %v2071, %v2070
    %v2120 = vpack.c.b16 %v2073, %v2072
    %v2121 = vpack.c.b16 %v2075, %v2074
    %v2122 = vpack.c.b16 %v2077, %v2076
    %v2123 = vpack.c.b16 %v2079, %v2078
    %v2124 = vpack.c.b16 %v2081, %v2080
    %v2125 = vpack.c.b16 %v2083, %v2082
    %v2126 = vpack.c.b16 %v2085, %v2084
    %v2127 = vpack.c.b16 %v2087, %v2086
    %v2128 = vpack.c.b16 %v2089, %v2088
    %v2129 = vpack.c.b16 %v2091, %v2090
    %v2130 = vpack.c.b16 %v2093, %v2092
    %v2131 = vpack.c.b16 %v2095, %v2094
    %v2132 = vpack.c.b16 %v2097, %v2096
    %v2133 = vpack.c.b16 %v2099, %v2098
    %v2134 = vpack.c.b16 %v2101, %v2100
    %v2135 = vpack.c.b16 %v2103, %v2102
    %2168 = vmatprep.subr.bf16.mxu0 0
    %2169 = vmatpush1.bf16.msra.mxu0 %v2104
    %2170 = vmatprep.subr.bf16.mxu0 0
    %2171 = vmatpush1.bf16.msra.mxu0 %v2105
    %2172 = vmatprep.subr.bf16.mxu0 0
    %2173 = vmatpush1.bf16.msra.mxu0 %v2106
    %2174 = vmatprep.subr.bf16.mxu0 0
    %2175 = vmatpush1.bf16.msra.mxu0 %v2107
    %2176 = vmatprep.subr.bf16.mxu0 0
    %2177 = vmatpush1.bf16.msra.mxu0 %v2108
    %2178 = vmatprep.subr.bf16.mxu0 0
    %2179 = vmatpush1.bf16.msra.mxu0 %v2109
    %2180 = vmatprep.subr.bf16.mxu0 0
    %2181 = vmatpush1.bf16.msra.mxu0 %v2110
    %2182 = vmatprep.subr.bf16.mxu0 0
    %2183 = vmatpush1.bf16.msra.mxu0 %v2111
    %2184 = vmatprep.subr.bf16.mxu0 0
    %2185 = vmatpush1.bf16.msra.mxu0 %v2112
    %2186 = vmatprep.subr.bf16.mxu0 0
    %2187 = vmatpush1.bf16.msra.mxu0 %v2113
    %2188 = vmatprep.subr.bf16.mxu0 0
    %2189 = vmatpush1.bf16.msra.mxu0 %v2114
    %2190 = vmatprep.subr.bf16.mxu0 0
    %2191 = vmatpush1.bf16.msra.mxu0 %v2115
    %2192 = vmatprep.subr.bf16.mxu0 0
    %2193 = vmatpush1.bf16.msra.mxu0 %v2116
    %2194 = vmatprep.subr.bf16.mxu0 0
    %2195 = vmatpush1.bf16.msra.mxu0 %v2117
    %2196 = vmatprep.subr.bf16.mxu0 0
    %2197 = vmatpush1.bf16.msra.mxu0 %v2118
    %2198 = vmatprep.subr.bf16.mxu0 0
    %2199 = vmatpush1.bf16.msra.mxu0 %v2119
    %2200 = vmatprep.mubr.bf16.mxu0 %v1874
    %2201 = vmatmul.mubr.bf16.gmra.mrb[0].mxu0 %v1873
    %v2202 = vpop.f32.mrb[0].mxu0
    %v2203 = vadd.f32 %v1974, %v2202
    %v2204 = vpop.f32.mrb[0].mxu0
    %v2205 = vpop.f32.mrb[0].mxu0
    %v2206 = vadd.f32 %v1974, %v2205
    %v2207 = vpop.f32.mrb[0].mxu0
    %2208 = vmatprep.mubr.bf16.mxu0 %v1878
    %2209 = vmatmul.mubr.bf16.gmra.mrb[0].mxu0 %v1877
    %v2210 = vpop.f32.mrb[0].mxu0
    %v2211 = vadd.f32 %v1974, %v2210
    %v2212 = vpop.f32.mrb[0].mxu0
    %v2213 = vpop.f32.mrb[0].mxu0
    %v2214 = vadd.f32 %v1974, %v2213
    %v2215 = vpop.f32.mrb[0].mxu0
    %2216 = vmatprep.mubr.bf16.mxu0 %v1882
    %2217 = vmatmul.mubr.bf16.gmra.mrb[0].mxu0 %v1881
    %v2218 = vpop.f32.mrb[0].mxu0
    %v2219 = vadd.f32 %v1974, %v2218
    %v2220 = vpop.f32.mrb[0].mxu0
    %v2221 = vpop.f32.mrb[0].mxu0
    %v2222 = vadd.f32 %v1974, %v2221
    %v2223 = vpop.f32.mrb[0].mxu0
    %2224 = vmatprep.mubr.bf16.mxu0 %v1886
    %2225 = vmatmul.mubr.bf16.gmra.mrb[0].mxu0 %v1885
    %v2226 = vpop.f32.mrb[0].mxu0
    %v2227 = vadd.f32 %v1974, %v2226
    %v2228 = vpop.f32.mrb[0].mxu0
    %v2229 = vpop.f32.mrb[0].mxu0
    %v2230 = vadd.f32 %v1974, %v2229
    %v2231 = vpop.f32.mrb[0].mxu0
    %2232 = vmatprep.mubr.bf16.mxu0 %v1890
    %2233 = vmatmul.mubr.bf16.gmra.mrb[0].mxu0 %v1889
    %v2234 = vpop.f32.mrb[0].mxu0
    %v2235 = vadd.f32 %v1974, %v2234
    %v2236 = vpop.f32.mrb[0].mxu0
    %v2237 = vpop.f32.mrb[0].mxu0
    %v2238 = vadd.f32 %v1974, %v2237
    %v2239 = vpop.f32.mrb[0].mxu0
    %2240 = vmatprep.mubr.bf16.mxu0 %v1894
    %2241 = vmatmul.mubr.bf16.gmra.mrb[0].mxu0 %v1893
    %v2242 = vpop.f32.mrb[0].mxu0
    %v2243 = vadd.f32 %v1974, %v2242
    %v2244 = vpop.f32.mrb[0].mxu0
    %v2245 = vpop.f32.mrb[0].mxu0
    %v2246 = vadd.f32 %v1974, %v2245
    %v2247 = vpop.f32.mrb[0].mxu0
    %2248 = vmatprep.mubr.bf16.mxu0 %v1898
    %2249 = vmatmul.mubr.bf16.gmra.mrb[0].mxu0 %v1897
    %v2250 = vpop.f32.mrb[0].mxu0
    %v2251 = vadd.f32 %v1974, %v2250
    %v2252 = vpop.f32.mrb[0].mxu0
    %v2253 = vpop.f32.mrb[0].mxu0
    %v2254 = vadd.f32 %v1974, %v2253
    %v2255 = vpop.f32.mrb[0].mxu0
    %2256 = vmatprep.mubr.bf16.mxu0 %v1902
    %2257 = vmatmul.mubr.bf16.gmra.mrb[0].mxu0 %v1901
    %v2258 = vpop.f32.mrb[0].mxu0
    %v2259 = vadd.f32 %v1974, %v2258
    %v2260 = vpop.f32.mrb[0].mxu0
    %v2261 = vpop.f32.mrb[0].mxu0
    %v2262 = vadd.f32 %v1974, %v2261
    %v2263 = vpop.f32.mrb[0].mxu0
    %2264 = vdwg.mxu0
    %2265 = vmatprep.subr.bf16.mxu0 0
    %2266 = vmatpush1.bf16.msra.mxu0 %v2120
    %2267 = vmatprep.subr.bf16.mxu0 0
    %2268 = vmatpush1.bf16.msra.mxu0 %v2121
    %2269 = vmatprep.subr.bf16.mxu0 0
    %2270 = vmatpush1.bf16.msra.mxu0 %v2122
    %2271 = vmatprep.subr.bf16.mxu0 0
    %2272 = vmatpush1.bf16.msra.mxu0 %v2123
    %2273 = vmatprep.subr.bf16.mxu0 0
    %2274 = vmatpush1.bf16.msra.mxu0 %v2124
    %2275 = vmatprep.subr.bf16.mxu0 0
    %2276 = vmatpush1.bf16.msra.mxu0 %v2125
    %2277 = vmatprep.subr.bf16.mxu0 0
    %2278 = vmatpush1.bf16.msra.mxu0 %v2126
    %2279 = vmatprep.subr.bf16.mxu0 0
    %2280 = vmatpush1.bf16.msra.mxu0 %v2127
    %2281 = vmatprep.subr.bf16.mxu0 0
    %2282 = vmatpush1.bf16.msra.mxu0 %v2128
    %2283 = vmatprep.subr.bf16.mxu0 0
    %2284 = vmatpush1.bf16.msra.mxu0 %v2129
    %2285 = vmatprep.subr.bf16.mxu0 0
    %2286 = vmatpush1.bf16.msra.mxu0 %v2130
    %2287 = vmatprep.subr.bf16.mxu0 0
    %2288 = vmatpush1.bf16.msra.mxu0 %v2131
    %2289 = vmatprep.subr.bf16.mxu0 0
    %2290 = vmatpush1.bf16.msra.mxu0 %v2132
    %2291 = vmatprep.subr.bf16.mxu0 0
    %2292 = vmatpush1.bf16.msra.mxu0 %v2133
    %2293 = vmatprep.subr.bf16.mxu0 0
    %2294 = vmatpush1.bf16.msra.mxu0 %v2134
    %2295 = vmatprep.subr.bf16.mxu0 0
    %2296 = vmatpush1.bf16.msra.mxu0 %v2135
    %2297 = vmatprep.mubr.bf16.mxu0 %v1876
    %2298 = vmatmul.mubr.bf16.gmra.mrb[0].mxu0 %v1875
    %v2299 = vpop.f32.mrb[0].mxu0
    %v2300 = vadd.f32 %v2203, %v2299
    %v2301 = vpop.f32.mrb[0].mxu0
    %v2302 = vpop.f32.mrb[0].mxu0
    %v2303 = vadd.f32 %v2206, %v2302
    %v2304 = vpop.f32.mrb[0].mxu0
    %2305 = vmatprep.mubr.bf16.mxu0 %v1880
    %2306 = vmatmul.mubr.bf16.gmra.mrb[0].mxu0 %v1879
    %v2307 = vpop.f32.mrb[0].mxu0
    %v2308 = vadd.f32 %v2211, %v2307
    %v2309 = vpop.f32.mrb[0].mxu0
    %v2310 = vpop.f32.mrb[0].mxu0
    %v2311 = vadd.f32 %v2214, %v2310
    %v2312 = vpop.f32.mrb[0].mxu0
    %2313 = vmatprep.mubr.bf16.mxu0 %v1884
    %2314 = vmatmul.mubr.bf16.gmra.mrb[0].mxu0 %v1883
    %v2315 = vpop.f32.mrb[0].mxu0
    %v2316 = vadd.f32 %v2219, %v2315
    %v2317 = vpop.f32.mrb[0].mxu0
    %v2318 = vpop.f32.mrb[0].mxu0
    %v2319 = vadd.f32 %v2222, %v2318
    %v2320 = vpop.f32.mrb[0].mxu0
    %2321 = vmatprep.mubr.bf16.mxu0 %v1888
    %2322 = vmatmul.mubr.bf16.gmra.mrb[0].mxu0 %v1887
    %v2323 = vpop.f32.mrb[0].mxu0
    %v2324 = vadd.f32 %v2227, %v2323
    %v2325 = vpop.f32.mrb[0].mxu0
    %v2326 = vpop.f32.mrb[0].mxu0
    %v2327 = vadd.f32 %v2230, %v2326
    %v2328 = vpop.f32.mrb[0].mxu0
    %2329 = vmatprep.mubr.bf16.mxu0 %v1892
    %2330 = vmatmul.mubr.bf16.gmra.mrb[0].mxu0 %v1891
    %v2331 = vpop.f32.mrb[0].mxu0
    %v2332 = vadd.f32 %v2235, %v2331
    %v2333 = vpop.f32.mrb[0].mxu0
    %v2334 = vpop.f32.mrb[0].mxu0
    %v2335 = vadd.f32 %v2238, %v2334
    %v2336 = vpop.f32.mrb[0].mxu0
    %2337 = vmatprep.mubr.bf16.mxu0 %v1896
    %2338 = vmatmul.mubr.bf16.gmra.mrb[0].mxu0 %v1895
    %v2339 = vpop.f32.mrb[0].mxu0
    %v2340 = vadd.f32 %v2243, %v2339
    %v2341 = vpop.f32.mrb[0].mxu0
    %v2342 = vpop.f32.mrb[0].mxu0
    %v2343 = vadd.f32 %v2246, %v2342
    %v2344 = vpop.f32.mrb[0].mxu0
    %2345 = vmatprep.mubr.bf16.mxu0 %v1900
    %2346 = vmatmul.mubr.bf16.gmra.mrb[0].mxu0 %v1899
    %v2347 = vpop.f32.mrb[0].mxu0
    %v2348 = vadd.f32 %v2251, %v2347
    %v2349 = vpop.f32.mrb[0].mxu0
    %v2350 = vpop.f32.mrb[0].mxu0
    %v2351 = vadd.f32 %v2254, %v2350
    %v2352 = vpop.f32.mrb[0].mxu0
    %2353 = vmatprep.mubr.bf16.mxu0 %v1904
    %2354 = vmatmul.mubr.bf16.gmra.mrb[0].mxu0 %v1903
    %v2355 = vpop.f32.mrb[0].mxu0
    %v2356 = vadd.f32 %v2259, %v2355
    %v2357 = vpop.f32.mrb[0].mxu0
    %v2358 = vpop.f32.mrb[0].mxu0
    %v2359 = vadd.f32 %v2262, %v2358
    %v2360 = vpop.f32.mrb[0].mxu0
    %2361 = vdwg.mxu0
    %v2362 = vmax.f32 %v2300, 0.0
    %v2363 = vmax.f32 %v2303, 0.0
    %v2364 = vmax.f32 %v2308, 0.0
    %v2365 = vmax.f32 %v2311, 0.0
    %v2366 = vmax.f32 %v2316, 0.0
    %v2367 = vmax.f32 %v2319, 0.0
    %v2368 = vmax.f32 %v2324, 0.0
    %v2369 = vmax.f32 %v2327, 0.0
    %v2370 = vmax.f32 %v2332, 0.0
    %v2371 = vmax.f32 %v2335, 0.0
    %v2372 = vmax.f32 %v2340, 0.0
    %v2373 = vmax.f32 %v2343, 0.0
    %v2374 = vmax.f32 %v2348, 0.0
    %v2375 = vmax.f32 %v2351, 0.0
    %v2376 = vmax.f32 %v2356, 0.0
    %v2377 = vmax.f32 %v2359, 0.0
    %vm2378 = vcmask 130048
    %2379 = vst.msk [vmem:[%s9] sm:$0xff] %vm2378, %v2362
    %2380 = vst.msk [vmem:[%s9 + $0x8] sm:$0xff] %vm2378, %v2363
    %2381 = vst.msk [vmem:[%s9 + $0x10] sm:$0xff] %vm2378, %v2364
    %2382 = vst.msk [vmem:[%s9 + $0x18] sm:$0xff] %vm2378, %v2365
    %2383 = vst.msk [vmem:[%s9 + $0x20] sm:$0xff] %vm2378, %v2366
    %2384 = vst.msk [vmem:[%s9 + $0x28] sm:$0xff] %vm2378, %v2367
    %2385 = vst.msk [vmem:[%s9 + $0x30] sm:$0xff] %vm2378, %v2368
    %2386 = vst.msk [vmem:[%s9 + $0x38] sm:$0xff] %vm2378, %v2369
    %2387 = vst.msk [vmem:[%s9 + $0x40] sm:$0xff] %vm2378, %v2370
    %2388 = vst.msk [vmem:[%s9 + $0x48] sm:$0xff] %vm2378, %v2371
    %2389 = vst.msk [vmem:[%s9 + $0x50] sm:$0xff] %vm2378, %v2372
    %2390 = vst.msk [vmem:[%s9 + $0x58] sm:$0xff] %vm2378, %v2373
    %2391 = vst.msk [vmem:[%s9 + $0x60] sm:$0xff] %vm2378, %v2374
    %2392 = vst.msk [vmem:[%s9 + $0x68] sm:$0xff] %vm2378, %v2375
    %2393 = vst.msk [vmem:[%s9 + $0x70] sm:$0xff] %vm2378, %v2376
    %2394 = vst.msk [vmem:[%s9 + $0x78] sm:$0xff] %vm2378, %v2377
    // Predicated region
    $region62: #{generator_forward.4} parent=1 // pred_check
      _
    $region63: #{generator_forward.4} parent=1 // pred_check_branch
      %2396 = sbr.rel (0) target = $region65
    $region64: #{generator_forward.4} parent=1 // pred_region
      _
    $region65: #{generator_forward.4} parent=1 // pred_fallthru
      _
    // Predicated region
    $region66: #{generator_forward.4} parent=1 // pred_check
      _
    $region67: #{generator_forward.4} parent=1 // pred_check_branch
      %2398 = sbr.rel (0) target = $region69
    $region68: #{generator_forward.4} parent=1 // pred_region
      _
    $region69: #{generator_forward.4} parent=1 // pred_fallthru
      _
    %2399 = vsyncpa [#allocation3], 1
    %2400 = vsyncpa [#allocation5], 1
    %2401 = vsyncpa [#allocation8], 1
    %2402 = vsyncpa [#allocation11], 1

// kernel: generator_forward.3
$region0: #{generator_forward.3}
  #allocation0 [shape = 'u32[]', space=smem, size = 0x4, offset = 0x4, fixed_abs, tag = 'smem constant byte address 0x4 - core index']
  #allocation1 [shape = 'u32[144,128]{1,0:T(1,128)}', space=vmem, size = 0x12000, scoped, tag = 'internal scratch']
  %s0 = inlined_call_operand.hbm [shape: f32[2,32], index: 0, kind: input, shape index: {}]
  %s1 = inlined_call_operand.vmem [shape: f32[2,10], index: 1, kind: input, shape index: {}]
  %s2 = inlined_call_operand.hbm [shape: bf16[32,8192], index: 2, kind: input, shape index: {}]
  %s3 = inlined_call_operand.hbm [shape: f32[1,8192], index: 3, kind: input, shape index: {}]
  %s4 = inlined_call_operand.hbm [shape: bf16[10,64], index: 4, kind: input, shape index: {}]
  %s5 = inlined_call_operand.hbm [shape: f32[1,64], index: 5, kind: input, shape index: {}]
  %s6 = inlined_call_operand.vmem [shape: f32[2,8192], index: 6, kind: output, shape index: {0}]
  %s7 = inlined_call_operand.vmem [shape: f32[2,64], index: 7, kind: output, shape index: {1}]
  %8 = xla_tuple %s6, %s7
  %s9 = sld [smem:[#allocation0]]
  $region62: #{generator_forward.3} parent=0
    _
  %s11 = ssub.s32 1, %s9
  %s12 = scalar_select 0, %s11, %s9
  $region1: #{generator_forward.3} parent=0
    #allocation2 [shape = 'u8[1024]{0}', space=vmem, size = 0x400, scoped, tag = 'input window, operand 0, single buffered']
    #allocation3 [shape = 's32[1]{0}', space=sflag, size = 0x4, scoped, tag = 'scoped memory for generator_forward.3']
    #allocation4 [shape = 'u8[524288]{0}', space=vmem, size = 0x80000, scoped, tag = 'input window, operand 2, single buffered']
    #allocation5 [shape = 's32[1]{0}', space=sflag, size = 0x4, scoped, tag = 'scoped memory for generator_forward.3']
    #allocation6 [shape = 'u8[32768]{0}', space=vmem, size = 0x8000, scoped, tag = 'input window, operand 3, single buffered']
    #allocation7 [shape = 'u8[4096]{0}', space=vmem, size = 0x1000, scoped, tag = 'input window, operand 4, single buffered']
    #allocation8 [shape = 's32[1]{0}', space=sflag, size = 0x4, scoped, tag = 'scoped memory for generator_forward.3']
    #allocation9 [shape = 'u8[512]{0}', space=vmem, size = 0x400, scoped, tag = 'input window, operand 5, single buffered']
    %13 = vsyncpa [#allocation3], 0
    %14 = vsyncpa [#allocation5], 0
    %15 = vsyncpa [#allocation8], 0
    // Predicated region
    $region2: #{generator_forward.3} parent=1 // pred_check
      _
    $region3: #{generator_forward.3} parent=1 // pred_check_branch
      %17 = sbr.rel (0) target = $region5
    $region4: #{generator_forward.3} parent=1 // pred_region
      %s19 = ssub.s32 32, 32
      %20 = vsyncadd [#allocation3], %s19
      %s22 = sshll.u32 [#allocation2], 4
      %s23 = int_to_ptr.vmem [resolvable:$true] %s22
      %25 = dma.hbm_to_vmem [thread:$0]  %s0, 32, %s23, [#allocation3]
    $region5: #{generator_forward.3} parent=1 // pred_fallthru
      _
    // Predicated region
    $region6: #{generator_forward.3} parent=1 // pred_check
      _
    $region7: #{generator_forward.3} parent=1 // pred_check_branch
      %27 = sbr.rel (0) target = $region9
    $region8: #{generator_forward.3} parent=1 // pred_region
      _
    $region9: #{generator_forward.3} parent=1 // pred_fallthru
      _
    // Predicated region
    $region10: #{generator_forward.3} parent=1 // pred_check
      _
    $region11: #{generator_forward.3} parent=1 // pred_check_branch
      %29 = sbr.rel (0) target = $region13
    $region12: #{generator_forward.3} parent=1 // pred_region
      %s31 = ssub.s32 16384, 16384
      %32 = vsyncadd [#allocation5], %s31
      %s33 = sshll.u32 [#allocation4], 4
      %s34 = int_to_ptr.vmem [resolvable:$true] %s33
      %39 = dma.hbm_to_vmem [thread:$0]  %s2, 16384, %s34, [#allocation5], 4096, 4096, 256
    $region13: #{generator_forward.3} parent=1 // pred_fallthru
      _
    // Predicated region
    $region14: #{generator_forward.3} parent=1 // pred_check
      _
    $region15: #{generator_forward.3} parent=1 // pred_check_branch
      %41 = sbr.rel (0) target = $region17
    $region16: #{generator_forward.3} parent=1 // pred_region
      %s43 = ssub.s32 1024, 1024
      %44 = vsyncadd [#allocation5], %s43
      %s46 = sshll.u32 [#allocation6], 4
      %s47 = int_to_ptr.vmem [resolvable:$true] %s46
      %49 = dma.hbm_to_vmem [thread:$0]  %s3, 1024, %s47, [#allocation5]
    $region17: #{generator_forward.3} parent=1 // pred_fallthru
      _
    // Predicated region
    $region18: #{generator_forward.3} parent=1 // pred_check
      _
    $region19: #{generator_forward.3} parent=1 // pred_check_branch
      %51 = sbr.rel (0) target = $region21
    $region20: #{generator_forward.3} parent=1 // pred_region
      %s53 = ssub.s32 128, 128
      %54 = vsyncadd [#allocation8], %s53
      %s55 = sshll.u32 [#allocation7], 4
      %s56 = int_to_ptr.vmem [resolvable:$true] %s55
      %61 = dma.hbm_to_vmem [thread:$0]  %s4, 128, %s56, [#allocation8], 64, 64, 4
    $region21: #{generator_forward.3} parent=1 // pred_fallthru
      _
    // Predicated region
    $region22: #{generator_forward.3} parent=1 // pred_check
      _
    $region23: #{generator_forward.3} parent=1 // pred_check_branch
      %63 = sbr.rel (0) target = $region25
    $region24: #{generator_forward.3} parent=1 // pred_region
      %s65 = ssub.s32 16, 16
      %66 = vsyncadd [#allocation8], %s65
      %s68 = sshll.u32 [#allocation9], 4
      %s69 = int_to_ptr.vmem [resolvable:$true] %s68
      %71 = dma.hbm_to_vmem [thread:$0]  %s5, 16, %s69, [#allocation8]
    $region25: #{generator_forward.3} parent=1 // pred_fallthru
      _
    // Predicated region
    $region26: #{generator_forward.3} parent=1 // pred_check
      _
    $region27: #{generator_forward.3} parent=1 // pred_check_branch
      %73 = sbr.rel (0) target = $region29
    $region28: #{generator_forward.3} parent=1 // pred_region
      %74 = dma.done [#allocation3], 32
    $region29: #{generator_forward.3} parent=1 // pred_fallthru
      _
    // Predicated region
    $region30: #{generator_forward.3} parent=1 // pred_check
      _
    $region31: #{generator_forward.3} parent=1 // pred_check_branch
      %76 = sbr.rel (0) target = $region33
    $region32: #{generator_forward.3} parent=1 // pred_region
      %77 = dma.done [#allocation5], 16384
    $region33: #{generator_forward.3} parent=1 // pred_fallthru
      _
    // Predicated region
    $region34: #{generator_forward.3} parent=1 // pred_check
      _
    $region35: #{generator_forward.3} parent=1 // pred_check_branch
      %79 = sbr.rel (0) target = $region37
    $region36: #{generator_forward.3} parent=1 // pred_region
      %80 = dma.done [#allocation5], 1024
    $region37: #{generator_forward.3} parent=1 // pred_fallthru
      _
    // Predicated region
    $region38: #{generator_forward.3} parent=1 // pred_check
      _
    $region39: #{generator_forward.3} parent=1 // pred_check_branch
      %82 = sbr.rel (0) target = $region41
    $region40: #{generator_forward.3} parent=1 // pred_region
      %83 = dma.done [#allocation8], 128
    $region41: #{generator_forward.3} parent=1 // pred_fallthru
      _
    // Predicated region
    $region42: #{generator_forward.3} parent=1 // pred_check
      _
    $region43: #{generator_forward.3} parent=1 // pred_check_branch
      %85 = sbr.rel (0) target = $region45
    $region44: #{generator_forward.3} parent=1 // pred_region
      %86 = dma.done [#allocation8], 16
    $region45: #{generator_forward.3} parent=1 // pred_fallthru
      _
    %v88 = vld [vmem:[#allocation2] sm:$0x3]
    %v89 = vpack.c.bf16 %v88, %v88
    %v90 = vld [vmem:[#allocation4] sm:$0xff]
    %v91 = vld [vmem:[#allocation4 + $0x8] sm:$0xff]
    %v92 = vld [vmem:[#allocation4 + $0x10] sm:$0xff]
    %v93 = vld [vmem:[#allocation4 + $0x18] sm:$0xff]
    %v94 = vld [vmem:[#allocation4 + $0x20] sm:$0xff]
    %v95 = vld [vmem:[#allocation4 + $0x28] sm:$0xff]
    %v96 = vld [vmem:[#allocation4 + $0x30] sm:$0xff]
    %v97 = vld [vmem:[#allocation4 + $0x38] sm:$0xff]
    %v98 = vld [vmem:[#allocation4 + $0x40] sm:$0xff]
    %v99 = vld [vmem:[#allocation4 + $0x48] sm:$0xff]
    %v100 = vld [vmem:[#allocation4 + $0x50] sm:$0xff]
    %v101 = vld [vmem:[#allocation4 + $0x58] sm:$0xff]
    %v102 = vld [vmem:[#allocation4 + $0x60] sm:$0xff]
    %v103 = vld [vmem:[#allocation4 + $0x68] sm:$0xff]
    %v104 = vld [vmem:[#allocation4 + $0x70] sm:$0xff]
    %v105 = vld [vmem:[#allocation4 + $0x78] sm:$0xff]
    %v106 = vld [vmem:[#allocation4 + $0x80] sm:$0xff]
    %v107 = vld [vmem:[#allocation4 + $0x88] sm:$0xff]
    %v108 = vld [vmem:[#allocation4 + $0x90] sm:$0xff]
    %v109 = vld [vmem:[#allocation4 + $0x98] sm:$0xff]
    %v110 = vld [vmem:[#allocation4 + $0xa0] sm:$0xff]
    %v111 = vld [vmem:[#allocation4 + $0xa8] sm:$0xff]
    %v112 = vld [vmem:[#allocation4 + $0xb0] sm:$0xff]
    %v113 = vld [vmem:[#allocation4 + $0xb8] sm:$0xff]
    %v114 = vld [vmem:[#allocation4 + $0xc0] sm:$0xff]
    %v115 = vld [vmem:[#allocation4 + $0xc8] sm:$0xff]
    %v116 = vld [vmem:[#allocation4 + $0xd0] sm:$0xff]
    %v117 = vld [vmem:[#allocation4 + $0xd8] sm:$0xff]
    %v118 = vld [vmem:[#allocation4 + $0xe0] sm:$0xff]
    %v119 = vld [vmem:[#allocation4 + $0xe8] sm:$0xff]
    %v120 = vld [vmem:[#allocation4 + $0xf0] sm:$0xff]
    %v121 = vld [vmem:[#allocation4 + $0xf8] sm:$0xff]
    %v122 = vld [vmem:[#allocation4 + $0x100] sm:$0xff]
    %v123 = vld [vmem:[#allocation4 + $0x108] sm:$0xff]
    %v124 = vld [vmem:[#allocation4 + $0x110] sm:$0xff]
    %v125 = vld [vmem:[#allocation4 + $0x118] sm:$0xff]
    %v126 = vld [vmem:[#allocation4 + $0x120] sm:$0xff]
    %v127 = vld [vmem:[#allocation4 + $0x128] sm:$0xff]
    %v128 = vld [vmem:[#allocation4 + $0x130] sm:$0xff]
    %v129 = vld [vmem:[#allocation4 + $0x138] sm:$0xff]
    %v130 = vld [vmem:[#allocation4 + $0x140] sm:$0xff]
    %v131 = vld [vmem:[#allocation4 + $0x148] sm:$0xff]
    %v132 = vld [vmem:[#allocation4 + $0x150] sm:$0xff]
    %v133 = vld [vmem:[#allocation4 + $0x158] sm:$0xff]
    %v134 = vld [vmem:[#allocation4 + $0x160] sm:$0xff]
    %v135 = vld [vmem:[#allocation4 + $0x168] sm:$0xff]
    %v136 = vld [vmem:[#allocation4 + $0x170] sm:$0xff]
    %v137 = vld [vmem:[#allocation4 + $0x178] sm:$0xff]
    %v138 = vld [vmem:[#allocation4 + $0x180] sm:$0xff]
    %v139 = vld [vmem:[#allocation4 + $0x188] sm:$0xff]
    %v140 = vld [vmem:[#allocation4 + $0x190] sm:$0xff]
    %v141 = vld [vmem:[#allocation4 + $0x198] sm:$0xff]
    %v142 = vld [vmem:[#allocation4 + $0x1a0] sm:$0xff]
    %v143 = vld [vmem:[#allocation4 + $0x1a8] sm:$0xff]
    %v144 = vld [vmem:[#allocation4 + $0x1b0] sm:$0xff]
    %v145 = vld [vmem:[#allocation4 + $0x1b8] sm:$0xff]
    %v146 = vld [vmem:[#allocation4 + $0x1c0] sm:$0xff]
    %v147 = vld [vmem:[#allocation4 + $0x1c8] sm:$0xff]
    %v148 = vld [vmem:[#allocation4 + $0x1d0] sm:$0xff]
    %v149 = vld [vmem:[#allocation4 + $0x1d8] sm:$0xff]
    %v150 = vld [vmem:[#allocation4 + $0x1e0] sm:$0xff]
    %v151 = vld [vmem:[#allocation4 + $0x1e8] sm:$0xff]
    %v152 = vld [vmem:[#allocation4 + $0x1f0] sm:$0xff]
    %v153 = vld [vmem:[#allocation4 + $0x1f8] sm:$0xff]
    %v154 = vld [vmem:[#allocation4 + $0x200] sm:$0xff]
    %v155 = vld [vmem:[#allocation4 + $0x208] sm:$0xff]
    %v156 = vld [vmem:[#allocation4 + $0x210] sm:$0xff]
    %v157 = vld [vmem:[#allocation4 + $0x218] sm:$0xff]
    %v158 = vld [vmem:[#allocation4 + $0x220] sm:$0xff]
    %v159 = vld [vmem:[#allocation4 + $0x228] sm:$0xff]
    %v160 = vld [vmem:[#allocation4 + $0x230] sm:$0xff]
    %v161 = vld [vmem:[#allocation4 + $0x238] sm:$0xff]
    %v162 = vld [vmem:[#allocation4 + $0x240] sm:$0xff]
    %v163 = vld [vmem:[#allocation4 + $0x248] sm:$0xff]
    %v164 = vld [vmem:[#allocation4 + $0x250] sm:$0xff]
    %v165 = vld [vmem:[#allocation4 + $0x258] sm:$0xff]
    %v166 = vld [vmem:[#allocation4 + $0x260] sm:$0xff]
    %v167 = vld [vmem:[#allocation4 + $0x268] sm:$0xff]
    %v168 = vld [vmem:[#allocation4 + $0x270] sm:$0xff]
    %v169 = vld [vmem:[#allocation4 + $0x278] sm:$0xff]
    %v170 = vld [vmem:[#allocation4 + $0x280] sm:$0xff]
    %v171 = vld [vmem:[#allocation4 + $0x288] sm:$0xff]
    %v172 = vld [vmem:[#allocation4 + $0x290] sm:$0xff]
    %v173 = vld [vmem:[#allocation4 + $0x298] sm:$0xff]
    %v174 = vld [vmem:[#allocation4 + $0x2a0] sm:$0xff]
    %v175 = vld [vmem:[#allocation4 + $0x2a8] sm:$0xff]
    %v176 = vld [vmem:[#allocation4 + $0x2b0] sm:$0xff]
    %v177 = vld [vmem:[#allocation4 + $0x2b8] sm:$0xff]
    %v178 = vld [vmem:[#allocation4 + $0x2c0] sm:$0xff]
    %v179 = vld [vmem:[#allocation4 + $0x2c8] sm:$0xff]
    %v180 = vld [vmem:[#allocation4 + $0x2d0] sm:$0xff]
    %v181 = vld [vmem:[#allocation4 + $0x2d8] sm:$0xff]
    %v182 = vld [vmem:[#allocation4 + $0x2e0] sm:$0xff]
    %v183 = vld [vmem:[#allocation4 + $0x2e8] sm:$0xff]
    %v184 = vld [vmem:[#allocation4 + $0x2f0] sm:$0xff]
    %v185 = vld [vmem:[#allocation4 + $0x2f8] sm:$0xff]
    %v186 = vld [vmem:[#allocation4 + $0x300] sm:$0xff]
    %v187 = vld [vmem:[#allocation4 + $0x308] sm:$0xff]
    %v188 = vld [vmem:[#allocation4 + $0x310] sm:$0xff]
    %v189 = vld [vmem:[#allocation4 + $0x318] sm:$0xff]
    %v190 = vld [vmem:[#allocation4 + $0x320] sm:$0xff]
    %v191 = vld [vmem:[#allocation4 + $0x328] sm:$0xff]
    %v192 = vld [vmem:[#allocation4 + $0x330] sm:$0xff]
    %v193 = vld [vmem:[#allocation4 + $0x338] sm:$0xff]
    %v194 = vld [vmem:[#allocation4 + $0x340] sm:$0xff]
    %v195 = vld [vmem:[#allocation4 + $0x348] sm:$0xff]
    %v196 = vld [vmem:[#allocation4 + $0x350] sm:$0xff]
    %v197 = vld [vmem:[#allocation4 + $0x358] sm:$0xff]
    %v198 = vld [vmem:[#allocation4 + $0x360] sm:$0xff]
    %v199 = vld [vmem:[#allocation4 + $0x368] sm:$0xff]
    %v200 = vld [vmem:[#allocation4 + $0x370] sm:$0xff]
    %v201 = vld [vmem:[#allocation4 + $0x378] sm:$0xff]
    %v202 = vld [vmem:[#allocation4 + $0x380] sm:$0xff]
    %v203 = vld [vmem:[#allocation4 + $0x388] sm:$0xff]
    %v204 = vld [vmem:[#allocation4 + $0x390] sm:$0xff]
    %v205 = vld [vmem:[#allocation4 + $0x398] sm:$0xff]
    %v206 = vld [vmem:[#allocation4 + $0x3a0] sm:$0xff]
    %v207 = vld [vmem:[#allocation4 + $0x3a8] sm:$0xff]
    %v208 = vld [vmem:[#allocation4 + $0x3b0] sm:$0xff]
    %v209 = vld [vmem:[#allocation4 + $0x3b8] sm:$0xff]
    %v210 = vld [vmem:[#allocation4 + $0x3c0] sm:$0xff]
    %v211 = vld [vmem:[#allocation4 + $0x3c8] sm:$0xff]
    %v212 = vld [vmem:[#allocation4 + $0x3d0] sm:$0xff]
    %v213 = vld [vmem:[#allocation4 + $0x3d8] sm:$0xff]
    %v214 = vld [vmem:[#allocation4 + $0x3e0] sm:$0xff]
    %v215 = vld [vmem:[#allocation4 + $0x3e8] sm:$0xff]
    %v216 = vld [vmem:[#allocation4 + $0x3f0] sm:$0xff]
    %v217 = vld [vmem:[#allocation4 + $0x3f8] sm:$0xff]
    %v218 = vld [vmem:[#allocation6] sm:$0xff]
    %v219 = vld [vmem:[#allocation6 + $0x8] sm:$0xff]
    %v220 = vld [vmem:[#allocation6 + $0x10] sm:$0xff]
    %v221 = vld [vmem:[#allocation6 + $0x18] sm:$0xff]
    %v222 = vld [vmem:[#allocation6 + $0x20] sm:$0xff]
    %v223 = vld [vmem:[#allocation6 + $0x28] sm:$0xff]
    %v224 = vld [vmem:[#allocation6 + $0x30] sm:$0xff]
    %v225 = vld [vmem:[#allocation6 + $0x38] sm:$0xff]
    %v234 = vlaneseq
    %v235 = vshrl.u32 %v234, 7
    %v236 = vsub.s32 0, %v235
    %v237 = vrot.slane %v218, %v236
    %v238 = vlaneseq
    %v239 = vshrl.u32 %v238, 7
    %v240 = vsub.s32 1, %v239
    %v241 = vrot.slane %v218, %v240
    %v242 = vlaneseq
    %v243 = vshrl.u32 %v242, 7
    %v244 = vsub.s32 2, %v243
    %v245 = vrot.slane %v218, %v244
    %v246 = vlaneseq
    %v247 = vshrl.u32 %v246, 7
    %v248 = vsub.s32 3, %v247
    %v249 = vrot.slane %v218, %v248
    %v250 = vlaneseq
    %v251 = vshrl.u32 %v250, 7
    %v252 = vsub.s32 4, %v251
    %v253 = vrot.slane %v218, %v252
    %v254 = vlaneseq
    %v255 = vshrl.u32 %v254, 7
    %v256 = vsub.s32 5, %v255
    %v257 = vrot.slane %v218, %v256
    %v258 = vlaneseq
    %v259 = vshrl.u32 %v258, 7
    %v260 = vsub.s32 6, %v259
    %v261 = vrot.slane %v218, %v260
    %v262 = vlaneseq
    %v263 = vshrl.u32 %v262, 7
    %v264 = vsub.s32 7, %v263
    %v265 = vrot.slane %v218, %v264
    %v266 = vlaneseq
    %v267 = vshrl.u32 %v266, 7
    %v268 = vsub.s32 0, %v267
    %v269 = vrot.slane %v219, %v268
    %v270 = vlaneseq
    %v271 = vshrl.u32 %v270, 7
    %v272 = vsub.s32 1, %v271
    %v273 = vrot.slane %v219, %v272
    %v274 = vlaneseq
    %v275 = vshrl.u32 %v274, 7
    %v276 = vsub.s32 2, %v275
    %v277 = vrot.slane %v219, %v276
    %v278 = vlaneseq
    %v279 = vshrl.u32 %v278, 7
    %v280 = vsub.s32 3, %v279
    %v281 = vrot.slane %v219, %v280
    %v282 = vlaneseq
    %v283 = vshrl.u32 %v282, 7
    %v284 = vsub.s32 4, %v283
    %v285 = vrot.slane %v219, %v284
    %v286 = vlaneseq
    %v287 = vshrl.u32 %v286, 7
    %v288 = vsub.s32 5, %v287
    %v289 = vrot.slane %v219, %v288
    %v290 = vlaneseq
    %v291 = vshrl.u32 %v290, 7
    %v292 = vsub.s32 6, %v291
    %v293 = vrot.slane %v219, %v292
    %v294 = vlaneseq
    %v295 = vshrl.u32 %v294, 7
    %v296 = vsub.s32 7, %v295
    %v297 = vrot.slane %v219, %v296
    %v298 = vlaneseq
    %v299 = vshrl.u32 %v298, 7
    %v300 = vsub.s32 0, %v299
    %v301 = vrot.slane %v220, %v300
    %v302 = vlaneseq
    %v303 = vshrl.u32 %v302, 7
    %v304 = vsub.s32 1, %v303
    %v305 = vrot.slane %v220, %v304
    %v306 = vlaneseq
    %v307 = vshrl.u32 %v306, 7
    %v308 = vsub.s32 2, %v307
    %v309 = vrot.slane %v220, %v308
    %v310 = vlaneseq
    %v311 = vshrl.u32 %v310, 7
    %v312 = vsub.s32 3, %v311
    %v313 = vrot.slane %v220, %v312
    %v314 = vlaneseq
    %v315 = vshrl.u32 %v314, 7
    %v316 = vsub.s32 4, %v315
    %v317 = vrot.slane %v220, %v316
    %v318 = vlaneseq
    %v319 = vshrl.u32 %v318, 7
    %v320 = vsub.s32 5, %v319
    %v321 = vrot.slane %v220, %v320
    %v322 = vlaneseq
    %v323 = vshrl.u32 %v322, 7
    %v324 = vsub.s32 6, %v323
    %v325 = vrot.slane %v220, %v324
    %v326 = vlaneseq
    %v327 = vshrl.u32 %v326, 7
    %v328 = vsub.s32 7, %v327
    %v329 = vrot.slane %v220, %v328
    %v330 = vlaneseq
    %v331 = vshrl.u32 %v330, 7
    %v332 = vsub.s32 0, %v331
    %v333 = vrot.slane %v221, %v332
    %v334 = vlaneseq
    %v335 = vshrl.u32 %v334, 7
    %v336 = vsub.s32 1, %v335
    %v337 = vrot.slane %v221, %v336
    %v338 = vlaneseq
    %v339 = vshrl.u32 %v338, 7
    %v340 = vsub.s32 2, %v339
    %v341 = vrot.slane %v221, %v340
    %v342 = vlaneseq
    %v343 = vshrl.u32 %v342, 7
    %v344 = vsub.s32 3, %v343
    %v345 = vrot.slane %v221, %v344
    %v346 = vlaneseq
    %v347 = vshrl.u32 %v346, 7
    %v348 = vsub.s32 4, %v347
    %v349 = vrot.slane %v221, %v348
    %v350 = vlaneseq
    %v351 = vshrl.u32 %v350, 7
    %v352 = vsub.s32 5, %v351
    %v353 = vrot.slane %v221, %v352
    %v354 = vlaneseq
    %v355 = vshrl.u32 %v354, 7
    %v356 = vsub.s32 6, %v355
    %v357 = vrot.slane %v221, %v356
    %v358 = vlaneseq
    %v359 = vshrl.u32 %v358, 7
    %v360 = vsub.s32 7, %v359
    %v361 = vrot.slane %v221, %v360
    %v362 = vlaneseq
    %v363 = vshrl.u32 %v362, 7
    %v364 = vsub.s32 0, %v363
    %v365 = vrot.slane %v222, %v364
    %v366 = vlaneseq
    %v367 = vshrl.u32 %v366, 7
    %v368 = vsub.s32 1, %v367
    %v369 = vrot.slane %v222, %v368
    %v370 = vlaneseq
    %v371 = vshrl.u32 %v370, 7
    %v372 = vsub.s32 2, %v371
    %v373 = vrot.slane %v222, %v372
    %v374 = vlaneseq
    %v375 = vshrl.u32 %v374, 7
    %v376 = vsub.s32 3, %v375
    %v377 = vrot.slane %v222, %v376
    %v378 = vlaneseq
    %v379 = vshrl.u32 %v378, 7
    %v380 = vsub.s32 4, %v379
    %v381 = vrot.slane %v222, %v380
    %v382 = vlaneseq
    %v383 = vshrl.u32 %v382, 7
    %v384 = vsub.s32 5, %v383
    %v385 = vrot.slane %v222, %v384
    %v386 = vlaneseq
    %v387 = vshrl.u32 %v386, 7
    %v388 = vsub.s32 6, %v387
    %v389 = vrot.slane %v222, %v388
    %v390 = vlaneseq
    %v391 = vshrl.u32 %v390, 7
    %v392 = vsub.s32 7, %v391
    %v393 = vrot.slane %v222, %v392
    %v394 = vlaneseq
    %v395 = vshrl.u32 %v394, 7
    %v396 = vsub.s32 0, %v395
    %v397 = vrot.slane %v223, %v396
    %v398 = vlaneseq
    %v399 = vshrl.u32 %v398, 7
    %v400 = vsub.s32 1, %v399
    %v401 = vrot.slane %v223, %v400
    %v402 = vlaneseq
    %v403 = vshrl.u32 %v402, 7
    %v404 = vsub.s32 2, %v403
    %v405 = vrot.slane %v223, %v404
    %v406 = vlaneseq
    %v407 = vshrl.u32 %v406, 7
    %v408 = vsub.s32 3, %v407
    %v409 = vrot.slane %v223, %v408
    %v410 = vlaneseq
    %v411 = vshrl.u32 %v410, 7
    %v412 = vsub.s32 4, %v411
    %v413 = vrot.slane %v223, %v412
    %v414 = vlaneseq
    %v415 = vshrl.u32 %v414, 7
    %v416 = vsub.s32 5, %v415
    %v417 = vrot.slane %v223, %v416
    %v418 = vlaneseq
    %v419 = vshrl.u32 %v418, 7
    %v420 = vsub.s32 6, %v419
    %v421 = vrot.slane %v223, %v420
    %v422 = vlaneseq
    %v423 = vshrl.u32 %v422, 7
    %v424 = vsub.s32 7, %v423
    %v425 = vrot.slane %v223, %v424
    %v426 = vlaneseq
    %v427 = vshrl.u32 %v426, 7
    %v428 = vsub.s32 0, %v427
    %v429 = vrot.slane %v224, %v428
    %v430 = vlaneseq
    %v431 = vshrl.u32 %v430, 7
    %v432 = vsub.s32 1, %v431
    %v433 = vrot.slane %v224, %v432
    %v434 = vlaneseq
    %v435 = vshrl.u32 %v434, 7
    %v436 = vsub.s32 2, %v435
    %v437 = vrot.slane %v224, %v436
    %v438 = vlaneseq
    %v439 = vshrl.u32 %v438, 7
    %v440 = vsub.s32 3, %v439
    %v441 = vrot.slane %v224, %v440
    %v442 = vlaneseq
    %v443 = vshrl.u32 %v442, 7
    %v444 = vsub.s32 4, %v443
    %v445 = vrot.slane %v224, %v444
    %v446 = vlaneseq
    %v447 = vshrl.u32 %v446, 7
    %v448 = vsub.s32 5, %v447
    %v449 = vrot.slane %v224, %v448
    %v450 = vlaneseq
    %v451 = vshrl.u32 %v450, 7
    %v452 = vsub.s32 6, %v451
    %v453 = vrot.slane %v224, %v452
    %v454 = vlaneseq
    %v455 = vshrl.u32 %v454, 7
    %v456 = vsub.s32 7, %v455
    %v457 = vrot.slane %v224, %v456
    %v458 = vlaneseq
    %v459 = vshrl.u32 %v458, 7
    %v460 = vsub.s32 0, %v459
    %v461 = vrot.slane %v225, %v460
    %v462 = vlaneseq
    %v463 = vshrl.u32 %v462, 7
    %v464 = vsub.s32 1, %v463
    %v465 = vrot.slane %v225, %v464
    %v466 = vlaneseq
    %v467 = vshrl.u32 %v466, 7
    %v468 = vsub.s32 2, %v467
    %v469 = vrot.slane %v225, %v468
    %v470 = vlaneseq
    %v471 = vshrl.u32 %v470, 7
    %v472 = vsub.s32 3, %v471
    %v473 = vrot.slane %v225, %v472
    %v474 = vlaneseq
    %v475 = vshrl.u32 %v474, 7
    %v476 = vsub.s32 4, %v475
    %v477 = vrot.slane %v225, %v476
    %v478 = vlaneseq
    %v479 = vshrl.u32 %v478, 7
    %v480 = vsub.s32 5, %v479
    %v481 = vrot.slane %v225, %v480
    %v482 = vlaneseq
    %v483 = vshrl.u32 %v482, 7
    %v484 = vsub.s32 6, %v483
    %v485 = vrot.slane %v225, %v484
    %v486 = vlaneseq
    %v487 = vshrl.u32 %v486, 7
    %v488 = vsub.s32 7, %v487
    %v489 = vrot.slane %v225, %v488
    %v682 = vunpack.c.l.b16 %v90
    %v683 = vunpack.c.h.b16 %v90
    %v684 = vunpack.c.l.b16 %v91
    %v685 = vunpack.c.h.b16 %v91
    %v686 = vunpack.c.l.b16 %v92
    %v687 = vunpack.c.h.b16 %v92
    %v688 = vunpack.c.l.b16 %v93
    %v689 = vunpack.c.h.b16 %v93
    %v690 = vunpack.c.l.b16 %v94
    %v691 = vunpack.c.h.b16 %v94
    %v692 = vunpack.c.l.b16 %v95
    %v693 = vunpack.c.h.b16 %v95
    %v694 = vunpack.c.l.b16 %v96
    %v695 = vunpack.c.h.b16 %v96
    %v696 = vunpack.c.l.b16 %v97
    %v697 = vunpack.c.h.b16 %v97
    %v698 = vunpack.c.l.b16 %v98
    %v699 = vunpack.c.h.b16 %v98
    %v700 = vunpack.c.l.b16 %v99
    %v701 = vunpack.c.h.b16 %v99
    %v702 = vunpack.c.l.b16 %v100
    %v703 = vunpack.c.h.b16 %v100
    %v704 = vunpack.c.l.b16 %v101
    %v705 = vunpack.c.h.b16 %v101
    %v706 = vunpack.c.l.b16 %v102
    %v707 = vunpack.c.h.b16 %v102
    %v708 = vunpack.c.l.b16 %v103
    %v709 = vunpack.c.h.b16 %v103
    %v710 = vunpack.c.l.b16 %v104
    %v711 = vunpack.c.h.b16 %v104
    %v712 = vunpack.c.l.b16 %v105
    %v713 = vunpack.c.h.b16 %v105
    %v714 = vunpack.c.l.b16 %v106
    %v715 = vunpack.c.h.b16 %v106
    %v716 = vunpack.c.l.b16 %v107
    %v717 = vunpack.c.h.b16 %v107
    %v718 = vunpack.c.l.b16 %v108
    %v719 = vunpack.c.h.b16 %v108
    %v720 = vunpack.c.l.b16 %v109
    %v721 = vunpack.c.h.b16 %v109
    %v722 = vunpack.c.l.b16 %v110
    %v723 = vunpack.c.h.b16 %v110
    %v724 = vunpack.c.l.b16 %v111
    %v725 = vunpack.c.h.b16 %v111
    %v726 = vunpack.c.l.b16 %v112
    %v727 = vunpack.c.h.b16 %v112
    %v728 = vunpack.c.l.b16 %v113
    %v729 = vunpack.c.h.b16 %v113
    %v730 = vunpack.c.l.b16 %v114
    %v731 = vunpack.c.h.b16 %v114
    %v732 = vunpack.c.l.b16 %v115
    %v733 = vunpack.c.h.b16 %v115
    %v734 = vunpack.c.l.b16 %v116
    %v735 = vunpack.c.h.b16 %v116
    %v736 = vunpack.c.l.b16 %v117
    %v737 = vunpack.c.h.b16 %v117
    %v738 = vunpack.c.l.b16 %v118
    %v739 = vunpack.c.h.b16 %v118
    %v740 = vunpack.c.l.b16 %v119
    %v741 = vunpack.c.h.b16 %v119
    %v742 = vunpack.c.l.b16 %v120
    %v743 = vunpack.c.h.b16 %v120
    %v744 = vunpack.c.l.b16 %v121
    %v745 = vunpack.c.h.b16 %v121
    %v746 = vunpack.c.l.b16 %v122
    %v747 = vunpack.c.h.b16 %v122
    %v748 = vunpack.c.l.b16 %v123
    %v749 = vunpack.c.h.b16 %v123
    %v750 = vunpack.c.l.b16 %v124
    %v751 = vunpack.c.h.b16 %v124
    %v752 = vunpack.c.l.b16 %v125
    %v753 = vunpack.c.h.b16 %v125
    %v754 = vunpack.c.l.b16 %v126
    %v755 = vunpack.c.h.b16 %v126
    %v756 = vunpack.c.l.b16 %v127
    %v757 = vunpack.c.h.b16 %v127
    %v758 = vunpack.c.l.b16 %v128
    %v759 = vunpack.c.h.b16 %v128
    %v760 = vunpack.c.l.b16 %v129
    %v761 = vunpack.c.h.b16 %v129
    %v762 = vunpack.c.l.b16 %v130
    %v763 = vunpack.c.h.b16 %v130
    %v764 = vunpack.c.l.b16 %v131
    %v765 = vunpack.c.h.b16 %v131
    %v766 = vunpack.c.l.b16 %v132
    %v767 = vunpack.c.h.b16 %v132
    %v768 = vunpack.c.l.b16 %v133
    %v769 = vunpack.c.h.b16 %v133
    %v770 = vunpack.c.l.b16 %v134
    %v771 = vunpack.c.h.b16 %v134
    %v772 = vunpack.c.l.b16 %v135
    %v773 = vunpack.c.h.b16 %v135
    %v774 = vunpack.c.l.b16 %v136
    %v775 = vunpack.c.h.b16 %v136
    %v776 = vunpack.c.l.b16 %v137
    %v777 = vunpack.c.h.b16 %v137
    %v778 = vunpack.c.l.b16 %v138
    %v779 = vunpack.c.h.b16 %v138
    %v780 = vunpack.c.l.b16 %v139
    %v781 = vunpack.c.h.b16 %v139
    %v782 = vunpack.c.l.b16 %v140
    %v783 = vunpack.c.h.b16 %v140
    %v784 = vunpack.c.l.b16 %v141
    %v785 = vunpack.c.h.b16 %v141
    %v786 = vunpack.c.l.b16 %v142
    %v787 = vunpack.c.h.b16 %v142
    %v788 = vunpack.c.l.b16 %v143
    %v789 = vunpack.c.h.b16 %v143
    %v790 = vunpack.c.l.b16 %v144
    %v791 = vunpack.c.h.b16 %v144
    %v792 = vunpack.c.l.b16 %v145
    %v793 = vunpack.c.h.b16 %v145
    %v794 = vunpack.c.l.b16 %v146
    %v795 = vunpack.c.h.b16 %v146
    %v796 = vunpack.c.l.b16 %v147
    %v797 = vunpack.c.h.b16 %v147
    %v798 = vunpack.c.l.b16 %v148
    %v799 = vunpack.c.h.b16 %v148
    %v800 = vunpack.c.l.b16 %v149
    %v801 = vunpack.c.h.b16 %v149
    %v802 = vunpack.c.l.b16 %v150
    %v803 = vunpack.c.h.b16 %v150
    %v804 = vunpack.c.l.b16 %v151
    %v805 = vunpack.c.h.b16 %v151
    %v806 = vunpack.c.l.b16 %v152
    %v807 = vunpack.c.h.b16 %v152
    %v808 = vunpack.c.l.b16 %v153
    %v809 = vunpack.c.h.b16 %v153
    %v810 = vunpack.c.l.b16 %v154
    %v811 = vunpack.c.h.b16 %v154
    %v812 = vunpack.c.l.b16 %v155
    %v813 = vunpack.c.h.b16 %v155
    %v814 = vunpack.c.l.b16 %v156
    %v815 = vunpack.c.h.b16 %v156
    %v816 = vunpack.c.l.b16 %v157
    %v817 = vunpack.c.h.b16 %v157
    %v818 = vunpack.c.l.b16 %v158
    %v819 = vunpack.c.h.b16 %v158
    %v820 = vunpack.c.l.b16 %v159
    %v821 = vunpack.c.h.b16 %v159
    %v822 = vunpack.c.l.b16 %v160
    %v823 = vunpack.c.h.b16 %v160
    %v824 = vunpack.c.l.b16 %v161
    %v825 = vunpack.c.h.b16 %v161
    %v826 = vunpack.c.l.b16 %v162
    %v827 = vunpack.c.h.b16 %v162
    %v828 = vunpack.c.l.b16 %v163
    %v829 = vunpack.c.h.b16 %v163
    %v830 = vunpack.c.l.b16 %v164
    %v831 = vunpack.c.h.b16 %v164
    %v832 = vunpack.c.l.b16 %v165
    %v833 = vunpack.c.h.b16 %v165
    %v834 = vunpack.c.l.b16 %v166
    %v835 = vunpack.c.h.b16 %v166
    %v836 = vunpack.c.l.b16 %v167
    %v837 = vunpack.c.h.b16 %v167
    %v838 = vunpack.c.l.b16 %v168
    %v839 = vunpack.c.h.b16 %v168
    %v840 = vunpack.c.l.b16 %v169
    %v841 = vunpack.c.h.b16 %v169
    %v842 = vunpack.c.l.b16 %v170
    %v843 = vunpack.c.h.b16 %v170
    %v844 = vunpack.c.l.b16 %v171
    %v845 = vunpack.c.h.b16 %v171
    %v846 = vunpack.c.l.b16 %v172
    %v847 = vunpack.c.h.b16 %v172
    %v848 = vunpack.c.l.b16 %v173
    %v849 = vunpack.c.h.b16 %v173
    %v850 = vunpack.c.l.b16 %v174
    %v851 = vunpack.c.h.b16 %v174
    %v852 = vunpack.c.l.b16 %v175
    %v853 = vunpack.c.h.b16 %v175
    %v854 = vunpack.c.l.b16 %v176
    %v855 = vunpack.c.h.b16 %v176
    %v856 = vunpack.c.l.b16 %v177
    %v857 = vunpack.c.h.b16 %v177
    %v858 = vunpack.c.l.b16 %v178
    %v859 = vunpack.c.h.b16 %v178
    %v860 = vunpack.c.l.b16 %v179
    %v861 = vunpack.c.h.b16 %v179
    %v862 = vunpack.c.l.b16 %v180
    %v863 = vunpack.c.h.b16 %v180
    %v864 = vunpack.c.l.b16 %v181
    %v865 = vunpack.c.h.b16 %v181
    %v866 = vunpack.c.l.b16 %v182
    %v867 = vunpack.c.h.b16 %v182
    %v868 = vunpack.c.l.b16 %v183
    %v869 = vunpack.c.h.b16 %v183
    %v870 = vunpack.c.l.b16 %v184
    %v871 = vunpack.c.h.b16 %v184
    %v872 = vunpack.c.l.b16 %v185
    %v873 = vunpack.c.h.b16 %v185
    %v874 = vunpack.c.l.b16 %v186
    %v875 = vunpack.c.h.b16 %v186
    %v876 = vunpack.c.l.b16 %v187
    %v877 = vunpack.c.h.b16 %v187
    %v878 = vunpack.c.l.b16 %v188
    %v879 = vunpack.c.h.b16 %v188
    %v880 = vunpack.c.l.b16 %v189
    %v881 = vunpack.c.h.b16 %v189
    %v882 = vunpack.c.l.b16 %v190
    %v883 = vunpack.c.h.b16 %v190
    %v884 = vunpack.c.l.b16 %v191
    %v885 = vunpack.c.h.b16 %v191
    %v886 = vunpack.c.l.b16 %v192
    %v887 = vunpack.c.h.b16 %v192
    %v888 = vunpack.c.l.b16 %v193
    %v889 = vunpack.c.h.b16 %v193
    %v890 = vunpack.c.l.b16 %v194
    %v891 = vunpack.c.h.b16 %v194
    %v892 = vunpack.c.l.b16 %v195
    %v893 = vunpack.c.h.b16 %v195
    %v894 = vunpack.c.l.b16 %v196
    %v895 = vunpack.c.h.b16 %v196
    %v896 = vunpack.c.l.b16 %v197
    %v897 = vunpack.c.h.b16 %v197
    %v898 = vunpack.c.l.b16 %v198
    %v899 = vunpack.c.h.b16 %v198
    %v900 = vunpack.c.l.b16 %v199
    %v901 = vunpack.c.h.b16 %v199
    %v902 = vunpack.c.l.b16 %v200
    %v903 = vunpack.c.h.b16 %v200
    %v904 = vunpack.c.l.b16 %v201
    %v905 = vunpack.c.h.b16 %v201
    %v906 = vunpack.c.l.b16 %v202
    %v907 = vunpack.c.h.b16 %v202
    %v908 = vunpack.c.l.b16 %v203
    %v909 = vunpack.c.h.b16 %v203
    %v910 = vunpack.c.l.b16 %v204
    %v911 = vunpack.c.h.b16 %v204
    %v912 = vunpack.c.l.b16 %v205
    %v913 = vunpack.c.h.b16 %v205
    %v914 = vunpack.c.l.b16 %v206
    %v915 = vunpack.c.h.b16 %v206
    %v916 = vunpack.c.l.b16 %v207
    %v917 = vunpack.c.h.b16 %v207
    %v918 = vunpack.c.l.b16 %v208
    %v919 = vunpack.c.h.b16 %v208
    %v920 = vunpack.c.l.b16 %v209
    %v921 = vunpack.c.h.b16 %v209
    %v922 = vunpack.c.l.b16 %v210
    %v923 = vunpack.c.h.b16 %v210
    %v924 = vunpack.c.l.b16 %v211
    %v925 = vunpack.c.h.b16 %v211
    %v926 = vunpack.c.l.b16 %v212
    %v927 = vunpack.c.h.b16 %v212
    %v928 = vunpack.c.l.b16 %v213
    %v929 = vunpack.c.h.b16 %v213
    %v930 = vunpack.c.l.b16 %v214
    %v931 = vunpack.c.h.b16 %v214
    %v932 = vunpack.c.l.b16 %v215
    %v933 = vunpack.c.h.b16 %v215
    %v934 = vunpack.c.l.b16 %v216
    %v935 = vunpack.c.h.b16 %v216
    %v936 = vunpack.c.l.b16 %v217
    %v937 = vunpack.c.h.b16 %v217
    %v938 = vpack.c.b16 %v746, %v682
    %v939 = vpack.c.b16 %v747, %v683
    %v940 = vpack.c.b16 %v748, %v684
    %v941 = vpack.c.b16 %v749, %v685
    %v942 = vpack.c.b16 %v750, %v686
    %v943 = vpack.c.b16 %v751, %v687
    %v944 = vpack.c.b16 %v752, %v688
    %v945 = vpack.c.b16 %v753, %v689
    %v946 = vpack.c.b16 %v754, %v690
    %v947 = vpack.c.b16 %v755, %v691
    %v948 = vpack.c.b16 %v756, %v692
    %v949 = vpack.c.b16 %v757, %v693
    %v950 = vpack.c.b16 %v758, %v694
    %v951 = vpack.c.b16 %v759, %v695
    %v952 = vpack.c.b16 %v760, %v696
    %v953 = vpack.c.b16 %v761, %v697
    %v954 = vpack.c.b16 %v762, %v698
    %v955 = vpack.c.b16 %v763, %v699
    %v956 = vpack.c.b16 %v764, %v700
    %v957 = vpack.c.b16 %v765, %v701
    %v958 = vpack.c.b16 %v766, %v702
    %v959 = vpack.c.b16 %v767, %v703
    %v960 = vpack.c.b16 %v768, %v704
    %v961 = vpack.c.b16 %v769, %v705
    %v962 = vpack.c.b16 %v770, %v706
    %v963 = vpack.c.b16 %v771, %v707
    %v964 = vpack.c.b16 %v772, %v708
    %v965 = vpack.c.b16 %v773, %v709
    %v966 = vpack.c.b16 %v774, %v710
    %v967 = vpack.c.b16 %v775, %v711
    %v968 = vpack.c.b16 %v776, %v712
    %v969 = vpack.c.b16 %v777, %v713
    %v970 = vpack.c.b16 %v778, %v714
    %v971 = vpack.c.b16 %v779, %v715
    %v972 = vpack.c.b16 %v780, %v716
    %v973 = vpack.c.b16 %v781, %v717
    %v974 = vpack.c.b16 %v782, %v718
    %v975 = vpack.c.b16 %v783, %v719
    %v976 = vpack.c.b16 %v784, %v720
    %v977 = vpack.c.b16 %v785, %v721
    %v978 = vpack.c.b16 %v786, %v722
    %v979 = vpack.c.b16 %v787, %v723
    %v980 = vpack.c.b16 %v788, %v724
    %v981 = vpack.c.b16 %v789, %v725
    %v982 = vpack.c.b16 %v790, %v726
    %v983 = vpack.c.b16 %v791, %v727
    %v984 = vpack.c.b16 %v792, %v728
    %v985 = vpack.c.b16 %v793, %v729
    %v986 = vpack.c.b16 %v794, %v730
    %v987 = vpack.c.b16 %v795, %v731
    %v988 = vpack.c.b16 %v796, %v732
    %v989 = vpack.c.b16 %v797, %v733
    %v990 = vpack.c.b16 %v798, %v734
    %v991 = vpack.c.b16 %v799, %v735
    %v992 = vpack.c.b16 %v800, %v736
    %v993 = vpack.c.b16 %v801, %v737
    %v994 = vpack.c.b16 %v802, %v738
    %v995 = vpack.c.b16 %v803, %v739
    %v996 = vpack.c.b16 %v804, %v740
    %v997 = vpack.c.b16 %v805, %v741
    %v998 = vpack.c.b16 %v806, %v742
    %v999 = vpack.c.b16 %v807, %v743
    %v1000 = vpack.c.b16 %v808, %v744
    %v1001 = vpack.c.b16 %v809, %v745
    %v1002 = vpack.c.b16 %v874, %v810
    %v1003 = vpack.c.b16 %v875, %v811
    %v1004 = vpack.c.b16 %v876, %v812
    %v1005 = vpack.c.b16 %v877, %v813
    %v1006 = vpack.c.b16 %v878, %v814
    %v1007 = vpack.c.b16 %v879, %v815
    %v1008 = vpack.c.b16 %v880, %v816
    %v1009 = vpack.c.b16 %v881, %v817
    %v1010 = vpack.c.b16 %v882, %v818
    %v1011 = vpack.c.b16 %v883, %v819
    %v1012 = vpack.c.b16 %v884, %v820
    %v1013 = vpack.c.b16 %v885, %v821
    %v1014 = vpack.c.b16 %v886, %v822
    %v1015 = vpack.c.b16 %v887, %v823
    %v1016 = vpack.c.b16 %v888, %v824
    %v1017 = vpack.c.b16 %v889, %v825
    %v1018 = vpack.c.b16 %v890, %v826
    %v1019 = vpack.c.b16 %v891, %v827
    %v1020 = vpack.c.b16 %v892, %v828
    %v1021 = vpack.c.b16 %v893, %v829
    %v1022 = vpack.c.b16 %v894, %v830
    %v1023 = vpack.c.b16 %v895, %v831
    %v1024 = vpack.c.b16 %v896, %v832
    %v1025 = vpack.c.b16 %v897, %v833
    %v1026 = vpack.c.b16 %v898, %v834
    %v1027 = vpack.c.b16 %v899, %v835
    %v1028 = vpack.c.b16 %v900, %v836
    %v1029 = vpack.c.b16 %v901, %v837
    %v1030 = vpack.c.b16 %v902, %v838
    %v1031 = vpack.c.b16 %v903, %v839
    %v1032 = vpack.c.b16 %v904, %v840
    %v1033 = vpack.c.b16 %v905, %v841
    %v1034 = vpack.c.b16 %v906, %v842
    %v1035 = vpack.c.b16 %v907, %v843
    %v1036 = vpack.c.b16 %v908, %v844
    %v1037 = vpack.c.b16 %v909, %v845
    %v1038 = vpack.c.b16 %v910, %v846
    %v1039 = vpack.c.b16 %v911, %v847
    %v1040 = vpack.c.b16 %v912, %v848
    %v1041 = vpack.c.b16 %v913, %v849
    %v1042 = vpack.c.b16 %v914, %v850
    %v1043 = vpack.c.b16 %v915, %v851
    %v1044 = vpack.c.b16 %v916, %v852
    %v1045 = vpack.c.b16 %v917, %v853
    %v1046 = vpack.c.b16 %v918, %v854
    %v1047 = vpack.c.b16 %v919, %v855
    %v1048 = vpack.c.b16 %v920, %v856
    %v1049 = vpack.c.b16 %v921, %v857
    %v1050 = vpack.c.b16 %v922, %v858
    %v1051 = vpack.c.b16 %v923, %v859
    %v1052 = vpack.c.b16 %v924, %v860
    %v1053 = vpack.c.b16 %v925, %v861
    %v1054 = vpack.c.b16 %v926, %v862
    %v1055 = vpack.c.b16 %v927, %v863
    %v1056 = vpack.c.b16 %v928, %v864
    %v1057 = vpack.c.b16 %v929, %v865
    %v1058 = vpack.c.b16 %v930, %v866
    %v1059 = vpack.c.b16 %v931, %v867
    %v1060 = vpack.c.b16 %v932, %v868
    %v1061 = vpack.c.b16 %v933, %v869
    %v1062 = vpack.c.b16 %v934, %v870
    %v1063 = vpack.c.b16 %v935, %v871
    %v1064 = vpack.c.b16 %v936, %v872
    %v1065 = vpack.c.b16 %v937, %v873
    %vm1194 = vcmask 261120
    %v1196 = vsel %vm1194, %v89, 0
    %1198 = vmatprep.subr.bf16.mxu0 %v939
    %1199 = vmatpush1.bf16.msra.mxu0 %v938
    %1200 = vmatprep.subr.bf16.mxu0 %v1003
    %1201 = vmatpush1.bf16.msra.mxu0 %v1002
    %1202 = vmatprep.subr.bf16.mxu0 0
    %1203 = vmatpush1.bf16.msra.mxu0 0
    %1204 = vmatprep.subr.bf16.mxu0 0
    %1205 = vmatpush1.bf16.msra.mxu0 0
    %1206 = vmatprep.subr.bf16.mxu0 0
    %1207 = vmatpush1.bf16.msra.mxu0 0
    %1208 = vmatprep.subr.bf16.mxu0 0
    %1209 = vmatpush1.bf16.msra.mxu0 0
    %1210 = vmatprep.subr.bf16.mxu0 0
    %1211 = vmatpush1.bf16.msra.mxu0 0
    %1212 = vmatprep.subr.bf16.mxu0 0
    %1213 = vmatpush1.bf16.msra.mxu0 0
    %1214 = vmatprep.subr.bf16.mxu0 0
    %1215 = vmatpush1.bf16.msra.mxu0 0
    %1216 = vmatprep.subr.bf16.mxu0 0
    %1217 = vmatpush1.bf16.msra.mxu0 0
    %1218 = vmatprep.subr.bf16.mxu0 0
    %1219 = vmatpush1.bf16.msra.mxu0 0
    %1220 = vmatprep.subr.bf16.mxu0 0
    %1221 = vmatpush1.bf16.msra.mxu0 0
    %1222 = vmatprep.subr.bf16.mxu0 0
    %1223 = vmatpush1.bf16.msra.mxu0 0
    %1224 = vmatprep.subr.bf16.mxu0 0
    %1225 = vmatpush1.bf16.msra.mxu0 0
    %1226 = vmatprep.subr.bf16.mxu0 0
    %1227 = vmatpush1.bf16.msra.mxu0 0
    %1228 = vmatprep.subr.bf16.mxu0 0
    %1229 = vmatpush1.bf16.msra.mxu0 0
    %1230 = vmatprep.mubr.bf16.mxu0 0
    %1231 = vmatmul.mubr.bf16.gmra.mrb[0].mxu0 %v1196
    %v1232 = vpop.f32.mrb[0].mxu0
    %v1233 = vadd.f32 %v237, %v1232
    %v1234 = vpop.f32.mrb[0].mxu0
    %v1235 = vadd.f32 %v241, %v1234
    %v1236 = vpop.f32.mrb[0].mxu0
    %v1237 = vpop.f32.mrb[0].mxu0
    %1238 = vdwg.mxu0
    %1239 = vmatprep.subr.bf16.mxu0 %v941
    %1240 = vmatpush1.bf16.msra.mxu0 %v940
    %1241 = vmatprep.subr.bf16.mxu0 %v1005
    %1242 = vmatpush1.bf16.msra.mxu0 %v1004
    %1243 = vmatprep.subr.bf16.mxu0 0
    %1244 = vmatpush1.bf16.msra.mxu0 0
    %1245 = vmatprep.subr.bf16.mxu0 0
    %1246 = vmatpush1.bf16.msra.mxu0 0
    %1247 = vmatprep.subr.bf16.mxu0 0
    %1248 = vmatpush1.bf16.msra.mxu0 0
    %1249 = vmatprep.subr.bf16.mxu0 0
    %1250 = vmatpush1.bf16.msra.mxu0 0
    %1251 = vmatprep.subr.bf16.mxu0 0
    %1252 = vmatpush1.bf16.msra.mxu0 0
    %1253 = vmatprep.subr.bf16.mxu0 0
    %1254 = vmatpush1.bf16.msra.mxu0 0
    %1255 = vmatprep.subr.bf16.mxu0 0
    %1256 = vmatpush1.bf16.msra.mxu0 0
    %1257 = vmatprep.subr.bf16.mxu0 0
    %1258 = vmatpush1.bf16.msra.mxu0 0
    %1259 = vmatprep.subr.bf16.mxu0 0
    %1260 = vmatpush1.bf16.msra.mxu0 0
    %1261 = vmatprep.subr.bf16.mxu0 0
    %1262 = vmatpush1.bf16.msra.mxu0 0
    %1263 = vmatprep.subr.bf16.mxu0 0
    %1264 = vmatpush1.bf16.msra.mxu0 0
    %1265 = vmatprep.subr.bf16.mxu0 0
    %1266 = vmatpush1.bf16.msra.mxu0 0
    %1267 = vmatprep.subr.bf16.mxu0 0
    %1268 = vmatpush1.bf16.msra.mxu0 0
    %1269 = vmatprep.subr.bf16.mxu0 0
    %1270 = vmatpush1.bf16.msra.mxu0 0
    %1271 = vmatprep.mubr.bf16.mxu0 0
    %1272 = vmatmul.mubr.bf16.gmra.mrb[0].mxu0 %v1196
    %v1273 = vpop.f32.mrb[0].mxu0
    %v1274 = vadd.f32 %v245, %v1273
    %v1275 = vpop.f32.mrb[0].mxu0
    %v1276 = vadd.f32 %v249, %v1275
    %v1277 = vpop.f32.mrb[0].mxu0
    %v1278 = vpop.f32.mrb[0].mxu0
    %1279 = vdwg.mxu0
    %1280 = vmatprep.subr.bf16.mxu0 %v943
    %1281 = vmatpush1.bf16.msra.mxu0 %v942
    %1282 = vmatprep.subr.bf16.mxu0 %v1007
    %1283 = vmatpush1.bf16.msra.mxu0 %v1006
    %1284 = vmatprep.subr.bf16.mxu0 0
    %1285 = vmatpush1.bf16.msra.mxu0 0
    %1286 = vmatprep.subr.bf16.mxu0 0
    %1287 = vmatpush1.bf16.msra.mxu0 0
    %1288 = vmatprep.subr.bf16.mxu0 0
    %1289 = vmatpush1.bf16.msra.mxu0 0
    %1290 = vmatprep.subr.bf16.mxu0 0
    %1291 = vmatpush1.bf16.msra.mxu0 0
    %1292 = vmatprep.subr.bf16.mxu0 0
    %1293 = vmatpush1.bf16.msra.mxu0 0
    %1294 = vmatprep.subr.bf16.mxu0 0
    %1295 = vmatpush1.bf16.msra.mxu0 0
    %1296 = vmatprep.subr.bf16.mxu0 0
    %1297 = vmatpush1.bf16.msra.mxu0 0
    %1298 = vmatprep.subr.bf16.mxu0 0
    %1299 = vmatpush1.bf16.msra.mxu0 0
    %1300 = vmatprep.subr.bf16.mxu0 0
    %1301 = vmatpush1.bf16.msra.mxu0 0
    %1302 = vmatprep.subr.bf16.mxu0 0
    %1303 = vmatpush1.bf16.msra.mxu0 0
    %1304 = vmatprep.subr.bf16.mxu0 0
    %1305 = vmatpush1.bf16.msra.mxu0 0
    %1306 = vmatprep.subr.bf16.mxu0 0
    %1307 = vmatpush1.bf16.msra.mxu0 0
    %1308 = vmatprep.subr.bf16.mxu0 0
    %1309 = vmatpush1.bf16.msra.mxu0 0
    %1310 = vmatprep.subr.bf16.mxu0 0
    %1311 = vmatpush1.bf16.msra.mxu0 0
    %1312 = vmatprep.mubr.bf16.mxu0 0
    %1313 = vmatmul.mubr.bf16.gmra.mrb[0].mxu0 %v1196
    %v1314 = vpop.f32.mrb[0].mxu0
    %v1315 = vadd.f32 %v253, %v1314
    %v1316 = vpop.f32.mrb[0].mxu0
    %v1317 = vadd.f32 %v257, %v1316
    %v1318 = vpop.f32.mrb[0].mxu0
    %v1319 = vpop.f32.mrb[0].mxu0
    %1320 = vdwg.mxu0
    %1321 = vmatprep.subr.bf16.mxu0 %v945
    %1322 = vmatpush1.bf16.msra.mxu0 %v944
    %1323 = vmatprep.subr.bf16.mxu0 %v1009
    %1324 = vmatpush1.bf16.msra.mxu0 %v1008
    %1325 = vmatprep.subr.bf16.mxu0 0
    %1326 = vmatpush1.bf16.msra.mxu0 0
    %1327 = vmatprep.subr.bf16.mxu0 0
    %1328 = vmatpush1.bf16.msra.mxu0 0
    %1329 = vmatprep.subr.bf16.mxu0 0
    %1330 = vmatpush1.bf16.msra.mxu0 0
    %1331 = vmatprep.subr.bf16.mxu0 0
    %1332 = vmatpush1.bf16.msra.mxu0 0
    %1333 = vmatprep.subr.bf16.mxu0 0
    %1334 = vmatpush1.bf16.msra.mxu0 0
    %1335 = vmatprep.subr.bf16.mxu0 0
    %1336 = vmatpush1.bf16.msra.mxu0 0
    %1337 = vmatprep.subr.bf16.mxu0 0
    %1338 = vmatpush1.bf16.msra.mxu0 0
    %1339 = vmatprep.subr.bf16.mxu0 0
    %1340 = vmatpush1.bf16.msra.mxu0 0
    %1341 = vmatprep.subr.bf16.mxu0 0
    %1342 = vmatpush1.bf16.msra.mxu0 0
    %1343 = vmatprep.subr.bf16.mxu0 0
    %1344 = vmatpush1.bf16.msra.mxu0 0
    %1345 = vmatprep.subr.bf16.mxu0 0
    %1346 = vmatpush1.bf16.msra.mxu0 0
    %1347 = vmatprep.subr.bf16.mxu0 0
    %1348 = vmatpush1.bf16.msra.mxu0 0
    %1349 = vmatprep.subr.bf16.mxu0 0
    %1350 = vmatpush1.bf16.msra.mxu0 0
    %1351 = vmatprep.subr.bf16.mxu0 0
    %1352 = vmatpush1.bf16.msra.mxu0 0
    %1353 = vmatprep.mubr.bf16.mxu0 0
    %1354 = vmatmul.mubr.bf16.gmra.mrb[0].mxu0 %v1196
    %v1355 = vpop.f32.mrb[0].mxu0
    %v1356 = vadd.f32 %v261, %v1355
    %v1357 = vpop.f32.mrb[0].mxu0
    %v1358 = vadd.f32 %v265, %v1357
    %v1359 = vpop.f32.mrb[0].mxu0
    %v1360 = vpop.f32.mrb[0].mxu0
    %1361 = vdwg.mxu0
    %1362 = vmatprep.subr.bf16.mxu0 %v947
    %1363 = vmatpush1.bf16.msra.mxu0 %v946
    %1364 = vmatprep.subr.bf16.mxu0 %v1011
    %1365 = vmatpush1.bf16.msra.mxu0 %v1010
    %1366 = vmatprep.subr.bf16.mxu0 0
    %1367 = vmatpush1.bf16.msra.mxu0 0
    %1368 = vmatprep.subr.bf16.mxu0 0
    %1369 = vmatpush1.bf16.msra.mxu0 0
    %1370 = vmatprep.subr.bf16.mxu0 0
    %1371 = vmatpush1.bf16.msra.mxu0 0
    %1372 = vmatprep.subr.bf16.mxu0 0
    %1373 = vmatpush1.bf16.msra.mxu0 0
    %1374 = vmatprep.subr.bf16.mxu0 0
    %1375 = vmatpush1.bf16.msra.mxu0 0
    %1376 = vmatprep.subr.bf16.mxu0 0
    %1377 = vmatpush1.bf16.msra.mxu0 0
    %1378 = vmatprep.subr.bf16.mxu0 0
    %1379 = vmatpush1.bf16.msra.mxu0 0
    %1380 = vmatprep.subr.bf16.mxu0 0
    %1381 = vmatpush1.bf16.msra.mxu0 0
    %1382 = vmatprep.subr.bf16.mxu0 0
    %1383 = vmatpush1.bf16.msra.mxu0 0
    %1384 = vmatprep.subr.bf16.mxu0 0
    %1385 = vmatpush1.bf16.msra.mxu0 0
    %1386 = vmatprep.subr.bf16.mxu0 0
    %1387 = vmatpush1.bf16.msra.mxu0 0
    %1388 = vmatprep.subr.bf16.mxu0 0
    %1389 = vmatpush1.bf16.msra.mxu0 0
    %1390 = vmatprep.subr.bf16.mxu0 0
    %1391 = vmatpush1.bf16.msra.mxu0 0
    %1392 = vmatprep.subr.bf16.mxu0 0
    %1393 = vmatpush1.bf16.msra.mxu0 0
    %1394 = vmatprep.mubr.bf16.mxu0 0
    %1395 = vmatmul.mubr.bf16.gmra.mrb[0].mxu0 %v1196
    %v1396 = vpop.f32.mrb[0].mxu0
    %v1397 = vadd.f32 %v269, %v1396
    %v1398 = vpop.f32.mrb[0].mxu0
    %v1399 = vadd.f32 %v273, %v1398
    %v1400 = vpop.f32.mrb[0].mxu0
    %v1401 = vpop.f32.mrb[0].mxu0
    %1402 = vdwg.mxu0
    %1403 = vmatprep.subr.bf16.mxu0 %v949
    %1404 = vmatpush1.bf16.msra.mxu0 %v948
    %1405 = vmatprep.subr.bf16.mxu0 %v1013
    %1406 = vmatpush1.bf16.msra.mxu0 %v1012
    %1407 = vmatprep.subr.bf16.mxu0 0
    %1408 = vmatpush1.bf16.msra.mxu0 0
    %1409 = vmatprep.subr.bf16.mxu0 0
    %1410 = vmatpush1.bf16.msra.mxu0 0
    %1411 = vmatprep.subr.bf16.mxu0 0
    %1412 = vmatpush1.bf16.msra.mxu0 0
    %1413 = vmatprep.subr.bf16.mxu0 0
    %1414 = vmatpush1.bf16.msra.mxu0 0
    %1415 = vmatprep.subr.bf16.mxu0 0
    %1416 = vmatpush1.bf16.msra.mxu0 0
    %1417 = vmatprep.subr.bf16.mxu0 0
    %1418 = vmatpush1.bf16.msra.mxu0 0
    %1419 = vmatprep.subr.bf16.mxu0 0
    %1420 = vmatpush1.bf16.msra.mxu0 0
    %1421 = vmatprep.subr.bf16.mxu0 0
    %1422 = vmatpush1.bf16.msra.mxu0 0
    %1423 = vmatprep.subr.bf16.mxu0 0
    %1424 = vmatpush1.bf16.msra.mxu0 0
    %1425 = vmatprep.subr.bf16.mxu0 0
    %1426 = vmatpush1.bf16.msra.mxu0 0
    %1427 = vmatprep.subr.bf16.mxu0 0
    %1428 = vmatpush1.bf16.msra.mxu0 0
    %1429 = vmatprep.subr.bf16.mxu0 0
    %1430 = vmatpush1.bf16.msra.mxu0 0
    %1431 = vmatprep.subr.bf16.mxu0 0
    %1432 = vmatpush1.bf16.msra.mxu0 0
    %1433 = vmatprep.subr.bf16.mxu0 0
    %1434 = vmatpush1.bf16.msra.mxu0 0
    %1435 = vmatprep.mubr.bf16.mxu0 0
    %1436 = vmatmul.mubr.bf16.gmra.mrb[0].mxu0 %v1196
    %v1437 = vpop.f32.mrb[0].mxu0
    %v1438 = vadd.f32 %v277, %v1437
    %v1439 = vpop.f32.mrb[0].mxu0
    %v1440 = vadd.f32 %v281, %v1439
    %v1441 = vpop.f32.mrb[0].mxu0
    %v1442 = vpop.f32.mrb[0].mxu0
    %1443 = vdwg.mxu0
    %1444 = vmatprep.subr.bf16.mxu0 %v951
    %1445 = vmatpush1.bf16.msra.mxu0 %v950
    %1446 = vmatprep.subr.bf16.mxu0 %v1015
    %1447 = vmatpush1.bf16.msra.mxu0 %v1014
    %1448 = vmatprep.subr.bf16.mxu0 0
    %1449 = vmatpush1.bf16.msra.mxu0 0
    %1450 = vmatprep.subr.bf16.mxu0 0
    %1451 = vmatpush1.bf16.msra.mxu0 0
    %1452 = vmatprep.subr.bf16.mxu0 0
    %1453 = vmatpush1.bf16.msra.mxu0 0
    %1454 = vmatprep.subr.bf16.mxu0 0
    %1455 = vmatpush1.bf16.msra.mxu0 0
    %1456 = vmatprep.subr.bf16.mxu0 0
    %1457 = vmatpush1.bf16.msra.mxu0 0
    %1458 = vmatprep.subr.bf16.mxu0 0
    %1459 = vmatpush1.bf16.msra.mxu0 0
    %1460 = vmatprep.subr.bf16.mxu0 0
    %1461 = vmatpush1.bf16.msra.mxu0 0
    %1462 = vmatprep.subr.bf16.mxu0 0
    %1463 = vmatpush1.bf16.msra.mxu0 0
    %1464 = vmatprep.subr.bf16.mxu0 0
    %1465 = vmatpush1.bf16.msra.mxu0 0
    %1466 = vmatprep.subr.bf16.mxu0 0
    %1467 = vmatpush1.bf16.msra.mxu0 0
    %1468 = vmatprep.subr.bf16.mxu0 0
    %1469 = vmatpush1.bf16.msra.mxu0 0
    %1470 = vmatprep.subr.bf16.mxu0 0
    %1471 = vmatpush1.bf16.msra.mxu0 0
    %1472 = vmatprep.subr.bf16.mxu0 0
    %1473 = vmatpush1.bf16.msra.mxu0 0
    %1474 = vmatprep.subr.bf16.mxu0 0
    %1475 = vmatpush1.bf16.msra.mxu0 0
    %1476 = vmatprep.mubr.bf16.mxu0 0
    %1477 = vmatmul.mubr.bf16.gmra.mrb[0].mxu0 %v1196
    %v1478 = vpop.f32.mrb[0].mxu0
    %v1479 = vadd.f32 %v285, %v1478
    %v1480 = vpop.f32.mrb[0].mxu0
    %v1481 = vadd.f32 %v289, %v1480
    %v1482 = vpop.f32.mrb[0].mxu0
    %v1483 = vpop.f32.mrb[0].mxu0
    %1484 = vdwg.mxu0
    %1485 = vmatprep.subr.bf16.mxu0 %v953
    %1486 = vmatpush1.bf16.msra.mxu0 %v952
    %1487 = vmatprep.subr.bf16.mxu0 %v1017
    %1488 = vmatpush1.bf16.msra.mxu0 %v1016
    %1489 = vmatprep.subr.bf16.mxu0 0
    %1490 = vmatpush1.bf16.msra.mxu0 0
    %1491 = vmatprep.subr.bf16.mxu0 0
    %1492 = vmatpush1.bf16.msra.mxu0 0
    %1493 = vmatprep.subr.bf16.mxu0 0
    %1494 = vmatpush1.bf16.msra.mxu0 0
    %1495 = vmatprep.subr.bf16.mxu0 0
    %1496 = vmatpush1.bf16.msra.mxu0 0
    %1497 = vmatprep.subr.bf16.mxu0 0
    %1498 = vmatpush1.bf16.msra.mxu0 0
    %1499 = vmatprep.subr.bf16.mxu0 0
    %1500 = vmatpush1.bf16.msra.mxu0 0
    %1501 = vmatprep.subr.bf16.mxu0 0
    %1502 = vmatpush1.bf16.msra.mxu0 0
    %1503 = vmatprep.subr.bf16.mxu0 0
    %1504 = vmatpush1.bf16.msra.mxu0 0
    %1505 = vmatprep.subr.bf16.mxu0 0
    %1506 = vmatpush1.bf16.msra.mxu0 0
    %1507 = vmatprep.subr.bf16.mxu0 0
    %1508 = vmatpush1.bf16.msra.mxu0 0
    %1509 = vmatprep.subr.bf16.mxu0 0
    %1510 = vmatpush1.bf16.msra.mxu0 0
    %1511 = vmatprep.subr.bf16.mxu0 0
    %1512 = vmatpush1.bf16.msra.mxu0 0
    %1513 = vmatprep.subr.bf16.mxu0 0
    %1514 = vmatpush1.bf16.msra.mxu0 0
    %1515 = vmatprep.subr.bf16.mxu0 0
    %1516 = vmatpush1.bf16.msra.mxu0 0
    %1517 = vmatprep.mubr.bf16.mxu0 0
    %1518 = vmatmul.mubr.bf16.gmra.mrb[0].mxu0 %v1196
    %v1519 = vpop.f32.mrb[0].mxu0
    %v1520 = vadd.f32 %v293, %v1519
    %v1521 = vpop.f32.mrb[0].mxu0
    %v1522 = vadd.f32 %v297, %v1521
    %v1523 = vpop.f32.mrb[0].mxu0
    %v1524 = vpop.f32.mrb[0].mxu0
    %1525 = vdwg.mxu0
    %1526 = vmatprep.subr.bf16.mxu0 %v955
    %1527 = vmatpush1.bf16.msra.mxu0 %v954
    %1528 = vmatprep.subr.bf16.mxu0 %v1019
    %1529 = vmatpush1.bf16.msra.mxu0 %v1018
    %1530 = vmatprep.subr.bf16.mxu0 0
    %1531 = vmatpush1.bf16.msra.mxu0 0
    %1532 = vmatprep.subr.bf16.mxu0 0
    %1533 = vmatpush1.bf16.msra.mxu0 0
    %1534 = vmatprep.subr.bf16.mxu0 0
    %1535 = vmatpush1.bf16.msra.mxu0 0
    %1536 = vmatprep.subr.bf16.mxu0 0
    %1537 = vmatpush1.bf16.msra.mxu0 0
    %1538 = vmatprep.subr.bf16.mxu0 0
    %1539 = vmatpush1.bf16.msra.mxu0 0
    %1540 = vmatprep.subr.bf16.mxu0 0
    %1541 = vmatpush1.bf16.msra.mxu0 0
    %1542 = vmatprep.subr.bf16.mxu0 0
    %1543 = vmatpush1.bf16.msra.mxu0 0
    %1544 = vmatprep.subr.bf16.mxu0 0
    %1545 = vmatpush1.bf16.msra.mxu0 0
    %1546 = vmatprep.subr.bf16.mxu0 0
    %1547 = vmatpush1.bf16.msra.mxu0 0
    %1548 = vmatprep.subr.bf16.mxu0 0
    %1549 = vmatpush1.bf16.msra.mxu0 0
    %1550 = vmatprep.subr.bf16.mxu0 0
    %1551 = vmatpush1.bf16.msra.mxu0 0
    %1552 = vmatprep.subr.bf16.mxu0 0
    %1553 = vmatpush1.bf16.msra.mxu0 0
    %1554 = vmatprep.subr.bf16.mxu0 0
    %1555 = vmatpush1.bf16.msra.mxu0 0
    %1556 = vmatprep.subr.bf16.mxu0 0
    %1557 = vmatpush1.bf16.msra.mxu0 0
    %1558 = vmatprep.mubr.bf16.mxu0 0
    %1559 = vmatmul.mubr.bf16.gmra.mrb[0].mxu0 %v1196
    %v1560 = vpop.f32.mrb[0].mxu0
    %v1561 = vadd.f32 %v301, %v1560
    %v1562 = vpop.f32.mrb[0].mxu0
    %v1563 = vadd.f32 %v305, %v1562
    %v1564 = vpop.f32.mrb[0].mxu0
    %v1565 = vpop.f32.mrb[0].mxu0
    %1566 = vdwg.mxu0
    %1567 = vmatprep.subr.bf16.mxu0 %v957
    %1568 = vmatpush1.bf16.msra.mxu0 %v956
    %1569 = vmatprep.subr.bf16.mxu0 %v1021
    %1570 = vmatpush1.bf16.msra.mxu0 %v1020
    %1571 = vmatprep.subr.bf16.mxu0 0
    %1572 = vmatpush1.bf16.msra.mxu0 0
    %1573 = vmatprep.subr.bf16.mxu0 0
    %1574 = vmatpush1.bf16.msra.mxu0 0
    %1575 = vmatprep.subr.bf16.mxu0 0
    %1576 = vmatpush1.bf16.msra.mxu0 0
    %1577 = vmatprep.subr.bf16.mxu0 0
    %1578 = vmatpush1.bf16.msra.mxu0 0
    %1579 = vmatprep.subr.bf16.mxu0 0
    %1580 = vmatpush1.bf16.msra.mxu0 0
    %1581 = vmatprep.subr.bf16.mxu0 0
    %1582 = vmatpush1.bf16.msra.mxu0 0
    %1583 = vmatprep.subr.bf16.mxu0 0
    %1584 = vmatpush1.bf16.msra.mxu0 0
    %1585 = vmatprep.subr.bf16.mxu0 0
    %1586 = vmatpush1.bf16.msra.mxu0 0
    %1587 = vmatprep.subr.bf16.mxu0 0
    %1588 = vmatpush1.bf16.msra.mxu0 0
    %1589 = vmatprep.subr.bf16.mxu0 0
    %1590 = vmatpush1.bf16.msra.mxu0 0
    %1591 = vmatprep.subr.bf16.mxu0 0
    %1592 = vmatpush1.bf16.msra.mxu0 0
    %1593 = vmatprep.subr.bf16.mxu0 0
    %1594 = vmatpush1.bf16.msra.mxu0 0
    %1595 = vmatprep.subr.bf16.mxu0 0
    %1596 = vmatpush1.bf16.msra.mxu0 0
    %1597 = vmatprep.subr.bf16.mxu0 0
    %1598 = vmatpush1.bf16.msra.mxu0 0
    %1599 = vmatprep.mubr.bf16.mxu0 0
    %1600 = vmatmul.mubr.bf16.gmra.mrb[0].mxu0 %v1196
    %v1601 = vpop.f32.mrb[0].mxu0
    %v1602 = vadd.f32 %v309, %v1601
    %v1603 = vpop.f32.mrb[0].mxu0
    %v1604 = vadd.f32 %v313, %v1603
    %v1605 = vpop.f32.mrb[0].mxu0
    %v1606 = vpop.f32.mrb[0].mxu0
    %1607 = vdwg.mxu0
    %1608 = vmatprep.subr.bf16.mxu0 %v959
    %1609 = vmatpush1.bf16.msra.mxu0 %v958
    %1610 = vmatprep.subr.bf16.mxu0 %v1023
    %1611 = vmatpush1.bf16.msra.mxu0 %v1022
    %1612 = vmatprep.subr.bf16.mxu0 0
    %1613 = vmatpush1.bf16.msra.mxu0 0
    %1614 = vmatprep.subr.bf16.mxu0 0
    %1615 = vmatpush1.bf16.msra.mxu0 0
    %1616 = vmatprep.subr.bf16.mxu0 0
    %1617 = vmatpush1.bf16.msra.mxu0 0
    %1618 = vmatprep.subr.bf16.mxu0 0
    %1619 = vmatpush1.bf16.msra.mxu0 0
    %1620 = vmatprep.subr.bf16.mxu0 0
    %1621 = vmatpush1.bf16.msra.mxu0 0
    %1622 = vmatprep.subr.bf16.mxu0 0
    %1623 = vmatpush1.bf16.msra.mxu0 0
    %1624 = vmatprep.subr.bf16.mxu0 0
    %1625 = vmatpush1.bf16.msra.mxu0 0
    %1626 = vmatprep.subr.bf16.mxu0 0
    %1627 = vmatpush1.bf16.msra.mxu0 0
    %1628 = vmatprep.subr.bf16.mxu0 0
    %1629 = vmatpush1.bf16.msra.mxu0 0
    %1630 = vmatprep.subr.bf16.mxu0 0
    %1631 = vmatpush1.bf16.msra.mxu0 0
    %1632 = vmatprep.subr.bf16.mxu0 0
    %1633 = vmatpush1.bf16.msra.mxu0 0
    %1634 = vmatprep.subr.bf16.mxu0 0
    %1635 = vmatpush1.bf16.msra.mxu0 0
    %1636 = vmatprep.subr.bf16.mxu0 0
    %1637 = vmatpush1.bf16.msra.mxu0 0
    %1638 = vmatprep.subr.bf16.mxu0 0
    %1639 = vmatpush1.bf16.msra.mxu0 0
    %1640 = vmatprep.mubr.bf16.mxu0 0
    %1641 = vmatmul.mubr.bf16.gmra.mrb[0].mxu0 %v1196
    %v1642 = vpop.f32.mrb[0].mxu0
    %v1643 = vadd.f32 %v317, %v1642
    %v1644 = vpop.f32.mrb[0].mxu0
    %v1645 = vadd.f32 %v321, %v1644
    %v1646 = vpop.f32.mrb[0].mxu0
    %v1647 = vpop.f32.mrb[0].mxu0
    %1648 = vdwg.mxu0
    %1649 = vmatprep.subr.bf16.mxu0 %v961
    %1650 = vmatpush1.bf16.msra.mxu0 %v960
    %1651 = vmatprep.subr.bf16.mxu0 %v1025
    %1652 = vmatpush1.bf16.msra.mxu0 %v1024
    %1653 = vmatprep.subr.bf16.mxu0 0
    %1654 = vmatpush1.bf16.msra.mxu0 0
    %1655 = vmatprep.subr.bf16.mxu0 0
    %1656 = vmatpush1.bf16.msra.mxu0 0
    %1657 = vmatprep.subr.bf16.mxu0 0
    %1658 = vmatpush1.bf16.msra.mxu0 0
    %1659 = vmatprep.subr.bf16.mxu0 0
    %1660 = vmatpush1.bf16.msra.mxu0 0
    %1661 = vmatprep.subr.bf16.mxu0 0
    %1662 = vmatpush1.bf16.msra.mxu0 0
    %1663 = vmatprep.subr.bf16.mxu0 0
    %1664 = vmatpush1.bf16.msra.mxu0 0
    %1665 = vmatprep.subr.bf16.mxu0 0
    %1666 = vmatpush1.bf16.msra.mxu0 0
    %1667 = vmatprep.subr.bf16.mxu0 0
    %1668 = vmatpush1.bf16.msra.mxu0 0
    %1669 = vmatprep.subr.bf16.mxu0 0
    %1670 = vmatpush1.bf16.msra.mxu0 0
    %1671 = vmatprep.subr.bf16.mxu0 0
    %1672 = vmatpush1.bf16.msra.mxu0 0
    %1673 = vmatprep.subr.bf16.mxu0 0
    %1674 = vmatpush1.bf16.msra.mxu0 0
    %1675 = vmatprep.subr.bf16.mxu0 0
    %1676 = vmatpush1.bf16.msra.mxu0 0
    %1677 = vmatprep.subr.bf16.mxu0 0
    %1678 = vmatpush1.bf16.msra.mxu0 0
    %1679 = vmatprep.subr.bf16.mxu0 0
    %1680 = vmatpush1.bf16.msra.mxu0 0
    %1681 = vmatprep.mubr.bf16.mxu0 0
    %1682 = vmatmul.mubr.bf16.gmra.mrb[0].mxu0 %v1196
    %v1683 = vpop.f32.mrb[0].mxu0
    %v1684 = vadd.f32 %v325, %v1683
    %v1685 = vpop.f32.mrb[0].mxu0
    %v1686 = vadd.f32 %v329, %v1685
    %v1687 = vpop.f32.mrb[0].mxu0
    %v1688 = vpop.f32.mrb[0].mxu0
    %1689 = vdwg.mxu0
    %1690 = vmatprep.subr.bf16.mxu0 %v963
    %1691 = vmatpush1.bf16.msra.mxu0 %v962
    %1692 = vmatprep.subr.bf16.mxu0 %v1027
    %1693 = vmatpush1.bf16.msra.mxu0 %v1026
    %1694 = vmatprep.subr.bf16.mxu0 0
    %1695 = vmatpush1.bf16.msra.mxu0 0
    %1696 = vmatprep.subr.bf16.mxu0 0
    %1697 = vmatpush1.bf16.msra.mxu0 0
    %1698 = vmatprep.subr.bf16.mxu0 0
    %1699 = vmatpush1.bf16.msra.mxu0 0
    %1700 = vmatprep.subr.bf16.mxu0 0
    %1701 = vmatpush1.bf16.msra.mxu0 0
    %1702 = vmatprep.subr.bf16.mxu0 0
    %1703 = vmatpush1.bf16.msra.mxu0 0
    %1704 = vmatprep.subr.bf16.mxu0 0
    %1705 = vmatpush1.bf16.msra.mxu0 0
    %1706 = vmatprep.subr.bf16.mxu0 0
    %1707 = vmatpush1.bf16.msra.mxu0 0
    %1708 = vmatprep.subr.bf16.mxu0 0
    %1709 = vmatpush1.bf16.msra.mxu0 0
    %1710 = vmatprep.subr.bf16.mxu0 0
    %1711 = vmatpush1.bf16.msra.mxu0 0
    %1712 = vmatprep.subr.bf16.mxu0 0
    %1713 = vmatpush1.bf16.msra.mxu0 0
    %1714 = vmatprep.subr.bf16.mxu0 0
    %1715 = vmatpush1.bf16.msra.mxu0 0
    %1716 = vmatprep.subr.bf16.mxu0 0
    %1717 = vmatpush1.bf16.msra.mxu0 0
    %1718 = vmatprep.subr.bf16.mxu0 0
    %1719 = vmatpush1.bf16.msra.mxu0 0
    %1720 = vmatprep.subr.bf16.mxu0 0
    %1721 = vmatpush1.bf16.msra.mxu0 0
    %1722 = vmatprep.mubr.bf16.mxu0 0
    %1723 = vmatmul.mubr.bf16.gmra.mrb[0].mxu0 %v1196
    %v1724 = vpop.f32.mrb[0].mxu0
    %v1725 = vadd.f32 %v333, %v1724
    %v1726 = vpop.f32.mrb[0].mxu0
    %v1727 = vadd.f32 %v337, %v1726
    %v1728 = vpop.f32.mrb[0].mxu0
    %v1729 = vpop.f32.mrb[0].mxu0
    %1730 = vdwg.mxu0
    %1731 = vmatprep.subr.bf16.mxu0 %v965
    %1732 = vmatpush1.bf16.msra.mxu0 %v964
    %1733 = vmatprep.subr.bf16.mxu0 %v1029
    %1734 = vmatpush1.bf16.msra.mxu0 %v1028
    %1735 = vmatprep.subr.bf16.mxu0 0
    %1736 = vmatpush1.bf16.msra.mxu0 0
    %1737 = vmatprep.subr.bf16.mxu0 0
    %1738 = vmatpush1.bf16.msra.mxu0 0
    %1739 = vmatprep.subr.bf16.mxu0 0
    %1740 = vmatpush1.bf16.msra.mxu0 0
    %1741 = vmatprep.subr.bf16.mxu0 0
    %1742 = vmatpush1.bf16.msra.mxu0 0
    %1743 = vmatprep.subr.bf16.mxu0 0
    %1744 = vmatpush1.bf16.msra.mxu0 0
    %1745 = vmatprep.subr.bf16.mxu0 0
    %1746 = vmatpush1.bf16.msra.mxu0 0
    %1747 = vmatprep.subr.bf16.mxu0 0
    %1748 = vmatpush1.bf16.msra.mxu0 0
    %1749 = vmatprep.subr.bf16.mxu0 0
    %1750 = vmatpush1.bf16.msra.mxu0 0
    %1751 = vmatprep.subr.bf16.mxu0 0
    %1752 = vmatpush1.bf16.msra.mxu0 0
    %1753 = vmatprep.subr.bf16.mxu0 0
    %1754 = vmatpush1.bf16.msra.mxu0 0
    %1755 = vmatprep.subr.bf16.mxu0 0
    %1756 = vmatpush1.bf16.msra.mxu0 0
    %1757 = vmatprep.subr.bf16.mxu0 0
    %1758 = vmatpush1.bf16.msra.mxu0 0
    %1759 = vmatprep.subr.bf16.mxu0 0
    %1760 = vmatpush1.bf16.msra.mxu0 0
    %1761 = vmatprep.subr.bf16.mxu0 0
    %1762 = vmatpush1.bf16.msra.mxu0 0
    %1763 = vmatprep.mubr.bf16.mxu0 0
    %1764 = vmatmul.mubr.bf16.gmra.mrb[0].mxu0 %v1196
    %v1765 = vpop.f32.mrb[0].mxu0
    %v1766 = vadd.f32 %v341, %v1765
    %v1767 = vpop.f32.mrb[0].mxu0
    %v1768 = vadd.f32 %v345, %v1767
    %v1769 = vpop.f32.mrb[0].mxu0
    %v1770 = vpop.f32.mrb[0].mxu0
    %1771 = vdwg.mxu0
    %1772 = vmatprep.subr.bf16.mxu0 %v967
    %1773 = vmatpush1.bf16.msra.mxu0 %v966
    %1774 = vmatprep.subr.bf16.mxu0 %v1031
    %1775 = vmatpush1.bf16.msra.mxu0 %v1030
    %1776 = vmatprep.subr.bf16.mxu0 0
    %1777 = vmatpush1.bf16.msra.mxu0 0
    %1778 = vmatprep.subr.bf16.mxu0 0
    %1779 = vmatpush1.bf16.msra.mxu0 0
    %1780 = vmatprep.subr.bf16.mxu0 0
    %1781 = vmatpush1.bf16.msra.mxu0 0
    %1782 = vmatprep.subr.bf16.mxu0 0
    %1783 = vmatpush1.bf16.msra.mxu0 0
    %1784 = vmatprep.subr.bf16.mxu0 0
    %1785 = vmatpush1.bf16.msra.mxu0 0
    %1786 = vmatprep.subr.bf16.mxu0 0
    %1787 = vmatpush1.bf16.msra.mxu0 0
    %1788 = vmatprep.subr.bf16.mxu0 0
    %1789 = vmatpush1.bf16.msra.mxu0 0
    %1790 = vmatprep.subr.bf16.mxu0 0
    %1791 = vmatpush1.bf16.msra.mxu0 0
    %1792 = vmatprep.subr.bf16.mxu0 0
    %1793 = vmatpush1.bf16.msra.mxu0 0
    %1794 = vmatprep.subr.bf16.mxu0 0
    %1795 = vmatpush1.bf16.msra.mxu0 0
    %1796 = vmatprep.subr.bf16.mxu0 0
    %1797 = vmatpush1.bf16.msra.mxu0 0
    %1798 = vmatprep.subr.bf16.mxu0 0
    %1799 = vmatpush1.bf16.msra.mxu0 0
    %1800 = vmatprep.subr.bf16.mxu0 0
    %1801 = vmatpush1.bf16.msra.mxu0 0
    %1802 = vmatprep.subr.bf16.mxu0 0
    %1803 = vmatpush1.bf16.msra.mxu0 0
    %1804 = vmatprep.mubr.bf16.mxu0 0
    %1805 = vmatmul.mubr.bf16.gmra.mrb[0].mxu0 %v1196
    %v1806 = vpop.f32.mrb[0].mxu0
    %v1807 = vadd.f32 %v349, %v1806
    %v1808 = vpop.f32.mrb[0].mxu0
    %v1809 = vadd.f32 %v353, %v1808
    %v1810 = vpop.f32.mrb[0].mxu0
    %v1811 = vpop.f32.mrb[0].mxu0
    %1812 = vdwg.mxu0
    %1813 = vmatprep.subr.bf16.mxu0 %v969
    %1814 = vmatpush1.bf16.msra.mxu0 %v968
    %1815 = vmatprep.subr.bf16.mxu0 %v1033
    %1816 = vmatpush1.bf16.msra.mxu0 %v1032
    %1817 = vmatprep.subr.bf16.mxu0 0
    %1818 = vmatpush1.bf16.msra.mxu0 0
    %1819 = vmatprep.subr.bf16.mxu0 0
    %1820 = vmatpush1.bf16.msra.mxu0 0
    %1821 = vmatprep.subr.bf16.mxu0 0
    %1822 = vmatpush1.bf16.msra.mxu0 0
    %1823 = vmatprep.subr.bf16.mxu0 0
    %1824 = vmatpush1.bf16.msra.mxu0 0
    %1825 = vmatprep.subr.bf16.mxu0 0
    %1826 = vmatpush1.bf16.msra.mxu0 0
    %1827 = vmatprep.subr.bf16.mxu0 0
    %1828 = vmatpush1.bf16.msra.mxu0 0
    %1829 = vmatprep.subr.bf16.mxu0 0
    %1830 = vmatpush1.bf16.msra.mxu0 0
    %1831 = vmatprep.subr.bf16.mxu0 0
    %1832 = vmatpush1.bf16.msra.mxu0 0
    %1833 = vmatprep.subr.bf16.mxu0 0
    %1834 = vmatpush1.bf16.msra.mxu0 0
    %1835 = vmatprep.subr.bf16.mxu0 0
    %1836 = vmatpush1.bf16.msra.mxu0 0
    %1837 = vmatprep.subr.bf16.mxu0 0
    %1838 = vmatpush1.bf16.msra.mxu0 0
    %1839 = vmatprep.subr.bf16.mxu0 0
    %1840 = vmatpush1.bf16.msra.mxu0 0
    %1841 = vmatprep.subr.bf16.mxu0 0
    %1842 = vmatpush1.bf16.msra.mxu0 0
    %1843 = vmatprep.subr.bf16.mxu0 0
    %1844 = vmatpush1.bf16.msra.mxu0 0
    %1845 = vmatprep.mubr.bf16.mxu0 0
    %1846 = vmatmul.mubr.bf16.gmra.mrb[0].mxu0 %v1196
    %v1847 = vpop.f32.mrb[0].mxu0
    %v1848 = vadd.f32 %v357, %v1847
    %v1849 = vpop.f32.mrb[0].mxu0
    %v1850 = vadd.f32 %v361, %v1849
    %v1851 = vpop.f32.mrb[0].mxu0
    %v1852 = vpop.f32.mrb[0].mxu0
    %1853 = vdwg.mxu0
    %1854 = vmatprep.subr.bf16.mxu0 %v971
    %1855 = vmatpush1.bf16.msra.mxu0 %v970
    %1856 = vmatprep.subr.bf16.mxu0 %v1035
    %1857 = vmatpush1.bf16.msra.mxu0 %v1034
    %1858 = vmatprep.subr.bf16.mxu0 0
    %1859 = vmatpush1.bf16.msra.mxu0 0
    %1860 = vmatprep.subr.bf16.mxu0 0
    %1861 = vmatpush1.bf16.msra.mxu0 0
    %1862 = vmatprep.subr.bf16.mxu0 0
    %1863 = vmatpush1.bf16.msra.mxu0 0
    %1864 = vmatprep.subr.bf16.mxu0 0
    %1865 = vmatpush1.bf16.msra.mxu0 0
    %1866 = vmatprep.subr.bf16.mxu0 0
    %1867 = vmatpush1.bf16.msra.mxu0 0
    %1868 = vmatprep.subr.bf16.mxu0 0
    %1869 = vmatpush1.bf16.msra.mxu0 0
    %1870 = vmatprep.subr.bf16.mxu0 0
    %1871 = vmatpush1.bf16.msra.mxu0 0
    %1872 = vmatprep.subr.bf16.mxu0 0
    %1873 = vmatpush1.bf16.msra.mxu0 0
    %1874 = vmatprep.subr.bf16.mxu0 0
    %1875 = vmatpush1.bf16.msra.mxu0 0
    %1876 = vmatprep.subr.bf16.mxu0 0
    %1877 = vmatpush1.bf16.msra.mxu0 0
    %1878 = vmatprep.subr.bf16.mxu0 0
    %1879 = vmatpush1.bf16.msra.mxu0 0
    %1880 = vmatprep.subr.bf16.mxu0 0
    %1881 = vmatpush1.bf16.msra.mxu0 0
    %1882 = vmatprep.subr.bf16.mxu0 0
    %1883 = vmatpush1.bf16.msra.mxu0 0
    %1884 = vmatprep.subr.bf16.mxu0 0
    %1885 = vmatpush1.bf16.msra.mxu0 0
    %1886 = vmatprep.mubr.bf16.mxu0 0
    %1887 = vmatmul.mubr.bf16.gmra.mrb[0].mxu0 %v1196
    %v1888 = vpop.f32.mrb[0].mxu0
    %v1889 = vadd.f32 %v365, %v1888
    %v1890 = vpop.f32.mrb[0].mxu0
    %v1891 = vadd.f32 %v369, %v1890
    %v1892 = vpop.f32.mrb[0].mxu0
    %v1893 = vpop.f32.mrb[0].mxu0
    %1894 = vdwg.mxu0
    %1895 = vmatprep.subr.bf16.mxu0 %v973
    %1896 = vmatpush1.bf16.msra.mxu0 %v972
    %1897 = vmatprep.subr.bf16.mxu0 %v1037
    %1898 = vmatpush1.bf16.msra.mxu0 %v1036
    %1899 = vmatprep.subr.bf16.mxu0 0
    %1900 = vmatpush1.bf16.msra.mxu0 0
    %1901 = vmatprep.subr.bf16.mxu0 0
    %1902 = vmatpush1.bf16.msra.mxu0 0
    %1903 = vmatprep.subr.bf16.mxu0 0
    %1904 = vmatpush1.bf16.msra.mxu0 0
    %1905 = vmatprep.subr.bf16.mxu0 0
    %1906 = vmatpush1.bf16.msra.mxu0 0
    %1907 = vmatprep.subr.bf16.mxu0 0
    %1908 = vmatpush1.bf16.msra.mxu0 0
    %1909 = vmatprep.subr.bf16.mxu0 0
    %1910 = vmatpush1.bf16.msra.mxu0 0
    %1911 = vmatprep.subr.bf16.mxu0 0
    %1912 = vmatpush1.bf16.msra.mxu0 0
    %1913 = vmatprep.subr.bf16.mxu0 0
    %1914 = vmatpush1.bf16.msra.mxu0 0
    %1915 = vmatprep.subr.bf16.mxu0 0
    %1916 = vmatpush1.bf16.msra.mxu0 0
    %1917 = vmatprep.subr.bf16.mxu0 0
    %1918 = vmatpush1.bf16.msra.mxu0 0
    %1919 = vmatprep.subr.bf16.mxu0 0
    %1920 = vmatpush1.bf16.msra.mxu0 0
    %1921 = vmatprep.subr.bf16.mxu0 0
    %1922 = vmatpush1.bf16.msra.mxu0 0
    %1923 = vmatprep.subr.bf16.mxu0 0
    %1924 = vmatpush1.bf16.msra.mxu0 0
    %1925 = vmatprep.subr.bf16.mxu0 0
    %1926 = vmatpush1.bf16.msra.mxu0 0
    %1927 = vmatprep.mubr.bf16.mxu0 0
    %1928 = vmatmul.mubr.bf16.gmra.mrb[0].mxu0 %v1196
    %v1929 = vpop.f32.mrb[0].mxu0
    %v1930 = vadd.f32 %v373, %v1929
    %v1931 = vpop.f32.mrb[0].mxu0
    %v1932 = vadd.f32 %v377, %v1931
    %v1933 = vpop.f32.mrb[0].mxu0
    %v1934 = vpop.f32.mrb[0].mxu0
    %1935 = vdwg.mxu0
    %1936 = vmatprep.subr.bf16.mxu0 %v975
    %1937 = vmatpush1.bf16.msra.mxu0 %v974
    %1938 = vmatprep.subr.bf16.mxu0 %v1039
    %1939 = vmatpush1.bf16.msra.mxu0 %v1038
    %1940 = vmatprep.subr.bf16.mxu0 0
    %1941 = vmatpush1.bf16.msra.mxu0 0
    %1942 = vmatprep.subr.bf16.mxu0 0
    %1943 = vmatpush1.bf16.msra.mxu0 0
    %1944 = vmatprep.subr.bf16.mxu0 0
    %1945 = vmatpush1.bf16.msra.mxu0 0
    %1946 = vmatprep.subr.bf16.mxu0 0
    %1947 = vmatpush1.bf16.msra.mxu0 0
    %1948 = vmatprep.subr.bf16.mxu0 0
    %1949 = vmatpush1.bf16.msra.mxu0 0
    %1950 = vmatprep.subr.bf16.mxu0 0
    %1951 = vmatpush1.bf16.msra.mxu0 0
    %1952 = vmatprep.subr.bf16.mxu0 0
    %1953 = vmatpush1.bf16.msra.mxu0 0
    %1954 = vmatprep.subr.bf16.mxu0 0
    %1955 = vmatpush1.bf16.msra.mxu0 0
    %1956 = vmatprep.subr.bf16.mxu0 0
    %1957 = vmatpush1.bf16.msra.mxu0 0
    %1958 = vmatprep.subr.bf16.mxu0 0
    %1959 = vmatpush1.bf16.msra.mxu0 0
    %1960 = vmatprep.subr.bf16.mxu0 0
    %1961 = vmatpush1.bf16.msra.mxu0 0
    %1962 = vmatprep.subr.bf16.mxu0 0
    %1963 = vmatpush1.bf16.msra.mxu0 0
    %1964 = vmatprep.subr.bf16.mxu0 0
    %1965 = vmatpush1.bf16.msra.mxu0 0
    %1966 = vmatprep.subr.bf16.mxu0 0
    %1967 = vmatpush1.bf16.msra.mxu0 0
    %1968 = vmatprep.mubr.bf16.mxu0 0
    %1969 = vmatmul.mubr.bf16.gmra.mrb[0].mxu0 %v1196
    %v1970 = vpop.f32.mrb[0].mxu0
    %v1971 = vadd.f32 %v381, %v1970
    %v1972 = vpop.f32.mrb[0].mxu0
    %v1973 = vadd.f32 %v385, %v1972
    %v1974 = vpop.f32.mrb[0].mxu0
    %v1975 = vpop.f32.mrb[0].mxu0
    %1976 = vdwg.mxu0
    %1977 = vmatprep.subr.bf16.mxu0 %v977
    %1978 = vmatpush1.bf16.msra.mxu0 %v976
    %1979 = vmatprep.subr.bf16.mxu0 %v1041
    %1980 = vmatpush1.bf16.msra.mxu0 %v1040
    %1981 = vmatprep.subr.bf16.mxu0 0
    %1982 = vmatpush1.bf16.msra.mxu0 0
    %1983 = vmatprep.subr.bf16.mxu0 0
    %1984 = vmatpush1.bf16.msra.mxu0 0
    %1985 = vmatprep.subr.bf16.mxu0 0
    %1986 = vmatpush1.bf16.msra.mxu0 0
    %1987 = vmatprep.subr.bf16.mxu0 0
    %1988 = vmatpush1.bf16.msra.mxu0 0
    %1989 = vmatprep.subr.bf16.mxu0 0
    %1990 = vmatpush1.bf16.msra.mxu0 0
    %1991 = vmatprep.subr.bf16.mxu0 0
    %1992 = vmatpush1.bf16.msra.mxu0 0
    %1993 = vmatprep.subr.bf16.mxu0 0
    %1994 = vmatpush1.bf16.msra.mxu0 0
    %1995 = vmatprep.subr.bf16.mxu0 0
    %1996 = vmatpush1.bf16.msra.mxu0 0
    %1997 = vmatprep.subr.bf16.mxu0 0
    %1998 = vmatpush1.bf16.msra.mxu0 0
    %1999 = vmatprep.subr.bf16.mxu0 0
    %2000 = vmatpush1.bf16.msra.mxu0 0
    %2001 = vmatprep.subr.bf16.mxu0 0
    %2002 = vmatpush1.bf16.msra.mxu0 0
    %2003 = vmatprep.subr.bf16.mxu0 0
    %2004 = vmatpush1.bf16.msra.mxu0 0
    %2005 = vmatprep.subr.bf16.mxu0 0
    %2006 = vmatpush1.bf16.msra.mxu0 0
    %2007 = vmatprep.subr.bf16.mxu0 0
    %2008 = vmatpush1.bf16.msra.mxu0 0
    %2009 = vmatprep.mubr.bf16.mxu0 0
    %2010 = vmatmul.mubr.bf16.gmra.mrb[0].mxu0 %v1196
    %v2011 = vpop.f32.mrb[0].mxu0
    %v2012 = vadd.f32 %v389, %v2011
    %v2013 = vpop.f32.mrb[0].mxu0
    %v2014 = vadd.f32 %v393, %v2013
    %v2015 = vpop.f32.mrb[0].mxu0
    %v2016 = vpop.f32.mrb[0].mxu0
    %2017 = vdwg.mxu0
    %2018 = vmatprep.subr.bf16.mxu0 %v979
    %2019 = vmatpush1.bf16.msra.mxu0 %v978
    %2020 = vmatprep.subr.bf16.mxu0 %v1043
    %2021 = vmatpush1.bf16.msra.mxu0 %v1042
    %2022 = vmatprep.subr.bf16.mxu0 0
    %2023 = vmatpush1.bf16.msra.mxu0 0
    %2024 = vmatprep.subr.bf16.mxu0 0
    %2025 = vmatpush1.bf16.msra.mxu0 0
    %2026 = vmatprep.subr.bf16.mxu0 0
    %2027 = vmatpush1.bf16.msra.mxu0 0
    %2028 = vmatprep.subr.bf16.mxu0 0
    %2029 = vmatpush1.bf16.msra.mxu0 0
    %2030 = vmatprep.subr.bf16.mxu0 0
    %2031 = vmatpush1.bf16.msra.mxu0 0
    %2032 = vmatprep.subr.bf16.mxu0 0
    %2033 = vmatpush1.bf16.msra.mxu0 0
    %2034 = vmatprep.subr.bf16.mxu0 0
    %2035 = vmatpush1.bf16.msra.mxu0 0
    %2036 = vmatprep.subr.bf16.mxu0 0
    %2037 = vmatpush1.bf16.msra.mxu0 0
    %2038 = vmatprep.subr.bf16.mxu0 0
    %2039 = vmatpush1.bf16.msra.mxu0 0
    %2040 = vmatprep.subr.bf16.mxu0 0
    %2041 = vmatpush1.bf16.msra.mxu0 0
    %2042 = vmatprep.subr.bf16.mxu0 0
    %2043 = vmatpush1.bf16.msra.mxu0 0
    %2044 = vmatprep.subr.bf16.mxu0 0
    %2045 = vmatpush1.bf16.msra.mxu0 0
    %2046 = vmatprep.subr.bf16.mxu0 0
    %2047 = vmatpush1.bf16.msra.mxu0 0
    %2048 = vmatprep.subr.bf16.mxu0 0
    %2049 = vmatpush1.bf16.msra.mxu0 0
    %2050 = vmatprep.mubr.bf16.mxu0 0
    %2051 = vmatmul.mubr.bf16.gmra.mrb[0].mxu0 %v1196
    %v2052 = vpop.f32.mrb[0].mxu0
    %v2053 = vadd.f32 %v397, %v2052
    %v2054 = vpop.f32.mrb[0].mxu0
    %v2055 = vadd.f32 %v401, %v2054
    %v2056 = vpop.f32.mrb[0].mxu0
    %v2057 = vpop.f32.mrb[0].mxu0
    %2058 = vdwg.mxu0
    %2059 = vmatprep.subr.bf16.mxu0 %v981
    %2060 = vmatpush1.bf16.msra.mxu0 %v980
    %2061 = vmatprep.subr.bf16.mxu0 %v1045
    %2062 = vmatpush1.bf16.msra.mxu0 %v1044
    %2063 = vmatprep.subr.bf16.mxu0 0
    %2064 = vmatpush1.bf16.msra.mxu0 0
    %2065 = vmatprep.subr.bf16.mxu0 0
    %2066 = vmatpush1.bf16.msra.mxu0 0
    %2067 = vmatprep.subr.bf16.mxu0 0
    %2068 = vmatpush1.bf16.msra.mxu0 0
    %2069 = vmatprep.subr.bf16.mxu0 0
    %2070 = vmatpush1.bf16.msra.mxu0 0
    %2071 = vmatprep.subr.bf16.mxu0 0
    %2072 = vmatpush1.bf16.msra.mxu0 0
    %2073 = vmatprep.subr.bf16.mxu0 0
    %2074 = vmatpush1.bf16.msra.mxu0 0
    %2075 = vmatprep.subr.bf16.mxu0 0
    %2076 = vmatpush1.bf16.msra.mxu0 0
    %2077 = vmatprep.subr.bf16.mxu0 0
    %2078 = vmatpush1.bf16.msra.mxu0 0
    %2079 = vmatprep.subr.bf16.mxu0 0
    %2080 = vmatpush1.bf16.msra.mxu0 0
    %2081 = vmatprep.subr.bf16.mxu0 0
    %2082 = vmatpush1.bf16.msra.mxu0 0
    %2083 = vmatprep.subr.bf16.mxu0 0
    %2084 = vmatpush1.bf16.msra.mxu0 0
    %2085 = vmatprep.subr.bf16.mxu0 0
    %2086 = vmatpush1.bf16.msra.mxu0 0
    %2087 = vmatprep.subr.bf16.mxu0 0
    %2088 = vmatpush1.bf16.msra.mxu0 0
    %2089 = vmatprep.subr.bf16.mxu0 0
    %2090 = vmatpush1.bf16.msra.mxu0 0
    %2091 = vmatprep.mubr.bf16.mxu0 0
    %2092 = vmatmul.mubr.bf16.gmra.mrb[0].mxu0 %v1196
    %v2093 = vpop.f32.mrb[0].mxu0
    %v2094 = vadd.f32 %v405, %v2093
    %v2095 = vpop.f32.mrb[0].mxu0
    %v2096 = vadd.f32 %v409, %v2095
    %v2097 = vpop.f32.mrb[0].mxu0
    %v2098 = vpop.f32.mrb[0].mxu0
    %2099 = vdwg.mxu0
    %2100 = vmatprep.subr.bf16.mxu0 %v983
    %2101 = vmatpush1.bf16.msra.mxu0 %v982
    %2102 = vmatprep.subr.bf16.mxu0 %v1047
    %2103 = vmatpush1.bf16.msra.mxu0 %v1046
    %2104 = vmatprep.subr.bf16.mxu0 0
    %2105 = vmatpush1.bf16.msra.mxu0 0
    %2106 = vmatprep.subr.bf16.mxu0 0
    %2107 = vmatpush1.bf16.msra.mxu0 0
    %2108 = vmatprep.subr.bf16.mxu0 0
    %2109 = vmatpush1.bf16.msra.mxu0 0
    %2110 = vmatprep.subr.bf16.mxu0 0
    %2111 = vmatpush1.bf16.msra.mxu0 0
    %2112 = vmatprep.subr.bf16.mxu0 0
    %2113 = vmatpush1.bf16.msra.mxu0 0
    %2114 = vmatprep.subr.bf16.mxu0 0
    %2115 = vmatpush1.bf16.msra.mxu0 0
    %2116 = vmatprep.subr.bf16.mxu0 0
    %2117 = vmatpush1.bf16.msra.mxu0 0
    %2118 = vmatprep.subr.bf16.mxu0 0
    %2119 = vmatpush1.bf16.msra.mxu0 0
    %2120 = vmatprep.subr.bf16.mxu0 0
    %2121 = vmatpush1.bf16.msra.mxu0 0
    %2122 = vmatprep.subr.bf16.mxu0 0
    %2123 = vmatpush1.bf16.msra.mxu0 0
    %2124 = vmatprep.subr.bf16.mxu0 0
    %2125 = vmatpush1.bf16.msra.mxu0 0
    %2126 = vmatprep.subr.bf16.mxu0 0
    %2127 = vmatpush1.bf16.msra.mxu0 0
    %2128 = vmatprep.subr.bf16.mxu0 0
    %2129 = vmatpush1.bf16.msra.mxu0 0
    %2130 = vmatprep.subr.bf16.mxu0 0
    %2131 = vmatpush1.bf16.msra.mxu0 0
    %2132 = vmatprep.mubr.bf16.mxu0 0
    %2133 = vmatmul.mubr.bf16.gmra.mrb[0].mxu0 %v1196
    %v2134 = vpop.f32.mrb[0].mxu0
    %v2135 = vadd.f32 %v413, %v2134
    %v2136 = vpop.f32.mrb[0].mxu0
    %v2137 = vadd.f32 %v417, %v2136
    %v2138 = vpop.f32.mrb[0].mxu0
    %v2139 = vpop.f32.mrb[0].mxu0
    %2140 = vdwg.mxu0
    %2141 = vmatprep.subr.bf16.mxu0 %v985
    %2142 = vmatpush1.bf16.msra.mxu0 %v984
    %2143 = vmatprep.subr.bf16.mxu0 %v1049
    %2144 = vmatpush1.bf16.msra.mxu0 %v1048
    %2145 = vmatprep.subr.bf16.mxu0 0
    %2146 = vmatpush1.bf16.msra.mxu0 0
    %2147 = vmatprep.subr.bf16.mxu0 0
    %2148 = vmatpush1.bf16.msra.mxu0 0
    %2149 = vmatprep.subr.bf16.mxu0 0
    %2150 = vmatpush1.bf16.msra.mxu0 0
    %2151 = vmatprep.subr.bf16.mxu0 0
    %2152 = vmatpush1.bf16.msra.mxu0 0
    %2153 = vmatprep.subr.bf16.mxu0 0
    %2154 = vmatpush1.bf16.msra.mxu0 0
    %2155 = vmatprep.subr.bf16.mxu0 0
    %2156 = vmatpush1.bf16.msra.mxu0 0
    %2157 = vmatprep.subr.bf16.mxu0 0
    %2158 = vmatpush1.bf16.msra.mxu0 0
    %2159 = vmatprep.subr.bf16.mxu0 0
    %2160 = vmatpush1.bf16.msra.mxu0 0
    %2161 = vmatprep.subr.bf16.mxu0 0
    %2162 = vmatpush1.bf16.msra.mxu0 0
    %2163 = vmatprep.subr.bf16.mxu0 0
    %2164 = vmatpush1.bf16.msra.mxu0 0
    %2165 = vmatprep.subr.bf16.mxu0 0
    %2166 = vmatpush1.bf16.msra.mxu0 0
    %2167 = vmatprep.subr.bf16.mxu0 0
    %2168 = vmatpush1.bf16.msra.mxu0 0
    %2169 = vmatprep.subr.bf16.mxu0 0
    %2170 = vmatpush1.bf16.msra.mxu0 0
    %2171 = vmatprep.subr.bf16.mxu0 0
    %2172 = vmatpush1.bf16.msra.mxu0 0
    %2173 = vmatprep.mubr.bf16.mxu0 0
    %2174 = vmatmul.mubr.bf16.gmra.mrb[0].mxu0 %v1196
    %v2175 = vpop.f32.mrb[0].mxu0
    %v2176 = vadd.f32 %v421, %v2175
    %v2177 = vpop.f32.mrb[0].mxu0
    %v2178 = vadd.f32 %v425, %v2177
    %v2179 = vpop.f32.mrb[0].mxu0
    %v2180 = vpop.f32.mrb[0].mxu0
    %2181 = vdwg.mxu0
    %2182 = vmatprep.subr.bf16.mxu0 %v987
    %2183 = vmatpush1.bf16.msra.mxu0 %v986
    %2184 = vmatprep.subr.bf16.mxu0 %v1051
    %2185 = vmatpush1.bf16.msra.mxu0 %v1050
    %2186 = vmatprep.subr.bf16.mxu0 0
    %2187 = vmatpush1.bf16.msra.mxu0 0
    %2188 = vmatprep.subr.bf16.mxu0 0
    %2189 = vmatpush1.bf16.msra.mxu0 0
    %2190 = vmatprep.subr.bf16.mxu0 0
    %2191 = vmatpush1.bf16.msra.mxu0 0
    %2192 = vmatprep.subr.bf16.mxu0 0
    %2193 = vmatpush1.bf16.msra.mxu0 0
    %2194 = vmatprep.subr.bf16.mxu0 0
    %2195 = vmatpush1.bf16.msra.mxu0 0
    %2196 = vmatprep.subr.bf16.mxu0 0
    %2197 = vmatpush1.bf16.msra.mxu0 0
    %2198 = vmatprep.subr.bf16.mxu0 0
    %2199 = vmatpush1.bf16.msra.mxu0 0
    %2200 = vmatprep.subr.bf16.mxu0 0
    %2201 = vmatpush1.bf16.msra.mxu0 0
    %2202 = vmatprep.subr.bf16.mxu0 0
    %2203 = vmatpush1.bf16.msra.mxu0 0
    %2204 = vmatprep.subr.bf16.mxu0 0
    %2205 = vmatpush1.bf16.msra.mxu0 0
    %2206 = vmatprep.subr.bf16.mxu0 0
    %2207 = vmatpush1.bf16.msra.mxu0 0
    %2208 = vmatprep.subr.bf16.mxu0 0
    %2209 = vmatpush1.bf16.msra.mxu0 0
    %2210 = vmatprep.subr.bf16.mxu0 0
    %2211 = vmatpush1.bf16.msra.mxu0 0
    %2212 = vmatprep.subr.bf16.mxu0 0
    %2213 = vmatpush1.bf16.msra.mxu0 0
    %2214 = vmatprep.mubr.bf16.mxu0 0
    %2215 = vmatmul.mubr.bf16.gmra.mrb[0].mxu0 %v1196
    %v2216 = vpop.f32.mrb[0].mxu0
    %v2217 = vadd.f32 %v429, %v2216
    %v2218 = vpop.f32.mrb[0].mxu0
    %v2219 = vadd.f32 %v433, %v2218
    %v2220 = vpop.f32.mrb[0].mxu0
    %v2221 = vpop.f32.mrb[0].mxu0
    %2222 = vdwg.mxu0
    %2223 = vmatprep.subr.bf16.mxu0 %v989
    %2224 = vmatpush1.bf16.msra.mxu0 %v988
    %2225 = vmatprep.subr.bf16.mxu0 %v1053
    %2226 = vmatpush1.bf16.msra.mxu0 %v1052
    %2227 = vmatprep.subr.bf16.mxu0 0
    %2228 = vmatpush1.bf16.msra.mxu0 0
    %2229 = vmatprep.subr.bf16.mxu0 0
    %2230 = vmatpush1.bf16.msra.mxu0 0
    %2231 = vmatprep.subr.bf16.mxu0 0
    %2232 = vmatpush1.bf16.msra.mxu0 0
    %2233 = vmatprep.subr.bf16.mxu0 0
    %2234 = vmatpush1.bf16.msra.mxu0 0
    %2235 = vmatprep.subr.bf16.mxu0 0
    %2236 = vmatpush1.bf16.msra.mxu0 0
    %2237 = vmatprep.subr.bf16.mxu0 0
    %2238 = vmatpush1.bf16.msra.mxu0 0
    %2239 = vmatprep.subr.bf16.mxu0 0
    %2240 = vmatpush1.bf16.msra.mxu0 0
    %2241 = vmatprep.subr.bf16.mxu0 0
    %2242 = vmatpush1.bf16.msra.mxu0 0
    %2243 = vmatprep.subr.bf16.mxu0 0
    %2244 = vmatpush1.bf16.msra.mxu0 0
    %2245 = vmatprep.subr.bf16.mxu0 0
    %2246 = vmatpush1.bf16.msra.mxu0 0
    %2247 = vmatprep.subr.bf16.mxu0 0
    %2248 = vmatpush1.bf16.msra.mxu0 0
    %2249 = vmatprep.subr.bf16.mxu0 0
    %2250 = vmatpush1.bf16.msra.mxu0 0
    %2251 = vmatprep.subr.bf16.mxu0 0
    %2252 = vmatpush1.bf16.msra.mxu0 0
    %2253 = vmatprep.subr.bf16.mxu0 0
    %2254 = vmatpush1.bf16.msra.mxu0 0
    %2255 = vmatprep.mubr.bf16.mxu0 0
    %2256 = vmatmul.mubr.bf16.gmra.mrb[0].mxu0 %v1196
    %v2257 = vpop.f32.mrb[0].mxu0
    %v2258 = vadd.f32 %v437, %v2257
    %v2259 = vpop.f32.mrb[0].mxu0
    %v2260 = vadd.f32 %v441, %v2259
    %v2261 = vpop.f32.mrb[0].mxu0
    %v2262 = vpop.f32.mrb[0].mxu0
    %2263 = vdwg.mxu0
    %2264 = vmatprep.subr.bf16.mxu0 %v991
    %2265 = vmatpush1.bf16.msra.mxu0 %v990
    %2266 = vmatprep.subr.bf16.mxu0 %v1055
    %2267 = vmatpush1.bf16.msra.mxu0 %v1054
    %2268 = vmatprep.subr.bf16.mxu0 0
    %2269 = vmatpush1.bf16.msra.mxu0 0
    %2270 = vmatprep.subr.bf16.mxu0 0
    %2271 = vmatpush1.bf16.msra.mxu0 0
    %2272 = vmatprep.subr.bf16.mxu0 0
    %2273 = vmatpush1.bf16.msra.mxu0 0
    %2274 = vmatprep.subr.bf16.mxu0 0
    %2275 = vmatpush1.bf16.msra.mxu0 0
    %2276 = vmatprep.subr.bf16.mxu0 0
    %2277 = vmatpush1.bf16.msra.mxu0 0
    %2278 = vmatprep.subr.bf16.mxu0 0
    %2279 = vmatpush1.bf16.msra.mxu0 0
    %2280 = vmatprep.subr.bf16.mxu0 0
    %2281 = vmatpush1.bf16.msra.mxu0 0
    %2282 = vmatprep.subr.bf16.mxu0 0
    %2283 = vmatpush1.bf16.msra.mxu0 0
    %2284 = vmatprep.subr.bf16.mxu0 0
    %2285 = vmatpush1.bf16.msra.mxu0 0
    %2286 = vmatprep.subr.bf16.mxu0 0
    %2287 = vmatpush1.bf16.msra.mxu0 0
    %2288 = vmatprep.subr.bf16.mxu0 0
    %2289 = vmatpush1.bf16.msra.mxu0 0
    %2290 = vmatprep.subr.bf16.mxu0 0
    %2291 = vmatpush1.bf16.msra.mxu0 0
    %2292 = vmatprep.subr.bf16.mxu0 0
    %2293 = vmatpush1.bf16.msra.mxu0 0
    %2294 = vmatprep.subr.bf16.mxu0 0
    %2295 = vmatpush1.bf16.msra.mxu0 0
    %2296 = vmatprep.mubr.bf16.mxu0 0
    %2297 = vmatmul.mubr.bf16.gmra.mrb[0].mxu0 %v1196
    %v2298 = vpop.f32.mrb[0].mxu0
    %v2299 = vadd.f32 %v445, %v2298
    %v2300 = vpop.f32.mrb[0].mxu0
    %v2301 = vadd.f32 %v449, %v2300
    %v2302 = vpop.f32.mrb[0].mxu0
    %v2303 = vpop.f32.mrb[0].mxu0
    %2304 = vdwg.mxu0
    %2305 = vmatprep.subr.bf16.mxu0 %v993
    %2306 = vmatpush1.bf16.msra.mxu0 %v992
    %2307 = vmatprep.subr.bf16.mxu0 %v1057
    %2308 = vmatpush1.bf16.msra.mxu0 %v1056
    %2309 = vmatprep.subr.bf16.mxu0 0
    %2310 = vmatpush1.bf16.msra.mxu0 0
    %2311 = vmatprep.subr.bf16.mxu0 0
    %2312 = vmatpush1.bf16.msra.mxu0 0
    %2313 = vmatprep.subr.bf16.mxu0 0
    %2314 = vmatpush1.bf16.msra.mxu0 0
    %2315 = vmatprep.subr.bf16.mxu0 0
    %2316 = vmatpush1.bf16.msra.mxu0 0
    %2317 = vmatprep.subr.bf16.mxu0 0
    %2318 = vmatpush1.bf16.msra.mxu0 0
    %2319 = vmatprep.subr.bf16.mxu0 0
    %2320 = vmatpush1.bf16.msra.mxu0 0
    %2321 = vmatprep.subr.bf16.mxu0 0
    %2322 = vmatpush1.bf16.msra.mxu0 0
    %2323 = vmatprep.subr.bf16.mxu0 0
    %2324 = vmatpush1.bf16.msra.mxu0 0
    %2325 = vmatprep.subr.bf16.mxu0 0
    %2326 = vmatpush1.bf16.msra.mxu0 0
    %2327 = vmatprep.subr.bf16.mxu0 0
    %2328 = vmatpush1.bf16.msra.mxu0 0
    %2329 = vmatprep.subr.bf16.mxu0 0
    %2330 = vmatpush1.bf16.msra.mxu0 0
    %2331 = vmatprep.subr.bf16.mxu0 0
    %2332 = vmatpush1.bf16.msra.mxu0 0
    %2333 = vmatprep.subr.bf16.mxu0 0
    %2334 = vmatpush1.bf16.msra.mxu0 0
    %2335 = vmatprep.subr.bf16.mxu0 0
    %2336 = vmatpush1.bf16.msra.mxu0 0
    %2337 = vmatprep.mubr.bf16.mxu0 0
    %2338 = vmatmul.mubr.bf16.gmra.mrb[0].mxu0 %v1196
    %v2339 = vpop.f32.mrb[0].mxu0
    %v2340 = vadd.f32 %v453, %v2339
    %v2341 = vpop.f32.mrb[0].mxu0
    %v2342 = vadd.f32 %v457, %v2341
    %v2343 = vpop.f32.mrb[0].mxu0
    %v2344 = vpop.f32.mrb[0].mxu0
    %2345 = vdwg.mxu0
    %2346 = vmatprep.subr.bf16.mxu0 %v995
    %2347 = vmatpush1.bf16.msra.mxu0 %v994
    %2348 = vmatprep.subr.bf16.mxu0 %v1059
    %2349 = vmatpush1.bf16.msra.mxu0 %v1058
    %2350 = vmatprep.subr.bf16.mxu0 0
    %2351 = vmatpush1.bf16.msra.mxu0 0
    %2352 = vmatprep.subr.bf16.mxu0 0
    %2353 = vmatpush1.bf16.msra.mxu0 0
    %2354 = vmatprep.subr.bf16.mxu0 0
    %2355 = vmatpush1.bf16.msra.mxu0 0
    %2356 = vmatprep.subr.bf16.mxu0 0
    %2357 = vmatpush1.bf16.msra.mxu0 0
    %2358 = vmatprep.subr.bf16.mxu0 0
    %2359 = vmatpush1.bf16.msra.mxu0 0
    %2360 = vmatprep.subr.bf16.mxu0 0
    %2361 = vmatpush1.bf16.msra.mxu0 0
    %2362 = vmatprep.subr.bf16.mxu0 0
    %2363 = vmatpush1.bf16.msra.mxu0 0
    %2364 = vmatprep.subr.bf16.mxu0 0
    %2365 = vmatpush1.bf16.msra.mxu0 0
    %2366 = vmatprep.subr.bf16.mxu0 0
    %2367 = vmatpush1.bf16.msra.mxu0 0
    %2368 = vmatprep.subr.bf16.mxu0 0
    %2369 = vmatpush1.bf16.msra.mxu0 0
    %2370 = vmatprep.subr.bf16.mxu0 0
    %2371 = vmatpush1.bf16.msra.mxu0 0
    %2372 = vmatprep.subr.bf16.mxu0 0
    %2373 = vmatpush1.bf16.msra.mxu0 0
    %2374 = vmatprep.subr.bf16.mxu0 0
    %2375 = vmatpush1.bf16.msra.mxu0 0
    %2376 = vmatprep.subr.bf16.mxu0 0
    %2377 = vmatpush1.bf16.msra.mxu0 0
    %2378 = vmatprep.mubr.bf16.mxu0 0
    %2379 = vmatmul.mubr.bf16.gmra.mrb[0].mxu0 %v1196
    %v2380 = vpop.f32.mrb[0].mxu0
    %v2381 = vadd.f32 %v461, %v2380
    %v2382 = vpop.f32.mrb[0].mxu0
    %v2383 = vadd.f32 %v465, %v2382
    %v2384 = vpop.f32.mrb[0].mxu0
    %v2385 = vpop.f32.mrb[0].mxu0
    %2386 = vdwg.mxu0
    %2387 = vmatprep.subr.bf16.mxu0 %v997
    %2388 = vmatpush1.bf16.msra.mxu0 %v996
    %2389 = vmatprep.subr.bf16.mxu0 %v1061
    %2390 = vmatpush1.bf16.msra.mxu0 %v1060
    %2391 = vmatprep.subr.bf16.mxu0 0
    %2392 = vmatpush1.bf16.msra.mxu0 0
    %2393 = vmatprep.subr.bf16.mxu0 0
    %2394 = vmatpush1.bf16.msra.mxu0 0
    %2395 = vmatprep.subr.bf16.mxu0 0
    %2396 = vmatpush1.bf16.msra.mxu0 0
    %2397 = vmatprep.subr.bf16.mxu0 0
    %2398 = vmatpush1.bf16.msra.mxu0 0
    %2399 = vmatprep.subr.bf16.mxu0 0
    %2400 = vmatpush1.bf16.msra.mxu0 0
    %2401 = vmatprep.subr.bf16.mxu0 0
    %2402 = vmatpush1.bf16.msra.mxu0 0
    %2403 = vmatprep.subr.bf16.mxu0 0
    %2404 = vmatpush1.bf16.msra.mxu0 0
    %2405 = vmatprep.subr.bf16.mxu0 0
    %2406 = vmatpush1.bf16.msra.mxu0 0
    %2407 = vmatprep.subr.bf16.mxu0 0
    %2408 = vmatpush1.bf16.msra.mxu0 0
    %2409 = vmatprep.subr.bf16.mxu0 0
    %2410 = vmatpush1.bf16.msra.mxu0 0
    %2411 = vmatprep.subr.bf16.mxu0 0
    %2412 = vmatpush1.bf16.msra.mxu0 0
    %2413 = vmatprep.subr.bf16.mxu0 0
    %2414 = vmatpush1.bf16.msra.mxu0 0
    %2415 = vmatprep.subr.bf16.mxu0 0
    %2416 = vmatpush1.bf16.msra.mxu0 0
    %2417 = vmatprep.subr.bf16.mxu0 0
    %2418 = vmatpush1.bf16.msra.mxu0 0
    %2419 = vmatprep.mubr.bf16.mxu0 0
    %2420 = vmatmul.mubr.bf16.gmra.mrb[0].mxu0 %v1196
    %v2421 = vpop.f32.mrb[0].mxu0
    %v2422 = vadd.f32 %v469, %v2421
    %v2423 = vpop.f32.mrb[0].mxu0
    %v2424 = vadd.f32 %v473, %v2423
    %v2425 = vpop.f32.mrb[0].mxu0
    %v2426 = vpop.f32.mrb[0].mxu0
    %2427 = vdwg.mxu0
    %2428 = vmatprep.subr.bf16.mxu0 %v999
    %2429 = vmatpush1.bf16.msra.mxu0 %v998
    %2430 = vmatprep.subr.bf16.mxu0 %v1063
    %2431 = vmatpush1.bf16.msra.mxu0 %v1062
    %2432 = vmatprep.subr.bf16.mxu0 0
    %2433 = vmatpush1.bf16.msra.mxu0 0
    %2434 = vmatprep.subr.bf16.mxu0 0
    %2435 = vmatpush1.bf16.msra.mxu0 0
    %2436 = vmatprep.subr.bf16.mxu0 0
    %2437 = vmatpush1.bf16.msra.mxu0 0
    %2438 = vmatprep.subr.bf16.mxu0 0
    %2439 = vmatpush1.bf16.msra.mxu0 0
    %2440 = vmatprep.subr.bf16.mxu0 0
    %2441 = vmatpush1.bf16.msra.mxu0 0
    %2442 = vmatprep.subr.bf16.mxu0 0
    %2443 = vmatpush1.bf16.msra.mxu0 0
    %2444 = vmatprep.subr.bf16.mxu0 0
    %2445 = vmatpush1.bf16.msra.mxu0 0
    %2446 = vmatprep.subr.bf16.mxu0 0
    %2447 = vmatpush1.bf16.msra.mxu0 0
    %2448 = vmatprep.subr.bf16.mxu0 0
    %2449 = vmatpush1.bf16.msra.mxu0 0
    %2450 = vmatprep.subr.bf16.mxu0 0
    %2451 = vmatpush1.bf16.msra.mxu0 0
    %2452 = vmatprep.subr.bf16.mxu0 0
    %2453 = vmatpush1.bf16.msra.mxu0 0
    %2454 = vmatprep.subr.bf16.mxu0 0
    %2455 = vmatpush1.bf16.msra.mxu0 0
    %2456 = vmatprep.subr.bf16.mxu0 0
    %2457 = vmatpush1.bf16.msra.mxu0 0
    %2458 = vmatprep.subr.bf16.mxu0 0
    %2459 = vmatpush1.bf16.msra.mxu0 0
    %2460 = vmatprep.mubr.bf16.mxu0 0
    %2461 = vmatmul.mubr.bf16.gmra.mrb[0].mxu0 %v1196
    %v2462 = vpop.f32.mrb[0].mxu0
    %v2463 = vadd.f32 %v477, %v2462
    %v2464 = vpop.f32.mrb[0].mxu0
    %v2465 = vadd.f32 %v481, %v2464
    %v2466 = vpop.f32.mrb[0].mxu0
    %v2467 = vpop.f32.mrb[0].mxu0
    %2468 = vdwg.mxu0
    %2469 = vmatprep.subr.bf16.mxu0 %v1001
    %2470 = vmatpush1.bf16.msra.mxu0 %v1000
    %2471 = vmatprep.subr.bf16.mxu0 %v1065
    %2472 = vmatpush1.bf16.msra.mxu0 %v1064
    %2473 = vmatprep.subr.bf16.mxu0 0
    %2474 = vmatpush1.bf16.msra.mxu0 0
    %2475 = vmatprep.subr.bf16.mxu0 0
    %2476 = vmatpush1.bf16.msra.mxu0 0
    %2477 = vmatprep.subr.bf16.mxu0 0
    %2478 = vmatpush1.bf16.msra.mxu0 0
    %2479 = vmatprep.subr.bf16.mxu0 0
    %2480 = vmatpush1.bf16.msra.mxu0 0
    %2481 = vmatprep.subr.bf16.mxu0 0
    %2482 = vmatpush1.bf16.msra.mxu0 0
    %2483 = vmatprep.subr.bf16.mxu0 0
    %2484 = vmatpush1.bf16.msra.mxu0 0
    %2485 = vmatprep.subr.bf16.mxu0 0
    %2486 = vmatpush1.bf16.msra.mxu0 0
    %2487 = vmatprep.subr.bf16.mxu0 0
    %2488 = vmatpush1.bf16.msra.mxu0 0
    %2489 = vmatprep.subr.bf16.mxu0 0
    %2490 = vmatpush1.bf16.msra.mxu0 0
    %2491 = vmatprep.subr.bf16.mxu0 0
    %2492 = vmatpush1.bf16.msra.mxu0 0
    %2493 = vmatprep.subr.bf16.mxu0 0
    %2494 = vmatpush1.bf16.msra.mxu0 0
    %2495 = vmatprep.subr.bf16.mxu0 0
    %2496 = vmatpush1.bf16.msra.mxu0 0
    %2497 = vmatprep.subr.bf16.mxu0 0
    %2498 = vmatpush1.bf16.msra.mxu0 0
    %2499 = vmatprep.subr.bf16.mxu0 0
    %2500 = vmatpush1.bf16.msra.mxu0 0
    %2501 = vmatprep.mubr.bf16.mxu0 0
    %2502 = vmatmul.mubr.bf16.gmra.mrb[0].mxu0 %v1196
    %v2503 = vpop.f32.mrb[0].mxu0
    %v2504 = vadd.f32 %v485, %v2503
    %v2505 = vpop.f32.mrb[0].mxu0
    %v2506 = vadd.f32 %v489, %v2505
    %v2507 = vpop.f32.mrb[0].mxu0
    %v2508 = vpop.f32.mrb[0].mxu0
    %2509 = vdwg.mxu0
    %v2574 = vcombine.low %v1233, %v1235
    %v2575 = vcombine.low %v1274, %v1276
    %v2577 = vunpack.c.l.s4 1983009808
    %v2578 = vunpack.c.0.s8 %v2577
    %v2579 = vlaneseq
    %v2580 = vshrl.u32 %v2579, 7
    %v2581 = vsub.s32 %v2578, %v2580
    %v2582 = vrot.slane %v2574, %v2581
    %v2584 = vunpack.c.l.s4 1983009808
    %v2585 = vunpack.c.0.s8 %v2584
    %v2586 = vlaneseq
    %v2587 = vshrl.u32 %v2586, 7
    %v2588 = vsub.s32 %v2585, %v2587
    %v2589 = vrot.slane %v2575, %v2588
    %v2590 = vcombine.low %v2582, %v2589
    %v2591 = vcombine.low %v1315, %v1317
    %v2592 = vcombine.low %v1356, %v1358
    %v2594 = vunpack.c.l.s4 1983009808
    %v2595 = vunpack.c.0.s8 %v2594
    %v2596 = vlaneseq
    %v2597 = vshrl.u32 %v2596, 7
    %v2598 = vsub.s32 %v2595, %v2597
    %v2599 = vrot.slane %v2591, %v2598
    %v2601 = vunpack.c.l.s4 1983009808
    %v2602 = vunpack.c.0.s8 %v2601
    %v2603 = vlaneseq
    %v2604 = vshrl.u32 %v2603, 7
    %v2605 = vsub.s32 %v2602, %v2604
    %v2606 = vrot.slane %v2592, %v2605
    %v2607 = vcombine.low %v2599, %v2606
    %v2608 = vcombine.low %v1397, %v1399
    %v2609 = vcombine.low %v1438, %v1440
    %v2611 = vunpack.c.l.s4 1983009808
    %v2612 = vunpack.c.0.s8 %v2611
    %v2613 = vlaneseq
    %v2614 = vshrl.u32 %v2613, 7
    %v2615 = vsub.s32 %v2612, %v2614
    %v2616 = vrot.slane %v2608, %v2615
    %v2618 = vunpack.c.l.s4 1983009808
    %v2619 = vunpack.c.0.s8 %v2618
    %v2620 = vlaneseq
    %v2621 = vshrl.u32 %v2620, 7
    %v2622 = vsub.s32 %v2619, %v2621
    %v2623 = vrot.slane %v2609, %v2622
    %v2624 = vcombine.low %v2616, %v2623
    %v2625 = vcombine.low %v1479, %v1481
    %v2626 = vcombine.low %v1520, %v1522
    %v2628 = vunpack.c.l.s4 1983009808
    %v2629 = vunpack.c.0.s8 %v2628
    %v2630 = vlaneseq
    %v2631 = vshrl.u32 %v2630, 7
    %v2632 = vsub.s32 %v2629, %v2631
    %v2633 = vrot.slane %v2625, %v2632
    %v2635 = vunpack.c.l.s4 1983009808
    %v2636 = vunpack.c.0.s8 %v2635
    %v2637 = vlaneseq
    %v2638 = vshrl.u32 %v2637, 7
    %v2639 = vsub.s32 %v2636, %v2638
    %v2640 = vrot.slane %v2626, %v2639
    %v2641 = vcombine.low %v2633, %v2640
    %v2642 = vcombine.low %v1561, %v1563
    %v2643 = vcombine.low %v1602, %v1604
    %v2645 = vunpack.c.l.s4 1983009808
    %v2646 = vunpack.c.0.s8 %v2645
    %v2647 = vlaneseq
    %v2648 = vshrl.u32 %v2647, 7
    %v2649 = vsub.s32 %v2646, %v2648
    %v2650 = vrot.slane %v2642, %v2649
    %v2652 = vunpack.c.l.s4 1983009808
    %v2653 = vunpack.c.0.s8 %v2652
    %v2654 = vlaneseq
    %v2655 = vshrl.u32 %v2654, 7
    %v2656 = vsub.s32 %v2653, %v2655
    %v2657 = vrot.slane %v2643, %v2656
    %v2658 = vcombine.low %v2650, %v2657
    %v2659 = vcombine.low %v1643, %v1645
    %v2660 = vcombine.low %v1684, %v1686
    %v2662 = vunpack.c.l.s4 1983009808
    %v2663 = vunpack.c.0.s8 %v2662
    %v2664 = vlaneseq
    %v2665 = vshrl.u32 %v2664, 7
    %v2666 = vsub.s32 %v2663, %v2665
    %v2667 = vrot.slane %v2659, %v2666
    %v2669 = vunpack.c.l.s4 1983009808
    %v2670 = vunpack.c.0.s8 %v2669
    %v2671 = vlaneseq
    %v2672 = vshrl.u32 %v2671, 7
    %v2673 = vsub.s32 %v2670, %v2672
    %v2674 = vrot.slane %v2660, %v2673
    %v2675 = vcombine.low %v2667, %v2674
    %v2676 = vcombine.low %v1725, %v1727
    %v2677 = vcombine.low %v1766, %v1768
    %v2679 = vunpack.c.l.s4 1983009808
    %v2680 = vunpack.c.0.s8 %v2679
    %v2681 = vlaneseq
    %v2682 = vshrl.u32 %v2681, 7
    %v2683 = vsub.s32 %v2680, %v2682
    %v2684 = vrot.slane %v2676, %v2683
    %v2686 = vunpack.c.l.s4 1983009808
    %v2687 = vunpack.c.0.s8 %v2686
    %v2688 = vlaneseq
    %v2689 = vshrl.u32 %v2688, 7
    %v2690 = vsub.s32 %v2687, %v2689
    %v2691 = vrot.slane %v2677, %v2690
    %v2692 = vcombine.low %v2684, %v2691
    %v2693 = vcombine.low %v1807, %v1809
    %v2694 = vcombine.low %v1848, %v1850
    %v2696 = vunpack.c.l.s4 1983009808
    %v2697 = vunpack.c.0.s8 %v2696
    %v2698 = vlaneseq
    %v2699 = vshrl.u32 %v2698, 7
    %v2700 = vsub.s32 %v2697, %v2699
    %v2701 = vrot.slane %v2693, %v2700
    %v2703 = vunpack.c.l.s4 1983009808
    %v2704 = vunpack.c.0.s8 %v2703
    %v2705 = vlaneseq
    %v2706 = vshrl.u32 %v2705, 7
    %v2707 = vsub.s32 %v2704, %v2706
    %v2708 = vrot.slane %v2694, %v2707
    %v2709 = vcombine.low %v2701, %v2708
    %v2710 = vcombine.low %v1889, %v1891
    %v2711 = vcombine.low %v1930, %v1932
    %v2713 = vunpack.c.l.s4 1983009808
    %v2714 = vunpack.c.0.s8 %v2713
    %v2715 = vlaneseq
    %v2716 = vshrl.u32 %v2715, 7
    %v2717 = vsub.s32 %v2714, %v2716
    %v2718 = vrot.slane %v2710, %v2717
    %v2720 = vunpack.c.l.s4 1983009808
    %v2721 = vunpack.c.0.s8 %v2720
    %v2722 = vlaneseq
    %v2723 = vshrl.u32 %v2722, 7
    %v2724 = vsub.s32 %v2721, %v2723
    %v2725 = vrot.slane %v2711, %v2724
    %v2726 = vcombine.low %v2718, %v2725
    %v2727 = vcombine.low %v1971, %v1973
    %v2728 = vcombine.low %v2012, %v2014
    %v2730 = vunpack.c.l.s4 1983009808
    %v2731 = vunpack.c.0.s8 %v2730
    %v2732 = vlaneseq
    %v2733 = vshrl.u32 %v2732, 7
    %v2734 = vsub.s32 %v2731, %v2733
    %v2735 = vrot.slane %v2727, %v2734
    %v2737 = vunpack.c.l.s4 1983009808
    %v2738 = vunpack.c.0.s8 %v2737
    %v2739 = vlaneseq
    %v2740 = vshrl.u32 %v2739, 7
    %v2741 = vsub.s32 %v2738, %v2740
    %v2742 = vrot.slane %v2728, %v2741
    %v2743 = vcombine.low %v2735, %v2742
    %v2744 = vcombine.low %v2053, %v2055
    %v2745 = vcombine.low %v2094, %v2096
    %v2747 = vunpack.c.l.s4 1983009808
    %v2748 = vunpack.c.0.s8 %v2747
    %v2749 = vlaneseq
    %v2750 = vshrl.u32 %v2749, 7
    %v2751 = vsub.s32 %v2748, %v2750
    %v2752 = vrot.slane %v2744, %v2751
    %v2754 = vunpack.c.l.s4 1983009808
    %v2755 = vunpack.c.0.s8 %v2754
    %v2756 = vlaneseq
    %v2757 = vshrl.u32 %v2756, 7
    %v2758 = vsub.s32 %v2755, %v2757
    %v2759 = vrot.slane %v2745, %v2758
    %v2760 = vcombine.low %v2752, %v2759
    %v2761 = vcombine.low %v2135, %v2137
    %v2762 = vcombine.low %v2176, %v2178
    %v2764 = vunpack.c.l.s4 1983009808
    %v2765 = vunpack.c.0.s8 %v2764
    %v2766 = vlaneseq
    %v2767 = vshrl.u32 %v2766, 7
    %v2768 = vsub.s32 %v2765, %v2767
    %v2769 = vrot.slane %v2761, %v2768
    %v2771 = vunpack.c.l.s4 1983009808
    %v2772 = vunpack.c.0.s8 %v2771
    %v2773 = vlaneseq
    %v2774 = vshrl.u32 %v2773, 7
    %v2775 = vsub.s32 %v2772, %v2774
    %v2776 = vrot.slane %v2762, %v2775
    %v2777 = vcombine.low %v2769, %v2776
    %v2778 = vcombine.low %v2217, %v2219
    %v2779 = vcombine.low %v2258, %v2260
    %v2781 = vunpack.c.l.s4 1983009808
    %v2782 = vunpack.c.0.s8 %v2781
    %v2783 = vlaneseq
    %v2784 = vshrl.u32 %v2783, 7
    %v2785 = vsub.s32 %v2782, %v2784
    %v2786 = vrot.slane %v2778, %v2785
    %v2788 = vunpack.c.l.s4 1983009808
    %v2789 = vunpack.c.0.s8 %v2788
    %v2790 = vlaneseq
    %v2791 = vshrl.u32 %v2790, 7
    %v2792 = vsub.s32 %v2789, %v2791
    %v2793 = vrot.slane %v2779, %v2792
    %v2794 = vcombine.low %v2786, %v2793
    %v2795 = vcombine.low %v2299, %v2301
    %v2796 = vcombine.low %v2340, %v2342
    %v2798 = vunpack.c.l.s4 1983009808
    %v2799 = vunpack.c.0.s8 %v2798
    %v2800 = vlaneseq
    %v2801 = vshrl.u32 %v2800, 7
    %v2802 = vsub.s32 %v2799, %v2801
    %v2803 = vrot.slane %v2795, %v2802
    %v2805 = vunpack.c.l.s4 1983009808
    %v2806 = vunpack.c.0.s8 %v2805
    %v2807 = vlaneseq
    %v2808 = vshrl.u32 %v2807, 7
    %v2809 = vsub.s32 %v2806, %v2808
    %v2810 = vrot.slane %v2796, %v2809
    %v2811 = vcombine.low %v2803, %v2810
    %v2812 = vcombine.low %v2381, %v2383
    %v2813 = vcombine.low %v2422, %v2424
    %v2815 = vunpack.c.l.s4 1983009808
    %v2816 = vunpack.c.0.s8 %v2815
    %v2817 = vlaneseq
    %v2818 = vshrl.u32 %v2817, 7
    %v2819 = vsub.s32 %v2816, %v2818
    %v2820 = vrot.slane %v2812, %v2819
    %v2822 = vunpack.c.l.s4 1983009808
    %v2823 = vunpack.c.0.s8 %v2822
    %v2824 = vlaneseq
    %v2825 = vshrl.u32 %v2824, 7
    %v2826 = vsub.s32 %v2823, %v2825
    %v2827 = vrot.slane %v2813, %v2826
    %v2828 = vcombine.low %v2820, %v2827
    %v2829 = vcombine.low %v2463, %v2465
    %v2830 = vcombine.low %v2504, %v2506
    %v2832 = vunpack.c.l.s4 1983009808
    %v2833 = vunpack.c.0.s8 %v2832
    %v2834 = vlaneseq
    %v2835 = vshrl.u32 %v2834, 7
    %v2836 = vsub.s32 %v2833, %v2835
    %v2837 = vrot.slane %v2829, %v2836
    %v2839 = vunpack.c.l.s4 1983009808
    %v2840 = vunpack.c.0.s8 %v2839
    %v2841 = vlaneseq
    %v2842 = vshrl.u32 %v2841, 7
    %v2843 = vsub.s32 %v2840, %v2842
    %v2844 = vrot.slane %v2830, %v2843
    %v2845 = vcombine.low %v2837, %v2844
    %2862 = vst [vmem:[%s6] sm:$0xff] %v2590
    %2863 = vst [vmem:[%s6 + $0x8] sm:$0xff] %v2607
    %2864 = vst [vmem:[%s6 + $0x10] sm:$0xff] %v2624
    %2865 = vst [vmem:[%s6 + $0x18] sm:$0xff] %v2641
    %2866 = vst [vmem:[%s6 + $0x20] sm:$0xff] %v2658
    %2867 = vst [vmem:[%s6 + $0x28] sm:$0xff] %v2675
    %2868 = vst [vmem:[%s6 + $0x30] sm:$0xff] %v2692
    %2869 = vst [vmem:[%s6 + $0x38] sm:$0xff] %v2709
    %2870 = vst [vmem:[%s6 + $0x40] sm:$0xff] %v2726
    %2871 = vst [vmem:[%s6 + $0x48] sm:$0xff] %v2743
    %2872 = vst [vmem:[%s6 + $0x50] sm:$0xff] %v2760
    %2873 = vst [vmem:[%s6 + $0x58] sm:$0xff] %v2777
    %2874 = vst [vmem:[%s6 + $0x60] sm:$0xff] %v2794
    %2875 = vst [vmem:[%s6 + $0x68] sm:$0xff] %v2811
    %2876 = vst [vmem:[%s6 + $0x70] sm:$0xff] %v2828
    %2877 = vst [vmem:[%s6 + $0x78] sm:$0xff] %v2845
    %v2878 = vld [vmem:[%s1] sm:$0x3]
    %v2879 = vpack.c.bf16 %v2878, %v2878
    %v2880 = vld [vmem:[#allocation7] sm:$0xf]
    %v2881 = vld [vmem:[#allocation7 + $0x4] sm:$0x1]
    %v2882 = vld [vmem:[#allocation9] sm:$0x1]
    %v2884 = vlaneseq
    %v2885 = vshrl.u32 %v2884, 7
    %v2886 = vsub.s32 0, %v2885
    %v2887 = vrot.slane %v2882, %v2886
    %v2891 = vunpack.c.l.b16 %v2880
    %v2892 = vunpack.c.l.b16 %v2881
    %v2893 = vpack.c.b16 %v2892, %v2891
    %vm2894 = vcmask 80896
    %v2896 = vsel %vm2894, %v2879, 0
    %vm2898 = vcmask 1044480
    %v2900 = vsel %vm2898, %v2893, 0
    %2902 = vmatprep.subr.bf16.mxu0 0
    %2903 = vmatpush1.bf16.msra.mxu0 %v2900
    %2904 = vmatprep.subr.bf16.mxu0 0
    %2905 = vmatpush1.bf16.msra.mxu0 0
    %2906 = vmatprep.subr.bf16.mxu0 0
    %2907 = vmatpush1.bf16.msra.mxu0 0
    %2908 = vmatprep.subr.bf16.mxu0 0
    %2909 = vmatpush1.bf16.msra.mxu0 0
    %2910 = vmatprep.subr.bf16.mxu0 0
    %2911 = vmatpush1.bf16.msra.mxu0 0
    %2912 = vmatprep.subr.bf16.mxu0 0
    %2913 = vmatpush1.bf16.msra.mxu0 0
    %2914 = vmatprep.subr.bf16.mxu0 0
    %2915 = vmatpush1.bf16.msra.mxu0 0
    %2916 = vmatprep.subr.bf16.mxu0 0
    %2917 = vmatpush1.bf16.msra.mxu0 0
    %2918 = vmatprep.subr.bf16.mxu0 0
    %2919 = vmatpush1.bf16.msra.mxu0 0
    %2920 = vmatprep.subr.bf16.mxu0 0
    %2921 = vmatpush1.bf16.msra.mxu0 0
    %2922 = vmatprep.subr.bf16.mxu0 0
    %2923 = vmatpush1.bf16.msra.mxu0 0
    %2924 = vmatprep.subr.bf16.mxu0 0
    %2925 = vmatpush1.bf16.msra.mxu0 0
    %2926 = vmatprep.subr.bf16.mxu0 0
    %2927 = vmatpush1.bf16.msra.mxu0 0
    %2928 = vmatprep.subr.bf16.mxu0 0
    %2929 = vmatpush1.bf16.msra.mxu0 0
    %2930 = vmatprep.subr.bf16.mxu0 0
    %2931 = vmatpush1.bf16.msra.mxu0 0
    %2932 = vmatprep.subr.bf16.mxu0 0
    %2933 = vmatpush1.bf16.msra.mxu0 0
    %2934 = vmatprep.mubr.bf16.mxu0 0
    %2935 = vmatmul.mubr.bf16.gmra.mrb[0].mxu0 %v2896
    %v2936 = vpop.f32.mrb[0].mxu0
    %v2937 = vadd.f32 %v2887, %v2936
    %v2938 = vpop.f32.mrb[0].mxu0
    %v2939 = vpop.f32.mrb[0].mxu0
    %v2940 = vpop.f32.mrb[0].mxu0
    %2941 = vdwg.mxu0
    %vm2942 = vcmask 517120
    %2943 = vst.msk [vmem:[%s7] sm:$0x3] %vm2942, %v2937
    // Predicated region
    $region46: #{generator_forward.3} parent=1 // pred_check
      _
    $region47: #{generator_forward.3} parent=1 // pred_check_branch
      %2945 = sbr.rel (0) target = $region49
    $region48: #{generator_forward.3} parent=1 // pred_region
      _
    $region49: #{generator_forward.3} parent=1 // pred_fallthru
      _
    // Predicated region
    $region50: #{generator_forward.3} parent=1 // pred_check
      _
    $region51: #{generator_forward.3} parent=1 // pred_check_branch
      %2947 = sbr.rel (0) target = $region53
    $region52: #{generator_forward.3} parent=1 // pred_region
      _
    $region53: #{generator_forward.3} parent=1 // pred_fallthru
      _
    // Predicated region
    $region54: #{generator_forward.3} parent=1 // pred_check
      _
    $region55: #{generator_forward.3} parent=1 // pred_check_branch
      %2949 = sbr.rel (0) target = $region57
    $region56: #{generator_forward.3} parent=1 // pred_region
      _
    $region57: #{generator_forward.3} parent=1 // pred_fallthru
      _
    // Predicated region
    $region58: #{generator_forward.3} parent=1 // pred_check
      _
    $region59: #{generator_forward.3} parent=1 // pred_check_branch
      %2951 = sbr.rel (0) target = $region61
    $region60: #{generator_forward.3} parent=1 // pred_region
      _
    $region61: #{generator_forward.3} parent=1 // pred_fallthru
      _
    %2952 = vsyncpa [#allocation3], 1
    %2953 = vsyncpa [#allocation5], 1
    %2954 = vsyncpa [#allocation8], 1

// kernel: generator_forward.5
$region0: #{generator_forward.5}
  #allocation0 [shape = 'u32[]', space=smem, size = 0x4, offset = 0x4, fixed_abs, tag = 'smem constant byte address 0x4 - core index']
  #allocation1 [shape = 'u32[144,128]{1,0:T(1,128)}', space=vmem, size = 0x12000, scoped, tag = 'internal scratch']
  %s0 = inlined_call_operand.vmem [shape: f32[2,1024], index: 0, kind: input, shape index: {}]
  %s1 = inlined_call_operand.hbm [shape: bf16[1024,1024], index: 1, kind: input, shape index: {}]
  %s2 = inlined_call_operand.hbm [shape: f32[1,1024], index: 2, kind: input, shape index: {}]
  %s3 = inlined_call_operand.vmem [shape: f32[2,1024], index: 3, kind: output, shape index: {}]
  %s4 = sld [smem:[#allocation0]]
  $region30: #{generator_forward.5} parent=0
    _
  %s6 = ssub.s32 1, %s4
  %s7 = scalar_select 0, %s6, %s4
  $region1: #{generator_forward.5} parent=0
    #allocation2 [shape = 'u8[2097152]{0}', space=vmem, size = 0x200000, scoped, tag = 'input window, operand 1, single buffered']
    #allocation3 [shape = 's32[1]{0}', space=sflag, size = 0x4, scoped, tag = 'scoped memory for generator_forward.5']
    #allocation4 [shape = 'u8[4096]{0}', space=vmem, size = 0x1000, scoped, tag = 'input window, operand 2, single buffered']
    #allocation5 [shape = 's32[1]{0}', space=sflag, size = 0x4, scoped, tag = 'scoped memory for generator_forward.5']
    %8 = vsyncpa [#allocation3], 0
    %9 = vsyncpa [#allocation5], 0
    // Predicated region
    $region2: #{generator_forward.5} parent=1 // pred_check
      _
    $region3: #{generator_forward.5} parent=1 // pred_check_branch
      %11 = sbr.rel (0) target = $region5
    $region4: #{generator_forward.5} parent=1 // pred_region
      _
    $region5: #{generator_forward.5} parent=1 // pred_fallthru
      _
    // Predicated region
    $region6: #{generator_forward.5} parent=1 // pred_check
      _
    $region7: #{generator_forward.5} parent=1 // pred_check_branch
      %13 = sbr.rel (0) target = $region9
    $region8: #{generator_forward.5} parent=1 // pred_region
      %s15 = ssub.s32 65536, 65536
      %16 = vsyncadd [#allocation3], %s15
      %s17 = sshll.u32 [#allocation2], 4
      %s18 = int_to_ptr.vmem [resolvable:$true] %s17
      %23 = dma.hbm_to_vmem [thread:$0]  %s1, 65536, %s18, [#allocation3], 512, 512, 32
    $region9: #{generator_forward.5} parent=1 // pred_fallthru
      _
    // Predicated region
    $region10: #{generator_forward.5} parent=1 // pred_check
      _
    $region11: #{generator_forward.5} parent=1 // pred_check_branch
      %25 = sbr.rel (0) target = $region13
    $region12: #{generator_forward.5} parent=1 // pred_region
      %s27 = ssub.s32 128, 128
      %28 = vsyncadd [#allocation5], %s27
      %s30 = sshll.u32 [#allocation4], 4
      %s31 = int_to_ptr.vmem [resolvable:$true] %s30
      %33 = dma.hbm_to_vmem [thread:$0]  %s2, 128, %s31, [#allocation5]
    $region13: #{generator_forward.5} parent=1 // pred_fallthru
      _
    // Predicated region
    $region14: #{generator_forward.5} parent=1 // pred_check
      _
    $region15: #{generator_forward.5} parent=1 // pred_check_branch
      %35 = sbr.rel (0) target = $region17
    $region16: #{generator_forward.5} parent=1 // pred_region
      %36 = dma.done [#allocation3], 65536
    $region17: #{generator_forward.5} parent=1 // pred_fallthru
      _
    // Predicated region
    $region18: #{generator_forward.5} parent=1 // pred_check
      _
    $region19: #{generator_forward.5} parent=1 // pred_check_branch
      %38 = sbr.rel (0) target = $region21
    $region20: #{generator_forward.5} parent=1 // pred_region
      %39 = dma.done [#allocation5], 128
    $region21: #{generator_forward.5} parent=1 // pred_fallthru
      _
    %v40 = vld [vmem:[%s0] sm:$0xff]
    %v41 = vld [vmem:[%s0 + $0x8] sm:$0xff]
    %v44 = vcombine.high %v40, %v40
    %v46 = vunpack.c.l.s4 1983009808
    %v47 = vunpack.c.0.s8 %v46
    %v48 = vlaneseq
    %v49 = vshrl.u32 %v48, 7
    %v50 = vsub.s32 %v47, %v49
    %v51 = vrot.slane %v40, %v50
    %v53 = vunpack.c.l.s4 1983009808
    %v54 = vunpack.c.0.s8 %v53
    %v55 = vlaneseq
    %v56 = vshrl.u32 %v55, 7
    %v57 = vsub.s32 %v54, %v56
    %v58 = vrot.slane %v44, %v57
    %v59 = vcombine.high %v51, %v51
    %v60 = vcombine.high %v58, %v58
    %v61 = vcombine.high %v41, %v41
    %v63 = vunpack.c.l.s4 1983009808
    %v64 = vunpack.c.0.s8 %v63
    %v65 = vlaneseq
    %v66 = vshrl.u32 %v65, 7
    %v67 = vsub.s32 %v64, %v66
    %v68 = vrot.slane %v41, %v67
    %v70 = vunpack.c.l.s4 1983009808
    %v71 = vunpack.c.0.s8 %v70
    %v72 = vlaneseq
    %v73 = vshrl.u32 %v72, 7
    %v74 = vsub.s32 %v71, %v73
    %v75 = vrot.slane %v61, %v74
    %v76 = vcombine.high %v68, %v68
    %v77 = vcombine.high %v75, %v75
    %v86 = vpack.c.bf16 %v51, %v51
    %v87 = vpack.c.bf16 %v59, %v59
    %v88 = vpack.c.bf16 %v58, %v58
    %v89 = vpack.c.bf16 %v60, %v60
    %v90 = vpack.c.bf16 %v68, %v68
    %v91 = vpack.c.bf16 %v76, %v76
    %v92 = vpack.c.bf16 %v75, %v75
    %v93 = vpack.c.bf16 %v77, %v77
    %v94 = vld [vmem:[#allocation2] sm:$0xff]
    %v95 = vld [vmem:[#allocation2 + $0x8] sm:$0xff]
    %v96 = vld [vmem:[#allocation2 + $0x10] sm:$0xff]
    %v97 = vld [vmem:[#allocation2 + $0x18] sm:$0xff]
    %v98 = vld [vmem:[#allocation2 + $0x20] sm:$0xff]
    %v99 = vld [vmem:[#allocation2 + $0x28] sm:$0xff]
    %v100 = vld [vmem:[#allocation2 + $0x30] sm:$0xff]
    %v101 = vld [vmem:[#allocation2 + $0x38] sm:$0xff]
    %v102 = vld [vmem:[#allocation2 + $0x40] sm:$0xff]
    %v103 = vld [vmem:[#allocation2 + $0x48] sm:$0xff]
    %v104 = vld [vmem:[#allocation2 + $0x50] sm:$0xff]
    %v105 = vld [vmem:[#allocation2 + $0x58] sm:$0xff]
    %v106 = vld [vmem:[#allocation2 + $0x60] sm:$0xff]
    %v107 = vld [vmem:[#allocation2 + $0x68] sm:$0xff]
    %v108 = vld [vmem:[#allocation2 + $0x70] sm:$0xff]
    %v109 = vld [vmem:[#allocation2 + $0x78] sm:$0xff]
    %v110 = vld [vmem:[#allocation2 + $0x80] sm:$0xff]
    %v111 = vld [vmem:[#allocation2 + $0x88] sm:$0xff]
    %v112 = vld [vmem:[#allocation2 + $0x90] sm:$0xff]
    %v113 = vld [vmem:[#allocation2 + $0x98] sm:$0xff]
    %v114 = vld [vmem:[#allocation2 + $0xa0] sm:$0xff]
    %v115 = vld [vmem:[#allocation2 + $0xa8] sm:$0xff]
    %v116 = vld [vmem:[#allocation2 + $0xb0] sm:$0xff]
    %v117 = vld [vmem:[#allocation2 + $0xb8] sm:$0xff]
    %v118 = vld [vmem:[#allocation2 + $0xc0] sm:$0xff]
    %v119 = vld [vmem:[#allocation2 + $0xc8] sm:$0xff]
    %v120 = vld [vmem:[#allocation2 + $0xd0] sm:$0xff]
    %v121 = vld [vmem:[#allocation2 + $0xd8] sm:$0xff]
    %v122 = vld [vmem:[#allocation2 + $0xe0] sm:$0xff]
    %v123 = vld [vmem:[#allocation2 + $0xe8] sm:$0xff]
    %v124 = vld [vmem:[#allocation2 + $0xf0] sm:$0xff]
    %v125 = vld [vmem:[#allocation2 + $0xf8] sm:$0xff]
    %v126 = vld [vmem:[#allocation2 + $0x100] sm:$0xff]
    %v127 = vld [vmem:[#allocation2 + $0x108] sm:$0xff]
    %v128 = vld [vmem:[#allocation2 + $0x110] sm:$0xff]
    %v129 = vld [vmem:[#allocation2 + $0x118] sm:$0xff]
    %v130 = vld [vmem:[#allocation2 + $0x120] sm:$0xff]
    %v131 = vld [vmem:[#allocation2 + $0x128] sm:$0xff]
    %v132 = vld [vmem:[#allocation2 + $0x130] sm:$0xff]
    %v133 = vld [vmem:[#allocation2 + $0x138] sm:$0xff]
    %v134 = vld [vmem:[#allocation2 + $0x140] sm:$0xff]
    %v135 = vld [vmem:[#allocation2 + $0x148] sm:$0xff]
    %v136 = vld [vmem:[#allocation2 + $0x150] sm:$0xff]
    %v137 = vld [vmem:[#allocation2 + $0x158] sm:$0xff]
    %v138 = vld [vmem:[#allocation2 + $0x160] sm:$0xff]
    %v139 = vld [vmem:[#allocation2 + $0x168] sm:$0xff]
    %v140 = vld [vmem:[#allocation2 + $0x170] sm:$0xff]
    %v141 = vld [vmem:[#allocation2 + $0x178] sm:$0xff]
    %v142 = vld [vmem:[#allocation2 + $0x180] sm:$0xff]
    %v143 = vld [vmem:[#allocation2 + $0x188] sm:$0xff]
    %v144 = vld [vmem:[#allocation2 + $0x190] sm:$0xff]
    %v145 = vld [vmem:[#allocation2 + $0x198] sm:$0xff]
    %v146 = vld [vmem:[#allocation2 + $0x1a0] sm:$0xff]
    %v147 = vld [vmem:[#allocation2 + $0x1a8] sm:$0xff]
    %v148 = vld [vmem:[#allocation2 + $0x1b0] sm:$0xff]
    %v149 = vld [vmem:[#allocation2 + $0x1b8] sm:$0xff]
    %v150 = vld [vmem:[#allocation2 + $0x1c0] sm:$0xff]
    %v151 = vld [vmem:[#allocation2 + $0x1c8] sm:$0xff]
    %v152 = vld [vmem:[#allocation2 + $0x1d0] sm:$0xff]
    %v153 = vld [vmem:[#allocation2 + $0x1d8] sm:$0xff]
    %v154 = vld [vmem:[#allocation2 + $0x1e0] sm:$0xff]
    %v155 = vld [vmem:[#allocation2 + $0x1e8] sm:$0xff]
    %v156 = vld [vmem:[#allocation2 + $0x1f0] sm:$0xff]
    %v157 = vld [vmem:[#allocation2 + $0x1f8] sm:$0xff]
    %v158 = vld [vmem:[#allocation2 + $0x200] sm:$0xff]
    %v159 = vld [vmem:[#allocation2 + $0x208] sm:$0xff]
    %v160 = vld [vmem:[#allocation2 + $0x210] sm:$0xff]
    %v161 = vld [vmem:[#allocation2 + $0x218] sm:$0xff]
    %v162 = vld [vmem:[#allocation2 + $0x220] sm:$0xff]
    %v163 = vld [vmem:[#allocation2 + $0x228] sm:$0xff]
    %v164 = vld [vmem:[#allocation2 + $0x230] sm:$0xff]
    %v165 = vld [vmem:[#allocation2 + $0x238] sm:$0xff]
    %v166 = vld [vmem:[#allocation2 + $0x240] sm:$0xff]
    %v167 = vld [vmem:[#allocation2 + $0x248] sm:$0xff]
    %v168 = vld [vmem:[#allocation2 + $0x250] sm:$0xff]
    %v169 = vld [vmem:[#allocation2 + $0x258] sm:$0xff]
    %v170 = vld [vmem:[#allocation2 + $0x260] sm:$0xff]
    %v171 = vld [vmem:[#allocation2 + $0x268] sm:$0xff]
    %v172 = vld [vmem:[#allocation2 + $0x270] sm:$0xff]
    %v173 = vld [vmem:[#allocation2 + $0x278] sm:$0xff]
    %v174 = vld [vmem:[#allocation2 + $0x280] sm:$0xff]
    %v175 = vld [vmem:[#allocation2 + $0x288] sm:$0xff]
    %v176 = vld [vmem:[#allocation2 + $0x290] sm:$0xff]
    %v177 = vld [vmem:[#allocation2 + $0x298] sm:$0xff]
    %v178 = vld [vmem:[#allocation2 + $0x2a0] sm:$0xff]
    %v179 = vld [vmem:[#allocation2 + $0x2a8] sm:$0xff]
    %v180 = vld [vmem:[#allocation2 + $0x2b0] sm:$0xff]
    %v181 = vld [vmem:[#allocation2 + $0x2b8] sm:$0xff]
    %v182 = vld [vmem:[#allocation2 + $0x2c0] sm:$0xff]
    %v183 = vld [vmem:[#allocation2 + $0x2c8] sm:$0xff]
    %v184 = vld [vmem:[#allocation2 + $0x2d0] sm:$0xff]
    %v185 = vld [vmem:[#allocation2 + $0x2d8] sm:$0xff]
    %v186 = vld [vmem:[#allocation2 + $0x2e0] sm:$0xff]
    %v187 = vld [vmem:[#allocation2 + $0x2e8] sm:$0xff]
    %v188 = vld [vmem:[#allocation2 + $0x2f0] sm:$0xff]
    %v189 = vld [vmem:[#allocation2 + $0x2f8] sm:$0xff]
    %v190 = vld [vmem:[#allocation2 + $0x300] sm:$0xff]
    %v191 = vld [vmem:[#allocation2 + $0x308] sm:$0xff]
    %v192 = vld [vmem:[#allocation2 + $0x310] sm:$0xff]
    %v193 = vld [vmem:[#allocation2 + $0x318] sm:$0xff]
    %v194 = vld [vmem:[#allocation2 + $0x320] sm:$0xff]
    %v195 = vld [vmem:[#allocation2 + $0x328] sm:$0xff]
    %v196 = vld [vmem:[#allocation2 + $0x330] sm:$0xff]
    %v197 = vld [vmem:[#allocation2 + $0x338] sm:$0xff]
    %v198 = vld [vmem:[#allocation2 + $0x340] sm:$0xff]
    %v199 = vld [vmem:[#allocation2 + $0x348] sm:$0xff]
    %v200 = vld [vmem:[#allocation2 + $0x350] sm:$0xff]
    %v201 = vld [vmem:[#allocation2 + $0x358] sm:$0xff]
    %v202 = vld [vmem:[#allocation2 + $0x360] sm:$0xff]
    %v203 = vld [vmem:[#allocation2 + $0x368] sm:$0xff]
    %v204 = vld [vmem:[#allocation2 + $0x370] sm:$0xff]
    %v205 = vld [vmem:[#allocation2 + $0x378] sm:$0xff]
    %v206 = vld [vmem:[#allocation2 + $0x380] sm:$0xff]
    %v207 = vld [vmem:[#allocation2 + $0x388] sm:$0xff]
    %v208 = vld [vmem:[#allocation2 + $0x390] sm:$0xff]
    %v209 = vld [vmem:[#allocation2 + $0x398] sm:$0xff]
    %v210 = vld [vmem:[#allocation2 + $0x3a0] sm:$0xff]
    %v211 = vld [vmem:[#allocation2 + $0x3a8] sm:$0xff]
    %v212 = vld [vmem:[#allocation2 + $0x3b0] sm:$0xff]
    %v213 = vld [vmem:[#allocation2 + $0x3b8] sm:$0xff]
    %v214 = vld [vmem:[#allocation2 + $0x3c0] sm:$0xff]
    %v215 = vld [vmem:[#allocation2 + $0x3c8] sm:$0xff]
    %v216 = vld [vmem:[#allocation2 + $0x3d0] sm:$0xff]
    %v217 = vld [vmem:[#allocation2 + $0x3d8] sm:$0xff]
    %v218 = vld [vmem:[#allocation2 + $0x3e0] sm:$0xff]
    %v219 = vld [vmem:[#allocation2 + $0x3e8] sm:$0xff]
    %v220 = vld [vmem:[#allocation2 + $0x3f0] sm:$0xff]
    %v221 = vld [vmem:[#allocation2 + $0x3f8] sm:$0xff]
    %v222 = vld [vmem:[#allocation2 + $0x400] sm:$0xff]
    %v223 = vld [vmem:[#allocation2 + $0x408] sm:$0xff]
    %v224 = vld [vmem:[#allocation2 + $0x410] sm:$0xff]
    %v225 = vld [vmem:[#allocation2 + $0x418] sm:$0xff]
    %v226 = vld [vmem:[#allocation2 + $0x420] sm:$0xff]
    %v227 = vld [vmem:[#allocation2 + $0x428] sm:$0xff]
    %v228 = vld [vmem:[#allocation2 + $0x430] sm:$0xff]
    %v229 = vld [vmem:[#allocation2 + $0x438] sm:$0xff]
    %v230 = vld [vmem:[#allocation2 + $0x440] sm:$0xff]
    %v231 = vld [vmem:[#allocation2 + $0x448] sm:$0xff]
    %v232 = vld [vmem:[#allocation2 + $0x450] sm:$0xff]
    %v233 = vld [vmem:[#allocation2 + $0x458] sm:$0xff]
    %v234 = vld [vmem:[#allocation2 + $0x460] sm:$0xff]
    %v235 = vld [vmem:[#allocation2 + $0x468] sm:$0xff]
    %v236 = vld [vmem:[#allocation2 + $0x470] sm:$0xff]
    %v237 = vld [vmem:[#allocation2 + $0x478] sm:$0xff]
    %v238 = vld [vmem:[#allocation2 + $0x480] sm:$0xff]
    %v239 = vld [vmem:[#allocation2 + $0x488] sm:$0xff]
    %v240 = vld [vmem:[#allocation2 + $0x490] sm:$0xff]
    %v241 = vld [vmem:[#allocation2 + $0x498] sm:$0xff]
    %v242 = vld [vmem:[#allocation2 + $0x4a0] sm:$0xff]
    %v243 = vld [vmem:[#allocation2 + $0x4a8] sm:$0xff]
    %v244 = vld [vmem:[#allocation2 + $0x4b0] sm:$0xff]
    %v245 = vld [vmem:[#allocation2 + $0x4b8] sm:$0xff]
    %v246 = vld [vmem:[#allocation2 + $0x4c0] sm:$0xff]
    %v247 = vld [vmem:[#allocation2 + $0x4c8] sm:$0xff]
    %v248 = vld [vmem:[#allocation2 + $0x4d0] sm:$0xff]
    %v249 = vld [vmem:[#allocation2 + $0x4d8] sm:$0xff]
    %v250 = vld [vmem:[#allocation2 + $0x4e0] sm:$0xff]
    %v251 = vld [vmem:[#allocation2 + $0x4e8] sm:$0xff]
    %v252 = vld [vmem:[#allocation2 + $0x4f0] sm:$0xff]
    %v253 = vld [vmem:[#allocation2 + $0x4f8] sm:$0xff]
    %v254 = vld [vmem:[#allocation2 + $0x500] sm:$0xff]
    %v255 = vld [vmem:[#allocation2 + $0x508] sm:$0xff]
    %v256 = vld [vmem:[#allocation2 + $0x510] sm:$0xff]
    %v257 = vld [vmem:[#allocation2 + $0x518] sm:$0xff]
    %v258 = vld [vmem:[#allocation2 + $0x520] sm:$0xff]
    %v259 = vld [vmem:[#allocation2 + $0x528] sm:$0xff]
    %v260 = vld [vmem:[#allocation2 + $0x530] sm:$0xff]
    %v261 = vld [vmem:[#allocation2 + $0x538] sm:$0xff]
    %v262 = vld [vmem:[#allocation2 + $0x540] sm:$0xff]
    %v263 = vld [vmem:[#allocation2 + $0x548] sm:$0xff]
    %v264 = vld [vmem:[#allocation2 + $0x550] sm:$0xff]
    %v265 = vld [vmem:[#allocation2 + $0x558] sm:$0xff]
    %v266 = vld [vmem:[#allocation2 + $0x560] sm:$0xff]
    %v267 = vld [vmem:[#allocation2 + $0x568] sm:$0xff]
    %v268 = vld [vmem:[#allocation2 + $0x570] sm:$0xff]
    %v269 = vld [vmem:[#allocation2 + $0x578] sm:$0xff]
    %v270 = vld [vmem:[#allocation2 + $0x580] sm:$0xff]
    %v271 = vld [vmem:[#allocation2 + $0x588] sm:$0xff]
    %v272 = vld [vmem:[#allocation2 + $0x590] sm:$0xff]
    %v273 = vld [vmem:[#allocation2 + $0x598] sm:$0xff]
    %v274 = vld [vmem:[#allocation2 + $0x5a0] sm:$0xff]
    %v275 = vld [vmem:[#allocation2 + $0x5a8] sm:$0xff]
    %v276 = vld [vmem:[#allocation2 + $0x5b0] sm:$0xff]
    %v277 = vld [vmem:[#allocation2 + $0x5b8] sm:$0xff]
    %v278 = vld [vmem:[#allocation2 + $0x5c0] sm:$0xff]
    %v279 = vld [vmem:[#allocation2 + $0x5c8] sm:$0xff]
    %v280 = vld [vmem:[#allocation2 + $0x5d0] sm:$0xff]
    %v281 = vld [vmem:[#allocation2 + $0x5d8] sm:$0xff]
    %v282 = vld [vmem:[#allocation2 + $0x5e0] sm:$0xff]
    %v283 = vld [vmem:[#allocation2 + $0x5e8] sm:$0xff]
    %v284 = vld [vmem:[#allocation2 + $0x5f0] sm:$0xff]
    %v285 = vld [vmem:[#allocation2 + $0x5f8] sm:$0xff]
    %v286 = vld [vmem:[#allocation2 + $0x600] sm:$0xff]
    %v287 = vld [vmem:[#allocation2 + $0x608] sm:$0xff]
    %v288 = vld [vmem:[#allocation2 + $0x610] sm:$0xff]
    %v289 = vld [vmem:[#allocation2 + $0x618] sm:$0xff]
    %v290 = vld [vmem:[#allocation2 + $0x620] sm:$0xff]
    %v291 = vld [vmem:[#allocation2 + $0x628] sm:$0xff]
    %v292 = vld [vmem:[#allocation2 + $0x630] sm:$0xff]
    %v293 = vld [vmem:[#allocation2 + $0x638] sm:$0xff]
    %v294 = vld [vmem:[#allocation2 + $0x640] sm:$0xff]
    %v295 = vld [vmem:[#allocation2 + $0x648] sm:$0xff]
    %v296 = vld [vmem:[#allocation2 + $0x650] sm:$0xff]
    %v297 = vld [vmem:[#allocation2 + $0x658] sm:$0xff]
    %v298 = vld [vmem:[#allocation2 + $0x660] sm:$0xff]
    %v299 = vld [vmem:[#allocation2 + $0x668] sm:$0xff]
    %v300 = vld [vmem:[#allocation2 + $0x670] sm:$0xff]
    %v301 = vld [vmem:[#allocation2 + $0x678] sm:$0xff]
    %v302 = vld [vmem:[#allocation2 + $0x680] sm:$0xff]
    %v303 = vld [vmem:[#allocation2 + $0x688] sm:$0xff]
    %v304 = vld [vmem:[#allocation2 + $0x690] sm:$0xff]
    %v305 = vld [vmem:[#allocation2 + $0x698] sm:$0xff]
    %v306 = vld [vmem:[#allocation2 + $0x6a0] sm:$0xff]
    %v307 = vld [vmem:[#allocation2 + $0x6a8] sm:$0xff]
    %v308 = vld [vmem:[#allocation2 + $0x6b0] sm:$0xff]
    %v309 = vld [vmem:[#allocation2 + $0x6b8] sm:$0xff]
    %v310 = vld [vmem:[#allocation2 + $0x6c0] sm:$0xff]
    %v311 = vld [vmem:[#allocation2 + $0x6c8] sm:$0xff]
    %v312 = vld [vmem:[#allocation2 + $0x6d0] sm:$0xff]
    %v313 = vld [vmem:[#allocation2 + $0x6d8] sm:$0xff]
    %v314 = vld [vmem:[#allocation2 + $0x6e0] sm:$0xff]
    %v315 = vld [vmem:[#allocation2 + $0x6e8] sm:$0xff]
    %v316 = vld [vmem:[#allocation2 + $0x6f0] sm:$0xff]
    %v317 = vld [vmem:[#allocation2 + $0x6f8] sm:$0xff]
    %v318 = vld [vmem:[#allocation2 + $0x700] sm:$0xff]
    %v319 = vld [vmem:[#allocation2 + $0x708] sm:$0xff]
    %v320 = vld [vmem:[#allocation2 + $0x710] sm:$0xff]
    %v321 = vld [vmem:[#allocation2 + $0x718] sm:$0xff]
    %v322 = vld [vmem:[#allocation2 + $0x720] sm:$0xff]
    %v323 = vld [vmem:[#allocation2 + $0x728] sm:$0xff]
    %v324 = vld [vmem:[#allocation2 + $0x730] sm:$0xff]
    %v325 = vld [vmem:[#allocation2 + $0x738] sm:$0xff]
    %v326 = vld [vmem:[#allocation2 + $0x740] sm:$0xff]
    %v327 = vld [vmem:[#allocation2 + $0x748] sm:$0xff]
    %v328 = vld [vmem:[#allocation2 + $0x750] sm:$0xff]
    %v329 = vld [vmem:[#allocation2 + $0x758] sm:$0xff]
    %v330 = vld [vmem:[#allocation2 + $0x760] sm:$0xff]
    %v331 = vld [vmem:[#allocation2 + $0x768] sm:$0xff]
    %v332 = vld [vmem:[#allocation2 + $0x770] sm:$0xff]
    %v333 = vld [vmem:[#allocation2 + $0x778] sm:$0xff]
    %v334 = vld [vmem:[#allocation2 + $0x780] sm:$0xff]
    %v335 = vld [vmem:[#allocation2 + $0x788] sm:$0xff]
    %v336 = vld [vmem:[#allocation2 + $0x790] sm:$0xff]
    %v337 = vld [vmem:[#allocation2 + $0x798] sm:$0xff]
    %v338 = vld [vmem:[#allocation2 + $0x7a0] sm:$0xff]
    %v339 = vld [vmem:[#allocation2 + $0x7a8] sm:$0xff]
    %v340 = vld [vmem:[#allocation2 + $0x7b0] sm:$0xff]
    %v341 = vld [vmem:[#allocation2 + $0x7b8] sm:$0xff]
    %v342 = vld [vmem:[#allocation2 + $0x7c0] sm:$0xff]
    %v343 = vld [vmem:[#allocation2 + $0x7c8] sm:$0xff]
    %v344 = vld [vmem:[#allocation2 + $0x7d0] sm:$0xff]
    %v345 = vld [vmem:[#allocation2 + $0x7d8] sm:$0xff]
    %v346 = vld [vmem:[#allocation2 + $0x7e0] sm:$0xff]
    %v347 = vld [vmem:[#allocation2 + $0x7e8] sm:$0xff]
    %v348 = vld [vmem:[#allocation2 + $0x7f0] sm:$0xff]
    %v349 = vld [vmem:[#allocation2 + $0x7f8] sm:$0xff]
    %v350 = vld [vmem:[#allocation2 + $0x800] sm:$0xff]
    %v351 = vld [vmem:[#allocation2 + $0x808] sm:$0xff]
    %v352 = vld [vmem:[#allocation2 + $0x810] sm:$0xff]
    %v353 = vld [vmem:[#allocation2 + $0x818] sm:$0xff]
    %v354 = vld [vmem:[#allocation2 + $0x820] sm:$0xff]
    %v355 = vld [vmem:[#allocation2 + $0x828] sm:$0xff]
    %v356 = vld [vmem:[#allocation2 + $0x830] sm:$0xff]
    %v357 = vld [vmem:[#allocation2 + $0x838] sm:$0xff]
    %v358 = vld [vmem:[#allocation2 + $0x840] sm:$0xff]
    %v359 = vld [vmem:[#allocation2 + $0x848] sm:$0xff]
    %v360 = vld [vmem:[#allocation2 + $0x850] sm:$0xff]
    %v361 = vld [vmem:[#allocation2 + $0x858] sm:$0xff]
    %v362 = vld [vmem:[#allocation2 + $0x860] sm:$0xff]
    %v363 = vld [vmem:[#allocation2 + $0x868] sm:$0xff]
    %v364 = vld [vmem:[#allocation2 + $0x870] sm:$0xff]
    %v365 = vld [vmem:[#allocation2 + $0x878] sm:$0xff]
    %v366 = vld [vmem:[#allocation2 + $0x880] sm:$0xff]
    %v367 = vld [vmem:[#allocation2 + $0x888] sm:$0xff]
    %v368 = vld [vmem:[#allocation2 + $0x890] sm:$0xff]
    %v369 = vld [vmem:[#allocation2 + $0x898] sm:$0xff]
    %v370 = vld [vmem:[#allocation2 + $0x8a0] sm:$0xff]
    %v371 = vld [vmem:[#allocation2 + $0x8a8] sm:$0xff]
    %v372 = vld [vmem:[#allocation2 + $0x8b0] sm:$0xff]
    %v373 = vld [vmem:[#allocation2 + $0x8b8] sm:$0xff]
    %v374 = vld [vmem:[#allocation2 + $0x8c0] sm:$0xff]
    %v375 = vld [vmem:[#allocation2 + $0x8c8] sm:$0xff]
    %v376 = vld [vmem:[#allocation2 + $0x8d0] sm:$0xff]
    %v377 = vld [vmem:[#allocation2 + $0x8d8] sm:$0xff]
    %v378 = vld [vmem:[#allocation2 + $0x8e0] sm:$0xff]
    %v379 = vld [vmem:[#allocation2 + $0x8e8] sm:$0xff]
    %v380 = vld [vmem:[#allocation2 + $0x8f0] sm:$0xff]
    %v381 = vld [vmem:[#allocation2 + $0x8f8] sm:$0xff]
    %v382 = vld [vmem:[#allocation2 + $0x900] sm:$0xff]
    %v383 = vld [vmem:[#allocation2 + $0x908] sm:$0xff]
    %v384 = vld [vmem:[#allocation2 + $0x910] sm:$0xff]
    %v385 = vld [vmem:[#allocation2 + $0x918] sm:$0xff]
    %v386 = vld [vmem:[#allocation2 + $0x920] sm:$0xff]
    %v387 = vld [vmem:[#allocation2 + $0x928] sm:$0xff]
    %v388 = vld [vmem:[#allocation2 + $0x930] sm:$0xff]
    %v389 = vld [vmem:[#allocation2 + $0x938] sm:$0xff]
    %v390 = vld [vmem:[#allocation2 + $0x940] sm:$0xff]
    %v391 = vld [vmem:[#allocation2 + $0x948] sm:$0xff]
    %v392 = vld [vmem:[#allocation2 + $0x950] sm:$0xff]
    %v393 = vld [vmem:[#allocation2 + $0x958] sm:$0xff]
    %v394 = vld [vmem:[#allocation2 + $0x960] sm:$0xff]
    %v395 = vld [vmem:[#allocation2 + $0x968] sm:$0xff]
    %v396 = vld [vmem:[#allocation2 + $0x970] sm:$0xff]
    %v397 = vld [vmem:[#allocation2 + $0x978] sm:$0xff]
    %v398 = vld [vmem:[#allocation2 + $0x980] sm:$0xff]
    %v399 = vld [vmem:[#allocation2 + $0x988] sm:$0xff]
    %v400 = vld [vmem:[#allocation2 + $0x990] sm:$0xff]
    %v401 = vld [vmem:[#allocation2 + $0x998] sm:$0xff]
    %v402 = vld [vmem:[#allocation2 + $0x9a0] sm:$0xff]
    %v403 = vld [vmem:[#allocation2 + $0x9a8] sm:$0xff]
    %v404 = vld [vmem:[#allocation2 + $0x9b0] sm:$0xff]
    %v405 = vld [vmem:[#allocation2 + $0x9b8] sm:$0xff]
    %v406 = vld [vmem:[#allocation2 + $0x9c0] sm:$0xff]
    %v407 = vld [vmem:[#allocation2 + $0x9c8] sm:$0xff]
    %v408 = vld [vmem:[#allocation2 + $0x9d0] sm:$0xff]
    %v409 = vld [vmem:[#allocation2 + $0x9d8] sm:$0xff]
    %v410 = vld [vmem:[#allocation2 + $0x9e0] sm:$0xff]
    %v411 = vld [vmem:[#allocation2 + $0x9e8] sm:$0xff]
    %v412 = vld [vmem:[#allocation2 + $0x9f0] sm:$0xff]
    %v413 = vld [vmem:[#allocation2 + $0x9f8] sm:$0xff]
    %v414 = vld [vmem:[#allocation2 + $0xa00] sm:$0xff]
    %v415 = vld [vmem:[#allocation2 + $0xa08] sm:$0xff]
    %v416 = vld [vmem:[#allocation2 + $0xa10] sm:$0xff]
    %v417 = vld [vmem:[#allocation2 + $0xa18] sm:$0xff]
    %v418 = vld [vmem:[#allocation2 + $0xa20] sm:$0xff]
    %v419 = vld [vmem:[#allocation2 + $0xa28] sm:$0xff]
    %v420 = vld [vmem:[#allocation2 + $0xa30] sm:$0xff]
    %v421 = vld [vmem:[#allocation2 + $0xa38] sm:$0xff]
    %v422 = vld [vmem:[#allocation2 + $0xa40] sm:$0xff]
    %v423 = vld [vmem:[#allocation2 + $0xa48] sm:$0xff]
    %v424 = vld [vmem:[#allocation2 + $0xa50] sm:$0xff]
    %v425 = vld [vmem:[#allocation2 + $0xa58] sm:$0xff]
    %v426 = vld [vmem:[#allocation2 + $0xa60] sm:$0xff]
    %v427 = vld [vmem:[#allocation2 + $0xa68] sm:$0xff]
    %v428 = vld [vmem:[#allocation2 + $0xa70] sm:$0xff]
    %v429 = vld [vmem:[#allocation2 + $0xa78] sm:$0xff]
    %v430 = vld [vmem:[#allocation2 + $0xa80] sm:$0xff]
    %v431 = vld [vmem:[#allocation2 + $0xa88] sm:$0xff]
    %v432 = vld [vmem:[#allocation2 + $0xa90] sm:$0xff]
    %v433 = vld [vmem:[#allocation2 + $0xa98] sm:$0xff]
    %v434 = vld [vmem:[#allocation2 + $0xaa0] sm:$0xff]
    %v435 = vld [vmem:[#allocation2 + $0xaa8] sm:$0xff]
    %v436 = vld [vmem:[#allocation2 + $0xab0] sm:$0xff]
    %v437 = vld [vmem:[#allocation2 + $0xab8] sm:$0xff]
    %v438 = vld [vmem:[#allocation2 + $0xac0] sm:$0xff]
    %v439 = vld [vmem:[#allocation2 + $0xac8] sm:$0xff]
    %v440 = vld [vmem:[#allocation2 + $0xad0] sm:$0xff]
    %v441 = vld [vmem:[#allocation2 + $0xad8] sm:$0xff]
    %v442 = vld [vmem:[#allocation2 + $0xae0] sm:$0xff]
    %v443 = vld [vmem:[#allocation2 + $0xae8] sm:$0xff]
    %v444 = vld [vmem:[#allocation2 + $0xaf0] sm:$0xff]
    %v445 = vld [vmem:[#allocation2 + $0xaf8] sm:$0xff]
    %v446 = vld [vmem:[#allocation2 + $0xb00] sm:$0xff]
    %v447 = vld [vmem:[#allocation2 + $0xb08] sm:$0xff]
    %v448 = vld [vmem:[#allocation2 + $0xb10] sm:$0xff]
    %v449 = vld [vmem:[#allocation2 + $0xb18] sm:$0xff]
    %v450 = vld [vmem:[#allocation2 + $0xb20] sm:$0xff]
    %v451 = vld [vmem:[#allocation2 + $0xb28] sm:$0xff]
    %v452 = vld [vmem:[#allocation2 + $0xb30] sm:$0xff]
    %v453 = vld [vmem:[#allocation2 + $0xb38] sm:$0xff]
    %v454 = vld [vmem:[#allocation2 + $0xb40] sm:$0xff]
    %v455 = vld [vmem:[#allocation2 + $0xb48] sm:$0xff]
    %v456 = vld [vmem:[#allocation2 + $0xb50] sm:$0xff]
    %v457 = vld [vmem:[#allocation2 + $0xb58] sm:$0xff]
    %v458 = vld [vmem:[#allocation2 + $0xb60] sm:$0xff]
    %v459 = vld [vmem:[#allocation2 + $0xb68] sm:$0xff]
    %v460 = vld [vmem:[#allocation2 + $0xb70] sm:$0xff]
    %v461 = vld [vmem:[#allocation2 + $0xb78] sm:$0xff]
    %v462 = vld [vmem:[#allocation2 + $0xb80] sm:$0xff]
    %v463 = vld [vmem:[#allocation2 + $0xb88] sm:$0xff]
    %v464 = vld [vmem:[#allocation2 + $0xb90] sm:$0xff]
    %v465 = vld [vmem:[#allocation2 + $0xb98] sm:$0xff]
    %v466 = vld [vmem:[#allocation2 + $0xba0] sm:$0xff]
    %v467 = vld [vmem:[#allocation2 + $0xba8] sm:$0xff]
    %v468 = vld [vmem:[#allocation2 + $0xbb0] sm:$0xff]
    %v469 = vld [vmem:[#allocation2 + $0xbb8] sm:$0xff]
    %v470 = vld [vmem:[#allocation2 + $0xbc0] sm:$0xff]
    %v471 = vld [vmem:[#allocation2 + $0xbc8] sm:$0xff]
    %v472 = vld [vmem:[#allocation2 + $0xbd0] sm:$0xff]
    %v473 = vld [vmem:[#allocation2 + $0xbd8] sm:$0xff]
    %v474 = vld [vmem:[#allocation2 + $0xbe0] sm:$0xff]
    %v475 = vld [vmem:[#allocation2 + $0xbe8] sm:$0xff]
    %v476 = vld [vmem:[#allocation2 + $0xbf0] sm:$0xff]
    %v477 = vld [vmem:[#allocation2 + $0xbf8] sm:$0xff]
    %v478 = vld [vmem:[#allocation2 + $0xc00] sm:$0xff]
    %v479 = vld [vmem:[#allocation2 + $0xc08] sm:$0xff]
    %v480 = vld [vmem:[#allocation2 + $0xc10] sm:$0xff]
    %v481 = vld [vmem:[#allocation2 + $0xc18] sm:$0xff]
    %v482 = vld [vmem:[#allocation2 + $0xc20] sm:$0xff]
    %v483 = vld [vmem:[#allocation2 + $0xc28] sm:$0xff]
    %v484 = vld [vmem:[#allocation2 + $0xc30] sm:$0xff]
    %v485 = vld [vmem:[#allocation2 + $0xc38] sm:$0xff]
    %v486 = vld [vmem:[#allocation2 + $0xc40] sm:$0xff]
    %v487 = vld [vmem:[#allocation2 + $0xc48] sm:$0xff]
    %v488 = vld [vmem:[#allocation2 + $0xc50] sm:$0xff]
    %v489 = vld [vmem:[#allocation2 + $0xc58] sm:$0xff]
    %v490 = vld [vmem:[#allocation2 + $0xc60] sm:$0xff]
    %v491 = vld [vmem:[#allocation2 + $0xc68] sm:$0xff]
    %v492 = vld [vmem:[#allocation2 + $0xc70] sm:$0xff]
    %v493 = vld [vmem:[#allocation2 + $0xc78] sm:$0xff]
    %v494 = vld [vmem:[#allocation2 + $0xc80] sm:$0xff]
    %v495 = vld [vmem:[#allocation2 + $0xc88] sm:$0xff]
    %v496 = vld [vmem:[#allocation2 + $0xc90] sm:$0xff]
    %v497 = vld [vmem:[#allocation2 + $0xc98] sm:$0xff]
    %v498 = vld [vmem:[#allocation2 + $0xca0] sm:$0xff]
    %v499 = vld [vmem:[#allocation2 + $0xca8] sm:$0xff]
    %v500 = vld [vmem:[#allocation2 + $0xcb0] sm:$0xff]
    %v501 = vld [vmem:[#allocation2 + $0xcb8] sm:$0xff]
    %v502 = vld [vmem:[#allocation2 + $0xcc0] sm:$0xff]
    %v503 = vld [vmem:[#allocation2 + $0xcc8] sm:$0xff]
    %v504 = vld [vmem:[#allocation2 + $0xcd0] sm:$0xff]
    %v505 = vld [vmem:[#allocation2 + $0xcd8] sm:$0xff]
    %v506 = vld [vmem:[#allocation2 + $0xce0] sm:$0xff]
    %v507 = vld [vmem:[#allocation2 + $0xce8] sm:$0xff]
    %v508 = vld [vmem:[#allocation2 + $0xcf0] sm:$0xff]
    %v509 = vld [vmem:[#allocation2 + $0xcf8] sm:$0xff]
    %v510 = vld [vmem:[#allocation2 + $0xd00] sm:$0xff]
    %v511 = vld [vmem:[#allocation2 + $0xd08] sm:$0xff]
    %v512 = vld [vmem:[#allocation2 + $0xd10] sm:$0xff]
    %v513 = vld [vmem:[#allocation2 + $0xd18] sm:$0xff]
    %v514 = vld [vmem:[#allocation2 + $0xd20] sm:$0xff]
    %v515 = vld [vmem:[#allocation2 + $0xd28] sm:$0xff]
    %v516 = vld [vmem:[#allocation2 + $0xd30] sm:$0xff]
    %v517 = vld [vmem:[#allocation2 + $0xd38] sm:$0xff]
    %v518 = vld [vmem:[#allocation2 + $0xd40] sm:$0xff]
    %v519 = vld [vmem:[#allocation2 + $0xd48] sm:$0xff]
    %v520 = vld [vmem:[#allocation2 + $0xd50] sm:$0xff]
    %v521 = vld [vmem:[#allocation2 + $0xd58] sm:$0xff]
    %v522 = vld [vmem:[#allocation2 + $0xd60] sm:$0xff]
    %v523 = vld [vmem:[#allocation2 + $0xd68] sm:$0xff]
    %v524 = vld [vmem:[#allocation2 + $0xd70] sm:$0xff]
    %v525 = vld [vmem:[#allocation2 + $0xd78] sm:$0xff]
    %v526 = vld [vmem:[#allocation2 + $0xd80] sm:$0xff]
    %v527 = vld [vmem:[#allocation2 + $0xd88] sm:$0xff]
    %v528 = vld [vmem:[#allocation2 + $0xd90] sm:$0xff]
    %v529 = vld [vmem:[#allocation2 + $0xd98] sm:$0xff]
    %v530 = vld [vmem:[#allocation2 + $0xda0] sm:$0xff]
    %v531 = vld [vmem:[#allocation2 + $0xda8] sm:$0xff]
    %v532 = vld [vmem:[#allocation2 + $0xdb0] sm:$0xff]
    %v533 = vld [vmem:[#allocation2 + $0xdb8] sm:$0xff]
    %v534 = vld [vmem:[#allocation2 + $0xdc0] sm:$0xff]
    %v535 = vld [vmem:[#allocation2 + $0xdc8] sm:$0xff]
    %v536 = vld [vmem:[#allocation2 + $0xdd0] sm:$0xff]
    %v537 = vld [vmem:[#allocation2 + $0xdd8] sm:$0xff]
    %v538 = vld [vmem:[#allocation2 + $0xde0] sm:$0xff]
    %v539 = vld [vmem:[#allocation2 + $0xde8] sm:$0xff]
    %v540 = vld [vmem:[#allocation2 + $0xdf0] sm:$0xff]
    %v541 = vld [vmem:[#allocation2 + $0xdf8] sm:$0xff]
    %v542 = vld [vmem:[#allocation2 + $0xe00] sm:$0xff]
    %v543 = vld [vmem:[#allocation2 + $0xe08] sm:$0xff]
    %v544 = vld [vmem:[#allocation2 + $0xe10] sm:$0xff]
    %v545 = vld [vmem:[#allocation2 + $0xe18] sm:$0xff]
    %v546 = vld [vmem:[#allocation2 + $0xe20] sm:$0xff]
    %v547 = vld [vmem:[#allocation2 + $0xe28] sm:$0xff]
    %v548 = vld [vmem:[#allocation2 + $0xe30] sm:$0xff]
    %v549 = vld [vmem:[#allocation2 + $0xe38] sm:$0xff]
    %v550 = vld [vmem:[#allocation2 + $0xe40] sm:$0xff]
    %v551 = vld [vmem:[#allocation2 + $0xe48] sm:$0xff]
    %v552 = vld [vmem:[#allocation2 + $0xe50] sm:$0xff]
    %v553 = vld [vmem:[#allocation2 + $0xe58] sm:$0xff]
    %v554 = vld [vmem:[#allocation2 + $0xe60] sm:$0xff]
    %v555 = vld [vmem:[#allocation2 + $0xe68] sm:$0xff]
    %v556 = vld [vmem:[#allocation2 + $0xe70] sm:$0xff]
    %v557 = vld [vmem:[#allocation2 + $0xe78] sm:$0xff]
    %v558 = vld [vmem:[#allocation2 + $0xe80] sm:$0xff]
    %v559 = vld [vmem:[#allocation2 + $0xe88] sm:$0xff]
    %v560 = vld [vmem:[#allocation2 + $0xe90] sm:$0xff]
    %v561 = vld [vmem:[#allocation2 + $0xe98] sm:$0xff]
    %v562 = vld [vmem:[#allocation2 + $0xea0] sm:$0xff]
    %v563 = vld [vmem:[#allocation2 + $0xea8] sm:$0xff]
    %v564 = vld [vmem:[#allocation2 + $0xeb0] sm:$0xff]
    %v565 = vld [vmem:[#allocation2 + $0xeb8] sm:$0xff]
    %v566 = vld [vmem:[#allocation2 + $0xec0] sm:$0xff]
    %v567 = vld [vmem:[#allocation2 + $0xec8] sm:$0xff]
    %v568 = vld [vmem:[#allocation2 + $0xed0] sm:$0xff]
    %v569 = vld [vmem:[#allocation2 + $0xed8] sm:$0xff]
    %v570 = vld [vmem:[#allocation2 + $0xee0] sm:$0xff]
    %v571 = vld [vmem:[#allocation2 + $0xee8] sm:$0xff]
    %v572 = vld [vmem:[#allocation2 + $0xef0] sm:$0xff]
    %v573 = vld [vmem:[#allocation2 + $0xef8] sm:$0xff]
    %v574 = vld [vmem:[#allocation2 + $0xf00] sm:$0xff]
    %v575 = vld [vmem:[#allocation2 + $0xf08] sm:$0xff]
    %v576 = vld [vmem:[#allocation2 + $0xf10] sm:$0xff]
    %v577 = vld [vmem:[#allocation2 + $0xf18] sm:$0xff]
    %v578 = vld [vmem:[#allocation2 + $0xf20] sm:$0xff]
    %v579 = vld [vmem:[#allocation2 + $0xf28] sm:$0xff]
    %v580 = vld [vmem:[#allocation2 + $0xf30] sm:$0xff]
    %v581 = vld [vmem:[#allocation2 + $0xf38] sm:$0xff]
    %v582 = vld [vmem:[#allocation2 + $0xf40] sm:$0xff]
    %v583 = vld [vmem:[#allocation2 + $0xf48] sm:$0xff]
    %v584 = vld [vmem:[#allocation2 + $0xf50] sm:$0xff]
    %v585 = vld [vmem:[#allocation2 + $0xf58] sm:$0xff]
    %v586 = vld [vmem:[#allocation2 + $0xf60] sm:$0xff]
    %v587 = vld [vmem:[#allocation2 + $0xf68] sm:$0xff]
    %v588 = vld [vmem:[#allocation2 + $0xf70] sm:$0xff]
    %v589 = vld [vmem:[#allocation2 + $0xf78] sm:$0xff]
    %v590 = vld [vmem:[#allocation2 + $0xf80] sm:$0xff]
    %v591 = vld [vmem:[#allocation2 + $0xf88] sm:$0xff]
    %v592 = vld [vmem:[#allocation2 + $0xf90] sm:$0xff]
    %v593 = vld [vmem:[#allocation2 + $0xf98] sm:$0xff]
    %v594 = vld [vmem:[#allocation2 + $0xfa0] sm:$0xff]
    %v595 = vld [vmem:[#allocation2 + $0xfa8] sm:$0xff]
    %v596 = vld [vmem:[#allocation2 + $0xfb0] sm:$0xff]
    %v597 = vld [vmem:[#allocation2 + $0xfb8] sm:$0xff]
    %v598 = vld [vmem:[#allocation2 + $0xfc0] sm:$0xff]
    %v599 = vld [vmem:[#allocation2 + $0xfc8] sm:$0xff]
    %v600 = vld [vmem:[#allocation2 + $0xfd0] sm:$0xff]
    %v601 = vld [vmem:[#allocation2 + $0xfd8] sm:$0xff]
    %v602 = vld [vmem:[#allocation2 + $0xfe0] sm:$0xff]
    %v603 = vld [vmem:[#allocation2 + $0xfe8] sm:$0xff]
    %v604 = vld [vmem:[#allocation2 + $0xff0] sm:$0xff]
    %v605 = vld [vmem:[#allocation2 + $0xff8] sm:$0xff]
    %v606 = vld [vmem:[#allocation4] sm:$0xff]
    %v608 = vlaneseq
    %v609 = vshrl.u32 %v608, 7
    %v610 = vsub.s32 0, %v609
    %v611 = vrot.slane %v606, %v610
    %v612 = vlaneseq
    %v613 = vshrl.u32 %v612, 7
    %v614 = vsub.s32 1, %v613
    %v615 = vrot.slane %v606, %v614
    %v616 = vlaneseq
    %v617 = vshrl.u32 %v616, 7
    %v618 = vsub.s32 2, %v617
    %v619 = vrot.slane %v606, %v618
    %v620 = vlaneseq
    %v621 = vshrl.u32 %v620, 7
    %v622 = vsub.s32 3, %v621
    %v623 = vrot.slane %v606, %v622
    %v624 = vlaneseq
    %v625 = vshrl.u32 %v624, 7
    %v626 = vsub.s32 4, %v625
    %v627 = vrot.slane %v606, %v626
    %v628 = vlaneseq
    %v629 = vshrl.u32 %v628, 7
    %v630 = vsub.s32 5, %v629
    %v631 = vrot.slane %v606, %v630
    %v632 = vlaneseq
    %v633 = vshrl.u32 %v632, 7
    %v634 = vsub.s32 6, %v633
    %v635 = vrot.slane %v606, %v634
    %v636 = vlaneseq
    %v637 = vshrl.u32 %v636, 7
    %v638 = vsub.s32 7, %v637
    %v639 = vrot.slane %v606, %v638
    %v1160 = vunpack.c.l.b16 %v94
    %v1161 = vunpack.c.h.b16 %v94
    %v1162 = vunpack.c.l.b16 %v95
    %v1163 = vunpack.c.h.b16 %v95
    %v1164 = vunpack.c.l.b16 %v96
    %v1165 = vunpack.c.h.b16 %v96
    %v1166 = vunpack.c.l.b16 %v97
    %v1167 = vunpack.c.h.b16 %v97
    %v1168 = vunpack.c.l.b16 %v98
    %v1169 = vunpack.c.h.b16 %v98
    %v1170 = vunpack.c.l.b16 %v99
    %v1171 = vunpack.c.h.b16 %v99
    %v1172 = vunpack.c.l.b16 %v100
    %v1173 = vunpack.c.h.b16 %v100
    %v1174 = vunpack.c.l.b16 %v101
    %v1175 = vunpack.c.h.b16 %v101
    %v1176 = vunpack.c.l.b16 %v102
    %v1177 = vunpack.c.h.b16 %v102
    %v1178 = vunpack.c.l.b16 %v103
    %v1179 = vunpack.c.h.b16 %v103
    %v1180 = vunpack.c.l.b16 %v104
    %v1181 = vunpack.c.h.b16 %v104
    %v1182 = vunpack.c.l.b16 %v105
    %v1183 = vunpack.c.h.b16 %v105
    %v1184 = vunpack.c.l.b16 %v106
    %v1185 = vunpack.c.h.b16 %v106
    %v1186 = vunpack.c.l.b16 %v107
    %v1187 = vunpack.c.h.b16 %v107
    %v1188 = vunpack.c.l.b16 %v108
    %v1189 = vunpack.c.h.b16 %v108
    %v1190 = vunpack.c.l.b16 %v109
    %v1191 = vunpack.c.h.b16 %v109
    %v1192 = vunpack.c.l.b16 %v110
    %v1193 = vunpack.c.h.b16 %v110
    %v1194 = vunpack.c.l.b16 %v111
    %v1195 = vunpack.c.h.b16 %v111
    %v1196 = vunpack.c.l.b16 %v112
    %v1197 = vunpack.c.h.b16 %v112
    %v1198 = vunpack.c.l.b16 %v113
    %v1199 = vunpack.c.h.b16 %v113
    %v1200 = vunpack.c.l.b16 %v114
    %v1201 = vunpack.c.h.b16 %v114
    %v1202 = vunpack.c.l.b16 %v115
    %v1203 = vunpack.c.h.b16 %v115
    %v1204 = vunpack.c.l.b16 %v116
    %v1205 = vunpack.c.h.b16 %v116
    %v1206 = vunpack.c.l.b16 %v117
    %v1207 = vunpack.c.h.b16 %v117
    %v1208 = vunpack.c.l.b16 %v118
    %v1209 = vunpack.c.h.b16 %v118
    %v1210 = vunpack.c.l.b16 %v119
    %v1211 = vunpack.c.h.b16 %v119
    %v1212 = vunpack.c.l.b16 %v120
    %v1213 = vunpack.c.h.b16 %v120
    %v1214 = vunpack.c.l.b16 %v121
    %v1215 = vunpack.c.h.b16 %v121
    %v1216 = vunpack.c.l.b16 %v122
    %v1217 = vunpack.c.h.b16 %v122
    %v1218 = vunpack.c.l.b16 %v123
    %v1219 = vunpack.c.h.b16 %v123
    %v1220 = vunpack.c.l.b16 %v124
    %v1221 = vunpack.c.h.b16 %v124
    %v1222 = vunpack.c.l.b16 %v125
    %v1223 = vunpack.c.h.b16 %v125
    %v1224 = vunpack.c.l.b16 %v126
    %v1225 = vunpack.c.h.b16 %v126
    %v1226 = vunpack.c.l.b16 %v127
    %v1227 = vunpack.c.h.b16 %v127
    %v1228 = vunpack.c.l.b16 %v128
    %v1229 = vunpack.c.h.b16 %v128
    %v1230 = vunpack.c.l.b16 %v129
    %v1231 = vunpack.c.h.b16 %v129
    %v1232 = vunpack.c.l.b16 %v130
    %v1233 = vunpack.c.h.b16 %v130
    %v1234 = vunpack.c.l.b16 %v131
    %v1235 = vunpack.c.h.b16 %v131
    %v1236 = vunpack.c.l.b16 %v132
    %v1237 = vunpack.c.h.b16 %v132
    %v1238 = vunpack.c.l.b16 %v133
    %v1239 = vunpack.c.h.b16 %v133
    %v1240 = vunpack.c.l.b16 %v134
    %v1241 = vunpack.c.h.b16 %v134
    %v1242 = vunpack.c.l.b16 %v135
    %v1243 = vunpack.c.h.b16 %v135
    %v1244 = vunpack.c.l.b16 %v136
    %v1245 = vunpack.c.h.b16 %v136
    %v1246 = vunpack.c.l.b16 %v137
    %v1247 = vunpack.c.h.b16 %v137
    %v1248 = vunpack.c.l.b16 %v138
    %v1249 = vunpack.c.h.b16 %v138
    %v1250 = vunpack.c.l.b16 %v139
    %v1251 = vunpack.c.h.b16 %v139
    %v1252 = vunpack.c.l.b16 %v140
    %v1253 = vunpack.c.h.b16 %v140
    %v1254 = vunpack.c.l.b16 %v141
    %v1255 = vunpack.c.h.b16 %v141
    %v1256 = vunpack.c.l.b16 %v142
    %v1257 = vunpack.c.h.b16 %v142
    %v1258 = vunpack.c.l.b16 %v143
    %v1259 = vunpack.c.h.b16 %v143
    %v1260 = vunpack.c.l.b16 %v144
    %v1261 = vunpack.c.h.b16 %v144
    %v1262 = vunpack.c.l.b16 %v145
    %v1263 = vunpack.c.h.b16 %v145
    %v1264 = vunpack.c.l.b16 %v146
    %v1265 = vunpack.c.h.b16 %v146
    %v1266 = vunpack.c.l.b16 %v147
    %v1267 = vunpack.c.h.b16 %v147
    %v1268 = vunpack.c.l.b16 %v148
    %v1269 = vunpack.c.h.b16 %v148
    %v1270 = vunpack.c.l.b16 %v149
    %v1271 = vunpack.c.h.b16 %v149
    %v1272 = vunpack.c.l.b16 %v150
    %v1273 = vunpack.c.h.b16 %v150
    %v1274 = vunpack.c.l.b16 %v151
    %v1275 = vunpack.c.h.b16 %v151
    %v1276 = vunpack.c.l.b16 %v152
    %v1277 = vunpack.c.h.b16 %v152
    %v1278 = vunpack.c.l.b16 %v153
    %v1279 = vunpack.c.h.b16 %v153
    %v1280 = vunpack.c.l.b16 %v154
    %v1281 = vunpack.c.h.b16 %v154
    %v1282 = vunpack.c.l.b16 %v155
    %v1283 = vunpack.c.h.b16 %v155
    %v1284 = vunpack.c.l.b16 %v156
    %v1285 = vunpack.c.h.b16 %v156
    %v1286 = vunpack.c.l.b16 %v157
    %v1287 = vunpack.c.h.b16 %v157
    %v1288 = vunpack.c.l.b16 %v158
    %v1289 = vunpack.c.h.b16 %v158
    %v1290 = vunpack.c.l.b16 %v159
    %v1291 = vunpack.c.h.b16 %v159
    %v1292 = vunpack.c.l.b16 %v160
    %v1293 = vunpack.c.h.b16 %v160
    %v1294 = vunpack.c.l.b16 %v161
    %v1295 = vunpack.c.h.b16 %v161
    %v1296 = vunpack.c.l.b16 %v162
    %v1297 = vunpack.c.h.b16 %v162
    %v1298 = vunpack.c.l.b16 %v163
    %v1299 = vunpack.c.h.b16 %v163
    %v1300 = vunpack.c.l.b16 %v164
    %v1301 = vunpack.c.h.b16 %v164
    %v1302 = vunpack.c.l.b16 %v165
    %v1303 = vunpack.c.h.b16 %v165
    %v1304 = vunpack.c.l.b16 %v166
    %v1305 = vunpack.c.h.b16 %v166
    %v1306 = vunpack.c.l.b16 %v167
    %v1307 = vunpack.c.h.b16 %v167
    %v1308 = vunpack.c.l.b16 %v168
    %v1309 = vunpack.c.h.b16 %v168
    %v1310 = vunpack.c.l.b16 %v169
    %v1311 = vunpack.c.h.b16 %v169
    %v1312 = vunpack.c.l.b16 %v170
    %v1313 = vunpack.c.h.b16 %v170
    %v1314 = vunpack.c.l.b16 %v171
    %v1315 = vunpack.c.h.b16 %v171
    %v1316 = vunpack.c.l.b16 %v172
    %v1317 = vunpack.c.h.b16 %v172
    %v1318 = vunpack.c.l.b16 %v173
    %v1319 = vunpack.c.h.b16 %v173
    %v1320 = vunpack.c.l.b16 %v174
    %v1321 = vunpack.c.h.b16 %v174
    %v1322 = vunpack.c.l.b16 %v175
    %v1323 = vunpack.c.h.b16 %v175
    %v1324 = vunpack.c.l.b16 %v176
    %v1325 = vunpack.c.h.b16 %v176
    %v1326 = vunpack.c.l.b16 %v177
    %v1327 = vunpack.c.h.b16 %v177
    %v1328 = vunpack.c.l.b16 %v178
    %v1329 = vunpack.c.h.b16 %v178
    %v1330 = vunpack.c.l.b16 %v179
    %v1331 = vunpack.c.h.b16 %v179
    %v1332 = vunpack.c.l.b16 %v180
    %v1333 = vunpack.c.h.b16 %v180
    %v1334 = vunpack.c.l.b16 %v181
    %v1335 = vunpack.c.h.b16 %v181
    %v1336 = vunpack.c.l.b16 %v182
    %v1337 = vunpack.c.h.b16 %v182
    %v1338 = vunpack.c.l.b16 %v183
    %v1339 = vunpack.c.h.b16 %v183
    %v1340 = vunpack.c.l.b16 %v184
    %v1341 = vunpack.c.h.b16 %v184
    %v1342 = vunpack.c.l.b16 %v185
    %v1343 = vunpack.c.h.b16 %v185
    %v1344 = vunpack.c.l.b16 %v186
    %v1345 = vunpack.c.h.b16 %v186
    %v1346 = vunpack.c.l.b16 %v187
    %v1347 = vunpack.c.h.b16 %v187
    %v1348 = vunpack.c.l.b16 %v188
    %v1349 = vunpack.c.h.b16 %v188
    %v1350 = vunpack.c.l.b16 %v189
    %v1351 = vunpack.c.h.b16 %v189
    %v1352 = vunpack.c.l.b16 %v190
    %v1353 = vunpack.c.h.b16 %v190
    %v1354 = vunpack.c.l.b16 %v191
    %v1355 = vunpack.c.h.b16 %v191
    %v1356 = vunpack.c.l.b16 %v192
    %v1357 = vunpack.c.h.b16 %v192
    %v1358 = vunpack.c.l.b16 %v193
    %v1359 = vunpack.c.h.b16 %v193
    %v1360 = vunpack.c.l.b16 %v194
    %v1361 = vunpack.c.h.b16 %v194
    %v1362 = vunpack.c.l.b16 %v195
    %v1363 = vunpack.c.h.b16 %v195
    %v1364 = vunpack.c.l.b16 %v196
    %v1365 = vunpack.c.h.b16 %v196
    %v1366 = vunpack.c.l.b16 %v197
    %v1367 = vunpack.c.h.b16 %v197
    %v1368 = vunpack.c.l.b16 %v198
    %v1369 = vunpack.c.h.b16 %v198
    %v1370 = vunpack.c.l.b16 %v199
    %v1371 = vunpack.c.h.b16 %v199
    %v1372 = vunpack.c.l.b16 %v200
    %v1373 = vunpack.c.h.b16 %v200
    %v1374 = vunpack.c.l.b16 %v201
    %v1375 = vunpack.c.h.b16 %v201
    %v1376 = vunpack.c.l.b16 %v202
    %v1377 = vunpack.c.h.b16 %v202
    %v1378 = vunpack.c.l.b16 %v203
    %v1379 = vunpack.c.h.b16 %v203
    %v1380 = vunpack.c.l.b16 %v204
    %v1381 = vunpack.c.h.b16 %v204
    %v1382 = vunpack.c.l.b16 %v205
    %v1383 = vunpack.c.h.b16 %v205
    %v1384 = vunpack.c.l.b16 %v206
    %v1385 = vunpack.c.h.b16 %v206
    %v1386 = vunpack.c.l.b16 %v207
    %v1387 = vunpack.c.h.b16 %v207
    %v1388 = vunpack.c.l.b16 %v208
    %v1389 = vunpack.c.h.b16 %v208
    %v1390 = vunpack.c.l.b16 %v209
    %v1391 = vunpack.c.h.b16 %v209
    %v1392 = vunpack.c.l.b16 %v210
    %v1393 = vunpack.c.h.b16 %v210
    %v1394 = vunpack.c.l.b16 %v211
    %v1395 = vunpack.c.h.b16 %v211
    %v1396 = vunpack.c.l.b16 %v212
    %v1397 = vunpack.c.h.b16 %v212
    %v1398 = vunpack.c.l.b16 %v213
    %v1399 = vunpack.c.h.b16 %v213
    %v1400 = vunpack.c.l.b16 %v214
    %v1401 = vunpack.c.h.b16 %v214
    %v1402 = vunpack.c.l.b16 %v215
    %v1403 = vunpack.c.h.b16 %v215
    %v1404 = vunpack.c.l.b16 %v216
    %v1405 = vunpack.c.h.b16 %v216
    %v1406 = vunpack.c.l.b16 %v217
    %v1407 = vunpack.c.h.b16 %v217
    %v1408 = vunpack.c.l.b16 %v218
    %v1409 = vunpack.c.h.b16 %v218
    %v1410 = vunpack.c.l.b16 %v219
    %v1411 = vunpack.c.h.b16 %v219
    %v1412 = vunpack.c.l.b16 %v220
    %v1413 = vunpack.c.h.b16 %v220
    %v1414 = vunpack.c.l.b16 %v221
    %v1415 = vunpack.c.h.b16 %v221
    %v1416 = vunpack.c.l.b16 %v222
    %v1417 = vunpack.c.h.b16 %v222
    %v1418 = vunpack.c.l.b16 %v223
    %v1419 = vunpack.c.h.b16 %v223
    %v1420 = vunpack.c.l.b16 %v224
    %v1421 = vunpack.c.h.b16 %v224
    %v1422 = vunpack.c.l.b16 %v225
    %v1423 = vunpack.c.h.b16 %v225
    %v1424 = vunpack.c.l.b16 %v226
    %v1425 = vunpack.c.h.b16 %v226
    %v1426 = vunpack.c.l.b16 %v227
    %v1427 = vunpack.c.h.b16 %v227
    %v1428 = vunpack.c.l.b16 %v228
    %v1429 = vunpack.c.h.b16 %v228
    %v1430 = vunpack.c.l.b16 %v229
    %v1431 = vunpack.c.h.b16 %v229
    %v1432 = vunpack.c.l.b16 %v230
    %v1433 = vunpack.c.h.b16 %v230
    %v1434 = vunpack.c.l.b16 %v231
    %v1435 = vunpack.c.h.b16 %v231
    %v1436 = vunpack.c.l.b16 %v232
    %v1437 = vunpack.c.h.b16 %v232
    %v1438 = vunpack.c.l.b16 %v233
    %v1439 = vunpack.c.h.b16 %v233
    %v1440 = vunpack.c.l.b16 %v234
    %v1441 = vunpack.c.h.b16 %v234
    %v1442 = vunpack.c.l.b16 %v235
    %v1443 = vunpack.c.h.b16 %v235
    %v1444 = vunpack.c.l.b16 %v236
    %v1445 = vunpack.c.h.b16 %v236
    %v1446 = vunpack.c.l.b16 %v237
    %v1447 = vunpack.c.h.b16 %v237
    %v1448 = vunpack.c.l.b16 %v238
    %v1449 = vunpack.c.h.b16 %v238
    %v1450 = vunpack.c.l.b16 %v239
    %v1451 = vunpack.c.h.b16 %v239
    %v1452 = vunpack.c.l.b16 %v240
    %v1453 = vunpack.c.h.b16 %v240
    %v1454 = vunpack.c.l.b16 %v241
    %v1455 = vunpack.c.h.b16 %v241
    %v1456 = vunpack.c.l.b16 %v242
    %v1457 = vunpack.c.h.b16 %v242
    %v1458 = vunpack.c.l.b16 %v243
    %v1459 = vunpack.c.h.b16 %v243
    %v1460 = vunpack.c.l.b16 %v244
    %v1461 = vunpack.c.h.b16 %v244
    %v1462 = vunpack.c.l.b16 %v245
    %v1463 = vunpack.c.h.b16 %v245
    %v1464 = vunpack.c.l.b16 %v246
    %v1465 = vunpack.c.h.b16 %v246
    %v1466 = vunpack.c.l.b16 %v247
    %v1467 = vunpack.c.h.b16 %v247
    %v1468 = vunpack.c.l.b16 %v248
    %v1469 = vunpack.c.h.b16 %v248
    %v1470 = vunpack.c.l.b16 %v249
    %v1471 = vunpack.c.h.b16 %v249
    %v1472 = vunpack.c.l.b16 %v250
    %v1473 = vunpack.c.h.b16 %v250
    %v1474 = vunpack.c.l.b16 %v251
    %v1475 = vunpack.c.h.b16 %v251
    %v1476 = vunpack.c.l.b16 %v252
    %v1477 = vunpack.c.h.b16 %v252
    %v1478 = vunpack.c.l.b16 %v253
    %v1479 = vunpack.c.h.b16 %v253
    %v1480 = vunpack.c.l.b16 %v254
    %v1481 = vunpack.c.h.b16 %v254
    %v1482 = vunpack.c.l.b16 %v255
    %v1483 = vunpack.c.h.b16 %v255
    %v1484 = vunpack.c.l.b16 %v256
    %v1485 = vunpack.c.h.b16 %v256
    %v1486 = vunpack.c.l.b16 %v257
    %v1487 = vunpack.c.h.b16 %v257
    %v1488 = vunpack.c.l.b16 %v258
    %v1489 = vunpack.c.h.b16 %v258
    %v1490 = vunpack.c.l.b16 %v259
    %v1491 = vunpack.c.h.b16 %v259
    %v1492 = vunpack.c.l.b16 %v260
    %v1493 = vunpack.c.h.b16 %v260
    %v1494 = vunpack.c.l.b16 %v261
    %v1495 = vunpack.c.h.b16 %v261
    %v1496 = vunpack.c.l.b16 %v262
    %v1497 = vunpack.c.h.b16 %v262
    %v1498 = vunpack.c.l.b16 %v263
    %v1499 = vunpack.c.h.b16 %v263
    %v1500 = vunpack.c.l.b16 %v264
    %v1501 = vunpack.c.h.b16 %v264
    %v1502 = vunpack.c.l.b16 %v265
    %v1503 = vunpack.c.h.b16 %v265
    %v1504 = vunpack.c.l.b16 %v266
    %v1505 = vunpack.c.h.b16 %v266
    %v1506 = vunpack.c.l.b16 %v267
    %v1507 = vunpack.c.h.b16 %v267
    %v1508 = vunpack.c.l.b16 %v268
    %v1509 = vunpack.c.h.b16 %v268
    %v1510 = vunpack.c.l.b16 %v269
    %v1511 = vunpack.c.h.b16 %v269
    %v1512 = vunpack.c.l.b16 %v270
    %v1513 = vunpack.c.h.b16 %v270
    %v1514 = vunpack.c.l.b16 %v271
    %v1515 = vunpack.c.h.b16 %v271
    %v1516 = vunpack.c.l.b16 %v272
    %v1517 = vunpack.c.h.b16 %v272
    %v1518 = vunpack.c.l.b16 %v273
    %v1519 = vunpack.c.h.b16 %v273
    %v1520 = vunpack.c.l.b16 %v274
    %v1521 = vunpack.c.h.b16 %v274
    %v1522 = vunpack.c.l.b16 %v275
    %v1523 = vunpack.c.h.b16 %v275
    %v1524 = vunpack.c.l.b16 %v276
    %v1525 = vunpack.c.h.b16 %v276
    %v1526 = vunpack.c.l.b16 %v277
    %v1527 = vunpack.c.h.b16 %v277
    %v1528 = vunpack.c.l.b16 %v278
    %v1529 = vunpack.c.h.b16 %v278
    %v1530 = vunpack.c.l.b16 %v279
    %v1531 = vunpack.c.h.b16 %v279
    %v1532 = vunpack.c.l.b16 %v280
    %v1533 = vunpack.c.h.b16 %v280
    %v1534 = vunpack.c.l.b16 %v281
    %v1535 = vunpack.c.h.b16 %v281
    %v1536 = vunpack.c.l.b16 %v282
    %v1537 = vunpack.c.h.b16 %v282
    %v1538 = vunpack.c.l.b16 %v283
    %v1539 = vunpack.c.h.b16 %v283
    %v1540 = vunpack.c.l.b16 %v284
    %v1541 = vunpack.c.h.b16 %v284
    %v1542 = vunpack.c.l.b16 %v285
    %v1543 = vunpack.c.h.b16 %v285
    %v1544 = vunpack.c.l.b16 %v286
    %v1545 = vunpack.c.h.b16 %v286
    %v1546 = vunpack.c.l.b16 %v287
    %v1547 = vunpack.c.h.b16 %v287
    %v1548 = vunpack.c.l.b16 %v288
    %v1549 = vunpack.c.h.b16 %v288
    %v1550 = vunpack.c.l.b16 %v289
    %v1551 = vunpack.c.h.b16 %v289
    %v1552 = vunpack.c.l.b16 %v290
    %v1553 = vunpack.c.h.b16 %v290
    %v1554 = vunpack.c.l.b16 %v291
    %v1555 = vunpack.c.h.b16 %v291
    %v1556 = vunpack.c.l.b16 %v292
    %v1557 = vunpack.c.h.b16 %v292
    %v1558 = vunpack.c.l.b16 %v293
    %v1559 = vunpack.c.h.b16 %v293
    %v1560 = vunpack.c.l.b16 %v294
    %v1561 = vunpack.c.h.b16 %v294
    %v1562 = vunpack.c.l.b16 %v295
    %v1563 = vunpack.c.h.b16 %v295
    %v1564 = vunpack.c.l.b16 %v296
    %v1565 = vunpack.c.h.b16 %v296
    %v1566 = vunpack.c.l.b16 %v297
    %v1567 = vunpack.c.h.b16 %v297
    %v1568 = vunpack.c.l.b16 %v298
    %v1569 = vunpack.c.h.b16 %v298
    %v1570 = vunpack.c.l.b16 %v299
    %v1571 = vunpack.c.h.b16 %v299
    %v1572 = vunpack.c.l.b16 %v300
    %v1573 = vunpack.c.h.b16 %v300
    %v1574 = vunpack.c.l.b16 %v301
    %v1575 = vunpack.c.h.b16 %v301
    %v1576 = vunpack.c.l.b16 %v302
    %v1577 = vunpack.c.h.b16 %v302
    %v1578 = vunpack.c.l.b16 %v303
    %v1579 = vunpack.c.h.b16 %v303
    %v1580 = vunpack.c.l.b16 %v304
    %v1581 = vunpack.c.h.b16 %v304
    %v1582 = vunpack.c.l.b16 %v305
    %v1583 = vunpack.c.h.b16 %v305
    %v1584 = vunpack.c.l.b16 %v306
    %v1585 = vunpack.c.h.b16 %v306
    %v1586 = vunpack.c.l.b16 %v307
    %v1587 = vunpack.c.h.b16 %v307
    %v1588 = vunpack.c.l.b16 %v308
    %v1589 = vunpack.c.h.b16 %v308
    %v1590 = vunpack.c.l.b16 %v309
    %v1591 = vunpack.c.h.b16 %v309
    %v1592 = vunpack.c.l.b16 %v310
    %v1593 = vunpack.c.h.b16 %v310
    %v1594 = vunpack.c.l.b16 %v311
    %v1595 = vunpack.c.h.b16 %v311
    %v1596 = vunpack.c.l.b16 %v312
    %v1597 = vunpack.c.h.b16 %v312
    %v1598 = vunpack.c.l.b16 %v313
    %v1599 = vunpack.c.h.b16 %v313
    %v1600 = vunpack.c.l.b16 %v314
    %v1601 = vunpack.c.h.b16 %v314
    %v1602 = vunpack.c.l.b16 %v315
    %v1603 = vunpack.c.h.b16 %v315
    %v1604 = vunpack.c.l.b16 %v316
    %v1605 = vunpack.c.h.b16 %v316
    %v1606 = vunpack.c.l.b16 %v317
    %v1607 = vunpack.c.h.b16 %v317
    %v1608 = vunpack.c.l.b16 %v318
    %v1609 = vunpack.c.h.b16 %v318
    %v1610 = vunpack.c.l.b16 %v319
    %v1611 = vunpack.c.h.b16 %v319
    %v1612 = vunpack.c.l.b16 %v320
    %v1613 = vunpack.c.h.b16 %v320
    %v1614 = vunpack.c.l.b16 %v321
    %v1615 = vunpack.c.h.b16 %v321
    %v1616 = vunpack.c.l.b16 %v322
    %v1617 = vunpack.c.h.b16 %v322
    %v1618 = vunpack.c.l.b16 %v323
    %v1619 = vunpack.c.h.b16 %v323
    %v1620 = vunpack.c.l.b16 %v324
    %v1621 = vunpack.c.h.b16 %v324
    %v1622 = vunpack.c.l.b16 %v325
    %v1623 = vunpack.c.h.b16 %v325
    %v1624 = vunpack.c.l.b16 %v326
    %v1625 = vunpack.c.h.b16 %v326
    %v1626 = vunpack.c.l.b16 %v327
    %v1627 = vunpack.c.h.b16 %v327
    %v1628 = vunpack.c.l.b16 %v328
    %v1629 = vunpack.c.h.b16 %v328
    %v1630 = vunpack.c.l.b16 %v329
    %v1631 = vunpack.c.h.b16 %v329
    %v1632 = vunpack.c.l.b16 %v330
    %v1633 = vunpack.c.h.b16 %v330
    %v1634 = vunpack.c.l.b16 %v331
    %v1635 = vunpack.c.h.b16 %v331
    %v1636 = vunpack.c.l.b16 %v332
    %v1637 = vunpack.c.h.b16 %v332
    %v1638 = vunpack.c.l.b16 %v333
    %v1639 = vunpack.c.h.b16 %v333
    %v1640 = vunpack.c.l.b16 %v334
    %v1641 = vunpack.c.h.b16 %v334
    %v1642 = vunpack.c.l.b16 %v335
    %v1643 = vunpack.c.h.b16 %v335
    %v1644 = vunpack.c.l.b16 %v336
    %v1645 = vunpack.c.h.b16 %v336
    %v1646 = vunpack.c.l.b16 %v337
    %v1647 = vunpack.c.h.b16 %v337
    %v1648 = vunpack.c.l.b16 %v338
    %v1649 = vunpack.c.h.b16 %v338
    %v1650 = vunpack.c.l.b16 %v339
    %v1651 = vunpack.c.h.b16 %v339
    %v1652 = vunpack.c.l.b16 %v340
    %v1653 = vunpack.c.h.b16 %v340
    %v1654 = vunpack.c.l.b16 %v341
    %v1655 = vunpack.c.h.b16 %v341
    %v1656 = vunpack.c.l.b16 %v342
    %v1657 = vunpack.c.h.b16 %v342
    %v1658 = vunpack.c.l.b16 %v343
    %v1659 = vunpack.c.h.b16 %v343
    %v1660 = vunpack.c.l.b16 %v344
    %v1661 = vunpack.c.h.b16 %v344
    %v1662 = vunpack.c.l.b16 %v345
    %v1663 = vunpack.c.h.b16 %v345
    %v1664 = vunpack.c.l.b16 %v346
    %v1665 = vunpack.c.h.b16 %v346
    %v1666 = vunpack.c.l.b16 %v347
    %v1667 = vunpack.c.h.b16 %v347
    %v1668 = vunpack.c.l.b16 %v348
    %v1669 = vunpack.c.h.b16 %v348
    %v1670 = vunpack.c.l.b16 %v349
    %v1671 = vunpack.c.h.b16 %v349
    %v1672 = vunpack.c.l.b16 %v350
    %v1673 = vunpack.c.h.b16 %v350
    %v1674 = vunpack.c.l.b16 %v351
    %v1675 = vunpack.c.h.b16 %v351
    %v1676 = vunpack.c.l.b16 %v352
    %v1677 = vunpack.c.h.b16 %v352
    %v1678 = vunpack.c.l.b16 %v353
    %v1679 = vunpack.c.h.b16 %v353
    %v1680 = vunpack.c.l.b16 %v354
    %v1681 = vunpack.c.h.b16 %v354
    %v1682 = vunpack.c.l.b16 %v355
    %v1683 = vunpack.c.h.b16 %v355
    %v1684 = vunpack.c.l.b16 %v356
    %v1685 = vunpack.c.h.b16 %v356
    %v1686 = vunpack.c.l.b16 %v357
    %v1687 = vunpack.c.h.b16 %v357
    %v1688 = vunpack.c.l.b16 %v358
    %v1689 = vunpack.c.h.b16 %v358
    %v1690 = vunpack.c.l.b16 %v359
    %v1691 = vunpack.c.h.b16 %v359
    %v1692 = vunpack.c.l.b16 %v360
    %v1693 = vunpack.c.h.b16 %v360
    %v1694 = vunpack.c.l.b16 %v361
    %v1695 = vunpack.c.h.b16 %v361
    %v1696 = vunpack.c.l.b16 %v362
    %v1697 = vunpack.c.h.b16 %v362
    %v1698 = vunpack.c.l.b16 %v363
    %v1699 = vunpack.c.h.b16 %v363
    %v1700 = vunpack.c.l.b16 %v364
    %v1701 = vunpack.c.h.b16 %v364
    %v1702 = vunpack.c.l.b16 %v365
    %v1703 = vunpack.c.h.b16 %v365
    %v1704 = vunpack.c.l.b16 %v366
    %v1705 = vunpack.c.h.b16 %v366
    %v1706 = vunpack.c.l.b16 %v367
    %v1707 = vunpack.c.h.b16 %v367
    %v1708 = vunpack.c.l.b16 %v368
    %v1709 = vunpack.c.h.b16 %v368
    %v1710 = vunpack.c.l.b16 %v369
    %v1711 = vunpack.c.h.b16 %v369
    %v1712 = vunpack.c.l.b16 %v370
    %v1713 = vunpack.c.h.b16 %v370
    %v1714 = vunpack.c.l.b16 %v371
    %v1715 = vunpack.c.h.b16 %v371
    %v1716 = vunpack.c.l.b16 %v372
    %v1717 = vunpack.c.h.b16 %v372
    %v1718 = vunpack.c.l.b16 %v373
    %v1719 = vunpack.c.h.b16 %v373
    %v1720 = vunpack.c.l.b16 %v374
    %v1721 = vunpack.c.h.b16 %v374
    %v1722 = vunpack.c.l.b16 %v375
    %v1723 = vunpack.c.h.b16 %v375
    %v1724 = vunpack.c.l.b16 %v376
    %v1725 = vunpack.c.h.b16 %v376
    %v1726 = vunpack.c.l.b16 %v377
    %v1727 = vunpack.c.h.b16 %v377
    %v1728 = vunpack.c.l.b16 %v378
    %v1729 = vunpack.c.h.b16 %v378
    %v1730 = vunpack.c.l.b16 %v379
    %v1731 = vunpack.c.h.b16 %v379
    %v1732 = vunpack.c.l.b16 %v380
    %v1733 = vunpack.c.h.b16 %v380
    %v1734 = vunpack.c.l.b16 %v381
    %v1735 = vunpack.c.h.b16 %v381
    %v1736 = vunpack.c.l.b16 %v382
    %v1737 = vunpack.c.h.b16 %v382
    %v1738 = vunpack.c.l.b16 %v383
    %v1739 = vunpack.c.h.b16 %v383
    %v1740 = vunpack.c.l.b16 %v384
    %v1741 = vunpack.c.h.b16 %v384
    %v1742 = vunpack.c.l.b16 %v385
    %v1743 = vunpack.c.h.b16 %v385
    %v1744 = vunpack.c.l.b16 %v386
    %v1745 = vunpack.c.h.b16 %v386
    %v1746 = vunpack.c.l.b16 %v387
    %v1747 = vunpack.c.h.b16 %v387
    %v1748 = vunpack.c.l.b16 %v388
    %v1749 = vunpack.c.h.b16 %v388
    %v1750 = vunpack.c.l.b16 %v389
    %v1751 = vunpack.c.h.b16 %v389
    %v1752 = vunpack.c.l.b16 %v390
    %v1753 = vunpack.c.h.b16 %v390
    %v1754 = vunpack.c.l.b16 %v391
    %v1755 = vunpack.c.h.b16 %v391
    %v1756 = vunpack.c.l.b16 %v392
    %v1757 = vunpack.c.h.b16 %v392
    %v1758 = vunpack.c.l.b16 %v393
    %v1759 = vunpack.c.h.b16 %v393
    %v1760 = vunpack.c.l.b16 %v394
    %v1761 = vunpack.c.h.b16 %v394
    %v1762 = vunpack.c.l.b16 %v395
    %v1763 = vunpack.c.h.b16 %v395
    %v1764 = vunpack.c.l.b16 %v396
    %v1765 = vunpack.c.h.b16 %v396
    %v1766 = vunpack.c.l.b16 %v397
    %v1767 = vunpack.c.h.b16 %v397
    %v1768 = vunpack.c.l.b16 %v398
    %v1769 = vunpack.c.h.b16 %v398
    %v1770 = vunpack.c.l.b16 %v399
    %v1771 = vunpack.c.h.b16 %v399
    %v1772 = vunpack.c.l.b16 %v400
    %v1773 = vunpack.c.h.b16 %v400
    %v1774 = vunpack.c.l.b16 %v401
    %v1775 = vunpack.c.h.b16 %v401
    %v1776 = vunpack.c.l.b16 %v402
    %v1777 = vunpack.c.h.b16 %v402
    %v1778 = vunpack.c.l.b16 %v403
    %v1779 = vunpack.c.h.b16 %v403
    %v1780 = vunpack.c.l.b16 %v404
    %v1781 = vunpack.c.h.b16 %v404
    %v1782 = vunpack.c.l.b16 %v405
    %v1783 = vunpack.c.h.b16 %v405
    %v1784 = vunpack.c.l.b16 %v406
    %v1785 = vunpack.c.h.b16 %v406
    %v1786 = vunpack.c.l.b16 %v407
    %v1787 = vunpack.c.h.b16 %v407
    %v1788 = vunpack.c.l.b16 %v408
    %v1789 = vunpack.c.h.b16 %v408
    %v1790 = vunpack.c.l.b16 %v409
    %v1791 = vunpack.c.h.b16 %v409
    %v1792 = vunpack.c.l.b16 %v410
    %v1793 = vunpack.c.h.b16 %v410
    %v1794 = vunpack.c.l.b16 %v411
    %v1795 = vunpack.c.h.b16 %v411
    %v1796 = vunpack.c.l.b16 %v412
    %v1797 = vunpack.c.h.b16 %v412
    %v1798 = vunpack.c.l.b16 %v413
    %v1799 = vunpack.c.h.b16 %v413
    %v1800 = vunpack.c.l.b16 %v414
    %v1801 = vunpack.c.h.b16 %v414
    %v1802 = vunpack.c.l.b16 %v415
    %v1803 = vunpack.c.h.b16 %v415
    %v1804 = vunpack.c.l.b16 %v416
    %v1805 = vunpack.c.h.b16 %v416
    %v1806 = vunpack.c.l.b16 %v417
    %v1807 = vunpack.c.h.b16 %v417
    %v1808 = vunpack.c.l.b16 %v418
    %v1809 = vunpack.c.h.b16 %v418
    %v1810 = vunpack.c.l.b16 %v419
    %v1811 = vunpack.c.h.b16 %v419
    %v1812 = vunpack.c.l.b16 %v420
    %v1813 = vunpack.c.h.b16 %v420
    %v1814 = vunpack.c.l.b16 %v421
    %v1815 = vunpack.c.h.b16 %v421
    %v1816 = vunpack.c.l.b16 %v422
    %v1817 = vunpack.c.h.b16 %v422
    %v1818 = vunpack.c.l.b16 %v423
    %v1819 = vunpack.c.h.b16 %v423
    %v1820 = vunpack.c.l.b16 %v424
    %v1821 = vunpack.c.h.b16 %v424
    %v1822 = vunpack.c.l.b16 %v425
    %v1823 = vunpack.c.h.b16 %v425
    %v1824 = vunpack.c.l.b16 %v426
    %v1825 = vunpack.c.h.b16 %v426
    %v1826 = vunpack.c.l.b16 %v427
    %v1827 = vunpack.c.h.b16 %v427
    %v1828 = vunpack.c.l.b16 %v428
    %v1829 = vunpack.c.h.b16 %v428
    %v1830 = vunpack.c.l.b16 %v429
    %v1831 = vunpack.c.h.b16 %v429
    %v1832 = vunpack.c.l.b16 %v430
    %v1833 = vunpack.c.h.b16 %v430
    %v1834 = vunpack.c.l.b16 %v431
    %v1835 = vunpack.c.h.b16 %v431
    %v1836 = vunpack.c.l.b16 %v432
    %v1837 = vunpack.c.h.b16 %v432
    %v1838 = vunpack.c.l.b16 %v433
    %v1839 = vunpack.c.h.b16 %v433
    %v1840 = vunpack.c.l.b16 %v434
    %v1841 = vunpack.c.h.b16 %v434
    %v1842 = vunpack.c.l.b16 %v435
    %v1843 = vunpack.c.h.b16 %v435
    %v1844 = vunpack.c.l.b16 %v436
    %v1845 = vunpack.c.h.b16 %v436
    %v1846 = vunpack.c.l.b16 %v437
    %v1847 = vunpack.c.h.b16 %v437
    %v1848 = vunpack.c.l.b16 %v438
    %v1849 = vunpack.c.h.b16 %v438
    %v1850 = vunpack.c.l.b16 %v439
    %v1851 = vunpack.c.h.b16 %v439
    %v1852 = vunpack.c.l.b16 %v440
    %v1853 = vunpack.c.h.b16 %v440
    %v1854 = vunpack.c.l.b16 %v441
    %v1855 = vunpack.c.h.b16 %v441
    %v1856 = vunpack.c.l.b16 %v442
    %v1857 = vunpack.c.h.b16 %v442
    %v1858 = vunpack.c.l.b16 %v443
    %v1859 = vunpack.c.h.b16 %v443
    %v1860 = vunpack.c.l.b16 %v444
    %v1861 = vunpack.c.h.b16 %v444
    %v1862 = vunpack.c.l.b16 %v445
    %v1863 = vunpack.c.h.b16 %v445
    %v1864 = vunpack.c.l.b16 %v446
    %v1865 = vunpack.c.h.b16 %v446
    %v1866 = vunpack.c.l.b16 %v447
    %v1867 = vunpack.c.h.b16 %v447
    %v1868 = vunpack.c.l.b16 %v448
    %v1869 = vunpack.c.h.b16 %v448
    %v1870 = vunpack.c.l.b16 %v449
    %v1871 = vunpack.c.h.b16 %v449
    %v1872 = vunpack.c.l.b16 %v450
    %v1873 = vunpack.c.h.b16 %v450
    %v1874 = vunpack.c.l.b16 %v451
    %v1875 = vunpack.c.h.b16 %v451
    %v1876 = vunpack.c.l.b16 %v452
    %v1877 = vunpack.c.h.b16 %v452
    %v1878 = vunpack.c.l.b16 %v453
    %v1879 = vunpack.c.h.b16 %v453
    %v1880 = vunpack.c.l.b16 %v454
    %v1881 = vunpack.c.h.b16 %v454
    %v1882 = vunpack.c.l.b16 %v455
    %v1883 = vunpack.c.h.b16 %v455
    %v1884 = vunpack.c.l.b16 %v456
    %v1885 = vunpack.c.h.b16 %v456
    %v1886 = vunpack.c.l.b16 %v457
    %v1887 = vunpack.c.h.b16 %v457
    %v1888 = vunpack.c.l.b16 %v458
    %v1889 = vunpack.c.h.b16 %v458
    %v1890 = vunpack.c.l.b16 %v459
    %v1891 = vunpack.c.h.b16 %v459
    %v1892 = vunpack.c.l.b16 %v460
    %v1893 = vunpack.c.h.b16 %v460
    %v1894 = vunpack.c.l.b16 %v461
    %v1895 = vunpack.c.h.b16 %v461
    %v1896 = vunpack.c.l.b16 %v462
    %v1897 = vunpack.c.h.b16 %v462
    %v1898 = vunpack.c.l.b16 %v463
    %v1899 = vunpack.c.h.b16 %v463
    %v1900 = vunpack.c.l.b16 %v464
    %v1901 = vunpack.c.h.b16 %v464
    %v1902 = vunpack.c.l.b16 %v465
    %v1903 = vunpack.c.h.b16 %v465
    %v1904 = vunpack.c.l.b16 %v466
    %v1905 = vunpack.c.h.b16 %v466
    %v1906 = vunpack.c.l.b16 %v467
    %v1907 = vunpack.c.h.b16 %v467
    %v1908 = vunpack.c.l.b16 %v468
    %v1909 = vunpack.c.h.b16 %v468
    %v1910 = vunpack.c.l.b16 %v469
    %v1911 = vunpack.c.h.b16 %v469
    %v1912 = vunpack.c.l.b16 %v470
    %v1913 = vunpack.c.h.b16 %v470
    %v1914 = vunpack.c.l.b16 %v471
    %v1915 = vunpack.c.h.b16 %v471
    %v1916 = vunpack.c.l.b16 %v472
    %v1917 = vunpack.c.h.b16 %v472
    %v1918 = vunpack.c.l.b16 %v473
    %v1919 = vunpack.c.h.b16 %v473
    %v1920 = vunpack.c.l.b16 %v474
    %v1921 = vunpack.c.h.b16 %v474
    %v1922 = vunpack.c.l.b16 %v475
    %v1923 = vunpack.c.h.b16 %v475
    %v1924 = vunpack.c.l.b16 %v476
    %v1925 = vunpack.c.h.b16 %v476
    %v1926 = vunpack.c.l.b16 %v477
    %v1927 = vunpack.c.h.b16 %v477
    %v1928 = vunpack.c.l.b16 %v478
    %v1929 = vunpack.c.h.b16 %v478
    %v1930 = vunpack.c.l.b16 %v479
    %v1931 = vunpack.c.h.b16 %v479
    %v1932 = vunpack.c.l.b16 %v480
    %v1933 = vunpack.c.h.b16 %v480
    %v1934 = vunpack.c.l.b16 %v481
    %v1935 = vunpack.c.h.b16 %v481
    %v1936 = vunpack.c.l.b16 %v482
    %v1937 = vunpack.c.h.b16 %v482
    %v1938 = vunpack.c.l.b16 %v483
    %v1939 = vunpack.c.h.b16 %v483
    %v1940 = vunpack.c.l.b16 %v484
    %v1941 = vunpack.c.h.b16 %v484
    %v1942 = vunpack.c.l.b16 %v485
    %v1943 = vunpack.c.h.b16 %v485
    %v1944 = vunpack.c.l.b16 %v486
    %v1945 = vunpack.c.h.b16 %v486
    %v1946 = vunpack.c.l.b16 %v487
    %v1947 = vunpack.c.h.b16 %v487
    %v1948 = vunpack.c.l.b16 %v488
    %v1949 = vunpack.c.h.b16 %v488
    %v1950 = vunpack.c.l.b16 %v489
    %v1951 = vunpack.c.h.b16 %v489
    %v1952 = vunpack.c.l.b16 %v490
    %v1953 = vunpack.c.h.b16 %v490
    %v1954 = vunpack.c.l.b16 %v491
    %v1955 = vunpack.c.h.b16 %v491
    %v1956 = vunpack.c.l.b16 %v492
    %v1957 = vunpack.c.h.b16 %v492
    %v1958 = vunpack.c.l.b16 %v493
    %v1959 = vunpack.c.h.b16 %v493
    %v1960 = vunpack.c.l.b16 %v494
    %v1961 = vunpack.c.h.b16 %v494
    %v1962 = vunpack.c.l.b16 %v495
    %v1963 = vunpack.c.h.b16 %v495
    %v1964 = vunpack.c.l.b16 %v496
    %v1965 = vunpack.c.h.b16 %v496
    %v1966 = vunpack.c.l.b16 %v497
    %v1967 = vunpack.c.h.b16 %v497
    %v1968 = vunpack.c.l.b16 %v498
    %v1969 = vunpack.c.h.b16 %v498
    %v1970 = vunpack.c.l.b16 %v499
    %v1971 = vunpack.c.h.b16 %v499
    %v1972 = vunpack.c.l.b16 %v500
    %v1973 = vunpack.c.h.b16 %v500
    %v1974 = vunpack.c.l.b16 %v501
    %v1975 = vunpack.c.h.b16 %v501
    %v1976 = vunpack.c.l.b16 %v502
    %v1977 = vunpack.c.h.b16 %v502
    %v1978 = vunpack.c.l.b16 %v503
    %v1979 = vunpack.c.h.b16 %v503
    %v1980 = vunpack.c.l.b16 %v504
    %v1981 = vunpack.c.h.b16 %v504
    %v1982 = vunpack.c.l.b16 %v505
    %v1983 = vunpack.c.h.b16 %v505
    %v1984 = vunpack.c.l.b16 %v506
    %v1985 = vunpack.c.h.b16 %v506
    %v1986 = vunpack.c.l.b16 %v507
    %v1987 = vunpack.c.h.b16 %v507
    %v1988 = vunpack.c.l.b16 %v508
    %v1989 = vunpack.c.h.b16 %v508
    %v1990 = vunpack.c.l.b16 %v509
    %v1991 = vunpack.c.h.b16 %v509
    %v1992 = vunpack.c.l.b16 %v510
    %v1993 = vunpack.c.h.b16 %v510
    %v1994 = vunpack.c.l.b16 %v511
    %v1995 = vunpack.c.h.b16 %v511
    %v1996 = vunpack.c.l.b16 %v512
    %v1997 = vunpack.c.h.b16 %v512
    %v1998 = vunpack.c.l.b16 %v513
    %v1999 = vunpack.c.h.b16 %v513
    %v2000 = vunpack.c.l.b16 %v514
    %v2001 = vunpack.c.h.b16 %v514
    %v2002 = vunpack.c.l.b16 %v515
    %v2003 = vunpack.c.h.b16 %v515
    %v2004 = vunpack.c.l.b16 %v516
    %v2005 = vunpack.c.h.b16 %v516
    %v2006 = vunpack.c.l.b16 %v517
    %v2007 = vunpack.c.h.b16 %v517
    %v2008 = vunpack.c.l.b16 %v518
    %v2009 = vunpack.c.h.b16 %v518
    %v2010 = vunpack.c.l.b16 %v519
    %v2011 = vunpack.c.h.b16 %v519
    %v2012 = vunpack.c.l.b16 %v520
    %v2013 = vunpack.c.h.b16 %v520
    %v2014 = vunpack.c.l.b16 %v521
    %v2015 = vunpack.c.h.b16 %v521
    %v2016 = vunpack.c.l.b16 %v522
    %v2017 = vunpack.c.h.b16 %v522
    %v2018 = vunpack.c.l.b16 %v523
    %v2019 = vunpack.c.h.b16 %v523
    %v2020 = vunpack.c.l.b16 %v524
    %v2021 = vunpack.c.h.b16 %v524
    %v2022 = vunpack.c.l.b16 %v525
    %v2023 = vunpack.c.h.b16 %v525
    %v2024 = vunpack.c.l.b16 %v526
    %v2025 = vunpack.c.h.b16 %v526
    %v2026 = vunpack.c.l.b16 %v527
    %v2027 = vunpack.c.h.b16 %v527
    %v2028 = vunpack.c.l.b16 %v528
    %v2029 = vunpack.c.h.b16 %v528
    %v2030 = vunpack.c.l.b16 %v529
    %v2031 = vunpack.c.h.b16 %v529
    %v2032 = vunpack.c.l.b16 %v530
    %v2033 = vunpack.c.h.b16 %v530
    %v2034 = vunpack.c.l.b16 %v531
    %v2035 = vunpack.c.h.b16 %v531
    %v2036 = vunpack.c.l.b16 %v532
    %v2037 = vunpack.c.h.b16 %v532
    %v2038 = vunpack.c.l.b16 %v533
    %v2039 = vunpack.c.h.b16 %v533
    %v2040 = vunpack.c.l.b16 %v534
    %v2041 = vunpack.c.h.b16 %v534
    %v2042 = vunpack.c.l.b16 %v535
    %v2043 = vunpack.c.h.b16 %v535
    %v2044 = vunpack.c.l.b16 %v536
    %v2045 = vunpack.c.h.b16 %v536
    %v2046 = vunpack.c.l.b16 %v537
    %v2047 = vunpack.c.h.b16 %v537
    %v2048 = vunpack.c.l.b16 %v538
    %v2049 = vunpack.c.h.b16 %v538
    %v2050 = vunpack.c.l.b16 %v539
    %v2051 = vunpack.c.h.b16 %v539
    %v2052 = vunpack.c.l.b16 %v540
    %v2053 = vunpack.c.h.b16 %v540
    %v2054 = vunpack.c.l.b16 %v541
    %v2055 = vunpack.c.h.b16 %v541
    %v2056 = vunpack.c.l.b16 %v542
    %v2057 = vunpack.c.h.b16 %v542
    %v2058 = vunpack.c.l.b16 %v543
    %v2059 = vunpack.c.h.b16 %v543
    %v2060 = vunpack.c.l.b16 %v544
    %v2061 = vunpack.c.h.b16 %v544
    %v2062 = vunpack.c.l.b16 %v545
    %v2063 = vunpack.c.h.b16 %v545
    %v2064 = vunpack.c.l.b16 %v546
    %v2065 = vunpack.c.h.b16 %v546
    %v2066 = vunpack.c.l.b16 %v547
    %v2067 = vunpack.c.h.b16 %v547
    %v2068 = vunpack.c.l.b16 %v548
    %v2069 = vunpack.c.h.b16 %v548
    %v2070 = vunpack.c.l.b16 %v549
    %v2071 = vunpack.c.h.b16 %v549
    %v2072 = vunpack.c.l.b16 %v550
    %v2073 = vunpack.c.h.b16 %v550
    %v2074 = vunpack.c.l.b16 %v551
    %v2075 = vunpack.c.h.b16 %v551
    %v2076 = vunpack.c.l.b16 %v552
    %v2077 = vunpack.c.h.b16 %v552
    %v2078 = vunpack.c.l.b16 %v553
    %v2079 = vunpack.c.h.b16 %v553
    %v2080 = vunpack.c.l.b16 %v554
    %v2081 = vunpack.c.h.b16 %v554
    %v2082 = vunpack.c.l.b16 %v555
    %v2083 = vunpack.c.h.b16 %v555
    %v2084 = vunpack.c.l.b16 %v556
    %v2085 = vunpack.c.h.b16 %v556
    %v2086 = vunpack.c.l.b16 %v557
    %v2087 = vunpack.c.h.b16 %v557
    %v2088 = vunpack.c.l.b16 %v558
    %v2089 = vunpack.c.h.b16 %v558
    %v2090 = vunpack.c.l.b16 %v559
    %v2091 = vunpack.c.h.b16 %v559
    %v2092 = vunpack.c.l.b16 %v560
    %v2093 = vunpack.c.h.b16 %v560
    %v2094 = vunpack.c.l.b16 %v561
    %v2095 = vunpack.c.h.b16 %v561
    %v2096 = vunpack.c.l.b16 %v562
    %v2097 = vunpack.c.h.b16 %v562
    %v2098 = vunpack.c.l.b16 %v563
    %v2099 = vunpack.c.h.b16 %v563
    %v2100 = vunpack.c.l.b16 %v564
    %v2101 = vunpack.c.h.b16 %v564
    %v2102 = vunpack.c.l.b16 %v565
    %v2103 = vunpack.c.h.b16 %v565
    %v2104 = vunpack.c.l.b16 %v566
    %v2105 = vunpack.c.h.b16 %v566
    %v2106 = vunpack.c.l.b16 %v567
    %v2107 = vunpack.c.h.b16 %v567
    %v2108 = vunpack.c.l.b16 %v568
    %v2109 = vunpack.c.h.b16 %v568
    %v2110 = vunpack.c.l.b16 %v569
    %v2111 = vunpack.c.h.b16 %v569
    %v2112 = vunpack.c.l.b16 %v570
    %v2113 = vunpack.c.h.b16 %v570
    %v2114 = vunpack.c.l.b16 %v571
    %v2115 = vunpack.c.h.b16 %v571
    %v2116 = vunpack.c.l.b16 %v572
    %v2117 = vunpack.c.h.b16 %v572
    %v2118 = vunpack.c.l.b16 %v573
    %v2119 = vunpack.c.h.b16 %v573
    %v2120 = vunpack.c.l.b16 %v574
    %v2121 = vunpack.c.h.b16 %v574
    %v2122 = vunpack.c.l.b16 %v575
    %v2123 = vunpack.c.h.b16 %v575
    %v2124 = vunpack.c.l.b16 %v576
    %v2125 = vunpack.c.h.b16 %v576
    %v2126 = vunpack.c.l.b16 %v577
    %v2127 = vunpack.c.h.b16 %v577
    %v2128 = vunpack.c.l.b16 %v578
    %v2129 = vunpack.c.h.b16 %v578
    %v2130 = vunpack.c.l.b16 %v579
    %v2131 = vunpack.c.h.b16 %v579
    %v2132 = vunpack.c.l.b16 %v580
    %v2133 = vunpack.c.h.b16 %v580
    %v2134 = vunpack.c.l.b16 %v581
    %v2135 = vunpack.c.h.b16 %v581
    %v2136 = vunpack.c.l.b16 %v582
    %v2137 = vunpack.c.h.b16 %v582
    %v2138 = vunpack.c.l.b16 %v583
    %v2139 = vunpack.c.h.b16 %v583
    %v2140 = vunpack.c.l.b16 %v584
    %v2141 = vunpack.c.h.b16 %v584
    %v2142 = vunpack.c.l.b16 %v585
    %v2143 = vunpack.c.h.b16 %v585
    %v2144 = vunpack.c.l.b16 %v586
    %v2145 = vunpack.c.h.b16 %v586
    %v2146 = vunpack.c.l.b16 %v587
    %v2147 = vunpack.c.h.b16 %v587
    %v2148 = vunpack.c.l.b16 %v588
    %v2149 = vunpack.c.h.b16 %v588
    %v2150 = vunpack.c.l.b16 %v589
    %v2151 = vunpack.c.h.b16 %v589
    %v2152 = vunpack.c.l.b16 %v590
    %v2153 = vunpack.c.h.b16 %v590
    %v2154 = vunpack.c.l.b16 %v591
    %v2155 = vunpack.c.h.b16 %v591
    %v2156 = vunpack.c.l.b16 %v592
    %v2157 = vunpack.c.h.b16 %v592
    %v2158 = vunpack.c.l.b16 %v593
    %v2159 = vunpack.c.h.b16 %v593
    %v2160 = vunpack.c.l.b16 %v594
    %v2161 = vunpack.c.h.b16 %v594
    %v2162 = vunpack.c.l.b16 %v595
    %v2163 = vunpack.c.h.b16 %v595
    %v2164 = vunpack.c.l.b16 %v596
    %v2165 = vunpack.c.h.b16 %v596
    %v2166 = vunpack.c.l.b16 %v597
    %v2167 = vunpack.c.h.b16 %v597
    %v2168 = vunpack.c.l.b16 %v598
    %v2169 = vunpack.c.h.b16 %v598
    %v2170 = vunpack.c.l.b16 %v599
    %v2171 = vunpack.c.h.b16 %v599
    %v2172 = vunpack.c.l.b16 %v600
    %v2173 = vunpack.c.h.b16 %v600
    %v2174 = vunpack.c.l.b16 %v601
    %v2175 = vunpack.c.h.b16 %v601
    %v2176 = vunpack.c.l.b16 %v602
    %v2177 = vunpack.c.h.b16 %v602
    %v2178 = vunpack.c.l.b16 %v603
    %v2179 = vunpack.c.h.b16 %v603
    %v2180 = vunpack.c.l.b16 %v604
    %v2181 = vunpack.c.h.b16 %v604
    %v2182 = vunpack.c.l.b16 %v605
    %v2183 = vunpack.c.h.b16 %v605
    %v2184 = vpack.c.b16 %v1168, %v1160
    %v2185 = vpack.c.b16 %v1169, %v1161
    %v2186 = vpack.c.b16 %v1170, %v1162
    %v2187 = vpack.c.b16 %v1171, %v1163
    %v2188 = vpack.c.b16 %v1172, %v1164
    %v2189 = vpack.c.b16 %v1173, %v1165
    %v2190 = vpack.c.b16 %v1174, %v1166
    %v2191 = vpack.c.b16 %v1175, %v1167
    %v2192 = vpack.c.b16 %v1184, %v1176
    %v2193 = vpack.c.b16 %v1185, %v1177
    %v2194 = vpack.c.b16 %v1186, %v1178
    %v2195 = vpack.c.b16 %v1187, %v1179
    %v2196 = vpack.c.b16 %v1188, %v1180
    %v2197 = vpack.c.b16 %v1189, %v1181
    %v2198 = vpack.c.b16 %v1190, %v1182
    %v2199 = vpack.c.b16 %v1191, %v1183
    %v2200 = vpack.c.b16 %v1200, %v1192
    %v2201 = vpack.c.b16 %v1201, %v1193
    %v2202 = vpack.c.b16 %v1202, %v1194
    %v2203 = vpack.c.b16 %v1203, %v1195
    %v2204 = vpack.c.b16 %v1204, %v1196
    %v2205 = vpack.c.b16 %v1205, %v1197
    %v2206 = vpack.c.b16 %v1206, %v1198
    %v2207 = vpack.c.b16 %v1207, %v1199
    %v2208 = vpack.c.b16 %v1216, %v1208
    %v2209 = vpack.c.b16 %v1217, %v1209
    %v2210 = vpack.c.b16 %v1218, %v1210
    %v2211 = vpack.c.b16 %v1219, %v1211
    %v2212 = vpack.c.b16 %v1220, %v1212
    %v2213 = vpack.c.b16 %v1221, %v1213
    %v2214 = vpack.c.b16 %v1222, %v1214
    %v2215 = vpack.c.b16 %v1223, %v1215
    %v2216 = vpack.c.b16 %v1232, %v1224
    %v2217 = vpack.c.b16 %v1233, %v1225
    %v2218 = vpack.c.b16 %v1234, %v1226
    %v2219 = vpack.c.b16 %v1235, %v1227
    %v2220 = vpack.c.b16 %v1236, %v1228
    %v2221 = vpack.c.b16 %v1237, %v1229
    %v2222 = vpack.c.b16 %v1238, %v1230
    %v2223 = vpack.c.b16 %v1239, %v1231
    %v2224 = vpack.c.b16 %v1248, %v1240
    %v2225 = vpack.c.b16 %v1249, %v1241
    %v2226 = vpack.c.b16 %v1250, %v1242
    %v2227 = vpack.c.b16 %v1251, %v1243
    %v2228 = vpack.c.b16 %v1252, %v1244
    %v2229 = vpack.c.b16 %v1253, %v1245
    %v2230 = vpack.c.b16 %v1254, %v1246
    %v2231 = vpack.c.b16 %v1255, %v1247
    %v2232 = vpack.c.b16 %v1264, %v1256
    %v2233 = vpack.c.b16 %v1265, %v1257
    %v2234 = vpack.c.b16 %v1266, %v1258
    %v2235 = vpack.c.b16 %v1267, %v1259
    %v2236 = vpack.c.b16 %v1268, %v1260
    %v2237 = vpack.c.b16 %v1269, %v1261
    %v2238 = vpack.c.b16 %v1270, %v1262
    %v2239 = vpack.c.b16 %v1271, %v1263
    %v2240 = vpack.c.b16 %v1280, %v1272
    %v2241 = vpack.c.b16 %v1281, %v1273
    %v2242 = vpack.c.b16 %v1282, %v1274
    %v2243 = vpack.c.b16 %v1283, %v1275
    %v2244 = vpack.c.b16 %v1284, %v1276
    %v2245 = vpack.c.b16 %v1285, %v1277
    %v2246 = vpack.c.b16 %v1286, %v1278
    %v2247 = vpack.c.b16 %v1287, %v1279
    %v2248 = vpack.c.b16 %v1296, %v1288
    %v2249 = vpack.c.b16 %v1297, %v1289
    %v2250 = vpack.c.b16 %v1298, %v1290
    %v2251 = vpack.c.b16 %v1299, %v1291
    %v2252 = vpack.c.b16 %v1300, %v1292
    %v2253 = vpack.c.b16 %v1301, %v1293
    %v2254 = vpack.c.b16 %v1302, %v1294
    %v2255 = vpack.c.b16 %v1303, %v1295
    %v2256 = vpack.c.b16 %v1312, %v1304
    %v2257 = vpack.c.b16 %v1313, %v1305
    %v2258 = vpack.c.b16 %v1314, %v1306
    %v2259 = vpack.c.b16 %v1315, %v1307
    %v2260 = vpack.c.b16 %v1316, %v1308
    %v2261 = vpack.c.b16 %v1317, %v1309
    %v2262 = vpack.c.b16 %v1318, %v1310
    %v2263 = vpack.c.b16 %v1319, %v1311
    %v2264 = vpack.c.b16 %v1328, %v1320
    %v2265 = vpack.c.b16 %v1329, %v1321
    %v2266 = vpack.c.b16 %v1330, %v1322
    %v2267 = vpack.c.b16 %v1331, %v1323
    %v2268 = vpack.c.b16 %v1332, %v1324
    %v2269 = vpack.c.b16 %v1333, %v1325
    %v2270 = vpack.c.b16 %v1334, %v1326
    %v2271 = vpack.c.b16 %v1335, %v1327
    %v2272 = vpack.c.b16 %v1344, %v1336
    %v2273 = vpack.c.b16 %v1345, %v1337
    %v2274 = vpack.c.b16 %v1346, %v1338
    %v2275 = vpack.c.b16 %v1347, %v1339
    %v2276 = vpack.c.b16 %v1348, %v1340
    %v2277 = vpack.c.b16 %v1349, %v1341
    %v2278 = vpack.c.b16 %v1350, %v1342
    %v2279 = vpack.c.b16 %v1351, %v1343
    %v2280 = vpack.c.b16 %v1360, %v1352
    %v2281 = vpack.c.b16 %v1361, %v1353
    %v2282 = vpack.c.b16 %v1362, %v1354
    %v2283 = vpack.c.b16 %v1363, %v1355
    %v2284 = vpack.c.b16 %v1364, %v1356
    %v2285 = vpack.c.b16 %v1365, %v1357
    %v2286 = vpack.c.b16 %v1366, %v1358
    %v2287 = vpack.c.b16 %v1367, %v1359
    %v2288 = vpack.c.b16 %v1376, %v1368
    %v2289 = vpack.c.b16 %v1377, %v1369
    %v2290 = vpack.c.b16 %v1378, %v1370
    %v2291 = vpack.c.b16 %v1379, %v1371
    %v2292 = vpack.c.b16 %v1380, %v1372
    %v2293 = vpack.c.b16 %v1381, %v1373
    %v2294 = vpack.c.b16 %v1382, %v1374
    %v2295 = vpack.c.b16 %v1383, %v1375
    %v2296 = vpack.c.b16 %v1392, %v1384
    %v2297 = vpack.c.b16 %v1393, %v1385
    %v2298 = vpack.c.b16 %v1394, %v1386
    %v2299 = vpack.c.b16 %v1395, %v1387
    %v2300 = vpack.c.b16 %v1396, %v1388
    %v2301 = vpack.c.b16 %v1397, %v1389
    %v2302 = vpack.c.b16 %v1398, %v1390
    %v2303 = vpack.c.b16 %v1399, %v1391
    %v2304 = vpack.c.b16 %v1408, %v1400
    %v2305 = vpack.c.b16 %v1409, %v1401
    %v2306 = vpack.c.b16 %v1410, %v1402
    %v2307 = vpack.c.b16 %v1411, %v1403
    %v2308 = vpack.c.b16 %v1412, %v1404
    %v2309 = vpack.c.b16 %v1413, %v1405
    %v2310 = vpack.c.b16 %v1414, %v1406
    %v2311 = vpack.c.b16 %v1415, %v1407
    %v2312 = vpack.c.b16 %v1424, %v1416
    %v2313 = vpack.c.b16 %v1425, %v1417
    %v2314 = vpack.c.b16 %v1426, %v1418
    %v2315 = vpack.c.b16 %v1427, %v1419
    %v2316 = vpack.c.b16 %v1428, %v1420
    %v2317 = vpack.c.b16 %v1429, %v1421
    %v2318 = vpack.c.b16 %v1430, %v1422
    %v2319 = vpack.c.b16 %v1431, %v1423
    %v2320 = vpack.c.b16 %v1440, %v1432
    %v2321 = vpack.c.b16 %v1441, %v1433
    %v2322 = vpack.c.b16 %v1442, %v1434
    %v2323 = vpack.c.b16 %v1443, %v1435
    %v2324 = vpack.c.b16 %v1444, %v1436
    %v2325 = vpack.c.b16 %v1445, %v1437
    %v2326 = vpack.c.b16 %v1446, %v1438
    %v2327 = vpack.c.b16 %v1447, %v1439
    %v2328 = vpack.c.b16 %v1456, %v1448
    %v2329 = vpack.c.b16 %v1457, %v1449
    %v2330 = vpack.c.b16 %v1458, %v1450
    %v2331 = vpack.c.b16 %v1459, %v1451
    %v2332 = vpack.c.b16 %v1460, %v1452
    %v2333 = vpack.c.b16 %v1461, %v1453
    %v2334 = vpack.c.b16 %v1462, %v1454
    %v2335 = vpack.c.b16 %v1463, %v1455
    %v2336 = vpack.c.b16 %v1472, %v1464
    %v2337 = vpack.c.b16 %v1473, %v1465
    %v2338 = vpack.c.b16 %v1474, %v1466
    %v2339 = vpack.c.b16 %v1475, %v1467
    %v2340 = vpack.c.b16 %v1476, %v1468
    %v2341 = vpack.c.b16 %v1477, %v1469
    %v2342 = vpack.c.b16 %v1478, %v1470
    %v2343 = vpack.c.b16 %v1479, %v1471
    %v2344 = vpack.c.b16 %v1488, %v1480
    %v2345 = vpack.c.b16 %v1489, %v1481
    %v2346 = vpack.c.b16 %v1490, %v1482
    %v2347 = vpack.c.b16 %v1491, %v1483
    %v2348 = vpack.c.b16 %v1492, %v1484
    %v2349 = vpack.c.b16 %v1493, %v1485
    %v2350 = vpack.c.b16 %v1494, %v1486
    %v2351 = vpack.c.b16 %v1495, %v1487
    %v2352 = vpack.c.b16 %v1504, %v1496
    %v2353 = vpack.c.b16 %v1505, %v1497
    %v2354 = vpack.c.b16 %v1506, %v1498
    %v2355 = vpack.c.b16 %v1507, %v1499
    %v2356 = vpack.c.b16 %v1508, %v1500
    %v2357 = vpack.c.b16 %v1509, %v1501
    %v2358 = vpack.c.b16 %v1510, %v1502
    %v2359 = vpack.c.b16 %v1511, %v1503
    %v2360 = vpack.c.b16 %v1520, %v1512
    %v2361 = vpack.c.b16 %v1521, %v1513
    %v2362 = vpack.c.b16 %v1522, %v1514
    %v2363 = vpack.c.b16 %v1523, %v1515
    %v2364 = vpack.c.b16 %v1524, %v1516
    %v2365 = vpack.c.b16 %v1525, %v1517
    %v2366 = vpack.c.b16 %v1526, %v1518
    %v2367 = vpack.c.b16 %v1527, %v1519
    %v2368 = vpack.c.b16 %v1536, %v1528
    %v2369 = vpack.c.b16 %v1537, %v1529
    %v2370 = vpack.c.b16 %v1538, %v1530
    %v2371 = vpack.c.b16 %v1539, %v1531
    %v2372 = vpack.c.b16 %v1540, %v1532
    %v2373 = vpack.c.b16 %v1541, %v1533
    %v2374 = vpack.c.b16 %v1542, %v1534
    %v2375 = vpack.c.b16 %v1543, %v1535
    %v2376 = vpack.c.b16 %v1552, %v1544
    %v2377 = vpack.c.b16 %v1553, %v1545
    %v2378 = vpack.c.b16 %v1554, %v1546
    %v2379 = vpack.c.b16 %v1555, %v1547
    %v2380 = vpack.c.b16 %v1556, %v1548
    %v2381 = vpack.c.b16 %v1557, %v1549
    %v2382 = vpack.c.b16 %v1558, %v1550
    %v2383 = vpack.c.b16 %v1559, %v1551
    %v2384 = vpack.c.b16 %v1568, %v1560
    %v2385 = vpack.c.b16 %v1569, %v1561
    %v2386 = vpack.c.b16 %v1570, %v1562
    %v2387 = vpack.c.b16 %v1571, %v1563
    %v2388 = vpack.c.b16 %v1572, %v1564
    %v2389 = vpack.c.b16 %v1573, %v1565
    %v2390 = vpack.c.b16 %v1574, %v1566
    %v2391 = vpack.c.b16 %v1575, %v1567
    %v2392 = vpack.c.b16 %v1584, %v1576
    %v2393 = vpack.c.b16 %v1585, %v1577
    %v2394 = vpack.c.b16 %v1586, %v1578
    %v2395 = vpack.c.b16 %v1587, %v1579
    %v2396 = vpack.c.b16 %v1588, %v1580
    %v2397 = vpack.c.b16 %v1589, %v1581
    %v2398 = vpack.c.b16 %v1590, %v1582
    %v2399 = vpack.c.b16 %v1591, %v1583
    %v2400 = vpack.c.b16 %v1600, %v1592
    %v2401 = vpack.c.b16 %v1601, %v1593
    %v2402 = vpack.c.b16 %v1602, %v1594
    %v2403 = vpack.c.b16 %v1603, %v1595
    %v2404 = vpack.c.b16 %v1604, %v1596
    %v2405 = vpack.c.b16 %v1605, %v1597
    %v2406 = vpack.c.b16 %v1606, %v1598
    %v2407 = vpack.c.b16 %v1607, %v1599
    %v2408 = vpack.c.b16 %v1616, %v1608
    %v2409 = vpack.c.b16 %v1617, %v1609
    %v2410 = vpack.c.b16 %v1618, %v1610
    %v2411 = vpack.c.b16 %v1619, %v1611
    %v2412 = vpack.c.b16 %v1620, %v1612
    %v2413 = vpack.c.b16 %v1621, %v1613
    %v2414 = vpack.c.b16 %v1622, %v1614
    %v2415 = vpack.c.b16 %v1623, %v1615
    %v2416 = vpack.c.b16 %v1632, %v1624
    %v2417 = vpack.c.b16 %v1633, %v1625
    %v2418 = vpack.c.b16 %v1634, %v1626
    %v2419 = vpack.c.b16 %v1635, %v1627
    %v2420 = vpack.c.b16 %v1636, %v1628
    %v2421 = vpack.c.b16 %v1637, %v1629
    %v2422 = vpack.c.b16 %v1638, %v1630
    %v2423 = vpack.c.b16 %v1639, %v1631
    %v2424 = vpack.c.b16 %v1648, %v1640
    %v2425 = vpack.c.b16 %v1649, %v1641
    %v2426 = vpack.c.b16 %v1650, %v1642
    %v2427 = vpack.c.b16 %v1651, %v1643
    %v2428 = vpack.c.b16 %v1652, %v1644
    %v2429 = vpack.c.b16 %v1653, %v1645
    %v2430 = vpack.c.b16 %v1654, %v1646
    %v2431 = vpack.c.b16 %v1655, %v1647
    %v2432 = vpack.c.b16 %v1664, %v1656
    %v2433 = vpack.c.b16 %v1665, %v1657
    %v2434 = vpack.c.b16 %v1666, %v1658
    %v2435 = vpack.c.b16 %v1667, %v1659
    %v2436 = vpack.c.b16 %v1668, %v1660
    %v2437 = vpack.c.b16 %v1669, %v1661
    %v2438 = vpack.c.b16 %v1670, %v1662
    %v2439 = vpack.c.b16 %v1671, %v1663
    %v2440 = vpack.c.b16 %v1680, %v1672
    %v2441 = vpack.c.b16 %v1681, %v1673
    %v2442 = vpack.c.b16 %v1682, %v1674
    %v2443 = vpack.c.b16 %v1683, %v1675
    %v2444 = vpack.c.b16 %v1684, %v1676
    %v2445 = vpack.c.b16 %v1685, %v1677
    %v2446 = vpack.c.b16 %v1686, %v1678
    %v2447 = vpack.c.b16 %v1687, %v1679
    %v2448 = vpack.c.b16 %v1696, %v1688
    %v2449 = vpack.c.b16 %v1697, %v1689
    %v2450 = vpack.c.b16 %v1698, %v1690
    %v2451 = vpack.c.b16 %v1699, %v1691
    %v2452 = vpack.c.b16 %v1700, %v1692
    %v2453 = vpack.c.b16 %v1701, %v1693
    %v2454 = vpack.c.b16 %v1702, %v1694
    %v2455 = vpack.c.b16 %v1703, %v1695
    %v2456 = vpack.c.b16 %v1712, %v1704
    %v2457 = vpack.c.b16 %v1713, %v1705
    %v2458 = vpack.c.b16 %v1714, %v1706
    %v2459 = vpack.c.b16 %v1715, %v1707
    %v2460 = vpack.c.b16 %v1716, %v1708
    %v2461 = vpack.c.b16 %v1717, %v1709
    %v2462 = vpack.c.b16 %v1718, %v1710
    %v2463 = vpack.c.b16 %v1719, %v1711
    %v2464 = vpack.c.b16 %v1728, %v1720
    %v2465 = vpack.c.b16 %v1729, %v1721
    %v2466 = vpack.c.b16 %v1730, %v1722
    %v2467 = vpack.c.b16 %v1731, %v1723
    %v2468 = vpack.c.b16 %v1732, %v1724
    %v2469 = vpack.c.b16 %v1733, %v1725
    %v2470 = vpack.c.b16 %v1734, %v1726
    %v2471 = vpack.c.b16 %v1735, %v1727
    %v2472 = vpack.c.b16 %v1744, %v1736
    %v2473 = vpack.c.b16 %v1745, %v1737
    %v2474 = vpack.c.b16 %v1746, %v1738
    %v2475 = vpack.c.b16 %v1747, %v1739
    %v2476 = vpack.c.b16 %v1748, %v1740
    %v2477 = vpack.c.b16 %v1749, %v1741
    %v2478 = vpack.c.b16 %v1750, %v1742
    %v2479 = vpack.c.b16 %v1751, %v1743
    %v2480 = vpack.c.b16 %v1760, %v1752
    %v2481 = vpack.c.b16 %v1761, %v1753
    %v2482 = vpack.c.b16 %v1762, %v1754
    %v2483 = vpack.c.b16 %v1763, %v1755
    %v2484 = vpack.c.b16 %v1764, %v1756
    %v2485 = vpack.c.b16 %v1765, %v1757
    %v2486 = vpack.c.b16 %v1766, %v1758
    %v2487 = vpack.c.b16 %v1767, %v1759
    %v2488 = vpack.c.b16 %v1776, %v1768
    %v2489 = vpack.c.b16 %v1777, %v1769
    %v2490 = vpack.c.b16 %v1778, %v1770
    %v2491 = vpack.c.b16 %v1779, %v1771
    %v2492 = vpack.c.b16 %v1780, %v1772
    %v2493 = vpack.c.b16 %v1781, %v1773
    %v2494 = vpack.c.b16 %v1782, %v1774
    %v2495 = vpack.c.b16 %v1783, %v1775
    %v2496 = vpack.c.b16 %v1792, %v1784
    %v2497 = vpack.c.b16 %v1793, %v1785
    %v2498 = vpack.c.b16 %v1794, %v1786
    %v2499 = vpack.c.b16 %v1795, %v1787
    %v2500 = vpack.c.b16 %v1796, %v1788
    %v2501 = vpack.c.b16 %v1797, %v1789
    %v2502 = vpack.c.b16 %v1798, %v1790
    %v2503 = vpack.c.b16 %v1799, %v1791
    %v2504 = vpack.c.b16 %v1808, %v1800
    %v2505 = vpack.c.b16 %v1809, %v1801
    %v2506 = vpack.c.b16 %v1810, %v1802
    %v2507 = vpack.c.b16 %v1811, %v1803
    %v2508 = vpack.c.b16 %v1812, %v1804
    %v2509 = vpack.c.b16 %v1813, %v1805
    %v2510 = vpack.c.b16 %v1814, %v1806
    %v2511 = vpack.c.b16 %v1815, %v1807
    %v2512 = vpack.c.b16 %v1824, %v1816
    %v2513 = vpack.c.b16 %v1825, %v1817
    %v2514 = vpack.c.b16 %v1826, %v1818
    %v2515 = vpack.c.b16 %v1827, %v1819
    %v2516 = vpack.c.b16 %v1828, %v1820
    %v2517 = vpack.c.b16 %v1829, %v1821
    %v2518 = vpack.c.b16 %v1830, %v1822
    %v2519 = vpack.c.b16 %v1831, %v1823
    %v2520 = vpack.c.b16 %v1840, %v1832
    %v2521 = vpack.c.b16 %v1841, %v1833
    %v2522 = vpack.c.b16 %v1842, %v1834
    %v2523 = vpack.c.b16 %v1843, %v1835
    %v2524 = vpack.c.b16 %v1844, %v1836
    %v2525 = vpack.c.b16 %v1845, %v1837
    %v2526 = vpack.c.b16 %v1846, %v1838
    %v2527 = vpack.c.b16 %v1847, %v1839
    %v2528 = vpack.c.b16 %v1856, %v1848
    %v2529 = vpack.c.b16 %v1857, %v1849
    %v2530 = vpack.c.b16 %v1858, %v1850
    %v2531 = vpack.c.b16 %v1859, %v1851
    %v2532 = vpack.c.b16 %v1860, %v1852
    %v2533 = vpack.c.b16 %v1861, %v1853
    %v2534 = vpack.c.b16 %v1862, %v1854
    %v2535 = vpack.c.b16 %v1863, %v1855
    %v2536 = vpack.c.b16 %v1872, %v1864
    %v2537 = vpack.c.b16 %v1873, %v1865
    %v2538 = vpack.c.b16 %v1874, %v1866
    %v2539 = vpack.c.b16 %v1875, %v1867
    %v2540 = vpack.c.b16 %v1876, %v1868
    %v2541 = vpack.c.b16 %v1877, %v1869
    %v2542 = vpack.c.b16 %v1878, %v1870
    %v2543 = vpack.c.b16 %v1879, %v1871
    %v2544 = vpack.c.b16 %v1888, %v1880
    %v2545 = vpack.c.b16 %v1889, %v1881
    %v2546 = vpack.c.b16 %v1890, %v1882
    %v2547 = vpack.c.b16 %v1891, %v1883
    %v2548 = vpack.c.b16 %v1892, %v1884
    %v2549 = vpack.c.b16 %v1893, %v1885
    %v2550 = vpack.c.b16 %v1894, %v1886
    %v2551 = vpack.c.b16 %v1895, %v1887
    %v2552 = vpack.c.b16 %v1904, %v1896
    %v2553 = vpack.c.b16 %v1905, %v1897
    %v2554 = vpack.c.b16 %v1906, %v1898
    %v2555 = vpack.c.b16 %v1907, %v1899
    %v2556 = vpack.c.b16 %v1908, %v1900
    %v2557 = vpack.c.b16 %v1909, %v1901
    %v2558 = vpack.c.b16 %v1910, %v1902
    %v2559 = vpack.c.b16 %v1911, %v1903
    %v2560 = vpack.c.b16 %v1920, %v1912
    %v2561 = vpack.c.b16 %v1921, %v1913
    %v2562 = vpack.c.b16 %v1922, %v1914
    %v2563 = vpack.c.b16 %v1923, %v1915
    %v2564 = vpack.c.b16 %v1924, %v1916
    %v2565 = vpack.c.b16 %v1925, %v1917
    %v2566 = vpack.c.b16 %v1926, %v1918
    %v2567 = vpack.c.b16 %v1927, %v1919
    %v2568 = vpack.c.b16 %v1936, %v1928
    %v2569 = vpack.c.b16 %v1937, %v1929
    %v2570 = vpack.c.b16 %v1938, %v1930
    %v2571 = vpack.c.b16 %v1939, %v1931
    %v2572 = vpack.c.b16 %v1940, %v1932
    %v2573 = vpack.c.b16 %v1941, %v1933
    %v2574 = vpack.c.b16 %v1942, %v1934
    %v2575 = vpack.c.b16 %v1943, %v1935
    %v2576 = vpack.c.b16 %v1952, %v1944
    %v2577 = vpack.c.b16 %v1953, %v1945
    %v2578 = vpack.c.b16 %v1954, %v1946
    %v2579 = vpack.c.b16 %v1955, %v1947
    %v2580 = vpack.c.b16 %v1956, %v1948
    %v2581 = vpack.c.b16 %v1957, %v1949
    %v2582 = vpack.c.b16 %v1958, %v1950
    %v2583 = vpack.c.b16 %v1959, %v1951
    %v2584 = vpack.c.b16 %v1968, %v1960
    %v2585 = vpack.c.b16 %v1969, %v1961
    %v2586 = vpack.c.b16 %v1970, %v1962
    %v2587 = vpack.c.b16 %v1971, %v1963
    %v2588 = vpack.c.b16 %v1972, %v1964
    %v2589 = vpack.c.b16 %v1973, %v1965
    %v2590 = vpack.c.b16 %v1974, %v1966
    %v2591 = vpack.c.b16 %v1975, %v1967
    %v2592 = vpack.c.b16 %v1984, %v1976
    %v2593 = vpack.c.b16 %v1985, %v1977
    %v2594 = vpack.c.b16 %v1986, %v1978
    %v2595 = vpack.c.b16 %v1987, %v1979
    %v2596 = vpack.c.b16 %v1988, %v1980
    %v2597 = vpack.c.b16 %v1989, %v1981
    %v2598 = vpack.c.b16 %v1990, %v1982
    %v2599 = vpack.c.b16 %v1991, %v1983
    %v2600 = vpack.c.b16 %v2000, %v1992
    %v2601 = vpack.c.b16 %v2001, %v1993
    %v2602 = vpack.c.b16 %v2002, %v1994
    %v2603 = vpack.c.b16 %v2003, %v1995
    %v2604 = vpack.c.b16 %v2004, %v1996
    %v2605 = vpack.c.b16 %v2005, %v1997
    %v2606 = vpack.c.b16 %v2006, %v1998
    %v2607 = vpack.c.b16 %v2007, %v1999
    %v2608 = vpack.c.b16 %v2016, %v2008
    %v2609 = vpack.c.b16 %v2017, %v2009
    %v2610 = vpack.c.b16 %v2018, %v2010
    %v2611 = vpack.c.b16 %v2019, %v2011
    %v2612 = vpack.c.b16 %v2020, %v2012
    %v2613 = vpack.c.b16 %v2021, %v2013
    %v2614 = vpack.c.b16 %v2022, %v2014
    %v2615 = vpack.c.b16 %v2023, %v2015
    %v2616 = vpack.c.b16 %v2032, %v2024
    %v2617 = vpack.c.b16 %v2033, %v2025
    %v2618 = vpack.c.b16 %v2034, %v2026
    %v2619 = vpack.c.b16 %v2035, %v2027
    %v2620 = vpack.c.b16 %v2036, %v2028
    %v2621 = vpack.c.b16 %v2037, %v2029
    %v2622 = vpack.c.b16 %v2038, %v2030
    %v2623 = vpack.c.b16 %v2039, %v2031
    %v2624 = vpack.c.b16 %v2048, %v2040
    %v2625 = vpack.c.b16 %v2049, %v2041
    %v2626 = vpack.c.b16 %v2050, %v2042
    %v2627 = vpack.c.b16 %v2051, %v2043
    %v2628 = vpack.c.b16 %v2052, %v2044
    %v2629 = vpack.c.b16 %v2053, %v2045
    %v2630 = vpack.c.b16 %v2054, %v2046
    %v2631 = vpack.c.b16 %v2055, %v2047
    %v2632 = vpack.c.b16 %v2064, %v2056
    %v2633 = vpack.c.b16 %v2065, %v2057
    %v2634 = vpack.c.b16 %v2066, %v2058
    %v2635 = vpack.c.b16 %v2067, %v2059
    %v2636 = vpack.c.b16 %v2068, %v2060
    %v2637 = vpack.c.b16 %v2069, %v2061
    %v2638 = vpack.c.b16 %v2070, %v2062
    %v2639 = vpack.c.b16 %v2071, %v2063
    %v2640 = vpack.c.b16 %v2080, %v2072
    %v2641 = vpack.c.b16 %v2081, %v2073
    %v2642 = vpack.c.b16 %v2082, %v2074
    %v2643 = vpack.c.b16 %v2083, %v2075
    %v2644 = vpack.c.b16 %v2084, %v2076
    %v2645 = vpack.c.b16 %v2085, %v2077
    %v2646 = vpack.c.b16 %v2086, %v2078
    %v2647 = vpack.c.b16 %v2087, %v2079
    %v2648 = vpack.c.b16 %v2096, %v2088
    %v2649 = vpack.c.b16 %v2097, %v2089
    %v2650 = vpack.c.b16 %v2098, %v2090
    %v2651 = vpack.c.b16 %v2099, %v2091
    %v2652 = vpack.c.b16 %v2100, %v2092
    %v2653 = vpack.c.b16 %v2101, %v2093
    %v2654 = vpack.c.b16 %v2102, %v2094
    %v2655 = vpack.c.b16 %v2103, %v2095
    %v2656 = vpack.c.b16 %v2112, %v2104
    %v2657 = vpack.c.b16 %v2113, %v2105
    %v2658 = vpack.c.b16 %v2114, %v2106
    %v2659 = vpack.c.b16 %v2115, %v2107
    %v2660 = vpack.c.b16 %v2116, %v2108
    %v2661 = vpack.c.b16 %v2117, %v2109
    %v2662 = vpack.c.b16 %v2118, %v2110
    %v2663 = vpack.c.b16 %v2119, %v2111
    %v2664 = vpack.c.b16 %v2128, %v2120
    %v2665 = vpack.c.b16 %v2129, %v2121
    %v2666 = vpack.c.b16 %v2130, %v2122
    %v2667 = vpack.c.b16 %v2131, %v2123
    %v2668 = vpack.c.b16 %v2132, %v2124
    %v2669 = vpack.c.b16 %v2133, %v2125
    %v2670 = vpack.c.b16 %v2134, %v2126
    %v2671 = vpack.c.b16 %v2135, %v2127
    %v2672 = vpack.c.b16 %v2144, %v2136
    %v2673 = vpack.c.b16 %v2145, %v2137
    %v2674 = vpack.c.b16 %v2146, %v2138
    %v2675 = vpack.c.b16 %v2147, %v2139
    %v2676 = vpack.c.b16 %v2148, %v2140
    %v2677 = vpack.c.b16 %v2149, %v2141
    %v2678 = vpack.c.b16 %v2150, %v2142
    %v2679 = vpack.c.b16 %v2151, %v2143
    %v2680 = vpack.c.b16 %v2160, %v2152
    %v2681 = vpack.c.b16 %v2161, %v2153
    %v2682 = vpack.c.b16 %v2162, %v2154
    %v2683 = vpack.c.b16 %v2163, %v2155
    %v2684 = vpack.c.b16 %v2164, %v2156
    %v2685 = vpack.c.b16 %v2165, %v2157
    %v2686 = vpack.c.b16 %v2166, %v2158
    %v2687 = vpack.c.b16 %v2167, %v2159
    %v2688 = vpack.c.b16 %v2176, %v2168
    %v2689 = vpack.c.b16 %v2177, %v2169
    %v2690 = vpack.c.b16 %v2178, %v2170
    %v2691 = vpack.c.b16 %v2179, %v2171
    %v2692 = vpack.c.b16 %v2180, %v2172
    %v2693 = vpack.c.b16 %v2181, %v2173
    %v2694 = vpack.c.b16 %v2182, %v2174
    %v2695 = vpack.c.b16 %v2183, %v2175
    %3208 = vmatprep.subr.bf16.mxu0 %v2185
    %3209 = vmatpush1.bf16.msra.mxu0 %v2184
    %3210 = vmatprep.subr.bf16.mxu0 %v2193
    %3211 = vmatpush1.bf16.msra.mxu0 %v2192
    %3212 = vmatprep.subr.bf16.mxu0 %v2201
    %3213 = vmatpush1.bf16.msra.mxu0 %v2200
    %3214 = vmatprep.subr.bf16.mxu0 %v2209
    %3215 = vmatpush1.bf16.msra.mxu0 %v2208
    %3216 = vmatprep.subr.bf16.mxu0 %v2217
    %3217 = vmatpush1.bf16.msra.mxu0 %v2216
    %3218 = vmatprep.subr.bf16.mxu0 %v2225
    %3219 = vmatpush1.bf16.msra.mxu0 %v2224
    %3220 = vmatprep.subr.bf16.mxu0 %v2233
    %3221 = vmatpush1.bf16.msra.mxu0 %v2232
    %3222 = vmatprep.subr.bf16.mxu0 %v2241
    %3223 = vmatpush1.bf16.msra.mxu0 %v2240
    %3224 = vmatprep.subr.bf16.mxu0 %v2249
    %3225 = vmatpush1.bf16.msra.mxu0 %v2248
    %3226 = vmatprep.subr.bf16.mxu0 %v2257
    %3227 = vmatpush1.bf16.msra.mxu0 %v2256
    %3228 = vmatprep.subr.bf16.mxu0 %v2265
    %3229 = vmatpush1.bf16.msra.mxu0 %v2264
    %3230 = vmatprep.subr.bf16.mxu0 %v2273
    %3231 = vmatpush1.bf16.msra.mxu0 %v2272
    %3232 = vmatprep.subr.bf16.mxu0 %v2281
    %3233 = vmatpush1.bf16.msra.mxu0 %v2280
    %3234 = vmatprep.subr.bf16.mxu0 %v2289
    %3235 = vmatpush1.bf16.msra.mxu0 %v2288
    %3236 = vmatprep.subr.bf16.mxu0 %v2297
    %3237 = vmatpush1.bf16.msra.mxu0 %v2296
    %3238 = vmatprep.subr.bf16.mxu0 %v2305
    %3239 = vmatpush1.bf16.msra.mxu0 %v2304
    %3240 = vmatprep.mubr.bf16.mxu0 %v87
    %3241 = vmatmul.mubr.bf16.gmra.mrb[0].mxu0 %v86
    %v3242 = vpop.f32.mrb[0].mxu0
    %v3243 = vadd.f32 %v611, %v3242
    %v3244 = vpop.f32.mrb[0].mxu0
    %v3245 = vadd.f32 %v615, %v3244
    %v3246 = vpop.f32.mrb[0].mxu0
    %v3247 = vpop.f32.mrb[0].mxu0
    %3248 = vdwg.mxu0
    %3249 = vmatprep.subr.bf16.mxu0 %v2313
    %3250 = vmatpush1.bf16.msra.mxu0 %v2312
    %3251 = vmatprep.subr.bf16.mxu0 %v2321
    %3252 = vmatpush1.bf16.msra.mxu0 %v2320
    %3253 = vmatprep.subr.bf16.mxu0 %v2329
    %3254 = vmatpush1.bf16.msra.mxu0 %v2328
    %3255 = vmatprep.subr.bf16.mxu0 %v2337
    %3256 = vmatpush1.bf16.msra.mxu0 %v2336
    %3257 = vmatprep.subr.bf16.mxu0 %v2345
    %3258 = vmatpush1.bf16.msra.mxu0 %v2344
    %3259 = vmatprep.subr.bf16.mxu0 %v2353
    %3260 = vmatpush1.bf16.msra.mxu0 %v2352
    %3261 = vmatprep.subr.bf16.mxu0 %v2361
    %3262 = vmatpush1.bf16.msra.mxu0 %v2360
    %3263 = vmatprep.subr.bf16.mxu0 %v2369
    %3264 = vmatpush1.bf16.msra.mxu0 %v2368
    %3265 = vmatprep.subr.bf16.mxu0 %v2377
    %3266 = vmatpush1.bf16.msra.mxu0 %v2376
    %3267 = vmatprep.subr.bf16.mxu0 %v2385
    %3268 = vmatpush1.bf16.msra.mxu0 %v2384
    %3269 = vmatprep.subr.bf16.mxu0 %v2393
    %3270 = vmatpush1.bf16.msra.mxu0 %v2392
    %3271 = vmatprep.subr.bf16.mxu0 %v2401
    %3272 = vmatpush1.bf16.msra.mxu0 %v2400
    %3273 = vmatprep.subr.bf16.mxu0 %v2409
    %3274 = vmatpush1.bf16.msra.mxu0 %v2408
    %3275 = vmatprep.subr.bf16.mxu0 %v2417
    %3276 = vmatpush1.bf16.msra.mxu0 %v2416
    %3277 = vmatprep.subr.bf16.mxu0 %v2425
    %3278 = vmatpush1.bf16.msra.mxu0 %v2424
    %3279 = vmatprep.subr.bf16.mxu0 %v2433
    %3280 = vmatpush1.bf16.msra.mxu0 %v2432
    %3281 = vmatprep.mubr.bf16.mxu0 %v89
    %3282 = vmatmul.mubr.bf16.gmra.mrb[0].mxu0 %v88
    %v3283 = vpop.f32.mrb[0].mxu0
    %v3284 = vadd.f32 %v3243, %v3283
    %v3285 = vpop.f32.mrb[0].mxu0
    %v3286 = vadd.f32 %v3245, %v3285
    %v3287 = vpop.f32.mrb[0].mxu0
    %v3288 = vpop.f32.mrb[0].mxu0
    %3289 = vdwg.mxu0
    %3290 = vmatprep.subr.bf16.mxu0 %v2441
    %3291 = vmatpush1.bf16.msra.mxu0 %v2440
    %3292 = vmatprep.subr.bf16.mxu0 %v2449
    %3293 = vmatpush1.bf16.msra.mxu0 %v2448
    %3294 = vmatprep.subr.bf16.mxu0 %v2457
    %3295 = vmatpush1.bf16.msra.mxu0 %v2456
    %3296 = vmatprep.subr.bf16.mxu0 %v2465
    %3297 = vmatpush1.bf16.msra.mxu0 %v2464
    %3298 = vmatprep.subr.bf16.mxu0 %v2473
    %3299 = vmatpush1.bf16.msra.mxu0 %v2472
    %3300 = vmatprep.subr.bf16.mxu0 %v2481
    %3301 = vmatpush1.bf16.msra.mxu0 %v2480
    %3302 = vmatprep.subr.bf16.mxu0 %v2489
    %3303 = vmatpush1.bf16.msra.mxu0 %v2488
    %3304 = vmatprep.subr.bf16.mxu0 %v2497
    %3305 = vmatpush1.bf16.msra.mxu0 %v2496
    %3306 = vmatprep.subr.bf16.mxu0 %v2505
    %3307 = vmatpush1.bf16.msra.mxu0 %v2504
    %3308 = vmatprep.subr.bf16.mxu0 %v2513
    %3309 = vmatpush1.bf16.msra.mxu0 %v2512
    %3310 = vmatprep.subr.bf16.mxu0 %v2521
    %3311 = vmatpush1.bf16.msra.mxu0 %v2520
    %3312 = vmatprep.subr.bf16.mxu0 %v2529
    %3313 = vmatpush1.bf16.msra.mxu0 %v2528
    %3314 = vmatprep.subr.bf16.mxu0 %v2537
    %3315 = vmatpush1.bf16.msra.mxu0 %v2536
    %3316 = vmatprep.subr.bf16.mxu0 %v2545
    %3317 = vmatpush1.bf16.msra.mxu0 %v2544
    %3318 = vmatprep.subr.bf16.mxu0 %v2553
    %3319 = vmatpush1.bf16.msra.mxu0 %v2552
    %3320 = vmatprep.subr.bf16.mxu0 %v2561
    %3321 = vmatpush1.bf16.msra.mxu0 %v2560
    %3322 = vmatprep.mubr.bf16.mxu0 %v91
    %3323 = vmatmul.mubr.bf16.gmra.mrb[0].mxu0 %v90
    %v3324 = vpop.f32.mrb[0].mxu0
    %v3325 = vadd.f32 %v3284, %v3324
    %v3326 = vpop.f32.mrb[0].mxu0
    %v3327 = vadd.f32 %v3286, %v3326
    %v3328 = vpop.f32.mrb[0].mxu0
    %v3329 = vpop.f32.mrb[0].mxu0
    %3330 = vdwg.mxu0
    %3331 = vmatprep.subr.bf16.mxu0 %v2569
    %3332 = vmatpush1.bf16.msra.mxu0 %v2568
    %3333 = vmatprep.subr.bf16.mxu0 %v2577
    %3334 = vmatpush1.bf16.msra.mxu0 %v2576
    %3335 = vmatprep.subr.bf16.mxu0 %v2585
    %3336 = vmatpush1.bf16.msra.mxu0 %v2584
    %3337 = vmatprep.subr.bf16.mxu0 %v2593
    %3338 = vmatpush1.bf16.msra.mxu0 %v2592
    %3339 = vmatprep.subr.bf16.mxu0 %v2601
    %3340 = vmatpush1.bf16.msra.mxu0 %v2600
    %3341 = vmatprep.subr.bf16.mxu0 %v2609
    %3342 = vmatpush1.bf16.msra.mxu0 %v2608
    %3343 = vmatprep.subr.bf16.mxu0 %v2617
    %3344 = vmatpush1.bf16.msra.mxu0 %v2616
    %3345 = vmatprep.subr.bf16.mxu0 %v2625
    %3346 = vmatpush1.bf16.msra.mxu0 %v2624
    %3347 = vmatprep.subr.bf16.mxu0 %v2633
    %3348 = vmatpush1.bf16.msra.mxu0 %v2632
    %3349 = vmatprep.subr.bf16.mxu0 %v2641
    %3350 = vmatpush1.bf16.msra.mxu0 %v2640
    %3351 = vmatprep.subr.bf16.mxu0 %v2649
    %3352 = vmatpush1.bf16.msra.mxu0 %v2648
    %3353 = vmatprep.subr.bf16.mxu0 %v2657
    %3354 = vmatpush1.bf16.msra.mxu0 %v2656
    %3355 = vmatprep.subr.bf16.mxu0 %v2665
    %3356 = vmatpush1.bf16.msra.mxu0 %v2664
    %3357 = vmatprep.subr.bf16.mxu0 %v2673
    %3358 = vmatpush1.bf16.msra.mxu0 %v2672
    %3359 = vmatprep.subr.bf16.mxu0 %v2681
    %3360 = vmatpush1.bf16.msra.mxu0 %v2680
    %3361 = vmatprep.subr.bf16.mxu0 %v2689
    %3362 = vmatpush1.bf16.msra.mxu0 %v2688
    %3363 = vmatprep.mubr.bf16.mxu0 %v93
    %3364 = vmatmul.mubr.bf16.gmra.mrb[0].mxu0 %v92
    %v3365 = vpop.f32.mrb[0].mxu0
    %v3366 = vadd.f32 %v3325, %v3365
    %v3367 = vpop.f32.mrb[0].mxu0
    %v3368 = vadd.f32 %v3327, %v3367
    %v3369 = vpop.f32.mrb[0].mxu0
    %v3370 = vpop.f32.mrb[0].mxu0
    %3371 = vdwg.mxu0
    %3372 = vmatprep.subr.bf16.mxu0 %v2187
    %3373 = vmatpush1.bf16.msra.mxu0 %v2186
    %3374 = vmatprep.subr.bf16.mxu0 %v2195
    %3375 = vmatpush1.bf16.msra.mxu0 %v2194
    %3376 = vmatprep.subr.bf16.mxu0 %v2203
    %3377 = vmatpush1.bf16.msra.mxu0 %v2202
    %3378 = vmatprep.subr.bf16.mxu0 %v2211
    %3379 = vmatpush1.bf16.msra.mxu0 %v2210
    %3380 = vmatprep.subr.bf16.mxu0 %v2219
    %3381 = vmatpush1.bf16.msra.mxu0 %v2218
    %3382 = vmatprep.subr.bf16.mxu0 %v2227
    %3383 = vmatpush1.bf16.msra.mxu0 %v2226
    %3384 = vmatprep.subr.bf16.mxu0 %v2235
    %3385 = vmatpush1.bf16.msra.mxu0 %v2234
    %3386 = vmatprep.subr.bf16.mxu0 %v2243
    %3387 = vmatpush1.bf16.msra.mxu0 %v2242
    %3388 = vmatprep.subr.bf16.mxu0 %v2251
    %3389 = vmatpush1.bf16.msra.mxu0 %v2250
    %3390 = vmatprep.subr.bf16.mxu0 %v2259
    %3391 = vmatpush1.bf16.msra.mxu0 %v2258
    %3392 = vmatprep.subr.bf16.mxu0 %v2267
    %3393 = vmatpush1.bf16.msra.mxu0 %v2266
    %3394 = vmatprep.subr.bf16.mxu0 %v2275
    %3395 = vmatpush1.bf16.msra.mxu0 %v2274
    %3396 = vmatprep.subr.bf16.mxu0 %v2283
    %3397 = vmatpush1.bf16.msra.mxu0 %v2282
    %3398 = vmatprep.subr.bf16.mxu0 %v2291
    %3399 = vmatpush1.bf16.msra.mxu0 %v2290
    %3400 = vmatprep.subr.bf16.mxu0 %v2299
    %3401 = vmatpush1.bf16.msra.mxu0 %v2298
    %3402 = vmatprep.subr.bf16.mxu0 %v2307
    %3403 = vmatpush1.bf16.msra.mxu0 %v2306
    %3404 = vmatprep.mubr.bf16.mxu0 %v87
    %3405 = vmatmul.mubr.bf16.gmra.mrb[0].mxu0 %v86
    %v3406 = vpop.f32.mrb[0].mxu0
    %v3407 = vadd.f32 %v619, %v3406
    %v3408 = vpop.f32.mrb[0].mxu0
    %v3409 = vadd.f32 %v623, %v3408
    %v3410 = vpop.f32.mrb[0].mxu0
    %v3411 = vpop.f32.mrb[0].mxu0
    %3412 = vdwg.mxu0
    %3413 = vmatprep.subr.bf16.mxu0 %v2315
    %3414 = vmatpush1.bf16.msra.mxu0 %v2314
    %3415 = vmatprep.subr.bf16.mxu0 %v2323
    %3416 = vmatpush1.bf16.msra.mxu0 %v2322
    %3417 = vmatprep.subr.bf16.mxu0 %v2331
    %3418 = vmatpush1.bf16.msra.mxu0 %v2330
    %3419 = vmatprep.subr.bf16.mxu0 %v2339
    %3420 = vmatpush1.bf16.msra.mxu0 %v2338
    %3421 = vmatprep.subr.bf16.mxu0 %v2347
    %3422 = vmatpush1.bf16.msra.mxu0 %v2346
    %3423 = vmatprep.subr.bf16.mxu0 %v2355
    %3424 = vmatpush1.bf16.msra.mxu0 %v2354
    %3425 = vmatprep.subr.bf16.mxu0 %v2363
    %3426 = vmatpush1.bf16.msra.mxu0 %v2362
    %3427 = vmatprep.subr.bf16.mxu0 %v2371
    %3428 = vmatpush1.bf16.msra.mxu0 %v2370
    %3429 = vmatprep.subr.bf16.mxu0 %v2379
    %3430 = vmatpush1.bf16.msra.mxu0 %v2378
    %3431 = vmatprep.subr.bf16.mxu0 %v2387
    %3432 = vmatpush1.bf16.msra.mxu0 %v2386
    %3433 = vmatprep.subr.bf16.mxu0 %v2395
    %3434 = vmatpush1.bf16.msra.mxu0 %v2394
    %3435 = vmatprep.subr.bf16.mxu0 %v2403
    %3436 = vmatpush1.bf16.msra.mxu0 %v2402
    %3437 = vmatprep.subr.bf16.mxu0 %v2411
    %3438 = vmatpush1.bf16.msra.mxu0 %v2410
    %3439 = vmatprep.subr.bf16.mxu0 %v2419
    %3440 = vmatpush1.bf16.msra.mxu0 %v2418
    %3441 = vmatprep.subr.bf16.mxu0 %v2427
    %3442 = vmatpush1.bf16.msra.mxu0 %v2426
    %3443 = vmatprep.subr.bf16.mxu0 %v2435
    %3444 = vmatpush1.bf16.msra.mxu0 %v2434
    %3445 = vmatprep.mubr.bf16.mxu0 %v89
    %3446 = vmatmul.mubr.bf16.gmra.mrb[0].mxu0 %v88
    %v3447 = vpop.f32.mrb[0].mxu0
    %v3448 = vadd.f32 %v3407, %v3447
    %v3449 = vpop.f32.mrb[0].mxu0
    %v3450 = vadd.f32 %v3409, %v3449
    %v3451 = vpop.f32.mrb[0].mxu0
    %v3452 = vpop.f32.mrb[0].mxu0
    %3453 = vdwg.mxu0
    %3454 = vmatprep.subr.bf16.mxu0 %v2443
    %3455 = vmatpush1.bf16.msra.mxu0 %v2442
    %3456 = vmatprep.subr.bf16.mxu0 %v2451
    %3457 = vmatpush1.bf16.msra.mxu0 %v2450
    %3458 = vmatprep.subr.bf16.mxu0 %v2459
    %3459 = vmatpush1.bf16.msra.mxu0 %v2458
    %3460 = vmatprep.subr.bf16.mxu0 %v2467
    %3461 = vmatpush1.bf16.msra.mxu0 %v2466
    %3462 = vmatprep.subr.bf16.mxu0 %v2475
    %3463 = vmatpush1.bf16.msra.mxu0 %v2474
    %3464 = vmatprep.subr.bf16.mxu0 %v2483
    %3465 = vmatpush1.bf16.msra.mxu0 %v2482
    %3466 = vmatprep.subr.bf16.mxu0 %v2491
    %3467 = vmatpush1.bf16.msra.mxu0 %v2490
    %3468 = vmatprep.subr.bf16.mxu0 %v2499
    %3469 = vmatpush1.bf16.msra.mxu0 %v2498
    %3470 = vmatprep.subr.bf16.mxu0 %v2507
    %3471 = vmatpush1.bf16.msra.mxu0 %v2506
    %3472 = vmatprep.subr.bf16.mxu0 %v2515
    %3473 = vmatpush1.bf16.msra.mxu0 %v2514
    %3474 = vmatprep.subr.bf16.mxu0 %v2523
    %3475 = vmatpush1.bf16.msra.mxu0 %v2522
    %3476 = vmatprep.subr.bf16.mxu0 %v2531
    %3477 = vmatpush1.bf16.msra.mxu0 %v2530
    %3478 = vmatprep.subr.bf16.mxu0 %v2539
    %3479 = vmatpush1.bf16.msra.mxu0 %v2538
    %3480 = vmatprep.subr.bf16.mxu0 %v2547
    %3481 = vmatpush1.bf16.msra.mxu0 %v2546
    %3482 = vmatprep.subr.bf16.mxu0 %v2555
    %3483 = vmatpush1.bf16.msra.mxu0 %v2554
    %3484 = vmatprep.subr.bf16.mxu0 %v2563
    %3485 = vmatpush1.bf16.msra.mxu0 %v2562
    %3486 = vmatprep.mubr.bf16.mxu0 %v91
    %3487 = vmatmul.mubr.bf16.gmra.mrb[0].mxu0 %v90
    %v3488 = vpop.f32.mrb[0].mxu0
    %v3489 = vadd.f32 %v3448, %v3488
    %v3490 = vpop.f32.mrb[0].mxu0
    %v3491 = vadd.f32 %v3450, %v3490
    %v3492 = vpop.f32.mrb[0].mxu0
    %v3493 = vpop.f32.mrb[0].mxu0
    %3494 = vdwg.mxu0
    %3495 = vmatprep.subr.bf16.mxu0 %v2571
    %3496 = vmatpush1.bf16.msra.mxu0 %v2570
    %3497 = vmatprep.subr.bf16.mxu0 %v2579
    %3498 = vmatpush1.bf16.msra.mxu0 %v2578
    %3499 = vmatprep.subr.bf16.mxu0 %v2587
    %3500 = vmatpush1.bf16.msra.mxu0 %v2586
    %3501 = vmatprep.subr.bf16.mxu0 %v2595
    %3502 = vmatpush1.bf16.msra.mxu0 %v2594
    %3503 = vmatprep.subr.bf16.mxu0 %v2603
    %3504 = vmatpush1.bf16.msra.mxu0 %v2602
    %3505 = vmatprep.subr.bf16.mxu0 %v2611
    %3506 = vmatpush1.bf16.msra.mxu0 %v2610
    %3507 = vmatprep.subr.bf16.mxu0 %v2619
    %3508 = vmatpush1.bf16.msra.mxu0 %v2618
    %3509 = vmatprep.subr.bf16.mxu0 %v2627
    %3510 = vmatpush1.bf16.msra.mxu0 %v2626
    %3511 = vmatprep.subr.bf16.mxu0 %v2635
    %3512 = vmatpush1.bf16.msra.mxu0 %v2634
    %3513 = vmatprep.subr.bf16.mxu0 %v2643
    %3514 = vmatpush1.bf16.msra.mxu0 %v2642
    %3515 = vmatprep.subr.bf16.mxu0 %v2651
    %3516 = vmatpush1.bf16.msra.mxu0 %v2650
    %3517 = vmatprep.subr.bf16.mxu0 %v2659
    %3518 = vmatpush1.bf16.msra.mxu0 %v2658
    %3519 = vmatprep.subr.bf16.mxu0 %v2667
    %3520 = vmatpush1.bf16.msra.mxu0 %v2666
    %3521 = vmatprep.subr.bf16.mxu0 %v2675
    %3522 = vmatpush1.bf16.msra.mxu0 %v2674
    %3523 = vmatprep.subr.bf16.mxu0 %v2683
    %3524 = vmatpush1.bf16.msra.mxu0 %v2682
    %3525 = vmatprep.subr.bf16.mxu0 %v2691
    %3526 = vmatpush1.bf16.msra.mxu0 %v2690
    %3527 = vmatprep.mubr.bf16.mxu0 %v93
    %3528 = vmatmul.mubr.bf16.gmra.mrb[0].mxu0 %v92
    %v3529 = vpop.f32.mrb[0].mxu0
    %v3530 = vadd.f32 %v3489, %v3529
    %v3531 = vpop.f32.mrb[0].mxu0
    %v3532 = vadd.f32 %v3491, %v3531
    %v3533 = vpop.f32.mrb[0].mxu0
    %v3534 = vpop.f32.mrb[0].mxu0
    %3535 = vdwg.mxu0
    %3536 = vmatprep.subr.bf16.mxu0 %v2189
    %3537 = vmatpush1.bf16.msra.mxu0 %v2188
    %3538 = vmatprep.subr.bf16.mxu0 %v2197
    %3539 = vmatpush1.bf16.msra.mxu0 %v2196
    %3540 = vmatprep.subr.bf16.mxu0 %v2205
    %3541 = vmatpush1.bf16.msra.mxu0 %v2204
    %3542 = vmatprep.subr.bf16.mxu0 %v2213
    %3543 = vmatpush1.bf16.msra.mxu0 %v2212
    %3544 = vmatprep.subr.bf16.mxu0 %v2221
    %3545 = vmatpush1.bf16.msra.mxu0 %v2220
    %3546 = vmatprep.subr.bf16.mxu0 %v2229
    %3547 = vmatpush1.bf16.msra.mxu0 %v2228
    %3548 = vmatprep.subr.bf16.mxu0 %v2237
    %3549 = vmatpush1.bf16.msra.mxu0 %v2236
    %3550 = vmatprep.subr.bf16.mxu0 %v2245
    %3551 = vmatpush1.bf16.msra.mxu0 %v2244
    %3552 = vmatprep.subr.bf16.mxu0 %v2253
    %3553 = vmatpush1.bf16.msra.mxu0 %v2252
    %3554 = vmatprep.subr.bf16.mxu0 %v2261
    %3555 = vmatpush1.bf16.msra.mxu0 %v2260
    %3556 = vmatprep.subr.bf16.mxu0 %v2269
    %3557 = vmatpush1.bf16.msra.mxu0 %v2268
    %3558 = vmatprep.subr.bf16.mxu0 %v2277
    %3559 = vmatpush1.bf16.msra.mxu0 %v2276
    %3560 = vmatprep.subr.bf16.mxu0 %v2285
    %3561 = vmatpush1.bf16.msra.mxu0 %v2284
    %3562 = vmatprep.subr.bf16.mxu0 %v2293
    %3563 = vmatpush1.bf16.msra.mxu0 %v2292
    %3564 = vmatprep.subr.bf16.mxu0 %v2301
    %3565 = vmatpush1.bf16.msra.mxu0 %v2300
    %3566 = vmatprep.subr.bf16.mxu0 %v2309
    %3567 = vmatpush1.bf16.msra.mxu0 %v2308
    %3568 = vmatprep.mubr.bf16.mxu0 %v87
    %3569 = vmatmul.mubr.bf16.gmra.mrb[0].mxu0 %v86
    %v3570 = vpop.f32.mrb[0].mxu0
    %v3571 = vadd.f32 %v627, %v3570
    %v3572 = vpop.f32.mrb[0].mxu0
    %v3573 = vadd.f32 %v631, %v3572
    %v3574 = vpop.f32.mrb[0].mxu0
    %v3575 = vpop.f32.mrb[0].mxu0
    %3576 = vdwg.mxu0
    %3577 = vmatprep.subr.bf16.mxu0 %v2317
    %3578 = vmatpush1.bf16.msra.mxu0 %v2316
    %3579 = vmatprep.subr.bf16.mxu0 %v2325
    %3580 = vmatpush1.bf16.msra.mxu0 %v2324
    %3581 = vmatprep.subr.bf16.mxu0 %v2333
    %3582 = vmatpush1.bf16.msra.mxu0 %v2332
    %3583 = vmatprep.subr.bf16.mxu0 %v2341
    %3584 = vmatpush1.bf16.msra.mxu0 %v2340
    %3585 = vmatprep.subr.bf16.mxu0 %v2349
    %3586 = vmatpush1.bf16.msra.mxu0 %v2348
    %3587 = vmatprep.subr.bf16.mxu0 %v2357
    %3588 = vmatpush1.bf16.msra.mxu0 %v2356
    %3589 = vmatprep.subr.bf16.mxu0 %v2365
    %3590 = vmatpush1.bf16.msra.mxu0 %v2364
    %3591 = vmatprep.subr.bf16.mxu0 %v2373
    %3592 = vmatpush1.bf16.msra.mxu0 %v2372
    %3593 = vmatprep.subr.bf16.mxu0 %v2381
    %3594 = vmatpush1.bf16.msra.mxu0 %v2380
    %3595 = vmatprep.subr.bf16.mxu0 %v2389
    %3596 = vmatpush1.bf16.msra.mxu0 %v2388
    %3597 = vmatprep.subr.bf16.mxu0 %v2397
    %3598 = vmatpush1.bf16.msra.mxu0 %v2396
    %3599 = vmatprep.subr.bf16.mxu0 %v2405
    %3600 = vmatpush1.bf16.msra.mxu0 %v2404
    %3601 = vmatprep.subr.bf16.mxu0 %v2413
    %3602 = vmatpush1.bf16.msra.mxu0 %v2412
    %3603 = vmatprep.subr.bf16.mxu0 %v2421
    %3604 = vmatpush1.bf16.msra.mxu0 %v2420
    %3605 = vmatprep.subr.bf16.mxu0 %v2429
    %3606 = vmatpush1.bf16.msra.mxu0 %v2428
    %3607 = vmatprep.subr.bf16.mxu0 %v2437
    %3608 = vmatpush1.bf16.msra.mxu0 %v2436
    %3609 = vmatprep.mubr.bf16.mxu0 %v89
    %3610 = vmatmul.mubr.bf16.gmra.mrb[0].mxu0 %v88
    %v3611 = vpop.f32.mrb[0].mxu0
    %v3612 = vadd.f32 %v3571, %v3611
    %v3613 = vpop.f32.mrb[0].mxu0
    %v3614 = vadd.f32 %v3573, %v3613
    %v3615 = vpop.f32.mrb[0].mxu0
    %v3616 = vpop.f32.mrb[0].mxu0
    %3617 = vdwg.mxu0
    %3618 = vmatprep.subr.bf16.mxu0 %v2445
    %3619 = vmatpush1.bf16.msra.mxu0 %v2444
    %3620 = vmatprep.subr.bf16.mxu0 %v2453
    %3621 = vmatpush1.bf16.msra.mxu0 %v2452
    %3622 = vmatprep.subr.bf16.mxu0 %v2461
    %3623 = vmatpush1.bf16.msra.mxu0 %v2460
    %3624 = vmatprep.subr.bf16.mxu0 %v2469
    %3625 = vmatpush1.bf16.msra.mxu0 %v2468
    %3626 = vmatprep.subr.bf16.mxu0 %v2477
    %3627 = vmatpush1.bf16.msra.mxu0 %v2476
    %3628 = vmatprep.subr.bf16.mxu0 %v2485
    %3629 = vmatpush1.bf16.msra.mxu0 %v2484
    %3630 = vmatprep.subr.bf16.mxu0 %v2493
    %3631 = vmatpush1.bf16.msra.mxu0 %v2492
    %3632 = vmatprep.subr.bf16.mxu0 %v2501
    %3633 = vmatpush1.bf16.msra.mxu0 %v2500
    %3634 = vmatprep.subr.bf16.mxu0 %v2509
    %3635 = vmatpush1.bf16.msra.mxu0 %v2508
    %3636 = vmatprep.subr.bf16.mxu0 %v2517
    %3637 = vmatpush1.bf16.msra.mxu0 %v2516
    %3638 = vmatprep.subr.bf16.mxu0 %v2525
    %3639 = vmatpush1.bf16.msra.mxu0 %v2524
    %3640 = vmatprep.subr.bf16.mxu0 %v2533
    %3641 = vmatpush1.bf16.msra.mxu0 %v2532
    %3642 = vmatprep.subr.bf16.mxu0 %v2541
    %3643 = vmatpush1.bf16.msra.mxu0 %v2540
    %3644 = vmatprep.subr.bf16.mxu0 %v2549
    %3645 = vmatpush1.bf16.msra.mxu0 %v2548
    %3646 = vmatprep.subr.bf16.mxu0 %v2557
    %3647 = vmatpush1.bf16.msra.mxu0 %v2556
    %3648 = vmatprep.subr.bf16.mxu0 %v2565
    %3649 = vmatpush1.bf16.msra.mxu0 %v2564
    %3650 = vmatprep.mubr.bf16.mxu0 %v91
    %3651 = vmatmul.mubr.bf16.gmra.mrb[0].mxu0 %v90
    %v3652 = vpop.f32.mrb[0].mxu0
    %v3653 = vadd.f32 %v3612, %v3652
    %v3654 = vpop.f32.mrb[0].mxu0
    %v3655 = vadd.f32 %v3614, %v3654
    %v3656 = vpop.f32.mrb[0].mxu0
    %v3657 = vpop.f32.mrb[0].mxu0
    %3658 = vdwg.mxu0
    %3659 = vmatprep.subr.bf16.mxu0 %v2573
    %3660 = vmatpush1.bf16.msra.mxu0 %v2572
    %3661 = vmatprep.subr.bf16.mxu0 %v2581
    %3662 = vmatpush1.bf16.msra.mxu0 %v2580
    %3663 = vmatprep.subr.bf16.mxu0 %v2589
    %3664 = vmatpush1.bf16.msra.mxu0 %v2588
    %3665 = vmatprep.subr.bf16.mxu0 %v2597
    %3666 = vmatpush1.bf16.msra.mxu0 %v2596
    %3667 = vmatprep.subr.bf16.mxu0 %v2605
    %3668 = vmatpush1.bf16.msra.mxu0 %v2604
    %3669 = vmatprep.subr.bf16.mxu0 %v2613
    %3670 = vmatpush1.bf16.msra.mxu0 %v2612
    %3671 = vmatprep.subr.bf16.mxu0 %v2621
    %3672 = vmatpush1.bf16.msra.mxu0 %v2620
    %3673 = vmatprep.subr.bf16.mxu0 %v2629
    %3674 = vmatpush1.bf16.msra.mxu0 %v2628
    %3675 = vmatprep.subr.bf16.mxu0 %v2637
    %3676 = vmatpush1.bf16.msra.mxu0 %v2636
    %3677 = vmatprep.subr.bf16.mxu0 %v2645
    %3678 = vmatpush1.bf16.msra.mxu0 %v2644
    %3679 = vmatprep.subr.bf16.mxu0 %v2653
    %3680 = vmatpush1.bf16.msra.mxu0 %v2652
    %3681 = vmatprep.subr.bf16.mxu0 %v2661
    %3682 = vmatpush1.bf16.msra.mxu0 %v2660
    %3683 = vmatprep.subr.bf16.mxu0 %v2669
    %3684 = vmatpush1.bf16.msra.mxu0 %v2668
    %3685 = vmatprep.subr.bf16.mxu0 %v2677
    %3686 = vmatpush1.bf16.msra.mxu0 %v2676
    %3687 = vmatprep.subr.bf16.mxu0 %v2685
    %3688 = vmatpush1.bf16.msra.mxu0 %v2684
    %3689 = vmatprep.subr.bf16.mxu0 %v2693
    %3690 = vmatpush1.bf16.msra.mxu0 %v2692
    %3691 = vmatprep.mubr.bf16.mxu0 %v93
    %3692 = vmatmul.mubr.bf16.gmra.mrb[0].mxu0 %v92
    %v3693 = vpop.f32.mrb[0].mxu0
    %v3694 = vadd.f32 %v3653, %v3693
    %v3695 = vpop.f32.mrb[0].mxu0
    %v3696 = vadd.f32 %v3655, %v3695
    %v3697 = vpop.f32.mrb[0].mxu0
    %v3698 = vpop.f32.mrb[0].mxu0
    %3699 = vdwg.mxu0
    %3700 = vmatprep.subr.bf16.mxu0 %v2191
    %3701 = vmatpush1.bf16.msra.mxu0 %v2190
    %3702 = vmatprep.subr.bf16.mxu0 %v2199
    %3703 = vmatpush1.bf16.msra.mxu0 %v2198
    %3704 = vmatprep.subr.bf16.mxu0 %v2207
    %3705 = vmatpush1.bf16.msra.mxu0 %v2206
    %3706 = vmatprep.subr.bf16.mxu0 %v2215
    %3707 = vmatpush1.bf16.msra.mxu0 %v2214
    %3708 = vmatprep.subr.bf16.mxu0 %v2223
    %3709 = vmatpush1.bf16.msra.mxu0 %v2222
    %3710 = vmatprep.subr.bf16.mxu0 %v2231
    %3711 = vmatpush1.bf16.msra.mxu0 %v2230
    %3712 = vmatprep.subr.bf16.mxu0 %v2239
    %3713 = vmatpush1.bf16.msra.mxu0 %v2238
    %3714 = vmatprep.subr.bf16.mxu0 %v2247
    %3715 = vmatpush1.bf16.msra.mxu0 %v2246
    %3716 = vmatprep.subr.bf16.mxu0 %v2255
    %3717 = vmatpush1.bf16.msra.mxu0 %v2254
    %3718 = vmatprep.subr.bf16.mxu0 %v2263
    %3719 = vmatpush1.bf16.msra.mxu0 %v2262
    %3720 = vmatprep.subr.bf16.mxu0 %v2271
    %3721 = vmatpush1.bf16.msra.mxu0 %v2270
    %3722 = vmatprep.subr.bf16.mxu0 %v2279
    %3723 = vmatpush1.bf16.msra.mxu0 %v2278
    %3724 = vmatprep.subr.bf16.mxu0 %v2287
    %3725 = vmatpush1.bf16.msra.mxu0 %v2286
    %3726 = vmatprep.subr.bf16.mxu0 %v2295
    %3727 = vmatpush1.bf16.msra.mxu0 %v2294
    %3728 = vmatprep.subr.bf16.mxu0 %v2303
    %3729 = vmatpush1.bf16.msra.mxu0 %v2302
    %3730 = vmatprep.subr.bf16.mxu0 %v2311
    %3731 = vmatpush1.bf16.msra.mxu0 %v2310
    %3732 = vmatprep.mubr.bf16.mxu0 %v87
    %3733 = vmatmul.mubr.bf16.gmra.mrb[0].mxu0 %v86
    %v3734 = vpop.f32.mrb[0].mxu0
    %v3735 = vadd.f32 %v635, %v3734
    %v3736 = vpop.f32.mrb[0].mxu0
    %v3737 = vadd.f32 %v639, %v3736
    %v3738 = vpop.f32.mrb[0].mxu0
    %v3739 = vpop.f32.mrb[0].mxu0
    %3740 = vdwg.mxu0
    %3741 = vmatprep.subr.bf16.mxu0 %v2319
    %3742 = vmatpush1.bf16.msra.mxu0 %v2318
    %3743 = vmatprep.subr.bf16.mxu0 %v2327
    %3744 = vmatpush1.bf16.msra.mxu0 %v2326
    %3745 = vmatprep.subr.bf16.mxu0 %v2335
    %3746 = vmatpush1.bf16.msra.mxu0 %v2334
    %3747 = vmatprep.subr.bf16.mxu0 %v2343
    %3748 = vmatpush1.bf16.msra.mxu0 %v2342
    %3749 = vmatprep.subr.bf16.mxu0 %v2351
    %3750 = vmatpush1.bf16.msra.mxu0 %v2350
    %3751 = vmatprep.subr.bf16.mxu0 %v2359
    %3752 = vmatpush1.bf16.msra.mxu0 %v2358
    %3753 = vmatprep.subr.bf16.mxu0 %v2367
    %3754 = vmatpush1.bf16.msra.mxu0 %v2366
    %3755 = vmatprep.subr.bf16.mxu0 %v2375
    %3756 = vmatpush1.bf16.msra.mxu0 %v2374
    %3757 = vmatprep.subr.bf16.mxu0 %v2383
    %3758 = vmatpush1.bf16.msra.mxu0 %v2382
    %3759 = vmatprep.subr.bf16.mxu0 %v2391
    %3760 = vmatpush1.bf16.msra.mxu0 %v2390
    %3761 = vmatprep.subr.bf16.mxu0 %v2399
    %3762 = vmatpush1.bf16.msra.mxu0 %v2398
    %3763 = vmatprep.subr.bf16.mxu0 %v2407
    %3764 = vmatpush1.bf16.msra.mxu0 %v2406
    %3765 = vmatprep.subr.bf16.mxu0 %v2415
    %3766 = vmatpush1.bf16.msra.mxu0 %v2414
    %3767 = vmatprep.subr.bf16.mxu0 %v2423
    %3768 = vmatpush1.bf16.msra.mxu0 %v2422
    %3769 = vmatprep.subr.bf16.mxu0 %v2431
    %3770 = vmatpush1.bf16.msra.mxu0 %v2430
    %3771 = vmatprep.subr.bf16.mxu0 %v2439
    %3772 = vmatpush1.bf16.msra.mxu0 %v2438
    %3773 = vmatprep.mubr.bf16.mxu0 %v89
    %3774 = vmatmul.mubr.bf16.gmra.mrb[0].mxu0 %v88
    %v3775 = vpop.f32.mrb[0].mxu0
    %v3776 = vadd.f32 %v3735, %v3775
    %v3777 = vpop.f32.mrb[0].mxu0
    %v3778 = vadd.f32 %v3737, %v3777
    %v3779 = vpop.f32.mrb[0].mxu0
    %v3780 = vpop.f32.mrb[0].mxu0
    %3781 = vdwg.mxu0
    %3782 = vmatprep.subr.bf16.mxu0 %v2447
    %3783 = vmatpush1.bf16.msra.mxu0 %v2446
    %3784 = vmatprep.subr.bf16.mxu0 %v2455
    %3785 = vmatpush1.bf16.msra.mxu0 %v2454
    %3786 = vmatprep.subr.bf16.mxu0 %v2463
    %3787 = vmatpush1.bf16.msra.mxu0 %v2462
    %3788 = vmatprep.subr.bf16.mxu0 %v2471
    %3789 = vmatpush1.bf16.msra.mxu0 %v2470
    %3790 = vmatprep.subr.bf16.mxu0 %v2479
    %3791 = vmatpush1.bf16.msra.mxu0 %v2478
    %3792 = vmatprep.subr.bf16.mxu0 %v2487
    %3793 = vmatpush1.bf16.msra.mxu0 %v2486
    %3794 = vmatprep.subr.bf16.mxu0 %v2495
    %3795 = vmatpush1.bf16.msra.mxu0 %v2494
    %3796 = vmatprep.subr.bf16.mxu0 %v2503
    %3797 = vmatpush1.bf16.msra.mxu0 %v2502
    %3798 = vmatprep.subr.bf16.mxu0 %v2511
    %3799 = vmatpush1.bf16.msra.mxu0 %v2510
    %3800 = vmatprep.subr.bf16.mxu0 %v2519
    %3801 = vmatpush1.bf16.msra.mxu0 %v2518
    %3802 = vmatprep.subr.bf16.mxu0 %v2527
    %3803 = vmatpush1.bf16.msra.mxu0 %v2526
    %3804 = vmatprep.subr.bf16.mxu0 %v2535
    %3805 = vmatpush1.bf16.msra.mxu0 %v2534
    %3806 = vmatprep.subr.bf16.mxu0 %v2543
    %3807 = vmatpush1.bf16.msra.mxu0 %v2542
    %3808 = vmatprep.subr.bf16.mxu0 %v2551
    %3809 = vmatpush1.bf16.msra.mxu0 %v2550
    %3810 = vmatprep.subr.bf16.mxu0 %v2559
    %3811 = vmatpush1.bf16.msra.mxu0 %v2558
    %3812 = vmatprep.subr.bf16.mxu0 %v2567
    %3813 = vmatpush1.bf16.msra.mxu0 %v2566
    %3814 = vmatprep.mubr.bf16.mxu0 %v91
    %3815 = vmatmul.mubr.bf16.gmra.mrb[0].mxu0 %v90
    %v3816 = vpop.f32.mrb[0].mxu0
    %v3817 = vadd.f32 %v3776, %v3816
    %v3818 = vpop.f32.mrb[0].mxu0
    %v3819 = vadd.f32 %v3778, %v3818
    %v3820 = vpop.f32.mrb[0].mxu0
    %v3821 = vpop.f32.mrb[0].mxu0
    %3822 = vdwg.mxu0
    %3823 = vmatprep.subr.bf16.mxu0 %v2575
    %3824 = vmatpush1.bf16.msra.mxu0 %v2574
    %3825 = vmatprep.subr.bf16.mxu0 %v2583
    %3826 = vmatpush1.bf16.msra.mxu0 %v2582
    %3827 = vmatprep.subr.bf16.mxu0 %v2591
    %3828 = vmatpush1.bf16.msra.mxu0 %v2590
    %3829 = vmatprep.subr.bf16.mxu0 %v2599
    %3830 = vmatpush1.bf16.msra.mxu0 %v2598
    %3831 = vmatprep.subr.bf16.mxu0 %v2607
    %3832 = vmatpush1.bf16.msra.mxu0 %v2606
    %3833 = vmatprep.subr.bf16.mxu0 %v2615
    %3834 = vmatpush1.bf16.msra.mxu0 %v2614
    %3835 = vmatprep.subr.bf16.mxu0 %v2623
    %3836 = vmatpush1.bf16.msra.mxu0 %v2622
    %3837 = vmatprep.subr.bf16.mxu0 %v2631
    %3838 = vmatpush1.bf16.msra.mxu0 %v2630
    %3839 = vmatprep.subr.bf16.mxu0 %v2639
    %3840 = vmatpush1.bf16.msra.mxu0 %v2638
    %3841 = vmatprep.subr.bf16.mxu0 %v2647
    %3842 = vmatpush1.bf16.msra.mxu0 %v2646
    %3843 = vmatprep.subr.bf16.mxu0 %v2655
    %3844 = vmatpush1.bf16.msra.mxu0 %v2654
    %3845 = vmatprep.subr.bf16.mxu0 %v2663
    %3846 = vmatpush1.bf16.msra.mxu0 %v2662
    %3847 = vmatprep.subr.bf16.mxu0 %v2671
    %3848 = vmatpush1.bf16.msra.mxu0 %v2670
    %3849 = vmatprep.subr.bf16.mxu0 %v2679
    %3850 = vmatpush1.bf16.msra.mxu0 %v2678
    %3851 = vmatprep.subr.bf16.mxu0 %v2687
    %3852 = vmatpush1.bf16.msra.mxu0 %v2686
    %3853 = vmatprep.subr.bf16.mxu0 %v2695
    %3854 = vmatpush1.bf16.msra.mxu0 %v2694
    %3855 = vmatprep.mubr.bf16.mxu0 %v93
    %3856 = vmatmul.mubr.bf16.gmra.mrb[0].mxu0 %v92
    %v3857 = vpop.f32.mrb[0].mxu0
    %v3858 = vadd.f32 %v3817, %v3857
    %v3859 = vpop.f32.mrb[0].mxu0
    %v3860 = vadd.f32 %v3819, %v3859
    %v3861 = vpop.f32.mrb[0].mxu0
    %v3862 = vpop.f32.mrb[0].mxu0
    %3863 = vdwg.mxu0
    %v3872 = vcombine.low %v3366, %v3368
    %v3873 = vcombine.low %v3530, %v3532
    %v3875 = vunpack.c.l.s4 1983009808
    %v3876 = vunpack.c.0.s8 %v3875
    %v3877 = vlaneseq
    %v3878 = vshrl.u32 %v3877, 7
    %v3879 = vsub.s32 %v3876, %v3878
    %v3880 = vrot.slane %v3872, %v3879
    %v3882 = vunpack.c.l.s4 1983009808
    %v3883 = vunpack.c.0.s8 %v3882
    %v3884 = vlaneseq
    %v3885 = vshrl.u32 %v3884, 7
    %v3886 = vsub.s32 %v3883, %v3885
    %v3887 = vrot.slane %v3873, %v3886
    %v3888 = vcombine.low %v3880, %v3887
    %v3889 = vcombine.low %v3694, %v3696
    %v3890 = vcombine.low %v3858, %v3860
    %v3892 = vunpack.c.l.s4 1983009808
    %v3893 = vunpack.c.0.s8 %v3892
    %v3894 = vlaneseq
    %v3895 = vshrl.u32 %v3894, 7
    %v3896 = vsub.s32 %v3893, %v3895
    %v3897 = vrot.slane %v3889, %v3896
    %v3899 = vunpack.c.l.s4 1983009808
    %v3900 = vunpack.c.0.s8 %v3899
    %v3901 = vlaneseq
    %v3902 = vshrl.u32 %v3901, 7
    %v3903 = vsub.s32 %v3900, %v3902
    %v3904 = vrot.slane %v3890, %v3903
    %v3905 = vcombine.low %v3897, %v3904
    %3908 = vst [vmem:[%s3] sm:$0xff] %v3888
    %3909 = vst [vmem:[%s3 + $0x8] sm:$0xff] %v3905
    // Predicated region
    $region22: #{generator_forward.5} parent=1 // pred_check
      _
    $region23: #{generator_forward.5} parent=1 // pred_check_branch
      %3911 = sbr.rel (0) target = $region25
    $region24: #{generator_forward.5} parent=1 // pred_region
      _
    $region25: #{generator_forward.5} parent=1 // pred_fallthru
      _
    // Predicated region
    $region26: #{generator_forward.5} parent=1 // pred_check
      _
    $region27: #{generator_forward.5} parent=1 // pred_check_branch
      %3913 = sbr.rel (0) target = $region29
    $region28: #{generator_forward.5} parent=1 // pred_region
      _
    $region29: #{generator_forward.5} parent=1 // pred_fallthru
      _
    %3914 = vsyncpa [#allocation3], 1
    %3915 = vsyncpa [#allocation5], 1

</llo_original>
